<compile_context>
chip_gen: v6e
topology: v6e:2x2x1
jax: 0.10.0
libtpu: 0.0.40
codegen_flags: <defaults>
</compile_context>

<pallas_src>
import math
import functools

import jax
import jax.numpy as jnp
from jax import lax
from jax.experimental import pallas as pl
from jax.experimental.pallas import tpu as pltpu


_F32 = jnp.float32
_WDT = jnp.bfloat16                 # weight storage / matmul-operand dtype
_NT = (((1,), (1,)), ((), ()))      # dot_general: contract last dims of both (A @ B^T)
_VMEM_LIMIT = 64 * 1024 * 1024

_LIN_KEYS = ('W', 'Wvar', 'b', 'bv')
_LN_KEYS = ('g', 'b', 'g2pgv', 'gv', 'bv')


# ----------------------------------------------------------------------------------
# In-kernel VMP building blocks (operate on values already loaded from refs)
# ----------------------------------------------------------------------------------

def _linear_vmp(x, vx, w, wvar, b, bv, relu):
    """LinearVMP: y = xW + b ; vy = [x^2 | vx] @ [Wv ; W^2+Wv] + bv  (K-stacked)."""
    cd = w.dtype
    y = jnp.dot(x.astype(cd), w, preferred_element_type=_F32)
    xv = jnp.concatenate([x * x, vx], axis=-1).astype(cd)
    vy = jnp.dot(xv, wvar, preferred_element_type=_F32)
    if b is not None:
        y = y + b
        vy = vy + bv
    if relu:
        # TODO(synk): original relu_vmp may use exact Gaussian rectification moments;
        # a first-order Taylor gate is used here.
        gate = (y > 0.0).astype(_F32)
        y = y * gate
        vy = vy * gate
    return y, vy


def _layernorm_vmp(x, vx, g, b, g2pgv, gv, bv, tol):
    """LayerNormVMP: normalize mean; first-order variance propagation (stats frozen).
    TODO(synk): exact original formula unknown; mu/sigma^2 variance contribution ignored."""
    mu = jnp.mean(x, axis=-1, keepdims=True)
    xc = x - mu
    s2 = jnp.mean(xc * xc, axis=-1, keepdims=True)
    inv = lax.rsqrt(s2 + tol)
    xn = xc * inv
    y = g * xn + b
    vy = g2pgv * vx * (inv * inv) + gv * (xn * xn) + bv
    return y, vy


def _softmax_vmp(s, vs):
    m = jnp.max(s, axis=-1, keepdims=True)
    e = jnp.exp(s - m)
    p = e * pl.reciprocal(jnp.sum(e, axis=-1, keepdims=True), approx=True)  # EUP slot
    row = jnp.sum(p * p * vs, axis=-1, keepdims=True)
    vp = p * p * ((1.0 - 2.0 * p) * vs + row)
    return p, jnp.maximum(vp, 0.0)     # clamp f32 cancellation residue (var >= 0)


def _attention_head_vmp(q, vq, k, vk, v, vv, scale):
    """Single-head VMP attention on 2-D [T, dk] slabs.
    Variance matmuls K-stacked: one MXU push each for scores and output."""
    s = lax.dot_general(q, k, _NT, preferred_element_type=_F32) * scale
    a_var = jnp.concatenate([q * q, vq], axis=-1)
    b_var = jnp.concatenate([vk, k * k + vk], axis=-1)
    vs = lax.dot_general(a_var, b_var, _NT, preferred_element_type=_F32) * (scale * scale)
    p, vp = _softmax_vmp(s, vs)
    o = jnp.dot(p, v, preferred_element_type=_F32)
    po = jnp.concatenate([p * p, vp], axis=-1)           # (T, 2T)
    v_stack = jnp.concatenate([vv, v * v + vv], axis=0)  # (2T, dk)
    vo = jnp.dot(po, v_stack, preferred_element_type=_F32)
    return o, vo


# ----------------------------------------------------------------------------------
# Pallas kernels
# ----------------------------------------------------------------------------------

def _embed_kernel(*refs, n_layers):
    refs = list(refs)
    vy_ref = refs.pop()
    y_ref = refs.pop()
    x = refs.pop(0)[...]
    vx = jnp.zeros_like(x)                          # var_x starts exactly at zero
    for i in range(n_layers):
        w, wvar, b, bv = [refs.pop(0)[...] for _ in range(4)]
        x, vx = _linear_vmp(x, vx, w, wvar, b, bv, relu=(i < n_layers - 1))
    pos = refs.pop(0)[...]
    y_ref[...] = x + pos                            # positional add fused in epilogue
    vy_ref[...] = vx


def _block_kernel(*refs, G, T, H, D, scale, tol, pre_ln, post_mlp, pool):
    refs = list(refs)
    vy_ref = refs.pop()
    y_ref = refs.pop()

    x = refs.pop(0)[...]
    vx = refs.pop(0)[...]

    if pre_ln:
        g, b, g2, gv, bv = [refs.pop(0)[...] for _ in range(5)]
        x, vx = _layernorm_vmp(x, vx, g, b, g2, gv, bv, tol)

    # fused Q|K|V projection (bias-free in the reference model), whole (G*T, D) slab
    wqkv, wqkvv = [refs.pop(0)[...] for _ in range(2)]
    qkv, vqkv = _linear_vmp(x, vx, wqkv, wqkvv, None, None, relu=False)

    dk = D // H
    attn_rows, vattn_rows = [], []
    for s in range(G):                               # attention is per-sequence
        rs = slice(s * T, (s + 1) * T)
        q_s, vq_s = qkv[rs], vqkv[rs]
        heads, vheads = [], []
        for h in range(H):
            # TODO(synk): for large D lay QKV head-major / dk padded to 128 host-side
            # so these lane slices land on tile boundaries.
            sq = slice(h * dk, (h + 1) * dk)
            sk = slice(D + h * dk, D + (h + 1) * dk)
            sv = slice(2 * D + h * dk, 2 * D + (h + 1) * dk)
            o_h, vo_h = _attention_head_vmp(q_s[:, sq], vq_s[:, sq],
                                            q_s[:, sk], vq_s[:, sk],
                                            q_s[:, sv], vq_s[:, sv], scale)
            heads.append(o_h)
            vheads.append(vo_h)
        attn_rows.append(jnp.concatenate(heads, axis=-1))
        vattn_rows.append(jnp.concatenate(vheads, axis=-1))
    attn = jnp.concatenate(attn_rows, axis=0) if G > 1 else attn_rows[0]
    vattn = jnp.concatenate(vattn_rows, axis=0) if G > 1 else vattn_rows[0]

    # residual around attention
    # TODO(synk): residual_vmp modes ('identity'/'taylor') are all treated as an
    # independent sum of variances here (cov(x, attn) ignored).
    x = x + attn
    vx = vx + vattn

    if post_mlp:
        g, b, g2, gv, bv = [refs.pop(0)[...] for _ in range(5)]
        x, vx = _layernorm_vmp(x, vx, g, b, g2, gv, bv, tol)
        w, wvar, b2, bv2 = [refs.pop(0)[...] for _ in range(4)]
        y, vy = _linear_vmp(x, vx, w, wvar, b2, bv2, relu=True)
        x = x + y
        vx = vx + vy

    if pool:
        # temporal mean pool fused into the epilogue: mean over T rows per sequence,
        # variance pooled as mean / T (reference: var.mean(dim=1) / t_in).
        inv_t = 1.0 / T
        pooled, vpooled = [], []
        for s in range(G):
            rs = slice(s * T, (s + 1) * T)
            pooled.append(jnp.mean(x[rs], axis=0, keepdims=True))
            vpooled.append(jnp.mean(vx[rs], axis=0, keepdims=True) * inv_t)
        y_ref[...] = jnp.concatenate(pooled, axis=0) if G > 1 else pooled[0]
        vy_ref[...] = jnp.concatenate(vpooled, axis=0) if G > 1 else vpooled[0]
    else:
        y_ref[...] = x          # single lane-dense (G*T, D) store
        vy_ref[...] = vx


def _classifier_kernel(*refs, n_layers):
    refs = list(refs)
    vy_ref = refs.pop()
    y_ref = refs.pop()
    x = refs.pop(0)[...]
    vx = refs.pop(0)[...]
    for i in range(n_layers):
        w, wvar, b, bv = [refs.pop(0)[...] for _ in range(4)]
        x, vx = _linear_vmp(x, vx, w, wvar, b, bv, relu=(i < n_layers - 1))
    y_ref[...] = x
    vy_ref[...] = vx


# ----------------------------------------------------------------------------------
# Pallas wrappers
# ----------------------------------------------------------------------------------

def _const_spec(shape):
    return pl.BlockSpec(shape, lambda b: (0, 0))


def _pick_group(B, T, target_rows=256, pooled=False):
    """Sequences per grid step: aim for ~target_rows rows per matmul tile while
    keeping tiling legal ((8,128) rule) and dividing B."""
    def ok(g):
        if B % g:
            return False
        if g != B and (g * T) % 8 != 0:
            return False
        if pooled and g != B and g % 8 != 0:
            return False
        return True
    g0 = max(1, min(B, max(1, target_rows // max(T, 1))))
    for cand in list(range(g0, 0, -1)) + list(range(g0 + 1, B + 1)):
        if ok(cand):
            return cand
    return B


def embed_forward(x, params, cfg, G):
    B, T, d_in = x.shape
    pos = params['pos']
    D = pos.shape[-1]
    xm = x.reshape(B * T, d_in)
    pos_tile = jnp.tile(pos, (G, 1))                 # hoisted host-side (constant)
    layers = params['emb']

    args = [xm]
    in_specs = [pl.BlockSpec((G * T, d_in), lambda b: (b, 0))]
    for p in layers:
        for k in _LIN_KEYS:
            args.append(p[k])
            in_specs.append(_const_spec(p[k].shape))
    args.append(pos_tile)
    in_specs.append(_const_spec(pos_tile.shape))

    row = pl.BlockSpec((G * T, D), lambda b: (b, 0))
    y, vy = pl.pallas_call(
        functools.partial(_embed_kernel, n_layers=len(layers)),
        grid=(B // G,),
        in_specs=in_specs,
        out_specs=(row, row),
        out_shape=(jax.ShapeDtypeStruct((B * T, D), _F32),) * 2,
        compiler_params=pltpu.CompilerParams(
            dimension_semantics=("parallel",), vmem_limit_bytes=_VMEM_LIMIT),
    )(*args)
    return y, vy


def block_forward(x, vx, blk, cfg, G, pre_ln, post_mlp, pool=False):
    M, D = x.shape
    T = cfg['t_in']
    B = M // T
    H = cfg['dim'][1]
    scale = 1.0 / math.sqrt(D)           # reference scales by sqrt(model dim)

    row = pl.BlockSpec((G * T, D), lambda b: (b, 0))
    args, in_specs = [x, vx], [row, row]

    def add(a):
        args.append(a)
        in_specs.append(_const_spec(a.shape))

    if pre_ln:
        for k in _LN_KEYS:
            add(blk['ln1'][k])
    for k in ('W', 'Wvar'):
        add(blk['qkv'][k])
    if post_mlp:
        for k in _LN_KEYS:
            add(blk['ln2'][k])
        for k in _LIN_KEYS:
            add(blk['fc'][k])

    if pool:
        out_spec = pl.BlockSpec((G, D), lambda b: (b, 0))
        out_shape = (jax.ShapeDtypeStruct((B, D), _F32),) * 2
    else:
        out_spec = row
        out_shape = (jax.ShapeDtypeStruct((M, D), _F32),) * 2

    y, vy = pl.pallas_call(
        functools.partial(_block_kernel, G=G, T=T, H=H, D=D, scale=scale,
                          tol=cfg['tol'], pre_ln=pre_ln, post_mlp=post_mlp, pool=pool),
        grid=(B // G,),
        in_specs=in_specs,
        out_specs=(out_spec, out_spec),
        out_shape=out_shape,
        compiler_params=pltpu.CompilerParams(
            dimension_semantics=("parallel",), vmem_limit_bytes=_VMEM_LIMIT),
    )(*args)
    return y, vy


def classifier_forward(xp, vxp, params, cfg):
    B, D = xp.shape
    layers = params['head']
    n_out = layers[-1]['W'].shape[1]

    args = [xp, vxp]
    in_specs = [_const_spec((B, D)), _const_spec((B, D))]
    for p in layers:
        for k in _LIN_KEYS:
            args.append(p[k])
            in_specs.append(_const_spec(p[k].shape))

    out = _const_spec((B, n_out))
    y, vy = pl.pallas_call(
        functools.partial(_classifier_kernel, n_layers=len(layers)),
        grid=(1,),
        in_specs=in_specs,
        out_specs=(out, out),
        out_shape=(jax.ShapeDtypeStruct((B, n_out), _F32),) * 2,
        compiler_params=pltpu.CompilerParams(
            dimension_semantics=("arbitrary",), vmem_limit_bytes=_VMEM_LIMIT),
    )(*args)
    return y, vy


def transformer_classifier_vmp(params, x, cfg):
    n = cfg['dim'][0]
    B, T, _ = x.shape
    G = _pick_group(B, T)
    xm, vxm = embed_forward(x, params, cfg, G)
    blocks = params['blocks']
    for i in range(n - 1):
        xm, vxm = block_forward(xm, vxm, blocks[i], cfg, G,
                                pre_ln=(i != 0), post_mlp=True)
    # final attention block: pre-LN + attention + residual, mean-pool fused in epilogue
    Gf = _pick_group(B, T, pooled=True)
    xp, vxp = block_forward(xm, vxm, blocks[n - 1], cfg, Gf,
                            pre_ln=True, post_mlp=False, pool=True)
    return classifier_forward(xp, vxp, params, cfg)


# ----------------------------------------------------------------------------------
# Deterministic parameter construction (host-side precompute of the K-stacked
# variance weights [Wv ; W^2 + Wv], bf16 weight storage)
# ----------------------------------------------------------------------------------

def positional_encoding(k, t):
    # TODO(synk): get_positional_encoding source not provided; standard sinusoidal PE.
    pos = jnp.arange(t, dtype=_F32)[:, None]
    i = jnp.arange(k)[None, :]
    div = jnp.power(10000.0, (2 * (i // 2)).astype(_F32) / k)
    ang = pos / div
    return jnp.where(i % 2 == 0, jnp.sin(ang), jnp.cos(ang))      # (t, k)


def _raw_linear(key, d_in, d_out, bias, var_init):
    k1, k2 = jax.random.split(key)
    bound = 1.0 / math.sqrt(d_in)
    w = jax.random.uniform(k1, (d_in, d_out), _F32, -bound, bound)
    wv = jnp.full((d_in, d_out), var_init[0], _F32)
    if bias:
        b = jax.random.uniform(k2, (1, d_out), _F32, -bound, bound)
        bv = jnp.full((1, d_out), var_init[1], _F32)
    else:
        b = jnp.zeros((1, d_out), _F32)
        bv = jnp.zeros((1, d_out), _F32)
    return w, wv, b, bv


def _pack_linear(w, wv, b, bv):
    wvar = jnp.concatenate([wv, w * w + wv], axis=0)        # (2*d_in, d_out)
    return dict(W=w.astype(_WDT), Wvar=wvar.astype(_WDT), b=b, bv=bv)


def init_linear(key, d_in, d_out, bias, var_init):
    return _pack_linear(*_raw_linear(key, d_in, d_out, bias, var_init))


def init_qkv(key, d, var_init):
    kq, kk, kv = jax.random.split(key, 3)
    wq, wvq, _, _ = _raw_linear(kq, d, d, False, var_init)
    wk, wvk, _, _ = _raw_linear(kk, d, d, False, var_init)
    wv_, wvv, _, _ = _raw_linear(kv, d, d, False, var_init)
    w = jnp.concatenate([wq, wk, wv_], axis=1)               # (d, 3d) merged projection
    wvar_top = jnp.concatenate([wvq, wvk, wvv], axis=1)
    wvar = jnp.concatenate([wvar_top, w * w + wvar_top], axis=0)   # (2d, 3d) K-stacked
    return dict(W=w.astype(_WDT), Wvar=wvar.astype(_WDT))


def init_layernorm(k, var_init):
    g = jnp.ones((1, k), _F32)
    gv = jnp.full((1, k), var_init[0], _F32)
    return dict(g=g, b=jnp.zeros((1, k), _F32), g2pgv=g * g + gv,
                gv=gv, bv=jnp.full((1, k), var_init[1], _F32))


def init_params(cfg, key):
    keys = iter(jax.random.split(key, 64))
    vi = cfg['var_init']
    n, _ = cfg['dim']
    params = {}

    emb_dims = [cfg['input_dim']] + list(cfg['emb'])
    params['emb'] = [init_linear(next(keys), emb_dims[i], emb_dims[i + 1], True, vi)
                     for i in range(len(cfg['emb']))]
    k = cfg['emb'][-1]
    params['pos'] = positional_encoding(k, cfg['t_in'])

    blocks = [dict(qkv=init_qkv(next(keys), k, vi)) for _ in range(n)]
    for i in range(n - 1):
        if i != 0:
            blocks[i]['ln1'] = init_layernorm(k, vi)     # norm1[i-1]
        blocks[i]['ln2'] = init_layernorm(k, vi)         # norm2[i]
        blocks[i]['fc'] = init_linear(next(keys), k, k, True, vi)
    blocks[n - 1]['ln1'] = init_layernorm(k, vi)         # norm1[n-2]
    params['blocks'] = blocks

    clas = cfg['clas']
    head = [init_linear(next(keys), clas[i], clas[i + 1], True, vi)
            for i in range(len(clas) - 1)]
    head.append(init_linear(next(keys), clas[-1], cfg['output_dim'], True, vi))
    params['head'] = head
    return params


# ----------------------------------------------------------------------------------

if __name__ == "__main__":
    cfg = dict(
        dim=(2, 4),            # n attention blocks, h heads
        residual='identity',
        embed=True,
        emb=[16, 32],          # embedding dims -> model dim k = 32
        input_dim=4,
        var_init=(0.001, 0.01),
        t_in=8,
        tol=1e-5,
        clas=[32, 16],
        output_dim=3,
    )

    root = jax.random.PRNGKey(0)
    k_par, k_in = jax.random.split(root)
    params = init_params(cfg, k_par)

    x = jax.random.normal(k_in, (2, cfg['t_in'], cfg['input_dim']), _F32)

    fwd = jax.jit(lambda p, xin: transformer_classifier_vmp(p, xin, cfg))
    mean_out, var_out = fwd(params, x)
    jax.block_until_ready((mean_out, var_out))

    assert mean_out.shape == (2, cfg['output_dim'])
    assert var_out.shape == (2, cfg['output_dim'])
    assert bool(jnp.all(jnp.isfinite(mean_out))) and bool(jnp.all(var_out >= 0.0))
    print("KERNEL_OK")
</pallas_src>

<mosaic_0001>
module attributes {stable_mosaic.version = 11 : i64} {
  func.func @_embed_kernel(%arg0: i32, %arg1: memref<16x4xf32, #tpu.memory_space<vmem>>, %arg2: memref<4x16xbf16, #tpu.memory_space<vmem>>, %arg3: memref<8x16xbf16, #tpu.memory_space<vmem>>, %arg4: memref<1x16xf32, #tpu.memory_space<vmem>>, %arg5: memref<1x16xf32, #tpu.memory_space<vmem>>, %arg6: memref<16x32xbf16, #tpu.memory_space<vmem>>, %arg7: memref<32x32xbf16, #tpu.memory_space<vmem>>, %arg8: memref<1x32xf32, #tpu.memory_space<vmem>>, %arg9: memref<1x32xf32, #tpu.memory_space<vmem>>, %arg10: memref<16x32xf32, #tpu.memory_space<vmem>>, %arg11: memref<16x32xf32, #tpu.memory_space<vmem>>, %arg12: memref<16x32xf32, #tpu.memory_space<vmem>>) attributes {dimension_semantics = [#tpu.dimension_semantics<parallel>], iteration_bounds = array<i64: 1>, scalar_prefetch = 0 : i64, scratch_operands = 0 : i64, tpu.core_type = #tpu.core_type<tc>, window_params = [{transform_indices = @transform_0, window_bounds = array<i64: 16, 4>}, {pipeline_mode = #tpu.pipeline_mode<synchronous>, transform_indices = @transform_1, window_bounds = array<i64: 4, 16>}, {pipeline_mode = #tpu.pipeline_mode<synchronous>, transform_indices = @transform_2, window_bounds = array<i64: 8, 16>}, {pipeline_mode = #tpu.pipeline_mode<synchronous>, transform_indices = @transform_3, window_bounds = array<i64: 1, 16>}, {pipeline_mode = #tpu.pipeline_mode<synchronous>, transform_indices = @transform_4, window_bounds = array<i64: 1, 16>}, {pipeline_mode = #tpu.pipeline_mode<synchronous>, transform_indices = @transform_5, window_bounds = array<i64: 16, 32>}, {pipeline_mode = #tpu.pipeline_mode<synchronous>, transform_indices = @transform_6, window_bounds = array<i64: 32, 32>}, {pipeline_mode = #tpu.pipeline_mode<synchronous>, transform_indices = @transform_7, window_bounds = array<i64: 1, 32>}, {pipeline_mode = #tpu.pipeline_mode<synchronous>, transform_indices = @transform_8, window_bounds = array<i64: 1, 32>}, {pipeline_mode = #tpu.pipeline_mode<synchronous>, transform_indices = @transform_9, window_bounds = array<i64: 16, 32>}, {transform_indices = @transform_10, window_bounds = array<i64: 16, 32>}, {transform_indices = @transform_11, window_bounds = array<i64: 16, 32>}]} {
    %c0 = arith.constant 0 : index
    %c0_0 = arith.constant 0 : index
    %0 = vector.load %arg1[%c0, %c0_0] : memref<16x4xf32, #tpu.memory_space<vmem>>, vector<16x4xf32>
    %cst = arith.constant 0.000000e+00 : f32
    %1 = vector.broadcast %cst : f32 to vector<16x4xf32>
    %c0_1 = arith.constant 0 : index
    %c0_2 = arith.constant 0 : index
    %2 = vector.load %arg2[%c0_1, %c0_2] : memref<4x16xbf16, #tpu.memory_space<vmem>>, vector<4x16xbf16>
    %c0_3 = arith.constant 0 : index
    %c0_4 = arith.constant 0 : index
    %3 = vector.load %arg3[%c0_3, %c0_4] : memref<8x16xbf16, #tpu.memory_space<vmem>>, vector<8x16xbf16>
    %c0_5 = arith.constant 0 : index
    %c0_6 = arith.constant 0 : index
    %4 = vector.load %arg4[%c0_5, %c0_6] : memref<1x16xf32, #tpu.memory_space<vmem>>, vector<1x16xf32>
    %c0_7 = arith.constant 0 : index
    %c0_8 = arith.constant 0 : index
    %5 = vector.load %arg5[%c0_7, %c0_8] : memref<1x16xf32, #tpu.memory_space<vmem>>, vector<1x16xf32>
    %6 = arith.truncf %0 : vector<16x4xf32> to vector<16x4xbf16>
    %cst_9 = arith.constant dense<0.000000e+00> : vector<16x16xf32>
    %7 = tpu.matmul %6, %2, %cst_9 {dimension_numbers = #tpu.dot_dimension_numbers<[1], [0], [0], [1], [0, 0, 1, 1], [], []>} : vector<16x4xbf16>, vector<4x16xbf16>, vector<16x16xf32> -> vector<16x16xf32>
    %8 = arith.mulf %0, %0 : vector<16x4xf32>
    %9 = tpu.concatenate %8, %1 in 1 : vector<16x4xf32>, vector<16x4xf32> -> vector<16x8xf32>
    %10 = arith.truncf %9 : vector<16x8xf32> to vector<16x8xbf16>
    %cst_10 = arith.constant dense<0.000000e+00> : vector<16x16xf32>
    %11 = tpu.matmul %10, %3, %cst_10 {dimension_numbers = #tpu.dot_dimension_numbers<[1], [0], [0], [1], [0, 0, 1, 1], [], []>} : vector<16x8xbf16>, vector<8x16xbf16>, vector<16x16xf32> -> vector<16x16xf32>
    %12 = vector.broadcast %4 : vector<1x16xf32> to vector<16x16xf32>
    %13 = arith.addf %7, %12 : vector<16x16xf32>
    %14 = vector.broadcast %5 : vector<1x16xf32> to vector<16x16xf32>
    %15 = arith.addf %11, %14 : vector<16x16xf32>
    %cst_11 = arith.constant 0.000000e+00 : f32
    %16 = vector.broadcast %cst_11 : f32 to vector<16x16xf32>
    %17 = arith.cmpf ogt, %13, %16 : vector<16x16xf32>
    %18 = arith.extui %17 : vector<16x16xi1> to vector<16x16xi32>
    %19 = arith.sitofp %18 : vector<16x16xi32> to vector<16x16xf32>
    %20 = arith.mulf %13, %19 : vector<16x16xf32>
    %21 = arith.mulf %15, %19 : vector<16x16xf32>
    %c0_12 = arith.constant 0 : index
    %c0_13 = arith.constant 0 : index
    %22 = vector.load %arg6[%c0_12, %c0_13] : memref<16x32xbf16, #tpu.memory_space<vmem>>, vector<16x32xbf16>
    %c0_14 = arith.constant 0 : index
    %c0_15 = arith.constant 0 : index
    %23 = vector.load %arg7[%c0_14, %c0_15] : memref<32x32xbf16, #tpu.memory_space<vmem>>, vector<32x32xbf16>
    %c0_16 = arith.constant 0 : index
    %c0_17 = arith.constant 0 : index
    %24 = vector.load %arg8[%c0_16, %c0_17] : memref<1x32xf32, #tpu.memory_space<vmem>>, vector<1x32xf32>
    %c0_18 = arith.constant 0 : index
    %c0_19 = arith.constant 0 : index
    %25 = vector.load %arg9[%c0_18, %c0_19] : memref<1x32xf32, #tpu.memory_space<vmem>>, vector<1x32xf32>
    %26 = arith.truncf %20 : vector<16x16xf32> to vector<16x16xbf16>
    %cst_20 = arith.constant dense<0.000000e+00> : vector<16x32xf32>
    %27 = tpu.matmul %26, %22, %cst_20 {dimension_numbers = #tpu.dot_dimension_numbers<[1], [0], [0], [1], [0, 0, 1, 1], [], []>} : vector<16x16xbf16>, vector<16x32xbf16>, vector<16x32xf32> -> vector<16x32xf32>
    %28 = arith.mulf %20, %20 : vector<16x16xf32>
    %29 = tpu.concatenate %28, %21 in 1 : vector<16x16xf32>, vector<16x16xf32> -> vector<16x32xf32>
    %30 = arith.truncf %29 : vector<16x32xf32> to vector<16x32xbf16>
    %cst_21 = arith.constant dense<0.000000e+00> : vector<16x32xf32>
    %31 = tpu.matmul %30, %23, %cst_21 {dimension_numbers = #tpu.dot_dimension_numbers<[1], [0], [0], [1], [0, 0, 1, 1], [], []>} : vector<16x32xbf16>, vector<32x32xbf16>, vector<16x32xf32> -> vector<16x32xf32>
    %32 = vector.broadcast %24 : vector<1x32xf32> to vector<16x32xf32>
    %33 = arith.addf %27, %32 : vector<16x32xf32>
    %34 = vector.broadcast %25 : vector<1x32xf32> to vector<16x32xf32>
    %35 = arith.addf %31, %34 : vector<16x32xf32>
    %c0_22 = arith.constant 0 : index
    %c0_23 = arith.constant 0 : index
    %36 = vector.load %arg10[%c0_22, %c0_23] : memref<16x32xf32, #tpu.memory_space<vmem>>, vector<16x32xf32>
    %37 = arith.addf %33, %36 : vector<16x32xf32>
    %c0_24 = arith.constant 0 : index
    %c0_25 = arith.constant 0 : index
    %38 = vector.load %arg11[%c0_24, %c0_25] : memref<16x32xf32, #tpu.memory_space<vmem>>, vector<16x32xf32>
    tpu.vector_store %arg11[%c0_24, %c0_25], %37 {strides = array<i32>} : memref<16x32xf32, #tpu.memory_space<vmem>>, vector<16x32xf32>,
    %c0_26 = arith.constant 0 : index
    %c0_27 = arith.constant 0 : index
    %39 = vector.load %arg12[%c0_26, %c0_27] : memref<16x32xf32, #tpu.memory_space<vmem>>, vector<16x32xf32>
    tpu.vector_store %arg12[%c0_26, %c0_27], %35 {strides = array<i32>} : memref<16x32xf32, #tpu.memory_space<vmem>>, vector<16x32xf32>,
    return
  }
  func.func @transform_0(%arg0: i32) -> (i32, i32) {
    %c0_i32 = arith.constant 0 : i32
    %c0_i32_0 = arith.constant 0 : i32
    return %arg0, %c0_i32 : i32, i32
  }
  func.func @transform_1(%arg0: i32) -> (i32, i32) {
    %c0_i32 = arith.constant 0 : i32
    %c0_i32_0 = arith.constant 0 : i32
    %c0_i32_1 = arith.constant 0 : i32
    return %c0_i32, %c0_i32_0 : i32, i32
  }
  func.func @transform_2(%arg0: i32) -> (i32, i32) {
    %c0_i32 = arith.constant 0 : i32
    %c0_i32_0 = arith.constant 0 : i32
    %c0_i32_1 = arith.constant 0 : i32
    return %c0_i32, %c0_i32_0 : i32, i32
  }
  func.func @transform_3(%arg0: i32) -> (i32, i32) {
    %c0_i32 = arith.constant 0 : i32
    %c0_i32_0 = arith.constant 0 : i32
    %c0_i32_1 = arith.constant 0 : i32
    return %c0_i32, %c0_i32_0 : i32, i32
  }
  func.func @transform_4(%arg0: i32) -> (i32, i32) {
    %c0_i32 = arith.constant 0 : i32
    %c0_i32_0 = arith.constant 0 : i32
    %c0_i32_1 = arith.constant 0 : i32
    return %c0_i32, %c0_i32_0 : i32, i32
  }
  func.func @transform_5(%arg0: i32) -> (i32, i32) {
    %c0_i32 = arith.constant 0 : i32
    %c0_i32_0 = arith.constant 0 : i32
    %c0_i32_1 = arith.constant 0 : i32
    return %c0_i32, %c0_i32_0 : i32, i32
  }
  func.func @transform_6(%arg0: i32) -> (i32, i32) {
    %c0_i32 = arith.constant 0 : i32
    %c0_i32_0 = arith.constant 0 : i32
    %c0_i32_1 = arith.constant 0 : i32
    return %c0_i32, %c0_i32_0 : i32, i32
  }
  func.func @transform_7(%arg0: i32) -> (i32, i32) {
    %c0_i32 = arith.constant 0 : i32
    %c0_i32_0 = arith.constant 0 : i32
    %c0_i32_1 = arith.constant 0 : i32
    return %c0_i32, %c0_i32_0 : i32, i32
  }
  func.func @transform_8(%arg0: i32) -> (i32, i32) {
    %c0_i32 = arith.constant 0 : i32
    %c0_i32_0 = arith.constant 0 : i32
    %c0_i32_1 = arith.constant 0 : i32
    return %c0_i32, %c0_i32_0 : i32, i32
  }
  func.func @transform_9(%arg0: i32) -> (i32, i32) {
    %c0_i32 = arith.constant 0 : i32
    %c0_i32_0 = arith.constant 0 : i32
    %c0_i32_1 = arith.constant 0 : i32
    return %c0_i32, %c0_i32_0 : i32, i32
  }
  func.func @transform_10(%arg0: i32) -> (i32, i32) {
    %c0_i32 = arith.constant 0 : i32
    %c0_i32_0 = arith.constant 0 : i32
    return %arg0, %c0_i32 : i32, i32
  }
  func.func @transform_11(%arg0: i32) -> (i32, i32) {
    %c0_i32 = arith.constant 0 : i32
    %c0_i32_0 = arith.constant 0 : i32
    return %arg0, %c0_i32 : i32, i32
  }
}

module attributes {stable_mosaic.version = 11 : i64} {
  func.func @_block_kernel(%arg0: i32, %arg1: memref<16x32xf32, #tpu.memory_space<vmem>>, %arg2: memref<16x32xf32, #tpu.memory_space<vmem>>, %arg3: memref<32x96xbf16, #tpu.memory_space<vmem>>, %arg4: memref<64x96xbf16, #tpu.memory_space<vmem>>, %arg5: memref<1x32xf32, #tpu.memory_space<vmem>>, %arg6: memref<1x32xf32, #tpu.memory_space<vmem>>, %arg7: memref<1x32xf32, #tpu.memory_space<vmem>>, %arg8: memref<1x32xf32, #tpu.memory_space<vmem>>, %arg9: memref<1x32xf32, #tpu.memory_space<vmem>>, %arg10: memref<32x32xbf16, #tpu.memory_space<vmem>>, %arg11: memref<64x32xbf16, #tpu.memory_space<vmem>>, %arg12: memref<1x32xf32, #tpu.memory_space<vmem>>, %arg13: memref<1x32xf32, #tpu.memory_space<vmem>>, %arg14: memref<16x32xf32, #tpu.memory_space<vmem>>, %arg15: memref<16x32xf32, #tpu.memory_space<vmem>>) attributes {dimension_semantics = [#tpu.dimension_semantics<parallel>], iteration_bounds = array<i64: 1>, scalar_prefetch = 0 : i64, scratch_operands = 0 : i64, tpu.core_type = #tpu.core_type<tc>, window_params = [{transform_indices = @transform_0, window_bounds = array<i64: 16, 32>}, {transform_indices = @transform_1, window_bounds = array<i64: 16, 32>}, {pipeline_mode = #tpu.pipeline_mode<synchronous>, transform_indices = @transform_2, window_bounds = array<i64: 32, 96>}, {pipeline_mode = #tpu.pipeline_mode<synchronous>, transform_indices = @transform_3, window_bounds = array<i64: 64, 96>}, {pipeline_mode = #tpu.pipeline_mode<synchronous>, transform_indices = @transform_4, window_bounds = array<i64: 1, 32>}, {pipeline_mode = #tpu.pipeline_mode<synchronous>, transform_indices = @transform_5, window_bounds = array<i64: 1, 32>}, {pipeline_mode = #tpu.pipeline_mode<synchronous>, transform_indices = @transform_6, window_bounds = array<i64: 1, 32>}, {pipeline_mode = #tpu.pipeline_mode<synchronous>, transform_indices = @transform_7, window_bounds = array<i64: 1, 32>}, {pipeline_mode = #tpu.pipeline_mode<synchronous>, transform_indices = @transform_8, window_bounds = array<i64: 1, 32>}, {pipeline_mode = #tpu.pipeline_mode<synchronous>, transform_indices = @transform_9, window_bounds = array<i64: 32, 32>}, {pipeline_mode = #tpu.pipeline_mode<synchronous>, transform_indices = @transform_10, window_bounds = array<i64: 64, 32>}, {pipeline_mode = #tpu.pipeline_mode<synchronous>, transform_indices = @transform_11, window_bounds = array<i64: 1, 32>}, {pipeline_mode = #tpu.pipeline_mode<synchronous>, transform_indices = @transform_12, window_bounds = array<i64: 1, 32>}, {transform_indices = @transform_13, window_bounds = array<i64: 16, 32>}, {transform_indices = @transform_14, window_bounds = array<i64: 16, 32>}]} {
    %c0 = arith.constant 0 : index
    %c0_0 = arith.constant 0 : index
    %0 = vector.load %arg1[%c0, %c0_0] : memref<16x32xf32, #tpu.memory_space<vmem>>, vector<16x32xf32>
    %c0_1 = arith.constant 0 : index
    %c0_2 = arith.constant 0 : index
    %1 = vector.load %arg2[%c0_1, %c0_2] : memref<16x32xf32, #tpu.memory_space<vmem>>, vector<16x32xf32>
    %c0_3 = arith.constant 0 : index
    %c0_4 = arith.constant 0 : index
    %2 = vector.load %arg3[%c0_3, %c0_4] : memref<32x96xbf16, #tpu.memory_space<vmem>>, vector<32x96xbf16>
    %c0_5 = arith.constant 0 : index
    %c0_6 = arith.constant 0 : index
    %3 = vector.load %arg4[%c0_5, %c0_6] : memref<64x96xbf16, #tpu.memory_space<vmem>>, vector<64x96xbf16>
    %4 = arith.truncf %0 : vector<16x32xf32> to vector<16x32xbf16>
    %cst = arith.constant dense<0.000000e+00> : vector<16x96xf32>
    %5 = tpu.matmul %4, %2, %cst {dimension_numbers = #tpu.dot_dimension_numbers<[1], [0], [0], [1], [0, 0, 1, 1], [], []>} : vector<16x32xbf16>, vector<32x96xbf16>, vector<16x96xf32> -> vector<16x96xf32>
    %6 = arith.mulf %0, %0 : vector<16x32xf32>
    %7 = tpu.concatenate %6, %1 in 1 : vector<16x32xf32>, vector<16x32xf32> -> vector<16x64xf32>
    %8 = arith.truncf %7 : vector<16x64xf32> to vector<16x64xbf16>
    %cst_7 = arith.constant dense<0.000000e+00> : vector<16x96xf32>
    %9 = tpu.matmul %8, %3, %cst_7 {dimension_numbers = #tpu.dot_dimension_numbers<[1], [0], [0], [1], [0, 0, 1, 1], [], []>} : vector<16x64xbf16>, vector<64x96xbf16>, vector<16x96xf32> -> vector<16x96xf32>
    %10 = vector.extract_strided_slice %5 {offsets = [0, 0], sizes = [8, 96], strides = [1, 1]} : vector<16x96xf32> to vector<8x96xf32>
    %11 = vector.extract_strided_slice %9 {offsets = [0, 0], sizes = [8, 96], strides = [1, 1]} : vector<16x96xf32> to vector<8x96xf32>
    %12 = vector.extract_strided_slice %10 {offsets = [0, 0], sizes = [8, 8], strides = [1, 1]} : vector<8x96xf32> to vector<8x8xf32>
    %13 = vector.extract_strided_slice %11 {offsets = [0, 0], sizes = [8, 8], strides = [1, 1]} : vector<8x96xf32> to vector<8x8xf32>
    %14 = vector.extract_strided_slice %10 {offsets = [0, 32], sizes = [8, 8], strides = [1, 1]} : vector<8x96xf32> to vector<8x8xf32>
    %15 = vector.extract_strided_slice %11 {offsets = [0, 32], sizes = [8, 8], strides = [1, 1]} : vector<8x96xf32> to vector<8x8xf32>
    %16 = vector.extract_strided_slice %10 {offsets = [0, 64], sizes = [8, 8], strides = [1, 1]} : vector<8x96xf32> to vector<8x8xf32>
    %17 = vector.extract_strided_slice %11 {offsets = [0, 64], sizes = [8, 8], strides = [1, 1]} : vector<8x96xf32> to vector<8x8xf32>
    %cst_8 = arith.constant dense<0.000000e+00> : vector<8x8xf32>
    %18 = tpu.matmul %12, %14, %cst_8 {dimension_numbers = #tpu.dot_dimension_numbers<[1], [1], [0], [0], [0, 0, 1, 0], [], []>} : vector<8x8xf32>, vector<8x8xf32>, vector<8x8xf32> -> vector<8x8xf32>
    %cst_9 = arith.constant 0.176776692 : f32
    %19 = vector.broadcast %cst_9 : f32 to vector<8x8xf32>
    %20 = arith.mulf %18, %19 : vector<8x8xf32>
    %21 = arith.mulf %12, %12 : vector<8x8xf32>
    %22 = tpu.concatenate %21, %13 in 1 : vector<8x8xf32>, vector<8x8xf32> -> vector<8x16xf32>
    %23 = arith.mulf %14, %14 : vector<8x8xf32>
    %24 = arith.addf %23, %15 : vector<8x8xf32>
    %25 = tpu.concatenate %15, %24 in 1 : vector<8x8xf32>, vector<8x8xf32> -> vector<8x16xf32>
    %cst_10 = arith.constant dense<0.000000e+00> : vector<8x8xf32>
    %26 = tpu.matmul %22, %25, %cst_10 {dimension_numbers = #tpu.dot_dimension_numbers<[1], [1], [0], [0], [0, 0, 1, 0], [], []>} : vector<8x16xf32>, vector<8x16xf32>, vector<8x8xf32> -> vector<8x8xf32>
    %cst_11 = arith.constant 3.125000e-02 : f32
    %27 = vector.broadcast %cst_11 : f32 to vector<8x8xf32>
    %28 = arith.mulf %26, %27 : vector<8x8xf32>
    %cst_12 = arith.constant dense<0xFF800000> : vector<8xf32>
    %29 = vector.multi_reduction <maximumf>, %20, %cst_12 [1] : vector<8x8xf32> to vector<8xf32>
    %30 = vector.shape_cast %29 : vector<8xf32> to vector<8x1xf32>
    %31 = vector.broadcast %30 : vector<8x1xf32> to vector<8x8xf32>
    %32 = arith.subf %20, %31 : vector<8x8xf32>
    %33 = math.exp %32 : vector<8x8xf32>
    %cst_13 = arith.constant dense<0.000000e+00> : vector<8xf32>
    %34 = vector.multi_reduction <add>, %33, %cst_13 [1] : vector<8x8xf32> to vector<8xf32>
    %35 = vector.shape_cast %34 : vector<8xf32> to vector<8x1xf32>
    %36 = tpu.reciprocal %35 {approx = true} : vector<8x1xf32> -> vector<8x1xf32>
    %37 = vector.broadcast %36 : vector<8x1xf32> to vector<8x8xf32>
    %38 = arith.mulf %33, %37 : vector<8x8xf32>
    %39 = arith.mulf %38, %38 : vector<8x8xf32>
    %40 = arith.mulf %39, %28 : vector<8x8xf32>
    %cst_14 = arith.constant dense<0.000000e+00> : vector<8xf32>
    %41 = vector.multi_reduction <add>, %40, %cst_14 [1] : vector<8x8xf32> to vector<8xf32>
    %42 = vector.shape_cast %41 : vector<8xf32> to vector<8x1xf32>
    %43 = arith.mulf %38, %38 : vector<8x8xf32>
    %cst_15 = arith.constant 2.000000e+00 : f32
    %44 = vector.broadcast %cst_15 : f32 to vector<8x8xf32>
    %45 = arith.mulf %44, %38 : vector<8x8xf32>
    %cst_16 = arith.constant 1.000000e+00 : f32
    %46 = vector.broadcast %cst_16 : f32 to vector<8x8xf32>
    %47 = arith.subf %46, %45 : vector<8x8xf32>
    %48 = arith.mulf %47, %28 : vector<8x8xf32>
    %49 = vector.broadcast %42 : vector<8x1xf32> to vector<8x8xf32>
    %50 = arith.addf %48, %49 : vector<8x8xf32>
    %51 = arith.mulf %43, %50 : vector<8x8xf32>
    %cst_17 = arith.constant 0.000000e+00 : f32
    %52 = vector.broadcast %cst_17 : f32 to vector<8x8xf32>
    %53 = arith.maximumf %51, %52 : vector<8x8xf32>
    %cst_18 = arith.constant dense<0.000000e+00> : vector<8x8xf32>
    %54 = tpu.matmul %38, %16, %cst_18 {dimension_numbers = #tpu.dot_dimension_numbers<[1], [0], [0], [1], [0, 0, 1, 1], [], []>} : vector<8x8xf32>, vector<8x8xf32>, vector<8x8xf32> -> vector<8x8xf32>
    %55 = arith.mulf %38, %38 : vector<8x8xf32>
    %56 = tpu.concatenate %55, %53 in 1 : vector<8x8xf32>, vector<8x8xf32> -> vector<8x16xf32>
    %57 = arith.mulf %16, %16 : vector<8x8xf32>
    %58 = arith.addf %57, %17 : vector<8x8xf32>
    %59 = tpu.concatenate %17, %58 in 0 : vector<8x8xf32>, vector<8x8xf32> -> vector<16x8xf32>
    %cst_19 = arith.constant dense<0.000000e+00> : vector<8x8xf32>
    %60 = tpu.matmul %56, %59, %cst_19 {dimension_numbers = #tpu.dot_dimension_numbers<[1], [0], [0], [1], [0, 0, 1, 1], [], []>} : vector<8x16xf32>, vector<16x8xf32>, vector<8x8xf32> -> vector<8x8xf32>
    %61 = vector.extract_strided_slice %10 {offsets = [0, 8], sizes = [8, 8], strides = [1, 1]} : vector<8x96xf32> to vector<8x8xf32>
    %62 = vector.extract_strided_slice %11 {offsets = [0, 8], sizes = [8, 8], strides = [1, 1]} : vector<8x96xf32> to vector<8x8xf32>
    %63 = vector.extract_strided_slice %10 {offsets = [0, 40], sizes = [8, 8], strides = [1, 1]} : vector<8x96xf32> to vector<8x8xf32>
    %64 = vector.extract_strided_slice %11 {offsets = [0, 40], sizes = [8, 8], strides = [1, 1]} : vector<8x96xf32> to vector<8x8xf32>
    %65 = vector.extract_strided_slice %10 {offsets = [0, 72], sizes = [8, 8], strides = [1, 1]} : vector<8x96xf32> to vector<8x8xf32>
    %66 = vector.extract_strided_slice %11 {offsets = [0, 72], sizes = [8, 8], strides = [1, 1]} : vector<8x96xf32> to vector<8x8xf32>
    %cst_20 = arith.constant dense<0.000000e+00> : vector<8x8xf32>
    %67 = tpu.matmul %61, %63, %cst_20 {dimension_numbers = #tpu.dot_dimension_numbers<[1], [1], [0], [0], [0, 0, 1, 0], [], []>} : vector<8x8xf32>, vector<8x8xf32>, vector<8x8xf32> -> vector<8x8xf32>
    %cst_21 = arith.constant 0.176776692 : f32
    %68 = vector.broadcast %cst_21 : f32 to vector<8x8xf32>
    %69 = arith.mulf %67, %68 : vector<8x8xf32>
    %70 = arith.mulf %61, %61 : vector<8x8xf32>
    %71 = tpu.concatenate %70, %62 in 1 : vector<8x8xf32>, vector<8x8xf32> -> vector<8x16xf32>
    %72 = arith.mulf %63, %63 : vector<8x8xf32>
    %73 = arith.addf %72, %64 : vector<8x8xf32>
    %74 = tpu.concatenate %64, %73 in 1 : vector<8x8xf32>, vector<8x8xf32> -> vector<8x16xf32>
    %cst_22 = arith.constant dense<0.000000e+00> : vector<8x8xf32>
    %75 = tpu.matmul %71, %74, %cst_22 {dimension_numbers = #tpu.dot_dimension_numbers<[1], [1], [0], [0], [0, 0, 1, 0], [], []>} : vector<8x16xf32>, vector<8x16xf32>, vector<8x8xf32> -> vector<8x8xf32>
    %cst_23 = arith.constant 3.125000e-02 : f32
    %76 = vector.broadcast %cst_23 : f32 to vector<8x8xf32>
    %77 = arith.mulf %75, %76 : vector<8x8xf32>
    %cst_24 = arith.constant dense<0xFF800000> : vector<8xf32>
    %78 = vector.multi_reduction <maximumf>, %69, %cst_24 [1] : vector<8x8xf32> to vector<8xf32>
    %79 = vector.shape_cast %78 : vector<8xf32> to vector<8x1xf32>
    %80 = vector.broadcast %79 : vector<8x1xf32> to vector<8x8xf32>
    %81 = arith.subf %69, %80 : vector<8x8xf32>
    %82 = math.exp %81 : vector<8x8xf32>
    %cst_25 = arith.constant dense<0.000000e+00> : vector<8xf32>
    %83 = vector.multi_reduction <add>, %82, %cst_25 [1] : vector<8x8xf32> to vector<8xf32>
    %84 = vector.shape_cast %83 : vector<8xf32> to vector<8x1xf32>
    %85 = tpu.reciprocal %84 {approx = true} : vector<8x1xf32> -> vector<8x1xf32>
    %86 = vector.broadcast %85 : vector<8x1xf32> to vector<8x8xf32>
    %87 = arith.mulf %82, %86 : vector<8x8xf32>
    %88 = arith.mulf %87, %87 : vector<8x8xf32>
    %89 = arith.mulf %88, %77 : vector<8x8xf32>
    %cst_26 = arith.constant dense<0.000000e+00> : vector<8xf32>
    %90 = vector.multi_reduction <add>, %89, %cst_26 [1] : vector<8x8xf32> to vector<8xf32>
    %91 = vector.shape_cast %90 : vector<8xf32> to vector<8x1xf32>
    %92 = arith.mulf %87, %87 : vector<8x8xf32>
    %cst_27 = arith.constant 2.000000e+00 : f32
    %93 = vector.broadcast %cst_27 : f32 to vector<8x8xf32>
    %94 = arith.mulf %93, %87 : vector<8x8xf32>
    %cst_28 = arith.constant 1.000000e+00 : f32
    %95 = vector.broadcast %cst_28 : f32 to vector<8x8xf32>
    %96 = arith.subf %95, %94 : vector<8x8xf32>
    %97 = arith.mulf %96, %77 : vector<8x8xf32>
    %98 = vector.broadcast %91 : vector<8x1xf32> to vector<8x8xf32>
    %99 = arith.addf %97, %98 : vector<8x8xf32>
    %100 = arith.mulf %92, %99 : vector<8x8xf32>
    %cst_29 = arith.constant 0.000000e+00 : f32
    %101 = vector.broadcast %cst_29 : f32 to vector<8x8xf32>
    %102 = arith.maximumf %100, %101 : vector<8x8xf32>
    %cst_30 = arith.constant dense<0.000000e+00> : vector<8x8xf32>
    %103 = tpu.matmul %87, %65, %cst_30 {dimension_numbers = #tpu.dot_dimension_numbers<[1], [0], [0], [1], [0, 0, 1, 1], [], []>} : vector<8x8xf32>, vector<8x8xf32>, vector<8x8xf32> -> vector<8x8xf32>
    %104 = arith.mulf %87, %87 : vector<8x8xf32>
    %105 = tpu.concatenate %104, %102 in 1 : vector<8x8xf32>, vector<8x8xf32> -> vector<8x16xf32>
    %106 = arith.mulf %65, %65 : vector<8x8xf32>
    %107 = arith.addf %106, %66 : vector<8x8xf32>
    %108 = tpu.concatenate %66, %107 in 0 : vector<8x8xf32>, vector<8x8xf32> -> vector<16x8xf32>
    %cst_31 = arith.constant dense<0.000000e+00> : vector<8x8xf32>
    %109 = tpu.matmul %105, %108, %cst_31 {dimension_numbers = #tpu.dot_dimension_numbers<[1], [0], [0], [1], [0, 0, 1, 1], [], []>} : vector<8x16xf32>, vector<16x8xf32>, vector<8x8xf32> -> vector<8x8xf32>
    %110 = vector.extract_strided_slice %10 {offsets = [0, 16], sizes = [8, 8], strides = [1, 1]} : vector<8x96xf32> to vector<8x8xf32>
    %111 = vector.extract_strided_slice %11 {offsets = [0, 16], sizes = [8, 8], strides = [1, 1]} : vector<8x96xf32> to vector<8x8xf32>
    %112 = vector.extract_strided_slice %10 {offsets = [0, 48], sizes = [8, 8], strides = [1, 1]} : vector<8x96xf32> to vector<8x8xf32>
    %113 = vector.extract_strided_slice %11 {offsets = [0, 48], sizes = [8, 8], strides = [1, 1]} : vector<8x96xf32> to vector<8x8xf32>
    %114 = vector.extract_strided_slice %10 {offsets = [0, 80], sizes = [8, 8], strides = [1, 1]} : vector<8x96xf32> to vector<8x8xf32>
    %115 = vector.extract_strided_slice %11 {offsets = [0, 80], sizes = [8, 8], strides = [1, 1]} : vector<8x96xf32> to vector<8x8xf32>
    %cst_32 = arith.constant dense<0.000000e+00> : vector<8x8xf32>
    %116 = tpu.matmul %110, %112, %cst_32 {dimension_numbers = #tpu.dot_dimension_numbers<[1], [1], [0], [0], [0, 0, 1, 0], [], []>} : vector<8x8xf32>, vector<8x8xf32>, vector<8x8xf32> -> vector<8x8xf32>
    %cst_33 = arith.constant 0.176776692 : f32
    %117 = vector.broadcast %cst_33 : f32 to vector<8x8xf32>
    %118 = arith.mulf %116, %117 : vector<8x8xf32>
    %119 = arith.mulf %110, %110 : vector<8x8xf32>
    %120 = tpu.concatenate %119, %111 in 1 : vector<8x8xf32>, vector<8x8xf32> -> vector<8x16xf32>
    %121 = arith.mulf %112, %112 : vector<8x8xf32>
    %122 = arith.addf %121, %113 : vector<8x8xf32>
    %123 = tpu.concatenate %113, %122 in 1 : vector<8x8xf32>, vector<8x8xf32> -> vector<8x16xf32>
    %cst_34 = arith.constant dense<0.000000e+00> : vector<8x8xf32>
    %124 = tpu.matmul %120, %123, %cst_34 {dimension_numbers = #tpu.dot_dimension_numbers<[1], [1], [0], [0], [0, 0, 1, 0], [], []>} : vector<8x16xf32>, vector<8x16xf32>, vector<8x8xf32> -> vector<8x8xf32>
    %cst_35 = arith.constant 3.125000e-02 : f32
    %125 = vector.broadcast %cst_35 : f32 to vector<8x8xf32>
    %126 = arith.mulf %124, %125 : vector<8x8xf32>
    %cst_36 = arith.constant dense<0xFF800000> : vector<8xf32>
    %127 = vector.multi_reduction <maximumf>, %118, %cst_36 [1] : vector<8x8xf32> to vector<8xf32>
    %128 = vector.shape_cast %127 : vector<8xf32> to vector<8x1xf32>
    %129 = vector.broadcast %128 : vector<8x1xf32> to vector<8x8xf32>
    %130 = arith.subf %118, %129 : vector<8x8xf32>
    %131 = math.exp %130 : vector<8x8xf32>
    %cst_37 = arith.constant dense<0.000000e+00> : vector<8xf32>
    %132 = vector.multi_reduction <add>, %131, %cst_37 [1] : vector<8x8xf32> to vector<8xf32>
    %133 = vector.shape_cast %132 : vector<8xf32> to vector<8x1xf32>
    %134 = tpu.reciprocal %133 {approx = true} : vector<8x1xf32> -> vector<8x1xf32>
    %135 = vector.broadcast %134 : vector<8x1xf32> to vector<8x8xf32>
    %136 = arith.mulf %131, %135 : vector<8x8xf32>
    %137 = arith.mulf %136, %136 : vector<8x8xf32>
    %138 = arith.mulf %137, %126 : vector<8x8xf32>
    %cst_38 = arith.constant dense<0.000000e+00> : vector<8xf32>
    %139 = vector.multi_reduction <add>, %138, %cst_38 [1] : vector<8x8xf32> to vector<8xf32>
    %140 = vector.shape_cast %139 : vector<8xf32> to vector<8x1xf32>
    %141 = arith.mulf %136, %136 : vector<8x8xf32>
    %cst_39 = arith.constant 2.000000e+00 : f32
    %142 = vector.broadcast %cst_39 : f32 to vector<8x8xf32>
    %143 = arith.mulf %142, %136 : vector<8x8xf32>
    %cst_40 = arith.constant 1.000000e+00 : f32
    %144 = vector.broadcast %cst_40 : f32 to vector<8x8xf32>
    %145 = arith.subf %144, %143 : vector<8x8xf32>
    %146 = arith.mulf %145, %126 : vector<8x8xf32>
    %147 = vector.broadcast %140 : vector<8x1xf32> to vector<8x8xf32>
    %148 = arith.addf %146, %147 : vector<8x8xf32>
    %149 = arith.mulf %141, %148 : vector<8x8xf32>
    %cst_41 = arith.constant 0.000000e+00 : f32
    %150 = vector.broadcast %cst_41 : f32 to vector<8x8xf32>
    %151 = arith.maximumf %149, %150 : vector<8x8xf32>
    %cst_42 = arith.constant dense<0.000000e+00> : vector<8x8xf32>
    %152 = tpu.matmul %136, %114, %cst_42 {dimension_numbers = #tpu.dot_dimension_numbers<[1], [0], [0], [1], [0, 0, 1, 1], [], []>} : vector<8x8xf32>, vector<8x8xf32>, vector<8x8xf32> -> vector<8x8xf32>
    %153 = arith.mulf %136, %136 : vector<8x8xf32>
    %154 = tpu.concatenate %153, %151 in 1 : vector<8x8xf32>, vector<8x8xf32> -> vector<8x16xf32>
    %155 = arith.mulf %114, %114 : vector<8x8xf32>
    %156 = arith.addf %155, %115 : vector<8x8xf32>
    %157 = tpu.concatenate %115, %156 in 0 : vector<8x8xf32>, vector<8x8xf32> -> vector<16x8xf32>
    %cst_43 = arith.constant dense<0.000000e+00> : vector<8x8xf32>
    %158 = tpu.matmul %154, %157, %cst_43 {dimension_numbers = #tpu.dot_dimension_numbers<[1], [0], [0], [1], [0, 0, 1, 1], [], []>} : vector<8x16xf32>, vector<16x8xf32>, vector<8x8xf32> -> vector<8x8xf32>
    %159 = vector.extract_strided_slice %10 {offsets = [0, 24], sizes = [8, 8], strides = [1, 1]} : vector<8x96xf32> to vector<8x8xf32>
    %160 = vector.extract_strided_slice %11 {offsets = [0, 24], sizes = [8, 8], strides = [1, 1]} : vector<8x96xf32> to vector<8x8xf32>
    %161 = vector.extract_strided_slice %10 {offsets = [0, 56], sizes = [8, 8], strides = [1, 1]} : vector<8x96xf32> to vector<8x8xf32>
    %162 = vector.extract_strided_slice %11 {offsets = [0, 56], sizes = [8, 8], strides = [1, 1]} : vector<8x96xf32> to vector<8x8xf32>
    %163 = vector.extract_strided_slice %10 {offsets = [0, 88], sizes = [8, 8], strides = [1, 1]} : vector<8x96xf32> to vector<8x8xf32>
    %164 = vector.extract_strided_slice %11 {offsets = [0, 88], sizes = [8, 8], strides = [1, 1]} : vector<8x96xf32> to vector<8x8xf32>
    %cst_44 = arith.constant dense<0.000000e+00> : vector<8x8xf32>
    %165 = tpu.matmul %159, %161, %cst_44 {dimension_numbers = #tpu.dot_dimension_numbers<[1], [1], [0], [0], [0, 0, 1, 0], [], []>} : vector<8x8xf32>, vector<8x8xf32>, vector<8x8xf32> -> vector<8x8xf32>
    %cst_45 = arith.constant 0.176776692 : f32
    %166 = vector.broadcast %cst_45 : f32 to vector<8x8xf32>
    %167 = arith.mulf %165, %166 : vector<8x8xf32>
    %168 = arith.mulf %159, %159 : vector<8x8xf32>
    %169 = tpu.concatenate %168, %160 in 1 : vector<8x8xf32>, vector<8x8xf32> -> vector<8x16xf32>
    %170 = arith.mulf %161, %161 : vector<8x8xf32>
    %171 = arith.addf %170, %162 : vector<8x8xf32>
    %172 = tpu.concatenate %162, %171 in 1 : vector<8x8xf32>, vector<8x8xf32> -> vector<8x16xf32>
    %cst_46 = arith.constant dense<0.000000e+00> : vector<8x8xf32>
    %173 = tpu.matmul %169, %172, %cst_46 {dimension_numbers = #tpu.dot_dimension_numbers<[1], [1], [0], [0], [0, 0, 1, 0], [], []>} : vector<8x16xf32>, vector<8x16xf32>, vector<8x8xf32> -> vector<8x8xf32>
    %cst_47 = arith.constant 3.125000e-02 : f32
    %174 = vector.broadcast %cst_47 : f32 to vector<8x8xf32>
    %175 = arith.mulf %173, %174 : vector<8x8xf32>
    %cst_48 = arith.constant dense<0xFF800000> : vector<8xf32>
    %176 = vector.multi_reduction <maximumf>, %167, %cst_48 [1] : vector<8x8xf32> to vector<8xf32>
    %177 = vector.shape_cast %176 : vector<8xf32> to vector<8x1xf32>
    %178 = vector.broadcast %177 : vector<8x1xf32> to vector<8x8xf32>
    %179 = arith.subf %167, %178 : vector<8x8xf32>
    %180 = math.exp %179 : vector<8x8xf32>
    %cst_49 = arith.constant dense<0.000000e+00> : vector<8xf32>
    %181 = vector.multi_reduction <add>, %180, %cst_49 [1] : vector<8x8xf32> to vector<8xf32>
    %182 = vector.shape_cast %181 : vector<8xf32> to vector<8x1xf32>
    %183 = tpu.reciprocal %182 {approx = true} : vector<8x1xf32> -> vector<8x1xf32>
    %184 = vector.broadcast %183 : vector<8x1xf32> to vector<8x8xf32>
    %185 = arith.mulf %180, %184 : vector<8x8xf32>
    %186 = arith.mulf %185, %185 : vector<8x8xf32>
    %187 = arith.mulf %186, %175 : vector<8x8xf32>
    %cst_50 = arith.constant dense<0.000000e+00> : vector<8xf32>
    %188 = vector.multi_reduction <add>, %187, %cst_50 [1] : vector<8x8xf32> to vector<8xf32>
    %189 = vector.shape_cast %188 : vector<8xf32> to vector<8x1xf32>
    %190 = arith.mulf %185, %185 : vector<8x8xf32>
    %cst_51 = arith.constant 2.000000e+00 : f32
    %191 = vector.broadcast %cst_51 : f32 to vector<8x8xf32>
    %192 = arith.mulf %191, %185 : vector<8x8xf32>
    %cst_52 = arith.constant 1.000000e+00 : f32
    %193 = vector.broadcast %cst_52 : f32 to vector<8x8xf32>
    %194 = arith.subf %193, %192 : vector<8x8xf32>
    %195 = arith.mulf %194, %175 : vector<8x8xf32>
    %196 = vector.broadcast %189 : vector<8x1xf32> to vector<8x8xf32>
    %197 = arith.addf %195, %196 : vector<8x8xf32>
    %198 = arith.mulf %190, %197 : vector<8x8xf32>
    %cst_53 = arith.constant 0.000000e+00 : f32
    %199 = vector.broadcast %cst_53 : f32 to vector<8x8xf32>
    %200 = arith.maximumf %198, %199 : vector<8x8xf32>
    %cst_54 = arith.constant dense<0.000000e+00> : vector<8x8xf32>
    %201 = tpu.matmul %185, %163, %cst_54 {dimension_numbers = #tpu.dot_dimension_numbers<[1], [0], [0], [1], [0, 0, 1, 1], [], []>} : vector<8x8xf32>, vector<8x8xf32>, vector<8x8xf32> -> vector<8x8xf32>
    %202 = arith.mulf %185, %185 : vector<8x8xf32>
    %203 = tpu.concatenate %202, %200 in 1 : vector<8x8xf32>, vector<8x8xf32> -> vector<8x16xf32>
    %204 = arith.mulf %163, %163 : vector<8x8xf32>
    %205 = arith.addf %204, %164 : vector<8x8xf32>
    %206 = tpu.concatenate %164, %205 in 0 : vector<8x8xf32>, vector<8x8xf32> -> vector<16x8xf32>
    %cst_55 = arith.constant dense<0.000000e+00> : vector<8x8xf32>
    %207 = tpu.matmul %203, %206, %cst_55 {dimension_numbers = #tpu.dot_dimension_numbers<[1], [0], [0], [1], [0, 0, 1, 1], [], []>} : vector<8x16xf32>, vector<16x8xf32>, vector<8x8xf32> -> vector<8x8xf32>
    %208 = tpu.concatenate %54, %103, %152, %201 in 1 : vector<8x8xf32>, vector<8x8xf32>, vector<8x8xf32>, vector<8x8xf32> -> vector<8x32xf32>
    %209 = tpu.concatenate %60, %109, %158, %207 in 1 : vector<8x8xf32>, vector<8x8xf32>, vector<8x8xf32>, vector<8x8xf32> -> vector<8x32xf32>
    %210 = vector.extract_strided_slice %5 {offsets = [8, 0], sizes = [8, 96], strides = [1, 1]} : vector<16x96xf32> to vector<8x96xf32>
    %211 = vector.extract_strided_slice %9 {offsets = [8, 0], sizes = [8, 96], strides = [1, 1]} : vector<16x96xf32> to vector<8x96xf32>
    %212 = vector.extract_strided_slice %210 {offsets = [0, 0], sizes = [8, 8], strides = [1, 1]} : vector<8x96xf32> to vector<8x8xf32>
    %213 = vector.extract_strided_slice %211 {offsets = [0, 0], sizes = [8, 8], strides = [1, 1]} : vector<8x96xf32> to vector<8x8xf32>
    %214 = vector.extract_strided_slice %210 {offsets = [0, 32], sizes = [8, 8], strides = [1, 1]} : vector<8x96xf32> to vector<8x8xf32>
    %215 = vector.extract_strided_slice %211 {offsets = [0, 32], sizes = [8, 8], strides = [1, 1]} : vector<8x96xf32> to vector<8x8xf32>
    %216 = vector.extract_strided_slice %210 {offsets = [0, 64], sizes = [8, 8], strides = [1, 1]} : vector<8x96xf32> to vector<8x8xf32>
    %217 = vector.extract_strided_slice %211 {offsets = [0, 64], sizes = [8, 8], strides = [1, 1]} : vector<8x96xf32> to vector<8x8xf32>
    %cst_56 = arith.constant dense<0.000000e+00> : vector<8x8xf32>
    %218 = tpu.matmul %212, %214, %cst_56 {dimension_numbers = #tpu.dot_dimension_numbers<[1], [1], [0], [0], [0, 0, 1, 0], [], []>} : vector<8x8xf32>, vector<8x8xf32>, vector<8x8xf32> -> vector<8x8xf32>
    %cst_57 = arith.constant 0.176776692 : f32
    %219 = vector.broadcast %cst_57 : f32 to vector<8x8xf32>
    %220 = arith.mulf %218, %219 : vector<8x8xf32>
    %221 = arith.mulf %212, %212 : vector<8x8xf32>
    %222 = tpu.concatenate %221, %213 in 1 : vector<8x8xf32>, vector<8x8xf32> -> vector<8x16xf32>
    %223 = arith.mulf %214, %214 : vector<8x8xf32>
    %224 = arith.addf %223, %215 : vector<8x8xf32>
    %225 = tpu.concatenate %215, %224 in 1 : vector<8x8xf32>, vector<8x8xf32> -> vector<8x16xf32>
    %cst_58 = arith.constant dense<0.000000e+00> : vector<8x8xf32>
    %226 = tpu.matmul %222, %225, %cst_58 {dimension_numbers = #tpu.dot_dimension_numbers<[1], [1], [0], [0], [0, 0, 1, 0], [], []>} : vector<8x16xf32>, vector<8x16xf32>, vector<8x8xf32> -> vector<8x8xf32>
    %cst_59 = arith.constant 3.125000e-02 : f32
    %227 = vector.broadcast %cst_59 : f32 to vector<8x8xf32>
    %228 = arith.mulf %226, %227 : vector<8x8xf32>
    %cst_60 = arith.constant dense<0xFF800000> : vector<8xf32>
    %229 = vector.multi_reduction <maximumf>, %220, %cst_60 [1] : vector<8x8xf32> to vector<8xf32>
    %230 = vector.shape_cast %229 : vector<8xf32> to vector<8x1xf32>
    %231 = vector.broadcast %230 : vector<8x1xf32> to vector<8x8xf32>
    %232 = arith.subf %220, %231 : vector<8x8xf32>
    %233 = math.exp %232 : vector<8x8xf32>
    %cst_61 = arith.constant dense<0.000000e+00> : vector<8xf32>
    %234 = vector.multi_reduction <add>, %233, %cst_61 [1] : vector<8x8xf32> to vector<8xf32>
    %235 = vector.shape_cast %234 : vector<8xf32> to vector<8x1xf32>
    %236 = tpu.reciprocal %235 {approx = true} : vector<8x1xf32> -> vector<8x1xf32>
    %237 = vector.broadcast %236 : vector<8x1xf32> to vector<8x8xf32>
    %238 = arith.mulf %233, %237 : vector<8x8xf32>
    %239 = arith.mulf %238, %238 : vector<8x8xf32>
    %240 = arith.mulf %239, %228 : vector<8x8xf32>
    %cst_62 = arith.constant dense<0.000000e+00> : vector<8xf32>
    %241 = vector.multi_reduction <add>, %240, %cst_62 [1] : vector<8x8xf32> to vector<8xf32>
    %242 = vector.shape_cast %241 : vector<8xf32> to vector<8x1xf32>
    %243 = arith.mulf %238, %238 : vector<8x8xf32>
    %cst_63 = arith.constant 2.000000e+00 : f32
    %244 = vector.broadcast %cst_63 : f32 to vector<8x8xf32>
    %245 = arith.mulf %244, %238 : vector<8x8xf32>
    %cst_64 = arith.constant 1.000000e+00 : f32
    %246 = vector.broadcast %cst_64 : f32 to vector<8x8xf32>
    %247 = arith.subf %246, %245 : vector<8x8xf32>
    %248 = arith.mulf %247, %228 : vector<8x8xf32>
    %249 = vector.broadcast %242 : vector<8x1xf32> to vector<8x8xf32>
    %250 = arith.addf %248, %249 : vector<8x8xf32>
    %251 = arith.mulf %243, %250 : vector<8x8xf32>
    %cst_65 = arith.constant 0.000000e+00 : f32
    %252 = vector.broadcast %cst_65 : f32 to vector<8x8xf32>
    %253 = arith.maximumf %251, %252 : vector<8x8xf32>
    %cst_66 = arith.constant dense<0.000000e+00> : vector<8x8xf32>
    %254 = tpu.matmul %238, %216, %cst_66 {dimension_numbers = #tpu.dot_dimension_numbers<[1], [0], [0], [1], [0, 0, 1, 1], [], []>} : vector<8x8xf32>, vector<8x8xf32>, vector<8x8xf32> -> vector<8x8xf32>
    %255 = arith.mulf %238, %238 : vector<8x8xf32>
    %256 = tpu.concatenate %255, %253 in 1 : vector<8x8xf32>, vector<8x8xf32> -> vector<8x16xf32>
    %257 = arith.mulf %216, %216 : vector<8x8xf32>
    %258 = arith.addf %257, %217 : vector<8x8xf32>
    %259 = tpu.concatenate %217, %258 in 0 : vector<8x8xf32>, vector<8x8xf32> -> vector<16x8xf32>
    %cst_67 = arith.constant dense<0.000000e+00> : vector<8x8xf32>
    %260 = tpu.matmul %256, %259, %cst_67 {dimension_numbers = #tpu.dot_dimension_numbers<[1], [0], [0], [1], [0, 0, 1, 1], [], []>} : vector<8x16xf32>, vector<16x8xf32>, vector<8x8xf32> -> vector<8x8xf32>
    %261 = vector.extract_strided_slice %210 {offsets = [0, 8], sizes = [8, 8], strides = [1, 1]} : vector<8x96xf32> to vector<8x8xf32>
    %262 = vector.extract_strided_slice %211 {offsets = [0, 8], sizes = [8, 8], strides = [1, 1]} : vector<8x96xf32> to vector<8x8xf32>
    %263 = vector.extract_strided_slice %210 {offsets = [0, 40], sizes = [8, 8], strides = [1, 1]} : vector<8x96xf32> to vector<8x8xf32>
    %264 = vector.extract_strided_slice %211 {offsets = [0, 40], sizes = [8, 8], strides = [1, 1]} : vector<8x96xf32> to vector<8x8xf32>
    %265 = vector.extract_strided_slice %210 {offsets = [0, 72], sizes = [8, 8], strides = [1, 1]} : vector<8x96xf32> to vector<8x8xf32>
    %266 = vector.extract_strided_slice %211 {offsets = [0, 72], sizes = [8, 8], strides = [1, 1]} : vector<8x96xf32> to vector<8x8xf32>
    %cst_68 = arith.constant dense<0.000000e+00> : vector<8x8xf32>
    %267 = tpu.matmul %261, %263, %cst_68 {dimension_numbers = #tpu.dot_dimension_numbers<[1], [1], [0], [0], [0, 0, 1, 0], [], []>} : vector<8x8xf32>, vector<8x8xf32>, vector<8x8xf32> -> vector<8x8xf32>
    %cst_69 = arith.constant 0.176776692 : f32
    %268 = vector.broadcast %cst_69 : f32 to vector<8x8xf32>
    %269 = arith.mulf %267, %268 : vector<8x8xf32>
    %270 = arith.mulf %261, %261 : vector<8x8xf32>
    %271 = tpu.concatenate %270, %262 in 1 : vector<8x8xf32>, vector<8x8xf32> -> vector<8x16xf32>
    %272 = arith.mulf %263, %263 : vector<8x8xf32>
    %273 = arith.addf %272, %264 : vector<8x8xf32>
    %274 = tpu.concatenate %264, %273 in 1 : vector<8x8xf32>, vector<8x8xf32> -> vector<8x16xf32>
    %cst_70 = arith.constant dense<0.000000e+00> : vector<8x8xf32>
    %275 = tpu.matmul %271, %274, %cst_70 {dimension_numbers = #tpu.dot_dimension_numbers<[1], [1], [0], [0], [0, 0, 1, 0], [], []>} : vector<8x16xf32>, vector<8x16xf32>, vector<8x8xf32> -> vector<8x8xf32>
    %cst_71 = arith.constant 3.125000e-02 : f32
    %276 = vector.broadcast %cst_71 : f32 to vector<8x8xf32>
    %277 = arith.mulf %275, %276 : vector<8x8xf32>
    %cst_72 = arith.constant dense<0xFF800000> : vector<8xf32>
    %278 = vector.multi_reduction <maximumf>, %269, %cst_72 [1] : vector<8x8xf32> to vector<8xf32>
    %279 = vector.shape_cast %278 : vector<8xf32> to vector<8x1xf32>
    %280 = vector.broadcast %279 : vector<8x1xf32> to vector<8x8xf32>
    %281 = arith.subf %269, %280 : vector<8x8xf32>
    %282 = math.exp %281 : vector<8x8xf32>
    %cst_73 = arith.constant dense<0.000000e+00> : vector<8xf32>
    %283 = vector.multi_reduction <add>, %282, %cst_73 [1] : vector<8x8xf32> to vector<8xf32>
    %284 = vector.shape_cast %283 : vector<8xf32> to vector<8x1xf32>
    %285 = tpu.reciprocal %284 {approx = true} : vector<8x1xf32> -> vector<8x1xf32>
    %286 = vector.broadcast %285 : vector<8x1xf32> to vector<8x8xf32>
    %287 = arith.mulf %282, %286 : vector<8x8xf32>
    %288 = arith.mulf %287, %287 : vector<8x8xf32>
    %289 = arith.mulf %288, %277 : vector<8x8xf32>
    %cst_74 = arith.constant dense<0.000000e+00> : vector<8xf32>
    %290 = vector.multi_reduction <add>, %289, %cst_74 [1] : vector<8x8xf32> to vector<8xf32>
    %291 = vector.shape_cast %290 : vector<8xf32> to vector<8x1xf32>
    %292 = arith.mulf %287, %287 : vector<8x8xf32>
    %cst_75 = arith.constant 2.000000e+00 : f32
    %293 = vector.broadcast %cst_75 : f32 to vector<8x8xf32>
    %294 = arith.mulf %293, %287 : vector<8x8xf32>
    %cst_76 = arith.constant 1.000000e+00 : f32
    %295 = vector.broadcast %cst_76 : f32 to vector<8x8xf32>
    %296 = arith.subf %295, %294 : vector<8x8xf32>
    %297 = arith.mulf %296, %277 : vector<8x8xf32>
    %298 = vector.broadcast %291 : vector<8x1xf32> to vector<8x8xf32>
    %299 = arith.addf %297, %298 : vector<8x8xf32>
    %300 = arith.mulf %292, %299 : vector<8x8xf32>
    %cst_77 = arith.constant 0.000000e+00 : f32
    %301 = vector.broadcast %cst_77 : f32 to vector<8x8xf32>
    %302 = arith.maximumf %300, %301 : vector<8x8xf32>
    %cst_78 = arith.constant dense<0.000000e+00> : vector<8x8xf32>
    %303 = tpu.matmul %287, %265, %cst_78 {dimension_numbers = #tpu.dot_dimension_numbers<[1], [0], [0], [1], [0, 0, 1, 1], [], []>} : vector<8x8xf32>, vector<8x8xf32>, vector<8x8xf32> -> vector<8x8xf32>
    %304 = arith.mulf %287, %287 : vector<8x8xf32>
    %305 = tpu.concatenate %304, %302 in 1 : vector<8x8xf32>, vector<8x8xf32> -> vector<8x16xf32>
    %306 = arith.mulf %265, %265 : vector<8x8xf32>
    %307 = arith.addf %306, %266 : vector<8x8xf32>
    %308 = tpu.concatenate %266, %307 in 0 : vector<8x8xf32>, vector<8x8xf32> -> vector<16x8xf32>
    %cst_79 = arith.constant dense<0.000000e+00> : vector<8x8xf32>
    %309 = tpu.matmul %305, %308, %cst_79 {dimension_numbers = #tpu.dot_dimension_numbers<[1], [0], [0], [1], [0, 0, 1, 1], [], []>} : vector<8x16xf32>, vector<16x8xf32>, vector<8x8xf32> -> vector<8x8xf32>
    %310 = vector.extract_strided_slice %210 {offsets = [0, 16], sizes = [8, 8], strides = [1, 1]} : vector<8x96xf32> to vector<8x8xf32>
    %311 = vector.extract_strided_slice %211 {offsets = [0, 16], sizes = [8, 8], strides = [1, 1]} : vector<8x96xf32> to vector<8x8xf32>
    %312 = vector.extract_strided_slice %210 {offsets = [0, 48], sizes = [8, 8], strides = [1, 1]} : vector<8x96xf32> to vector<8x8xf32>
    %313 = vector.extract_strided_slice %211 {offsets = [0, 48], sizes = [8, 8], strides = [1, 1]} : vector<8x96xf32> to vector<8x8xf32>
    %314 = vector.extract_strided_slice %210 {offsets = [0, 80], sizes = [8, 8], strides = [1, 1]} : vector<8x96xf32> to vector<8x8xf32>
    %315 = vector.extract_strided_slice %211 {offsets = [0, 80], sizes = [8, 8], strides = [1, 1]} : vector<8x96xf32> to vector<8x8xf32>
    %cst_80 = arith.constant dense<0.000000e+00> : vector<8x8xf32>
    %316 = tpu.matmul %310, %312, %cst_80 {dimension_numbers = #tpu.dot_dimension_numbers<[1], [1], [0], [0], [0, 0, 1, 0], [], []>} : vector<8x8xf32>, vector<8x8xf32>, vector<8x8xf32> -> vector<8x8xf32>
    %cst_81 = arith.constant 0.176776692 : f32
    %317 = vector.broadcast %cst_81 : f32 to vector<8x8xf32>
    %318 = arith.mulf %316, %317 : vector<8x8xf32>
    %319 = arith.mulf %310, %310 : vector<8x8xf32>
    %320 = tpu.concatenate %319, %311 in 1 : vector<8x8xf32>, vector<8x8xf32> -> vector<8x16xf32>
    %321 = arith.mulf %312, %312 : vector<8x8xf32>
    %322 = arith.addf %321, %313 : vector<8x8xf32>
    %323 = tpu.concatenate %313, %322 in 1 : vector<8x8xf32>, vector<8x8xf32> -> vector<8x16xf32>
    %cst_82 = arith.constant dense<0.000000e+00> : vector<8x8xf32>
    %324 = tpu.matmul %320, %323, %cst_82 {dimension_numbers = #tpu.dot_dimension_numbers<[1], [1], [0], [0], [0, 0, 1, 0], [], []>} : vector<8x16xf32>, vector<8x16xf32>, vector<8x8xf32> -> vector<8x8xf32>
    %cst_83 = arith.constant 3.125000e-02 : f32
    %325 = vector.broadcast %cst_83 : f32 to vector<8x8xf32>
    %326 = arith.mulf %324, %325 : vector<8x8xf32>
    %cst_84 = arith.constant dense<0xFF800000> : vector<8xf32>
    %327 = vector.multi_reduction <maximumf>, %318, %cst_84 [1] : vector<8x8xf32> to vector<8xf32>
    %328 = vector.shape_cast %327 : vector<8xf32> to vector<8x1xf32>
    %329 = vector.broadcast %328 : vector<8x1xf32> to vector<8x8xf32>
    %330 = arith.subf %318, %329 : vector<8x8xf32>
    %331 = math.exp %330 : vector<8x8xf32>
    %cst_85 = arith.constant dense<0.000000e+00> : vector<8xf32>
    %332 = vector.multi_reduction <add>, %331, %cst_85 [1] : vector<8x8xf32> to vector<8xf32>
    %333 = vector.shape_cast %332 : vector<8xf32> to vector<8x1xf32>
    %334 = tpu.reciprocal %333 {approx = true} : vector<8x1xf32> -> vector<8x1xf32>
    %335 = vector.broadcast %334 : vector<8x1xf32> to vector<8x8xf32>
    %336 = arith.mulf %331, %335 : vector<8x8xf32>
    %337 = arith.mulf %336, %336 : vector<8x8xf32>
    %338 = arith.mulf %337, %326 : vector<8x8xf32>
    %cst_86 = arith.constant dense<0.000000e+00> : vector<8xf32>
    %339 = vector.multi_reduction <add>, %338, %cst_86 [1] : vector<8x8xf32> to vector<8xf32>
    %340 = vector.shape_cast %339 : vector<8xf32> to vector<8x1xf32>
    %341 = arith.mulf %336, %336 : vector<8x8xf32>
    %cst_87 = arith.constant 2.000000e+00 : f32
    %342 = vector.broadcast %cst_87 : f32 to vector<8x8xf32>
    %343 = arith.mulf %342, %336 : vector<8x8xf32>
    %cst_88 = arith.constant 1.000000e+00 : f32
    %344 = vector.broadcast %cst_88 : f32 to vector<8x8xf32>
    %345 = arith.subf %344, %343 : vector<8x8xf32>
    %346 = arith.mulf %345, %326 : vector<8x8xf32>
    %347 = vector.broadcast %340 : vector<8x1xf32> to vector<8x8xf32>
    %348 = arith.addf %346, %347 : vector<8x8xf32>
    %349 = arith.mulf %341, %348 : vector<8x8xf32>
    %cst_89 = arith.constant 0.000000e+00 : f32
    %350 = vector.broadcast %cst_89 : f32 to vector<8x8xf32>
    %351 = arith.maximumf %349, %350 : vector<8x8xf32>
    %cst_90 = arith.constant dense<0.000000e+00> : vector<8x8xf32>
    %352 = tpu.matmul %336, %314, %cst_90 {dimension_numbers = #tpu.dot_dimension_numbers<[1], [0], [0], [1], [0, 0, 1, 1], [], []>} : vector<8x8xf32>, vector<8x8xf32>, vector<8x8xf32> -> vector<8x8xf32>
    %353 = arith.mulf %336, %336 : vector<8x8xf32>
    %354 = tpu.concatenate %353, %351 in 1 : vector<8x8xf32>, vector<8x8xf32> -> vector<8x16xf32>
    %355 = arith.mulf %314, %314 : vector<8x8xf32>
    %356 = arith.addf %355, %315 : vector<8x8xf32>
    %357 = tpu.concatenate %315, %356 in 0 : vector<8x8xf32>, vector<8x8xf32> -> vector<16x8xf32>
    %cst_91 = arith.constant dense<0.000000e+00> : vector<8x8xf32>
    %358 = tpu.matmul %354, %357, %cst_91 {dimension_numbers = #tpu.dot_dimension_numbers<[1], [0], [0], [1], [0, 0, 1, 1], [], []>} : vector<8x16xf32>, vector<16x8xf32>, vector<8x8xf32> -> vector<8x8xf32>
    %359 = vector.extract_strided_slice %210 {offsets = [0, 24], sizes = [8, 8], strides = [1, 1]} : vector<8x96xf32> to vector<8x8xf32>
    %360 = vector.extract_strided_slice %211 {offsets = [0, 24], sizes = [8, 8], strides = [1, 1]} : vector<8x96xf32> to vector<8x8xf32>
    %361 = vector.extract_strided_slice %210 {offsets = [0, 56], sizes = [8, 8], strides = [1, 1]} : vector<8x96xf32> to vector<8x8xf32>
    %362 = vector.extract_strided_slice %211 {offsets = [0, 56], sizes = [8, 8], strides = [1, 1]} : vector<8x96xf32> to vector<8x8xf32>
    %363 = vector.extract_strided_slice %210 {offsets = [0, 88], sizes = [8, 8], strides = [1, 1]} : vector<8x96xf32> to vector<8x8xf32>
    %364 = vector.extract_strided_slice %211 {offsets = [0, 88], sizes = [8, 8], strides = [1, 1]} : vector<8x96xf32> to vector<8x8xf32>
    %cst_92 = arith.constant dense<0.000000e+00> : vector<8x8xf32>
    %365 = tpu.matmul %359, %361, %cst_92 {dimension_numbers = #tpu.dot_dimension_numbers<[1], [1], [0], [0], [0, 0, 1, 0], [], []>} : vector<8x8xf32>, vector<8x8xf32>, vector<8x8xf32> -> vector<8x8xf32>
    %cst_93 = arith.constant 0.176776692 : f32
    %366 = vector.broadcast %cst_93 : f32 to vector<8x8xf32>
    %367 = arith.mulf %365, %366 : vector<8x8xf32>
    %368 = arith.mulf %359, %359 : vector<8x8xf32>
    %369 = tpu.concatenate %368, %360 in 1 : vector<8x8xf32>, vector<8x8xf32> -> vector<8x16xf32>
    %370 = arith.mulf %361, %361 : vector<8x8xf32>
    %371 = arith.addf %370, %362 : vector<8x8xf32>
    %372 = tpu.concatenate %362, %371 in 1 : vector<8x8xf32>, vector<8x8xf32> -> vector<8x16xf32>
    %cst_94 = arith.constant dense<0.000000e+00> : vector<8x8xf32>
    %373 = tpu.matmul %369, %372, %cst_94 {dimension_numbers = #tpu.dot_dimension_numbers<[1], [1], [0], [0], [0, 0, 1, 0], [], []>} : vector<8x16xf32>, vector<8x16xf32>, vector<8x8xf32> -> vector<8x8xf32>
    %cst_95 = arith.constant 3.125000e-02 : f32
    %374 = vector.broadcast %cst_95 : f32 to vector<8x8xf32>
    %375 = arith.mulf %373, %374 : vector<8x8xf32>
    %cst_96 = arith.constant dense<0xFF800000> : vector<8xf32>
    %376 = vector.multi_reduction <maximumf>, %367, %cst_96 [1] : vector<8x8xf32> to vector<8xf32>
    %377 = vector.shape_cast %376 : vector<8xf32> to vector<8x1xf32>
    %378 = vector.broadcast %377 : vector<8x1xf32> to vector<8x8xf32>
    %379 = arith.subf %367, %378 : vector<8x8xf32>
    %380 = math.exp %379 : vector<8x8xf32>
    %cst_97 = arith.constant dense<0.000000e+00> : vector<8xf32>
    %381 = vector.multi_reduction <add>, %380, %cst_97 [1] : vector<8x8xf32> to vector<8xf32>
    %382 = vector.shape_cast %381 : vector<8xf32> to vector<8x1xf32>
    %383 = tpu.reciprocal %382 {approx = true} : vector<8x1xf32> -> vector<8x1xf32>
    %384 = vector.broadcast %383 : vector<8x1xf32> to vector<8x8xf32>
    %385 = arith.mulf %380, %384 : vector<8x8xf32>
    %386 = arith.mulf %385, %385 : vector<8x8xf32>
    %387 = arith.mulf %386, %375 : vector<8x8xf32>
    %cst_98 = arith.constant dense<0.000000e+00> : vector<8xf32>
    %388 = vector.multi_reduction <add>, %387, %cst_98 [1] : vector<8x8xf32> to vector<8xf32>
    %389 = vector.shape_cast %388 : vector<8xf32> to vector<8x1xf32>
    %390 = arith.mulf %385, %385 : vector<8x8xf32>
    %cst_99 = arith.constant 2.000000e+00 : f32
    %391 = vector.broadcast %cst_99 : f32 to vector<8x8xf32>
    %392 = arith.mulf %391, %385 : vector<8x8xf32>
    %cst_100 = arith.constant 1.000000e+00 : f32
    %393 = vector.broadcast %cst_100 : f32 to vector<8x8xf32>
    %394 = arith.subf %393, %392 : vector<8x8xf32>
    %395 = arith.mulf %394, %375 : vector<8x8xf32>
    %396 = vector.broadcast %389 : vector<8x1xf32> to vector<8x8xf32>
    %397 = arith.addf %395, %396 : vector<8x8xf32>
    %398 = arith.mulf %390, %397 : vector<8x8xf32>
    %cst_101 = arith.constant 0.000000e+00 : f32
    %399 = vector.broadcast %cst_101 : f32 to vector<8x8xf32>
    %400 = arith.maximumf %398, %399 : vector<8x8xf32>
    %cst_102 = arith.constant dense<0.000000e+00> : vector<8x8xf32>
    %401 = tpu.matmul %385, %363, %cst_102 {dimension_numbers = #tpu.dot_dimension_numbers<[1], [0], [0], [1], [0, 0, 1, 1], [], []>} : vector<8x8xf32>, vector<8x8xf32>, vector<8x8xf32> -> vector<8x8xf32>
    %402 = arith.mulf %385, %385 : vector<8x8xf32>
    %403 = tpu.concatenate %402, %400 in 1 : vector<8x8xf32>, vector<8x8xf32> -> vector<8x16xf32>
    %404 = arith.mulf %363, %363 : vector<8x8xf32>
    %405 = arith.addf %404, %364 : vector<8x8xf32>
    %406 = tpu.concatenate %364, %405 in 0 : vector<8x8xf32>, vector<8x8xf32> -> vector<16x8xf32>
    %cst_103 = arith.constant dense<0.000000e+00> : vector<8x8xf32>
    %407 = tpu.matmul %403, %406, %cst_103 {dimension_numbers = #tpu.dot_dimension_numbers<[1], [0], [0], [1], [0, 0, 1, 1], [], []>} : vector<8x16xf32>, vector<16x8xf32>, vector<8x8xf32> -> vector<8x8xf32>
    %408 = tpu.concatenate %254, %303, %352, %401 in 1 : vector<8x8xf32>, vector<8x8xf32>, vector<8x8xf32>, vector<8x8xf32> -> vector<8x32xf32>
    %409 = tpu.concatenate %260, %309, %358, %407 in 1 : vector<8x8xf32>, vector<8x8xf32>, vector<8x8xf32>, vector<8x8xf32> -> vector<8x32xf32>
    %410 = tpu.concatenate %208, %408 in 0 : vector<8x32xf32>, vector<8x32xf32> -> vector<16x32xf32>
    %411 = tpu.concatenate %209, %409 in 0 : vector<8x32xf32>, vector<8x32xf32> -> vector<16x32xf32>
    %412 = arith.addf %0, %410 : vector<16x32xf32>
    %413 = arith.addf %1, %411 : vector<16x32xf32>
    %c0_104 = arith.constant 0 : index
    %c0_105 = arith.constant 0 : index
    %414 = vector.load %arg5[%c0_104, %c0_105] : memref<1x32xf32, #tpu.memory_space<vmem>>, vector<1x32xf32>
    %c0_106 = arith.constant 0 : index
    %c0_107 = arith.constant 0 : index
    %415 = vector.load %arg6[%c0_106, %c0_107] : memref<1x32xf32, #tpu.memory_space<vmem>>, vector<1x32xf32>
    %c0_108 = arith.constant 0 : index
    %c0_109 = arith.constant 0 : index
    %416 = vector.load %arg7[%c0_108, %c0_109] : memref<1x32xf32, #tpu.memory_space<vmem>>, vector<1x32xf32>
    %c0_110 = arith.constant 0 : index
    %c0_111 = arith.constant 0 : index
    %417 = vector.load %arg8[%c0_110, %c0_111] : memref<1x32xf32, #tpu.memory_space<vmem>>, vector<1x32xf32>
    %c0_112 = arith.constant 0 : index
    %c0_113 = arith.constant 0 : index
    %418 = vector.load %arg9[%c0_112, %c0_113] : memref<1x32xf32, #tpu.memory_space<vmem>>, vector<1x32xf32>
    %cst_114 = arith.constant dense<0.000000e+00> : vector<16xf32>
    %419 = vector.multi_reduction <add>, %412, %cst_114 [1] : vector<16x32xf32> to vector<16xf32>
    %420 = vector.shape_cast %419 : vector<16xf32> to vector<16x1xf32>
    %cst_115 = arith.constant 3.200000e+01 : f32
    %421 = vector.broadcast %cst_115 : f32 to vector<16x1xf32>
    %422 = arith.divf %420, %421 : vector<16x1xf32>
    %423 = vector.broadcast %422 : vector<16x1xf32> to vector<16x32xf32>
    %424 = arith.subf %412, %423 : vector<16x32xf32>
    %425 = arith.mulf %424, %424 : vector<16x32xf32>
    %cst_116 = arith.constant dense<0.000000e+00> : vector<16xf32>
    %426 = vector.multi_reduction <add>, %425, %cst_116 [1] : vector<16x32xf32> to vector<16xf32>
    %427 = vector.shape_cast %426 : vector<16xf32> to vector<16x1xf32>
    %cst_117 = arith.constant 3.200000e+01 : f32
    %428 = vector.broadcast %cst_117 : f32 to vector<16x1xf32>
    %429 = arith.divf %427, %428 : vector<16x1xf32>
    %cst_118 = arith.constant 9.99999974E-6 : f32
    %430 = vector.broadcast %cst_118 : f32 to vector<16x1xf32>
    %431 = arith.addf %429, %430 : vector<16x1xf32>
    %432 = math.rsqrt %431 : vector<16x1xf32>
    %433 = vector.broadcast %432 : vector<16x1xf32> to vector<16x32xf32>
    %434 = arith.mulf %424, %433 : vector<16x32xf32>
    %435 = vector.broadcast %414 : vector<1x32xf32> to vector<16x32xf32>
    %436 = arith.mulf %435, %434 : vector<16x32xf32>
    %437 = vector.broadcast %415 : vector<1x32xf32> to vector<16x32xf32>
    %438 = arith.addf %436, %437 : vector<16x32xf32>
    %439 = vector.broadcast %416 : vector<1x32xf32> to vector<16x32xf32>
    %440 = arith.mulf %439, %413 : vector<16x32xf32>
    %441 = arith.mulf %432, %432 : vector<16x1xf32>
    %442 = vector.broadcast %441 : vector<16x1xf32> to vector<16x32xf32>
    %443 = arith.mulf %440, %442 : vector<16x32xf32>
    %444 = arith.mulf %434, %434 : vector<16x32xf32>
    %445 = vector.broadcast %417 : vector<1x32xf32> to vector<16x32xf32>
    %446 = arith.mulf %445, %444 : vector<16x32xf32>
    %447 = arith.addf %443, %446 : vector<16x32xf32>
    %448 = vector.broadcast %418 : vector<1x32xf32> to vector<16x32xf32>
    %449 = arith.addf %447, %448 : vector<16x32xf32>
    %c0_119 = arith.constant 0 : index
    %c0_120 = arith.constant 0 : index
    %450 = vector.load %arg10[%c0_119, %c0_120] : memref<32x32xbf16, #tpu.memory_space<vmem>>, vector<32x32xbf16>
    %c0_121 = arith.constant 0 : index
    %c0_122 = arith.constant 0 : index
    %451 = vector.load %arg11[%c0_121, %c0_122] : memref<64x32xbf16, #tpu.memory_space<vmem>>, vector<64x32xbf16>
    %c0_123 = arith.constant 0 : index
    %c0_124 = arith.constant 0 : index
    %452 = vector.load %arg12[%c0_123, %c0_124] : memref<1x32xf32, #tpu.memory_space<vmem>>, vector<1x32xf32>
    %c0_125 = arith.constant 0 : index
    %c0_126 = arith.constant 0 : index
    %453 = vector.load %arg13[%c0_125, %c0_126] : memref<1x32xf32, #tpu.memory_space<vmem>>, vector<1x32xf32>
    %454 = arith.truncf %438 : vector<16x32xf32> to vector<16x32xbf16>
    %cst_127 = arith.constant dense<0.000000e+00> : vector<16x32xf32>
    %455 = tpu.matmul %454, %450, %cst_127 {dimension_numbers = #tpu.dot_dimension_numbers<[1], [0], [0], [1], [0, 0, 1, 1], [], []>} : vector<16x32xbf16>, vector<32x32xbf16>, vector<16x32xf32> -> vector<16x32xf32>
    %456 = arith.mulf %438, %438 : vector<16x32xf32>
    %457 = tpu.concatenate %456, %449 in 1 : vector<16x32xf32>, vector<16x32xf32> -> vector<16x64xf32>
    %458 = arith.truncf %457 : vector<16x64xf32> to vector<16x64xbf16>
    %cst_128 = arith.constant dense<0.000000e+00> : vector<16x32xf32>
    %459 = tpu.matmul %458, %451, %cst_128 {dimension_numbers = #tpu.dot_dimension_numbers<[1], [0], [0], [1], [0, 0, 1, 1], [], []>} : vector<16x64xbf16>, vector<64x32xbf16>, vector<16x32xf32> -> vector<16x32xf32>
    %460 = vector.broadcast %452 : vector<1x32xf32> to vector<16x32xf32>
    %461 = arith.addf %455, %460 : vector<16x32xf32>
    %462 = vector.broadcast %453 : vector<1x32xf32> to vector<16x32xf32>
    %463 = arith.addf %459, %462 : vector<16x32xf32>
    %cst_129 = arith.constant 0.000000e+00 : f32
    %464 = vector.broadcast %cst_129 : f32 to vector<16x32xf32>
    %465 = arith.cmpf ogt, %461, %464 : vector<16x32xf32>
    %466 = arith.extui %465 : vector<16x32xi1> to vector<16x32xi32>
    %467 = arith.sitofp %466 : vector<16x32xi32> to vector<16x32xf32>
    %468 = arith.mulf %461, %467 : vector<16x32xf32>
    %469 = arith.mulf %463, %467 : vector<16x32xf32>
    %470 = arith.addf %438, %468 : vector<16x32xf32>
    %471 = arith.addf %449, %469 : vector<16x32xf32>
    %c0_130 = arith.constant 0 : index
    %c0_131 = arith.constant 0 : index
    %472 = vector.load %arg14[%c0_130, %c0_131] : memref<16x32xf32, #tpu.memory_space<vmem>>, vector<16x32xf32>
    tpu.vector_store %arg14[%c0_130, %c0_131], %470 {strides = array<i32>} : memref<16x32xf32, #tpu.memory_space<vmem>>, vector<16x32xf32>,
    %c0_132 = arith.constant 0 : index
    %c0_133 = arith.constant 0 : index
    %473 = vector.load %arg15[%c0_132, %c0_133] : memref<16x32xf32, #tpu.memory_space<vmem>>, vector<16x32xf32>
    tpu.vector_store %arg15[%c0_132, %c0_133], %471 {strides = array<i32>} : memref<16x32xf32, #tpu.memory_space<vmem>>, vector<16x32xf32>,
    return
  }
  func.func @transform_0(%arg0: i32) -> (i32, i32) {
    %c0_i32 = arith.constant 0 : i32
    %c0_i32_0 = arith.constant 0 : i32
    return %arg0, %c0_i32 : i32, i32
  }
  func.func @transform_1(%arg0: i32) -> (i32, i32) {
    %c0_i32 = arith.constant 0 : i32
    %c0_i32_0 = arith.constant 0 : i32
    return %arg0, %c0_i32 : i32, i32
  }
  func.func @transform_2(%arg0: i32) -> (i32, i32) {
    %c0_i32 = arith.constant 0 : i32
    %c0_i32_0 = arith.constant 0 : i32
    %c0_i32_1 = arith.constant 0 : i32
    return %c0_i32, %c0_i32_0 : i32, i32
  }
  func.func @transform_3(%arg0: i32) -> (i32, i32) {
    %c0_i32 = arith.constant 0 : i32
    %c0_i32_0 = arith.constant 0 : i32
    %c0_i32_1 = arith.constant 0 : i32
    return %c0_i32, %c0_i32_0 : i32, i32
  }
  func.func @transform_4(%arg0: i32) -> (i32, i32) {
    %c0_i32 = arith.constant 0 : i32
    %c0_i32_0 = arith.constant 0 : i32
    %c0_i32_1 = arith.constant 0 : i32
    return %c0_i32, %c0_i32_0 : i32, i32
  }
  func.func @transform_5(%arg0: i32) -> (i32, i32) {
    %c0_i32 = arith.constant 0 : i32
    %c0_i32_0 = arith.constant 0 : i32
    %c0_i32_1 = arith.constant 0 : i32
    return %c0_i32, %c0_i32_0 : i32, i32
  }
  func.func @transform_6(%arg0: i32) -> (i32, i32) {
    %c0_i32 = arith.constant 0 : i32
    %c0_i32_0 = arith.constant 0 : i32
    %c0_i32_1 = arith.constant 0 : i32
    return %c0_i32, %c0_i32_0 : i32, i32
  }
  func.func @transform_7(%arg0: i32) -> (i32, i32) {
    %c0_i32 = arith.constant 0 : i32
    %c0_i32_0 = arith.constant 0 : i32
    %c0_i32_1 = arith.constant 0 : i32
    return %c0_i32, %c0_i32_0 : i32, i32
  }
  func.func @transform_8(%arg0: i32) -> (i32, i32) {
    %c0_i32 = arith.constant 0 : i32
    %c0_i32_0 = arith.constant 0 : i32
    %c0_i32_1 = arith.constant 0 : i32
    return %c0_i32, %c0_i32_0 : i32, i32
  }
  func.func @transform_9(%arg0: i32) -> (i32, i32) {
    %c0_i32 = arith.constant 0 : i32
    %c0_i32_0 = arith.constant 0 : i32
    %c0_i32_1 = arith.constant 0 : i32
    return %c0_i32, %c0_i32_0 : i32, i32
  }
  func.func @transform_10(%arg0: i32) -> (i32, i32) {
    %c0_i32 = arith.constant 0 : i32
    %c0_i32_0 = arith.constant 0 : i32
    %c0_i32_1 = arith.constant 0 : i32
    return %c0_i32, %c0_i32_0 : i32, i32
  }
  func.func @transform_11(%arg0: i32) -> (i32, i32) {
    %c0_i32 = arith.constant 0 : i32
    %c0_i32_0 = arith.constant 0 : i32
    %c0_i32_1 = arith.constant 0 : i32
    return %c0_i32, %c0_i32_0 : i32, i32
  }
  func.func @transform_12(%arg0: i32) -> (i32, i32) {
    %c0_i32 = arith.constant 0 : i32
    %c0_i32_0 = arith.constant 0 : i32
    %c0_i32_1 = arith.constant 0 : i32
    return %c0_i32, %c0_i32_0 : i32, i32
  }
  func.func @transform_13(%arg0: i32) -> (i32, i32) {
    %c0_i32 = arith.constant 0 : i32
    %c0_i32_0 = arith.constant 0 : i32
    return %arg0, %c0_i32 : i32, i32
  }
  func.func @transform_14(%arg0: i32) -> (i32, i32) {
    %c0_i32 = arith.constant 0 : i32
    %c0_i32_0 = arith.constant 0 : i32
    return %arg0, %c0_i32 : i32, i32
  }
}

module attributes {stable_mosaic.version = 11 : i64} {
  func.func @_block_kernel(%arg0: i32, %arg1: memref<16x32xf32, #tpu.memory_space<vmem>>, %arg2: memref<16x32xf32, #tpu.memory_space<vmem>>, %arg3: memref<1x32xf32, #tpu.memory_space<vmem>>, %arg4: memref<1x32xf32, #tpu.memory_space<vmem>>, %arg5: memref<1x32xf32, #tpu.memory_space<vmem>>, %arg6: memref<1x32xf32, #tpu.memory_space<vmem>>, %arg7: memref<1x32xf32, #tpu.memory_space<vmem>>, %arg8: memref<32x96xbf16, #tpu.memory_space<vmem>>, %arg9: memref<64x96xbf16, #tpu.memory_space<vmem>>, %arg10: memref<2x32xf32, #tpu.memory_space<vmem>>, %arg11: memref<2x32xf32, #tpu.memory_space<vmem>>) attributes {dimension_semantics = [#tpu.dimension_semantics<parallel>], iteration_bounds = array<i64: 1>, scalar_prefetch = 0 : i64, scratch_operands = 0 : i64, tpu.core_type = #tpu.core_type<tc>, window_params = [{transform_indices = @transform_0, window_bounds = array<i64: 16, 32>}, {transform_indices = @transform_1, window_bounds = array<i64: 16, 32>}, {pipeline_mode = #tpu.pipeline_mode<synchronous>, transform_indices = @transform_2, window_bounds = array<i64: 1, 32>}, {pipeline_mode = #tpu.pipeline_mode<synchronous>, transform_indices = @transform_3, window_bounds = array<i64: 1, 32>}, {pipeline_mode = #tpu.pipeline_mode<synchronous>, transform_indices = @transform_4, window_bounds = array<i64: 1, 32>}, {pipeline_mode = #tpu.pipeline_mode<synchronous>, transform_indices = @transform_5, window_bounds = array<i64: 1, 32>}, {pipeline_mode = #tpu.pipeline_mode<synchronous>, transform_indices = @transform_6, window_bounds = array<i64: 1, 32>}, {pipeline_mode = #tpu.pipeline_mode<synchronous>, transform_indices = @transform_7, window_bounds = array<i64: 32, 96>}, {pipeline_mode = #tpu.pipeline_mode<synchronous>, transform_indices = @transform_8, window_bounds = array<i64: 64, 96>}, {transform_indices = @transform_9, window_bounds = array<i64: 2, 32>}, {transform_indices = @transform_10, window_bounds = array<i64: 2, 32>}]} {
    %c0 = arith.constant 0 : index
    %c0_0 = arith.constant 0 : index
    %0 = vector.load %arg1[%c0, %c0_0] : memref<16x32xf32, #tpu.memory_space<vmem>>, vector<16x32xf32>
    %c0_1 = arith.constant 0 : index
    %c0_2 = arith.constant 0 : index
    %1 = vector.load %arg2[%c0_1, %c0_2] : memref<16x32xf32, #tpu.memory_space<vmem>>, vector<16x32xf32>
    %c0_3 = arith.constant 0 : index
    %c0_4 = arith.constant 0 : index
    %2 = vector.load %arg3[%c0_3, %c0_4] : memref<1x32xf32, #tpu.memory_space<vmem>>, vector<1x32xf32>
    %c0_5 = arith.constant 0 : index
    %c0_6 = arith.constant 0 : index
    %3 = vector.load %arg4[%c0_5, %c0_6] : memref<1x32xf32, #tpu.memory_space<vmem>>, vector<1x32xf32>
    %c0_7 = arith.constant 0 : index
    %c0_8 = arith.constant 0 : index
    %4 = vector.load %arg5[%c0_7, %c0_8] : memref<1x32xf32, #tpu.memory_space<vmem>>, vector<1x32xf32>
    %c0_9 = arith.constant 0 : index
    %c0_10 = arith.constant 0 : index
    %5 = vector.load %arg6[%c0_9, %c0_10] : memref<1x32xf32, #tpu.memory_space<vmem>>, vector<1x32xf32>
    %c0_11 = arith.constant 0 : index
    %c0_12 = arith.constant 0 : index
    %6 = vector.load %arg7[%c0_11, %c0_12] : memref<1x32xf32, #tpu.memory_space<vmem>>, vector<1x32xf32>
    %cst = arith.constant dense<0.000000e+00> : vector<16xf32>
    %7 = vector.multi_reduction <add>, %0, %cst [1] : vector<16x32xf32> to vector<16xf32>
    %8 = vector.shape_cast %7 : vector<16xf32> to vector<16x1xf32>
    %cst_13 = arith.constant 3.200000e+01 : f32
    %9 = vector.broadcast %cst_13 : f32 to vector<16x1xf32>
    %10 = arith.divf %8, %9 : vector<16x1xf32>
    %11 = vector.broadcast %10 : vector<16x1xf32> to vector<16x32xf32>
    %12 = arith.subf %0, %11 : vector<16x32xf32>
    %13 = arith.mulf %12, %12 : vector<16x32xf32>
    %cst_14 = arith.constant dense<0.000000e+00> : vector<16xf32>
    %14 = vector.multi_reduction <add>, %13, %cst_14 [1] : vector<16x32xf32> to vector<16xf32>
    %15 = vector.shape_cast %14 : vector<16xf32> to vector<16x1xf32>
    %cst_15 = arith.constant 3.200000e+01 : f32
    %16 = vector.broadcast %cst_15 : f32 to vector<16x1xf32>
    %17 = arith.divf %15, %16 : vector<16x1xf32>
    %cst_16 = arith.constant 9.99999974E-6 : f32
    %18 = vector.broadcast %cst_16 : f32 to vector<16x1xf32>
    %19 = arith.addf %17, %18 : vector<16x1xf32>
    %20 = math.rsqrt %19 : vector<16x1xf32>
    %21 = vector.broadcast %20 : vector<16x1xf32> to vector<16x32xf32>
    %22 = arith.mulf %12, %21 : vector<16x32xf32>
    %23 = vector.broadcast %2 : vector<1x32xf32> to vector<16x32xf32>
    %24 = arith.mulf %23, %22 : vector<16x32xf32>
    %25 = vector.broadcast %3 : vector<1x32xf32> to vector<16x32xf32>
    %26 = arith.addf %24, %25 : vector<16x32xf32>
    %27 = vector.broadcast %4 : vector<1x32xf32> to vector<16x32xf32>
    %28 = arith.mulf %27, %1 : vector<16x32xf32>
    %29 = arith.mulf %20, %20 : vector<16x1xf32>
    %30 = vector.broadcast %29 : vector<16x1xf32> to vector<16x32xf32>
    %31 = arith.mulf %28, %30 : vector<16x32xf32>
    %32 = arith.mulf %22, %22 : vector<16x32xf32>
    %33 = vector.broadcast %5 : vector<1x32xf32> to vector<16x32xf32>
    %34 = arith.mulf %33, %32 : vector<16x32xf32>
    %35 = arith.addf %31, %34 : vector<16x32xf32>
    %36 = vector.broadcast %6 : vector<1x32xf32> to vector<16x32xf32>
    %37 = arith.addf %35, %36 : vector<16x32xf32>
    %c0_17 = arith.constant 0 : index
    %c0_18 = arith.constant 0 : index
    %38 = vector.load %arg8[%c0_17, %c0_18] : memref<32x96xbf16, #tpu.memory_space<vmem>>, vector<32x96xbf16>
    %c0_19 = arith.constant 0 : index
    %c0_20 = arith.constant 0 : index
    %39 = vector.load %arg9[%c0_19, %c0_20] : memref<64x96xbf16, #tpu.memory_space<vmem>>, vector<64x96xbf16>
    %40 = arith.truncf %26 : vector<16x32xf32> to vector<16x32xbf16>
    %cst_21 = arith.constant dense<0.000000e+00> : vector<16x96xf32>
    %41 = tpu.matmul %40, %38, %cst_21 {dimension_numbers = #tpu.dot_dimension_numbers<[1], [0], [0], [1], [0, 0, 1, 1], [], []>} : vector<16x32xbf16>, vector<32x96xbf16>, vector<16x96xf32> -> vector<16x96xf32>
    %42 = arith.mulf %26, %26 : vector<16x32xf32>
    %43 = tpu.concatenate %42, %37 in 1 : vector<16x32xf32>, vector<16x32xf32> -> vector<16x64xf32>
    %44 = arith.truncf %43 : vector<16x64xf32> to vector<16x64xbf16>
    %cst_22 = arith.constant dense<0.000000e+00> : vector<16x96xf32>
    %45 = tpu.matmul %44, %39, %cst_22 {dimension_numbers = #tpu.dot_dimension_numbers<[1], [0], [0], [1], [0, 0, 1, 1], [], []>} : vector<16x64xbf16>, vector<64x96xbf16>, vector<16x96xf32> -> vector<16x96xf32>
    %46 = vector.extract_strided_slice %41 {offsets = [0, 0], sizes = [8, 96], strides = [1, 1]} : vector<16x96xf32> to vector<8x96xf32>
    %47 = vector.extract_strided_slice %45 {offsets = [0, 0], sizes = [8, 96], strides = [1, 1]} : vector<16x96xf32> to vector<8x96xf32>
    %48 = vector.extract_strided_slice %46 {offsets = [0, 0], sizes = [8, 8], strides = [1, 1]} : vector<8x96xf32> to vector<8x8xf32>
    %49 = vector.extract_strided_slice %47 {offsets = [0, 0], sizes = [8, 8], strides = [1, 1]} : vector<8x96xf32> to vector<8x8xf32>
    %50 = vector.extract_strided_slice %46 {offsets = [0, 32], sizes = [8, 8], strides = [1, 1]} : vector<8x96xf32> to vector<8x8xf32>
    %51 = vector.extract_strided_slice %47 {offsets = [0, 32], sizes = [8, 8], strides = [1, 1]} : vector<8x96xf32> to vector<8x8xf32>
    %52 = vector.extract_strided_slice %46 {offsets = [0, 64], sizes = [8, 8], strides = [1, 1]} : vector<8x96xf32> to vector<8x8xf32>
    %53 = vector.extract_strided_slice %47 {offsets = [0, 64], sizes = [8, 8], strides = [1, 1]} : vector<8x96xf32> to vector<8x8xf32>
    %cst_23 = arith.constant dense<0.000000e+00> : vector<8x8xf32>
    %54 = tpu.matmul %48, %50, %cst_23 {dimension_numbers = #tpu.dot_dimension_numbers<[1], [1], [0], [0], [0, 0, 1, 0], [], []>} : vector<8x8xf32>, vector<8x8xf32>, vector<8x8xf32> -> vector<8x8xf32>
    %cst_24 = arith.constant 0.176776692 : f32
    %55 = vector.broadcast %cst_24 : f32 to vector<8x8xf32>
    %56 = arith.mulf %54, %55 : vector<8x8xf32>
    %57 = arith.mulf %48, %48 : vector<8x8xf32>
    %58 = tpu.concatenate %57, %49 in 1 : vector<8x8xf32>, vector<8x8xf32> -> vector<8x16xf32>
    %59 = arith.mulf %50, %50 : vector<8x8xf32>
    %60 = arith.addf %59, %51 : vector<8x8xf32>
    %61 = tpu.concatenate %51, %60 in 1 : vector<8x8xf32>, vector<8x8xf32> -> vector<8x16xf32>
    %cst_25 = arith.constant dense<0.000000e+00> : vector<8x8xf32>
    %62 = tpu.matmul %58, %61, %cst_25 {dimension_numbers = #tpu.dot_dimension_numbers<[1], [1], [0], [0], [0, 0, 1, 0], [], []>} : vector<8x16xf32>, vector<8x16xf32>, vector<8x8xf32> -> vector<8x8xf32>
    %cst_26 = arith.constant 3.125000e-02 : f32
    %63 = vector.broadcast %cst_26 : f32 to vector<8x8xf32>
    %64 = arith.mulf %62, %63 : vector<8x8xf32>
    %cst_27 = arith.constant dense<0xFF800000> : vector<8xf32>
    %65 = vector.multi_reduction <maximumf>, %56, %cst_27 [1] : vector<8x8xf32> to vector<8xf32>
    %66 = vector.shape_cast %65 : vector<8xf32> to vector<8x1xf32>
    %67 = vector.broadcast %66 : vector<8x1xf32> to vector<8x8xf32>
    %68 = arith.subf %56, %67 : vector<8x8xf32>
    %69 = math.exp %68 : vector<8x8xf32>
    %cst_28 = arith.constant dense<0.000000e+00> : vector<8xf32>
    %70 = vector.multi_reduction <add>, %69, %cst_28 [1] : vector<8x8xf32> to vector<8xf32>
    %71 = vector.shape_cast %70 : vector<8xf32> to vector<8x1xf32>
    %72 = tpu.reciprocal %71 {approx = true} : vector<8x1xf32> -> vector<8x1xf32>
    %73 = vector.broadcast %72 : vector<8x1xf32> to vector<8x8xf32>
    %74 = arith.mulf %69, %73 : vector<8x8xf32>
    %75 = arith.mulf %74, %74 : vector<8x8xf32>
    %76 = arith.mulf %75, %64 : vector<8x8xf32>
    %cst_29 = arith.constant dense<0.000000e+00> : vector<8xf32>
    %77 = vector.multi_reduction <add>, %76, %cst_29 [1] : vector<8x8xf32> to vector<8xf32>
    %78 = vector.shape_cast %77 : vector<8xf32> to vector<8x1xf32>
    %79 = arith.mulf %74, %74 : vector<8x8xf32>
    %cst_30 = arith.constant 2.000000e+00 : f32
    %80 = vector.broadcast %cst_30 : f32 to vector<8x8xf32>
    %81 = arith.mulf %80, %74 : vector<8x8xf32>
    %cst_31 = arith.constant 1.000000e+00 : f32
    %82 = vector.broadcast %cst_31 : f32 to vector<8x8xf32>
    %83 = arith.subf %82, %81 : vector<8x8xf32>
    %84 = arith.mulf %83, %64 : vector<8x8xf32>
    %85 = vector.broadcast %78 : vector<8x1xf32> to vector<8x8xf32>
    %86 = arith.addf %84, %85 : vector<8x8xf32>
    %87 = arith.mulf %79, %86 : vector<8x8xf32>
    %cst_32 = arith.constant 0.000000e+00 : f32
    %88 = vector.broadcast %cst_32 : f32 to vector<8x8xf32>
    %89 = arith.maximumf %87, %88 : vector<8x8xf32>
    %cst_33 = arith.constant dense<0.000000e+00> : vector<8x8xf32>
    %90 = tpu.matmul %74, %52, %cst_33 {dimension_numbers = #tpu.dot_dimension_numbers<[1], [0], [0], [1], [0, 0, 1, 1], [], []>} : vector<8x8xf32>, vector<8x8xf32>, vector<8x8xf32> -> vector<8x8xf32>
    %91 = arith.mulf %74, %74 : vector<8x8xf32>
    %92 = tpu.concatenate %91, %89 in 1 : vector<8x8xf32>, vector<8x8xf32> -> vector<8x16xf32>
    %93 = arith.mulf %52, %52 : vector<8x8xf32>
    %94 = arith.addf %93, %53 : vector<8x8xf32>
    %95 = tpu.concatenate %53, %94 in 0 : vector<8x8xf32>, vector<8x8xf32> -> vector<16x8xf32>
    %cst_34 = arith.constant dense<0.000000e+00> : vector<8x8xf32>
    %96 = tpu.matmul %92, %95, %cst_34 {dimension_numbers = #tpu.dot_dimension_numbers<[1], [0], [0], [1], [0, 0, 1, 1], [], []>} : vector<8x16xf32>, vector<16x8xf32>, vector<8x8xf32> -> vector<8x8xf32>
    %97 = vector.extract_strided_slice %46 {offsets = [0, 8], sizes = [8, 8], strides = [1, 1]} : vector<8x96xf32> to vector<8x8xf32>
    %98 = vector.extract_strided_slice %47 {offsets = [0, 8], sizes = [8, 8], strides = [1, 1]} : vector<8x96xf32> to vector<8x8xf32>
    %99 = vector.extract_strided_slice %46 {offsets = [0, 40], sizes = [8, 8], strides = [1, 1]} : vector<8x96xf32> to vector<8x8xf32>
    %100 = vector.extract_strided_slice %47 {offsets = [0, 40], sizes = [8, 8], strides = [1, 1]} : vector<8x96xf32> to vector<8x8xf32>
    %101 = vector.extract_strided_slice %46 {offsets = [0, 72], sizes = [8, 8], strides = [1, 1]} : vector<8x96xf32> to vector<8x8xf32>
    %102 = vector.extract_strided_slice %47 {offsets = [0, 72], sizes = [8, 8], strides = [1, 1]} : vector<8x96xf32> to vector<8x8xf32>
    %cst_35 = arith.constant dense<0.000000e+00> : vector<8x8xf32>
    %103 = tpu.matmul %97, %99, %cst_35 {dimension_numbers = #tpu.dot_dimension_numbers<[1], [1], [0], [0], [0, 0, 1, 0], [], []>} : vector<8x8xf32>, vector<8x8xf32>, vector<8x8xf32> -> vector<8x8xf32>
    %cst_36 = arith.constant 0.176776692 : f32
    %104 = vector.broadcast %cst_36 : f32 to vector<8x8xf32>
    %105 = arith.mulf %103, %104 : vector<8x8xf32>
    %106 = arith.mulf %97, %97 : vector<8x8xf32>
    %107 = tpu.concatenate %106, %98 in 1 : vector<8x8xf32>, vector<8x8xf32> -> vector<8x16xf32>
    %108 = arith.mulf %99, %99 : vector<8x8xf32>
    %109 = arith.addf %108, %100 : vector<8x8xf32>
    %110 = tpu.concatenate %100, %109 in 1 : vector<8x8xf32>, vector<8x8xf32> -> vector<8x16xf32>
    %cst_37 = arith.constant dense<0.000000e+00> : vector<8x8xf32>
    %111 = tpu.matmul %107, %110, %cst_37 {dimension_numbers = #tpu.dot_dimension_numbers<[1], [1], [0], [0], [0, 0, 1, 0], [], []>} : vector<8x16xf32>, vector<8x16xf32>, vector<8x8xf32> -> vector<8x8xf32>
    %cst_38 = arith.constant 3.125000e-02 : f32
    %112 = vector.broadcast %cst_38 : f32 to vector<8x8xf32>
    %113 = arith.mulf %111, %112 : vector<8x8xf32>
    %cst_39 = arith.constant dense<0xFF800000> : vector<8xf32>
    %114 = vector.multi_reduction <maximumf>, %105, %cst_39 [1] : vector<8x8xf32> to vector<8xf32>
    %115 = vector.shape_cast %114 : vector<8xf32> to vector<8x1xf32>
    %116 = vector.broadcast %115 : vector<8x1xf32> to vector<8x8xf32>
    %117 = arith.subf %105, %116 : vector<8x8xf32>
    %118 = math.exp %117 : vector<8x8xf32>
    %cst_40 = arith.constant dense<0.000000e+00> : vector<8xf32>
    %119 = vector.multi_reduction <add>, %118, %cst_40 [1] : vector<8x8xf32> to vector<8xf32>
    %120 = vector.shape_cast %119 : vector<8xf32> to vector<8x1xf32>
    %121 = tpu.reciprocal %120 {approx = true} : vector<8x1xf32> -> vector<8x1xf32>
    %122 = vector.broadcast %121 : vector<8x1xf32> to vector<8x8xf32>
    %123 = arith.mulf %118, %122 : vector<8x8xf32>
    %124 = arith.mulf %123, %123 : vector<8x8xf32>
    %125 = arith.mulf %124, %113 : vector<8x8xf32>
    %cst_41 = arith.constant dense<0.000000e+00> : vector<8xf32>
    %126 = vector.multi_reduction <add>, %125, %cst_41 [1] : vector<8x8xf32> to vector<8xf32>
    %127 = vector.shape_cast %126 : vector<8xf32> to vector<8x1xf32>
    %128 = arith.mulf %123, %123 : vector<8x8xf32>
    %cst_42 = arith.constant 2.000000e+00 : f32
    %129 = vector.broadcast %cst_42 : f32 to vector<8x8xf32>
    %130 = arith.mulf %129, %123 : vector<8x8xf32>
    %cst_43 = arith.constant 1.000000e+00 : f32
    %131 = vector.broadcast %cst_43 : f32 to vector<8x8xf32>
    %132 = arith.subf %131, %130 : vector<8x8xf32>
    %133 = arith.mulf %132, %113 : vector<8x8xf32>
    %134 = vector.broadcast %127 : vector<8x1xf32> to vector<8x8xf32>
    %135 = arith.addf %133, %134 : vector<8x8xf32>
    %136 = arith.mulf %128, %135 : vector<8x8xf32>
    %cst_44 = arith.constant 0.000000e+00 : f32
    %137 = vector.broadcast %cst_44 : f32 to vector<8x8xf32>
    %138 = arith.maximumf %136, %137 : vector<8x8xf32>
    %cst_45 = arith.constant dense<0.000000e+00> : vector<8x8xf32>
    %139 = tpu.matmul %123, %101, %cst_45 {dimension_numbers = #tpu.dot_dimension_numbers<[1], [0], [0], [1], [0, 0, 1, 1], [], []>} : vector<8x8xf32>, vector<8x8xf32>, vector<8x8xf32> -> vector<8x8xf32>
    %140 = arith.mulf %123, %123 : vector<8x8xf32>
    %141 = tpu.concatenate %140, %138 in 1 : vector<8x8xf32>, vector<8x8xf32> -> vector<8x16xf32>
    %142 = arith.mulf %101, %101 : vector<8x8xf32>
    %143 = arith.addf %142, %102 : vector<8x8xf32>
    %144 = tpu.concatenate %102, %143 in 0 : vector<8x8xf32>, vector<8x8xf32> -> vector<16x8xf32>
    %cst_46 = arith.constant dense<0.000000e+00> : vector<8x8xf32>
    %145 = tpu.matmul %141, %144, %cst_46 {dimension_numbers = #tpu.dot_dimension_numbers<[1], [0], [0], [1], [0, 0, 1, 1], [], []>} : vector<8x16xf32>, vector<16x8xf32>, vector<8x8xf32> -> vector<8x8xf32>
    %146 = vector.extract_strided_slice %46 {offsets = [0, 16], sizes = [8, 8], strides = [1, 1]} : vector<8x96xf32> to vector<8x8xf32>
    %147 = vector.extract_strided_slice %47 {offsets = [0, 16], sizes = [8, 8], strides = [1, 1]} : vector<8x96xf32> to vector<8x8xf32>
    %148 = vector.extract_strided_slice %46 {offsets = [0, 48], sizes = [8, 8], strides = [1, 1]} : vector<8x96xf32> to vector<8x8xf32>
    %149 = vector.extract_strided_slice %47 {offsets = [0, 48], sizes = [8, 8], strides = [1, 1]} : vector<8x96xf32> to vector<8x8xf32>
    %150 = vector.extract_strided_slice %46 {offsets = [0, 80], sizes = [8, 8], strides = [1, 1]} : vector<8x96xf32> to vector<8x8xf32>
    %151 = vector.extract_strided_slice %47 {offsets = [0, 80], sizes = [8, 8], strides = [1, 1]} : vector<8x96xf32> to vector<8x8xf32>
    %cst_47 = arith.constant dense<0.000000e+00> : vector<8x8xf32>
    %152 = tpu.matmul %146, %148, %cst_47 {dimension_numbers = #tpu.dot_dimension_numbers<[1], [1], [0], [0], [0, 0, 1, 0], [], []>} : vector<8x8xf32>, vector<8x8xf32>, vector<8x8xf32> -> vector<8x8xf32>
    %cst_48 = arith.constant 0.176776692 : f32
    %153 = vector.broadcast %cst_48 : f32 to vector<8x8xf32>
    %154 = arith.mulf %152, %153 : vector<8x8xf32>
    %155 = arith.mulf %146, %146 : vector<8x8xf32>
    %156 = tpu.concatenate %155, %147 in 1 : vector<8x8xf32>, vector<8x8xf32> -> vector<8x16xf32>
    %157 = arith.mulf %148, %148 : vector<8x8xf32>
    %158 = arith.addf %157, %149 : vector<8x8xf32>
    %159 = tpu.concatenate %149, %158 in 1 : vector<8x8xf32>, vector<8x8xf32> -> vector<8x16xf32>
    %cst_49 = arith.constant dense<0.000000e+00> : vector<8x8xf32>
    %160 = tpu.matmul %156, %159, %cst_49 {dimension_numbers = #tpu.dot_dimension_numbers<[1], [1], [0], [0], [0, 0, 1, 0], [], []>} : vector<8x16xf32>, vector<8x16xf32>, vector<8x8xf32> -> vector<8x8xf32>
    %cst_50 = arith.constant 3.125000e-02 : f32
    %161 = vector.broadcast %cst_50 : f32 to vector<8x8xf32>
    %162 = arith.mulf %160, %161 : vector<8x8xf32>
    %cst_51 = arith.constant dense<0xFF800000> : vector<8xf32>
    %163 = vector.multi_reduction <maximumf>, %154, %cst_51 [1] : vector<8x8xf32> to vector<8xf32>
    %164 = vector.shape_cast %163 : vector<8xf32> to vector<8x1xf32>
    %165 = vector.broadcast %164 : vector<8x1xf32> to vector<8x8xf32>
    %166 = arith.subf %154, %165 : vector<8x8xf32>
    %167 = math.exp %166 : vector<8x8xf32>
    %cst_52 = arith.constant dense<0.000000e+00> : vector<8xf32>
    %168 = vector.multi_reduction <add>, %167, %cst_52 [1] : vector<8x8xf32> to vector<8xf32>
    %169 = vector.shape_cast %168 : vector<8xf32> to vector<8x1xf32>
    %170 = tpu.reciprocal %169 {approx = true} : vector<8x1xf32> -> vector<8x1xf32>
    %171 = vector.broadcast %170 : vector<8x1xf32> to vector<8x8xf32>
    %172 = arith.mulf %167, %171 : vector<8x8xf32>
    %173 = arith.mulf %172, %172 : vector<8x8xf32>
    %174 = arith.mulf %173, %162 : vector<8x8xf32>
    %cst_53 = arith.constant dense<0.000000e+00> : vector<8xf32>
    %175 = vector.multi_reduction <add>, %174, %cst_53 [1] : vector<8x8xf32> to vector<8xf32>
    %176 = vector.shape_cast %175 : vector<8xf32> to vector<8x1xf32>
    %177 = arith.mulf %172, %172 : vector<8x8xf32>
    %cst_54 = arith.constant 2.000000e+00 : f32
    %178 = vector.broadcast %cst_54 : f32 to vector<8x8xf32>
    %179 = arith.mulf %178, %172 : vector<8x8xf32>
    %cst_55 = arith.constant 1.000000e+00 : f32
    %180 = vector.broadcast %cst_55 : f32 to vector<8x8xf32>
    %181 = arith.subf %180, %179 : vector<8x8xf32>
    %182 = arith.mulf %181, %162 : vector<8x8xf32>
    %183 = vector.broadcast %176 : vector<8x1xf32> to vector<8x8xf32>
    %184 = arith.addf %182, %183 : vector<8x8xf32>
    %185 = arith.mulf %177, %184 : vector<8x8xf32>
    %cst_56 = arith.constant 0.000000e+00 : f32
    %186 = vector.broadcast %cst_56 : f32 to vector<8x8xf32>
    %187 = arith.maximumf %185, %186 : vector<8x8xf32>
    %cst_57 = arith.constant dense<0.000000e+00> : vector<8x8xf32>
    %188 = tpu.matmul %172, %150, %cst_57 {dimension_numbers = #tpu.dot_dimension_numbers<[1], [0], [0], [1], [0, 0, 1, 1], [], []>} : vector<8x8xf32>, vector<8x8xf32>, vector<8x8xf32> -> vector<8x8xf32>
    %189 = arith.mulf %172, %172 : vector<8x8xf32>
    %190 = tpu.concatenate %189, %187 in 1 : vector<8x8xf32>, vector<8x8xf32> -> vector<8x16xf32>
    %191 = arith.mulf %150, %150 : vector<8x8xf32>
    %192 = arith.addf %191, %151 : vector<8x8xf32>
    %193 = tpu.concatenate %151, %192 in 0 : vector<8x8xf32>, vector<8x8xf32> -> vector<16x8xf32>
    %cst_58 = arith.constant dense<0.000000e+00> : vector<8x8xf32>
    %194 = tpu.matmul %190, %193, %cst_58 {dimension_numbers = #tpu.dot_dimension_numbers<[1], [0], [0], [1], [0, 0, 1, 1], [], []>} : vector<8x16xf32>, vector<16x8xf32>, vector<8x8xf32> -> vector<8x8xf32>
    %195 = vector.extract_strided_slice %46 {offsets = [0, 24], sizes = [8, 8], strides = [1, 1]} : vector<8x96xf32> to vector<8x8xf32>
    %196 = vector.extract_strided_slice %47 {offsets = [0, 24], sizes = [8, 8], strides = [1, 1]} : vector<8x96xf32> to vector<8x8xf32>
    %197 = vector.extract_strided_slice %46 {offsets = [0, 56], sizes = [8, 8], strides = [1, 1]} : vector<8x96xf32> to vector<8x8xf32>
    %198 = vector.extract_strided_slice %47 {offsets = [0, 56], sizes = [8, 8], strides = [1, 1]} : vector<8x96xf32> to vector<8x8xf32>
    %199 = vector.extract_strided_slice %46 {offsets = [0, 88], sizes = [8, 8], strides = [1, 1]} : vector<8x96xf32> to vector<8x8xf32>
    %200 = vector.extract_strided_slice %47 {offsets = [0, 88], sizes = [8, 8], strides = [1, 1]} : vector<8x96xf32> to vector<8x8xf32>
    %cst_59 = arith.constant dense<0.000000e+00> : vector<8x8xf32>
    %201 = tpu.matmul %195, %197, %cst_59 {dimension_numbers = #tpu.dot_dimension_numbers<[1], [1], [0], [0], [0, 0, 1, 0], [], []>} : vector<8x8xf32>, vector<8x8xf32>, vector<8x8xf32> -> vector<8x8xf32>
    %cst_60 = arith.constant 0.176776692 : f32
    %202 = vector.broadcast %cst_60 : f32 to vector<8x8xf32>
    %203 = arith.mulf %201, %202 : vector<8x8xf32>
    %204 = arith.mulf %195, %195 : vector<8x8xf32>
    %205 = tpu.concatenate %204, %196 in 1 : vector<8x8xf32>, vector<8x8xf32> -> vector<8x16xf32>
    %206 = arith.mulf %197, %197 : vector<8x8xf32>
    %207 = arith.addf %206, %198 : vector<8x8xf32>
    %208 = tpu.concatenate %198, %207 in 1 : vector<8x8xf32>, vector<8x8xf32> -> vector<8x16xf32>
    %cst_61 = arith.constant dense<0.000000e+00> : vector<8x8xf32>
    %209 = tpu.matmul %205, %208, %cst_61 {dimension_numbers = #tpu.dot_dimension_numbers<[1], [1], [0], [0], [0, 0, 1, 0], [], []>} : vector<8x16xf32>, vector<8x16xf32>, vector<8x8xf32> -> vector<8x8xf32>
    %cst_62 = arith.constant 3.125000e-02 : f32
    %210 = vector.broadcast %cst_62 : f32 to vector<8x8xf32>
    %211 = arith.mulf %209, %210 : vector<8x8xf32>
    %cst_63 = arith.constant dense<0xFF800000> : vector<8xf32>
    %212 = vector.multi_reduction <maximumf>, %203, %cst_63 [1] : vector<8x8xf32> to vector<8xf32>
    %213 = vector.shape_cast %212 : vector<8xf32> to vector<8x1xf32>
    %214 = vector.broadcast %213 : vector<8x1xf32> to vector<8x8xf32>
    %215 = arith.subf %203, %214 : vector<8x8xf32>
    %216 = math.exp %215 : vector<8x8xf32>
    %cst_64 = arith.constant dense<0.000000e+00> : vector<8xf32>
    %217 = vector.multi_reduction <add>, %216, %cst_64 [1] : vector<8x8xf32> to vector<8xf32>
    %218 = vector.shape_cast %217 : vector<8xf32> to vector<8x1xf32>
    %219 = tpu.reciprocal %218 {approx = true} : vector<8x1xf32> -> vector<8x1xf32>
    %220 = vector.broadcast %219 : vector<8x1xf32> to vector<8x8xf32>
    %221 = arith.mulf %216, %220 : vector<8x8xf32>
    %222 = arith.mulf %221, %221 : vector<8x8xf32>
    %223 = arith.mulf %222, %211 : vector<8x8xf32>
    %cst_65 = arith.constant dense<0.000000e+00> : vector<8xf32>
    %224 = vector.multi_reduction <add>, %223, %cst_65 [1] : vector<8x8xf32> to vector<8xf32>
    %225 = vector.shape_cast %224 : vector<8xf32> to vector<8x1xf32>
    %226 = arith.mulf %221, %221 : vector<8x8xf32>
    %cst_66 = arith.constant 2.000000e+00 : f32
    %227 = vector.broadcast %cst_66 : f32 to vector<8x8xf32>
    %228 = arith.mulf %227, %221 : vector<8x8xf32>
    %cst_67 = arith.constant 1.000000e+00 : f32
    %229 = vector.broadcast %cst_67 : f32 to vector<8x8xf32>
    %230 = arith.subf %229, %228 : vector<8x8xf32>
    %231 = arith.mulf %230, %211 : vector<8x8xf32>
    %232 = vector.broadcast %225 : vector<8x1xf32> to vector<8x8xf32>
    %233 = arith.addf %231, %232 : vector<8x8xf32>
    %234 = arith.mulf %226, %233 : vector<8x8xf32>
    %cst_68 = arith.constant 0.000000e+00 : f32
    %235 = vector.broadcast %cst_68 : f32 to vector<8x8xf32>
    %236 = arith.maximumf %234, %235 : vector<8x8xf32>
    %cst_69 = arith.constant dense<0.000000e+00> : vector<8x8xf32>
    %237 = tpu.matmul %221, %199, %cst_69 {dimension_numbers = #tpu.dot_dimension_numbers<[1], [0], [0], [1], [0, 0, 1, 1], [], []>} : vector<8x8xf32>, vector<8x8xf32>, vector<8x8xf32> -> vector<8x8xf32>
    %238 = arith.mulf %221, %221 : vector<8x8xf32>
    %239 = tpu.concatenate %238, %236 in 1 : vector<8x8xf32>, vector<8x8xf32> -> vector<8x16xf32>
    %240 = arith.mulf %199, %199 : vector<8x8xf32>
    %241 = arith.addf %240, %200 : vector<8x8xf32>
    %242 = tpu.concatenate %200, %241 in 0 : vector<8x8xf32>, vector<8x8xf32> -> vector<16x8xf32>
    %cst_70 = arith.constant dense<0.000000e+00> : vector<8x8xf32>
    %243 = tpu.matmul %239, %242, %cst_70 {dimension_numbers = #tpu.dot_dimension_numbers<[1], [0], [0], [1], [0, 0, 1, 1], [], []>} : vector<8x16xf32>, vector<16x8xf32>, vector<8x8xf32> -> vector<8x8xf32>
    %244 = tpu.concatenate %90, %139, %188, %237 in 1 : vector<8x8xf32>, vector<8x8xf32>, vector<8x8xf32>, vector<8x8xf32> -> vector<8x32xf32>
    %245 = tpu.concatenate %96, %145, %194, %243 in 1 : vector<8x8xf32>, vector<8x8xf32>, vector<8x8xf32>, vector<8x8xf32> -> vector<8x32xf32>
    %246 = vector.extract_strided_slice %41 {offsets = [8, 0], sizes = [8, 96], strides = [1, 1]} : vector<16x96xf32> to vector<8x96xf32>
    %247 = vector.extract_strided_slice %45 {offsets = [8, 0], sizes = [8, 96], strides = [1, 1]} : vector<16x96xf32> to vector<8x96xf32>
    %248 = vector.extract_strided_slice %246 {offsets = [0, 0], sizes = [8, 8], strides = [1, 1]} : vector<8x96xf32> to vector<8x8xf32>
    %249 = vector.extract_strided_slice %247 {offsets = [0, 0], sizes = [8, 8], strides = [1, 1]} : vector<8x96xf32> to vector<8x8xf32>
    %250 = vector.extract_strided_slice %246 {offsets = [0, 32], sizes = [8, 8], strides = [1, 1]} : vector<8x96xf32> to vector<8x8xf32>
    %251 = vector.extract_strided_slice %247 {offsets = [0, 32], sizes = [8, 8], strides = [1, 1]} : vector<8x96xf32> to vector<8x8xf32>
    %252 = vector.extract_strided_slice %246 {offsets = [0, 64], sizes = [8, 8], strides = [1, 1]} : vector<8x96xf32> to vector<8x8xf32>
    %253 = vector.extract_strided_slice %247 {offsets = [0, 64], sizes = [8, 8], strides = [1, 1]} : vector<8x96xf32> to vector<8x8xf32>
    %cst_71 = arith.constant dense<0.000000e+00> : vector<8x8xf32>
    %254 = tpu.matmul %248, %250, %cst_71 {dimension_numbers = #tpu.dot_dimension_numbers<[1], [1], [0], [0], [0, 0, 1, 0], [], []>} : vector<8x8xf32>, vector<8x8xf32>, vector<8x8xf32> -> vector<8x8xf32>
    %cst_72 = arith.constant 0.176776692 : f32
    %255 = vector.broadcast %cst_72 : f32 to vector<8x8xf32>
    %256 = arith.mulf %254, %255 : vector<8x8xf32>
    %257 = arith.mulf %248, %248 : vector<8x8xf32>
    %258 = tpu.concatenate %257, %249 in 1 : vector<8x8xf32>, vector<8x8xf32> -> vector<8x16xf32>
    %259 = arith.mulf %250, %250 : vector<8x8xf32>
    %260 = arith.addf %259, %251 : vector<8x8xf32>
    %261 = tpu.concatenate %251, %260 in 1 : vector<8x8xf32>, vector<8x8xf32> -> vector<8x16xf32>
    %cst_73 = arith.constant dense<0.000000e+00> : vector<8x8xf32>
    %262 = tpu.matmul %258, %261, %cst_73 {dimension_numbers = #tpu.dot_dimension_numbers<[1], [1], [0], [0], [0, 0, 1, 0], [], []>} : vector<8x16xf32>, vector<8x16xf32>, vector<8x8xf32> -> vector<8x8xf32>
    %cst_74 = arith.constant 3.125000e-02 : f32
    %263 = vector.broadcast %cst_74 : f32 to vector<8x8xf32>
    %264 = arith.mulf %262, %263 : vector<8x8xf32>
    %cst_75 = arith.constant dense<0xFF800000> : vector<8xf32>
    %265 = vector.multi_reduction <maximumf>, %256, %cst_75 [1] : vector<8x8xf32> to vector<8xf32>
    %266 = vector.shape_cast %265 : vector<8xf32> to vector<8x1xf32>
    %267 = vector.broadcast %266 : vector<8x1xf32> to vector<8x8xf32>
    %268 = arith.subf %256, %267 : vector<8x8xf32>
    %269 = math.exp %268 : vector<8x8xf32>
    %cst_76 = arith.constant dense<0.000000e+00> : vector<8xf32>
    %270 = vector.multi_reduction <add>, %269, %cst_76 [1] : vector<8x8xf32> to vector<8xf32>
    %271 = vector.shape_cast %270 : vector<8xf32> to vector<8x1xf32>
    %272 = tpu.reciprocal %271 {approx = true} : vector<8x1xf32> -> vector<8x1xf32>
    %273 = vector.broadcast %272 : vector<8x1xf32> to vector<8x8xf32>
    %274 = arith.mulf %269, %273 : vector<8x8xf32>
    %275 = arith.mulf %274, %274 : vector<8x8xf32>
    %276 = arith.mulf %275, %264 : vector<8x8xf32>
    %cst_77 = arith.constant dense<0.000000e+00> : vector<8xf32>
    %277 = vector.multi_reduction <add>, %276, %cst_77 [1] : vector<8x8xf32> to vector<8xf32>
    %278 = vector.shape_cast %277 : vector<8xf32> to vector<8x1xf32>
    %279 = arith.mulf %274, %274 : vector<8x8xf32>
    %cst_78 = arith.constant 2.000000e+00 : f32
    %280 = vector.broadcast %cst_78 : f32 to vector<8x8xf32>
    %281 = arith.mulf %280, %274 : vector<8x8xf32>
    %cst_79 = arith.constant 1.000000e+00 : f32
    %282 = vector.broadcast %cst_79 : f32 to vector<8x8xf32>
    %283 = arith.subf %282, %281 : vector<8x8xf32>
    %284 = arith.mulf %283, %264 : vector<8x8xf32>
    %285 = vector.broadcast %278 : vector<8x1xf32> to vector<8x8xf32>
    %286 = arith.addf %284, %285 : vector<8x8xf32>
    %287 = arith.mulf %279, %286 : vector<8x8xf32>
    %cst_80 = arith.constant 0.000000e+00 : f32
    %288 = vector.broadcast %cst_80 : f32 to vector<8x8xf32>
    %289 = arith.maximumf %287, %288 : vector<8x8xf32>
    %cst_81 = arith.constant dense<0.000000e+00> : vector<8x8xf32>
    %290 = tpu.matmul %274, %252, %cst_81 {dimension_numbers = #tpu.dot_dimension_numbers<[1], [0], [0], [1], [0, 0, 1, 1], [], []>} : vector<8x8xf32>, vector<8x8xf32>, vector<8x8xf32> -> vector<8x8xf32>
    %291 = arith.mulf %274, %274 : vector<8x8xf32>
    %292 = tpu.concatenate %291, %289 in 1 : vector<8x8xf32>, vector<8x8xf32> -> vector<8x16xf32>
    %293 = arith.mulf %252, %252 : vector<8x8xf32>
    %294 = arith.addf %293, %253 : vector<8x8xf32>
    %295 = tpu.concatenate %253, %294 in 0 : vector<8x8xf32>, vector<8x8xf32> -> vector<16x8xf32>
    %cst_82 = arith.constant dense<0.000000e+00> : vector<8x8xf32>
    %296 = tpu.matmul %292, %295, %cst_82 {dimension_numbers = #tpu.dot_dimension_numbers<[1], [0], [0], [1], [0, 0, 1, 1], [], []>} : vector<8x16xf32>, vector<16x8xf32>, vector<8x8xf32> -> vector<8x8xf32>
    %297 = vector.extract_strided_slice %246 {offsets = [0, 8], sizes = [8, 8], strides = [1, 1]} : vector<8x96xf32> to vector<8x8xf32>
    %298 = vector.extract_strided_slice %247 {offsets = [0, 8], sizes = [8, 8], strides = [1, 1]} : vector<8x96xf32> to vector<8x8xf32>
    %299 = vector.extract_strided_slice %246 {offsets = [0, 40], sizes = [8, 8], strides = [1, 1]} : vector<8x96xf32> to vector<8x8xf32>
    %300 = vector.extract_strided_slice %247 {offsets = [0, 40], sizes = [8, 8], strides = [1, 1]} : vector<8x96xf32> to vector<8x8xf32>
    %301 = vector.extract_strided_slice %246 {offsets = [0, 72], sizes = [8, 8], strides = [1, 1]} : vector<8x96xf32> to vector<8x8xf32>
    %302 = vector.extract_strided_slice %247 {offsets = [0, 72], sizes = [8, 8], strides = [1, 1]} : vector<8x96xf32> to vector<8x8xf32>
    %cst_83 = arith.constant dense<0.000000e+00> : vector<8x8xf32>
    %303 = tpu.matmul %297, %299, %cst_83 {dimension_numbers = #tpu.dot_dimension_numbers<[1], [1], [0], [0], [0, 0, 1, 0], [], []>} : vector<8x8xf32>, vector<8x8xf32>, vector<8x8xf32> -> vector<8x8xf32>
    %cst_84 = arith.constant 0.176776692 : f32
    %304 = vector.broadcast %cst_84 : f32 to vector<8x8xf32>
    %305 = arith.mulf %303, %304 : vector<8x8xf32>
    %306 = arith.mulf %297, %297 : vector<8x8xf32>
    %307 = tpu.concatenate %306, %298 in 1 : vector<8x8xf32>, vector<8x8xf32> -> vector<8x16xf32>
    %308 = arith.mulf %299, %299 : vector<8x8xf32>
    %309 = arith.addf %308, %300 : vector<8x8xf32>
    %310 = tpu.concatenate %300, %309 in 1 : vector<8x8xf32>, vector<8x8xf32> -> vector<8x16xf32>
    %cst_85 = arith.constant dense<0.000000e+00> : vector<8x8xf32>
    %311 = tpu.matmul %307, %310, %cst_85 {dimension_numbers = #tpu.dot_dimension_numbers<[1], [1], [0], [0], [0, 0, 1, 0], [], []>} : vector<8x16xf32>, vector<8x16xf32>, vector<8x8xf32> -> vector<8x8xf32>
    %cst_86 = arith.constant 3.125000e-02 : f32
    %312 = vector.broadcast %cst_86 : f32 to vector<8x8xf32>
    %313 = arith.mulf %311, %312 : vector<8x8xf32>
    %cst_87 = arith.constant dense<0xFF800000> : vector<8xf32>
    %314 = vector.multi_reduction <maximumf>, %305, %cst_87 [1] : vector<8x8xf32> to vector<8xf32>
    %315 = vector.shape_cast %314 : vector<8xf32> to vector<8x1xf32>
    %316 = vector.broadcast %315 : vector<8x1xf32> to vector<8x8xf32>
    %317 = arith.subf %305, %316 : vector<8x8xf32>
    %318 = math.exp %317 : vector<8x8xf32>
    %cst_88 = arith.constant dense<0.000000e+00> : vector<8xf32>
    %319 = vector.multi_reduction <add>, %318, %cst_88 [1] : vector<8x8xf32> to vector<8xf32>
    %320 = vector.shape_cast %319 : vector<8xf32> to vector<8x1xf32>
    %321 = tpu.reciprocal %320 {approx = true} : vector<8x1xf32> -> vector<8x1xf32>
    %322 = vector.broadcast %321 : vector<8x1xf32> to vector<8x8xf32>
    %323 = arith.mulf %318, %322 : vector<8x8xf32>
    %324 = arith.mulf %323, %323 : vector<8x8xf32>
    %325 = arith.mulf %324, %313 : vector<8x8xf32>
    %cst_89 = arith.constant dense<0.000000e+00> : vector<8xf32>
    %326 = vector.multi_reduction <add>, %325, %cst_89 [1] : vector<8x8xf32> to vector<8xf32>
    %327 = vector.shape_cast %326 : vector<8xf32> to vector<8x1xf32>
    %328 = arith.mulf %323, %323 : vector<8x8xf32>
    %cst_90 = arith.constant 2.000000e+00 : f32
    %329 = vector.broadcast %cst_90 : f32 to vector<8x8xf32>
    %330 = arith.mulf %329, %323 : vector<8x8xf32>
    %cst_91 = arith.constant 1.000000e+00 : f32
    %331 = vector.broadcast %cst_91 : f32 to vector<8x8xf32>
    %332 = arith.subf %331, %330 : vector<8x8xf32>
    %333 = arith.mulf %332, %313 : vector<8x8xf32>
    %334 = vector.broadcast %327 : vector<8x1xf32> to vector<8x8xf32>
    %335 = arith.addf %333, %334 : vector<8x8xf32>
    %336 = arith.mulf %328, %335 : vector<8x8xf32>
    %cst_92 = arith.constant 0.000000e+00 : f32
    %337 = vector.broadcast %cst_92 : f32 to vector<8x8xf32>
    %338 = arith.maximumf %336, %337 : vector<8x8xf32>
    %cst_93 = arith.constant dense<0.000000e+00> : vector<8x8xf32>
    %339 = tpu.matmul %323, %301, %cst_93 {dimension_numbers = #tpu.dot_dimension_numbers<[1], [0], [0], [1], [0, 0, 1, 1], [], []>} : vector<8x8xf32>, vector<8x8xf32>, vector<8x8xf32> -> vector<8x8xf32>
    %340 = arith.mulf %323, %323 : vector<8x8xf32>
    %341 = tpu.concatenate %340, %338 in 1 : vector<8x8xf32>, vector<8x8xf32> -> vector<8x16xf32>
    %342 = arith.mulf %301, %301 : vector<8x8xf32>
    %343 = arith.addf %342, %302 : vector<8x8xf32>
    %344 = tpu.concatenate %302, %343 in 0 : vector<8x8xf32>, vector<8x8xf32> -> vector<16x8xf32>
    %cst_94 = arith.constant dense<0.000000e+00> : vector<8x8xf32>
    %345 = tpu.matmul %341, %344, %cst_94 {dimension_numbers = #tpu.dot_dimension_numbers<[1], [0], [0], [1], [0, 0, 1, 1], [], []>} : vector<8x16xf32>, vector<16x8xf32>, vector<8x8xf32> -> vector<8x8xf32>
    %346 = vector.extract_strided_slice %246 {offsets = [0, 16], sizes = [8, 8], strides = [1, 1]} : vector<8x96xf32> to vector<8x8xf32>
    %347 = vector.extract_strided_slice %247 {offsets = [0, 16], sizes = [8, 8], strides = [1, 1]} : vector<8x96xf32> to vector<8x8xf32>
    %348 = vector.extract_strided_slice %246 {offsets = [0, 48], sizes = [8, 8], strides = [1, 1]} : vector<8x96xf32> to vector<8x8xf32>
    %349 = vector.extract_strided_slice %247 {offsets = [0, 48], sizes = [8, 8], strides = [1, 1]} : vector<8x96xf32> to vector<8x8xf32>
    %350 = vector.extract_strided_slice %246 {offsets = [0, 80], sizes = [8, 8], strides = [1, 1]} : vector<8x96xf32> to vector<8x8xf32>
    %351 = vector.extract_strided_slice %247 {offsets = [0, 80], sizes = [8, 8], strides = [1, 1]} : vector<8x96xf32> to vector<8x8xf32>
    %cst_95 = arith.constant dense<0.000000e+00> : vector<8x8xf32>
    %352 = tpu.matmul %346, %348, %cst_95 {dimension_numbers = #tpu.dot_dimension_numbers<[1], [1], [0], [0], [0, 0, 1, 0], [], []>} : vector<8x8xf32>, vector<8x8xf32>, vector<8x8xf32> -> vector<8x8xf32>
    %cst_96 = arith.constant 0.176776692 : f32
    %353 = vector.broadcast %cst_96 : f32 to vector<8x8xf32>
    %354 = arith.mulf %352, %353 : vector<8x8xf32>
    %355 = arith.mulf %346, %346 : vector<8x8xf32>
    %356 = tpu.concatenate %355, %347 in 1 : vector<8x8xf32>, vector<8x8xf32> -> vector<8x16xf32>
    %357 = arith.mulf %348, %348 : vector<8x8xf32>
    %358 = arith.addf %357, %349 : vector<8x8xf32>
    %359 = tpu.concatenate %349, %358 in 1 : vector<8x8xf32>, vector<8x8xf32> -> vector<8x16xf32>
    %cst_97 = arith.constant dense<0.000000e+00> : vector<8x8xf32>
    %360 = tpu.matmul %356, %359, %cst_97 {dimension_numbers = #tpu.dot_dimension_numbers<[1], [1], [0], [0], [0, 0, 1, 0], [], []>} : vector<8x16xf32>, vector<8x16xf32>, vector<8x8xf32> -> vector<8x8xf32>
    %cst_98 = arith.constant 3.125000e-02 : f32
    %361 = vector.broadcast %cst_98 : f32 to vector<8x8xf32>
    %362 = arith.mulf %360, %361 : vector<8x8xf32>
    %cst_99 = arith.constant dense<0xFF800000> : vector<8xf32>
    %363 = vector.multi_reduction <maximumf>, %354, %cst_99 [1] : vector<8x8xf32> to vector<8xf32>
    %364 = vector.shape_cast %363 : vector<8xf32> to vector<8x1xf32>
    %365 = vector.broadcast %364 : vector<8x1xf32> to vector<8x8xf32>
    %366 = arith.subf %354, %365 : vector<8x8xf32>
    %367 = math.exp %366 : vector<8x8xf32>
    %cst_100 = arith.constant dense<0.000000e+00> : vector<8xf32>
    %368 = vector.multi_reduction <add>, %367, %cst_100 [1] : vector<8x8xf32> to vector<8xf32>
    %369 = vector.shape_cast %368 : vector<8xf32> to vector<8x1xf32>
    %370 = tpu.reciprocal %369 {approx = true} : vector<8x1xf32> -> vector<8x1xf32>
    %371 = vector.broadcast %370 : vector<8x1xf32> to vector<8x8xf32>
    %372 = arith.mulf %367, %371 : vector<8x8xf32>
    %373 = arith.mulf %372, %372 : vector<8x8xf32>
    %374 = arith.mulf %373, %362 : vector<8x8xf32>
    %cst_101 = arith.constant dense<0.000000e+00> : vector<8xf32>
    %375 = vector.multi_reduction <add>, %374, %cst_101 [1] : vector<8x8xf32> to vector<8xf32>
    %376 = vector.shape_cast %375 : vector<8xf32> to vector<8x1xf32>
    %377 = arith.mulf %372, %372 : vector<8x8xf32>
    %cst_102 = arith.constant 2.000000e+00 : f32
    %378 = vector.broadcast %cst_102 : f32 to vector<8x8xf32>
    %379 = arith.mulf %378, %372 : vector<8x8xf32>
    %cst_103 = arith.constant 1.000000e+00 : f32
    %380 = vector.broadcast %cst_103 : f32 to vector<8x8xf32>
    %381 = arith.subf %380, %379 : vector<8x8xf32>
    %382 = arith.mulf %381, %362 : vector<8x8xf32>
    %383 = vector.broadcast %376 : vector<8x1xf32> to vector<8x8xf32>
    %384 = arith.addf %382, %383 : vector<8x8xf32>
    %385 = arith.mulf %377, %384 : vector<8x8xf32>
    %cst_104 = arith.constant 0.000000e+00 : f32
    %386 = vector.broadcast %cst_104 : f32 to vector<8x8xf32>
    %387 = arith.maximumf %385, %386 : vector<8x8xf32>
    %cst_105 = arith.constant dense<0.000000e+00> : vector<8x8xf32>
    %388 = tpu.matmul %372, %350, %cst_105 {dimension_numbers = #tpu.dot_dimension_numbers<[1], [0], [0], [1], [0, 0, 1, 1], [], []>} : vector<8x8xf32>, vector<8x8xf32>, vector<8x8xf32> -> vector<8x8xf32>
    %389 = arith.mulf %372, %372 : vector<8x8xf32>
    %390 = tpu.concatenate %389, %387 in 1 : vector<8x8xf32>, vector<8x8xf32> -> vector<8x16xf32>
    %391 = arith.mulf %350, %350 : vector<8x8xf32>
    %392 = arith.addf %391, %351 : vector<8x8xf32>
    %393 = tpu.concatenate %351, %392 in 0 : vector<8x8xf32>, vector<8x8xf32> -> vector<16x8xf32>
    %cst_106 = arith.constant dense<0.000000e+00> : vector<8x8xf32>
    %394 = tpu.matmul %390, %393, %cst_106 {dimension_numbers = #tpu.dot_dimension_numbers<[1], [0], [0], [1], [0, 0, 1, 1], [], []>} : vector<8x16xf32>, vector<16x8xf32>, vector<8x8xf32> -> vector<8x8xf32>
    %395 = vector.extract_strided_slice %246 {offsets = [0, 24], sizes = [8, 8], strides = [1, 1]} : vector<8x96xf32> to vector<8x8xf32>
    %396 = vector.extract_strided_slice %247 {offsets = [0, 24], sizes = [8, 8], strides = [1, 1]} : vector<8x96xf32> to vector<8x8xf32>
    %397 = vector.extract_strided_slice %246 {offsets = [0, 56], sizes = [8, 8], strides = [1, 1]} : vector<8x96xf32> to vector<8x8xf32>
    %398 = vector.extract_strided_slice %247 {offsets = [0, 56], sizes = [8, 8], strides = [1, 1]} : vector<8x96xf32> to vector<8x8xf32>
    %399 = vector.extract_strided_slice %246 {offsets = [0, 88], sizes = [8, 8], strides = [1, 1]} : vector<8x96xf32> to vector<8x8xf32>
    %400 = vector.extract_strided_slice %247 {offsets = [0, 88], sizes = [8, 8], strides = [1, 1]} : vector<8x96xf32> to vector<8x8xf32>
    %cst_107 = arith.constant dense<0.000000e+00> : vector<8x8xf32>
    %401 = tpu.matmul %395, %397, %cst_107 {dimension_numbers = #tpu.dot_dimension_numbers<[1], [1], [0], [0], [0, 0, 1, 0], [], []>} : vector<8x8xf32>, vector<8x8xf32>, vector<8x8xf32> -> vector<8x8xf32>
    %cst_108 = arith.constant 0.176776692 : f32
    %402 = vector.broadcast %cst_108 : f32 to vector<8x8xf32>
    %403 = arith.mulf %401, %402 : vector<8x8xf32>
    %404 = arith.mulf %395, %395 : vector<8x8xf32>
    %405 = tpu.concatenate %404, %396 in 1 : vector<8x8xf32>, vector<8x8xf32> -> vector<8x16xf32>
    %406 = arith.mulf %397, %397 : vector<8x8xf32>
    %407 = arith.addf %406, %398 : vector<8x8xf32>
    %408 = tpu.concatenate %398, %407 in 1 : vector<8x8xf32>, vector<8x8xf32> -> vector<8x16xf32>
    %cst_109 = arith.constant dense<0.000000e+00> : vector<8x8xf32>
    %409 = tpu.matmul %405, %408, %cst_109 {dimension_numbers = #tpu.dot_dimension_numbers<[1], [1], [0], [0], [0, 0, 1, 0], [], []>} : vector<8x16xf32>, vector<8x16xf32>, vector<8x8xf32> -> vector<8x8xf32>
    %cst_110 = arith.constant 3.125000e-02 : f32
    %410 = vector.broadcast %cst_110 : f32 to vector<8x8xf32>
    %411 = arith.mulf %409, %410 : vector<8x8xf32>
    %cst_111 = arith.constant dense<0xFF800000> : vector<8xf32>
    %412 = vector.multi_reduction <maximumf>, %403, %cst_111 [1] : vector<8x8xf32> to vector<8xf32>
    %413 = vector.shape_cast %412 : vector<8xf32> to vector<8x1xf32>
    %414 = vector.broadcast %413 : vector<8x1xf32> to vector<8x8xf32>
    %415 = arith.subf %403, %414 : vector<8x8xf32>
    %416 = math.exp %415 : vector<8x8xf32>
    %cst_112 = arith.constant dense<0.000000e+00> : vector<8xf32>
    %417 = vector.multi_reduction <add>, %416, %cst_112 [1] : vector<8x8xf32> to vector<8xf32>
    %418 = vector.shape_cast %417 : vector<8xf32> to vector<8x1xf32>
    %419 = tpu.reciprocal %418 {approx = true} : vector<8x1xf32> -> vector<8x1xf32>
    %420 = vector.broadcast %419 : vector<8x1xf32> to vector<8x8xf32>
    %421 = arith.mulf %416, %420 : vector<8x8xf32>
    %422 = arith.mulf %421, %421 : vector<8x8xf32>
    %423 = arith.mulf %422, %411 : vector<8x8xf32>
    %cst_113 = arith.constant dense<0.000000e+00> : vector<8xf32>
    %424 = vector.multi_reduction <add>, %423, %cst_113 [1] : vector<8x8xf32> to vector<8xf32>
    %425 = vector.shape_cast %424 : vector<8xf32> to vector<8x1xf32>
    %426 = arith.mulf %421, %421 : vector<8x8xf32>
    %cst_114 = arith.constant 2.000000e+00 : f32
    %427 = vector.broadcast %cst_114 : f32 to vector<8x8xf32>
    %428 = arith.mulf %427, %421 : vector<8x8xf32>
    %cst_115 = arith.constant 1.000000e+00 : f32
    %429 = vector.broadcast %cst_115 : f32 to vector<8x8xf32>
    %430 = arith.subf %429, %428 : vector<8x8xf32>
    %431 = arith.mulf %430, %411 : vector<8x8xf32>
    %432 = vector.broadcast %425 : vector<8x1xf32> to vector<8x8xf32>
    %433 = arith.addf %431, %432 : vector<8x8xf32>
    %434 = arith.mulf %426, %433 : vector<8x8xf32>
    %cst_116 = arith.constant 0.000000e+00 : f32
    %435 = vector.broadcast %cst_116 : f32 to vector<8x8xf32>
    %436 = arith.maximumf %434, %435 : vector<8x8xf32>
    %cst_117 = arith.constant dense<0.000000e+00> : vector<8x8xf32>
    %437 = tpu.matmul %421, %399, %cst_117 {dimension_numbers = #tpu.dot_dimension_numbers<[1], [0], [0], [1], [0, 0, 1, 1], [], []>} : vector<8x8xf32>, vector<8x8xf32>, vector<8x8xf32> -> vector<8x8xf32>
    %438 = arith.mulf %421, %421 : vector<8x8xf32>
    %439 = tpu.concatenate %438, %436 in 1 : vector<8x8xf32>, vector<8x8xf32> -> vector<8x16xf32>
    %440 = arith.mulf %399, %399 : vector<8x8xf32>
    %441 = arith.addf %440, %400 : vector<8x8xf32>
    %442 = tpu.concatenate %400, %441 in 0 : vector<8x8xf32>, vector<8x8xf32> -> vector<16x8xf32>
    %cst_118 = arith.constant dense<0.000000e+00> : vector<8x8xf32>
    %443 = tpu.matmul %439, %442, %cst_118 {dimension_numbers = #tpu.dot_dimension_numbers<[1], [0], [0], [1], [0, 0, 1, 1], [], []>} : vector<8x16xf32>, vector<16x8xf32>, vector<8x8xf32> -> vector<8x8xf32>
    %444 = tpu.concatenate %290, %339, %388, %437 in 1 : vector<8x8xf32>, vector<8x8xf32>, vector<8x8xf32>, vector<8x8xf32> -> vector<8x32xf32>
    %445 = tpu.concatenate %296, %345, %394, %443 in 1 : vector<8x8xf32>, vector<8x8xf32>, vector<8x8xf32>, vector<8x8xf32> -> vector<8x32xf32>
    %446 = tpu.concatenate %244, %444 in 0 : vector<8x32xf32>, vector<8x32xf32> -> vector<16x32xf32>
    %447 = tpu.concatenate %245, %445 in 0 : vector<8x32xf32>, vector<8x32xf32> -> vector<16x32xf32>
    %448 = arith.addf %26, %446 : vector<16x32xf32>
    %449 = arith.addf %37, %447 : vector<16x32xf32>
    %450 = vector.extract_strided_slice %448 {offsets = [0, 0], sizes = [8, 32], strides = [1, 1]} : vector<16x32xf32> to vector<8x32xf32>
    %cst_119 = arith.constant dense<0.000000e+00> : vector<32xf32>
    %451 = vector.multi_reduction <add>, %450, %cst_119 [0] : vector<8x32xf32> to vector<32xf32>
    %452 = vector.shape_cast %451 : vector<32xf32> to vector<1x32xf32>
    %cst_120 = arith.constant 8.000000e+00 : f32
    %453 = vector.broadcast %cst_120 : f32 to vector<1x32xf32>
    %454 = arith.divf %452, %453 : vector<1x32xf32>
    %455 = vector.extract_strided_slice %449 {offsets = [0, 0], sizes = [8, 32], strides = [1, 1]} : vector<16x32xf32> to vector<8x32xf32>
    %cst_121 = arith.constant dense<0.000000e+00> : vector<32xf32>
    %456 = vector.multi_reduction <add>, %455, %cst_121 [0] : vector<8x32xf32> to vector<32xf32>
    %457 = vector.shape_cast %456 : vector<32xf32> to vector<1x32xf32>
    %cst_122 = arith.constant 8.000000e+00 : f32
    %458 = vector.broadcast %cst_122 : f32 to vector<1x32xf32>
    %459 = arith.divf %457, %458 : vector<1x32xf32>
    %cst_123 = arith.constant 1.250000e-01 : f32
    %460 = vector.broadcast %cst_123 : f32 to vector<1x32xf32>
    %461 = arith.mulf %459, %460 : vector<1x32xf32>
    %462 = vector.extract_strided_slice %448 {offsets = [8, 0], sizes = [8, 32], strides = [1, 1]} : vector<16x32xf32> to vector<8x32xf32>
    %cst_124 = arith.constant dense<0.000000e+00> : vector<32xf32>
    %463 = vector.multi_reduction <add>, %462, %cst_124 [0] : vector<8x32xf32> to vector<32xf32>
    %464 = vector.shape_cast %463 : vector<32xf32> to vector<1x32xf32>
    %cst_125 = arith.constant 8.000000e+00 : f32
    %465 = vector.broadcast %cst_125 : f32 to vector<1x32xf32>
    %466 = arith.divf %464, %465 : vector<1x32xf32>
    %467 = vector.extract_strided_slice %449 {offsets = [8, 0], sizes = [8, 32], strides = [1, 1]} : vector<16x32xf32> to vector<8x32xf32>
    %cst_126 = arith.constant dense<0.000000e+00> : vector<32xf32>
    %468 = vector.multi_reduction <add>, %467, %cst_126 [0] : vector<8x32xf32> to vector<32xf32>
    %469 = vector.shape_cast %468 : vector<32xf32> to vector<1x32xf32>
    %cst_127 = arith.constant 8.000000e+00 : f32
    %470 = vector.broadcast %cst_127 : f32 to vector<1x32xf32>
    %471 = arith.divf %469, %470 : vector<1x32xf32>
    %cst_128 = arith.constant 1.250000e-01 : f32
    %472 = vector.broadcast %cst_128 : f32 to vector<1x32xf32>
    %473 = arith.mulf %471, %472 : vector<1x32xf32>
    %474 = tpu.concatenate %454, %466 in 0 : vector<1x32xf32>, vector<1x32xf32> -> vector<2x32xf32>
    %c0_129 = arith.constant 0 : index
    %c0_130 = arith.constant 0 : index
    %475 = vector.load %arg10[%c0_129, %c0_130] : memref<2x32xf32, #tpu.memory_space<vmem>>, vector<2x32xf32>
    tpu.vector_store %arg10[%c0_129, %c0_130], %474 {strides = array<i32>} : memref<2x32xf32, #tpu.memory_space<vmem>>, vector<2x32xf32>,
    %476 = tpu.concatenate %461, %473 in 0 : vector<1x32xf32>, vector<1x32xf32> -> vector<2x32xf32>
    %c0_131 = arith.constant 0 : index
    %c0_132 = arith.constant 0 : index
    %477 = vector.load %arg11[%c0_131, %c0_132] : memref<2x32xf32, #tpu.memory_space<vmem>>, vector<2x32xf32>
    tpu.vector_store %arg11[%c0_131, %c0_132], %476 {strides = array<i32>} : memref<2x32xf32, #tpu.memory_space<vmem>>, vector<2x32xf32>,
    return
  }
  func.func @transform_0(%arg0: i32) -> (i32, i32) {
    %c0_i32 = arith.constant 0 : i32
    %c0_i32_0 = arith.constant 0 : i32
    return %arg0, %c0_i32 : i32, i32
  }
  func.func @transform_1(%arg0: i32) -> (i32, i32) {
    %c0_i32 = arith.constant 0 : i32
    %c0_i32_0 = arith.constant 0 : i32
    return %arg0, %c0_i32 : i32, i32
  }
  func.func @transform_2(%arg0: i32) -> (i32, i32) {
    %c0_i32 = arith.constant 0 : i32
    %c0_i32_0 = arith.constant 0 : i32
    %c0_i32_1 = arith.constant 0 : i32
    return %c0_i32, %c0_i32_0 : i32, i32
  }
  func.func @transform_3(%arg0: i32) -> (i32, i32) {
    %c0_i32 = arith.constant 0 : i32
    %c0_i32_0 = arith.constant 0 : i32
    %c0_i32_1 = arith.constant 0 : i32
    return %c0_i32, %c0_i32_0 : i32, i32
  }
  func.func @transform_4(%arg0: i32) -> (i32, i32) {
    %c0_i32 = arith.constant 0 : i32
    %c0_i32_0 = arith.constant 0 : i32
    %c0_i32_1 = arith.constant 0 : i32
    return %c0_i32, %c0_i32_0 : i32, i32
  }
  func.func @transform_5(%arg0: i32) -> (i32, i32) {
    %c0_i32 = arith.constant 0 : i32
    %c0_i32_0 = arith.constant 0 : i32
    %c0_i32_1 = arith.constant 0 : i32
    return %c0_i32, %c0_i32_0 : i32, i32
  }
  func.func @transform_6(%arg0: i32) -> (i32, i32) {
    %c0_i32 = arith.constant 0 : i32
    %c0_i32_0 = arith.constant 0 : i32
    %c0_i32_1 = arith.constant 0 : i32
    return %c0_i32, %c0_i32_0 : i32, i32
  }
  func.func @transform_7(%arg0: i32) -> (i32, i32) {
    %c0_i32 = arith.constant 0 : i32
    %c0_i32_0 = arith.constant 0 : i32
    %c0_i32_1 = arith.constant 0 : i32
    return %c0_i32, %c0_i32_0 : i32, i32
  }
  func.func @transform_8(%arg0: i32) -> (i32, i32) {
    %c0_i32 = arith.constant 0 : i32
    %c0_i32_0 = arith.constant 0 : i32
    %c0_i32_1 = arith.constant 0 : i32
    return %c0_i32, %c0_i32_0 : i32, i32
  }
  func.func @transform_9(%arg0: i32) -> (i32, i32) {
    %c0_i32 = arith.constant 0 : i32
    %c0_i32_0 = arith.constant 0 : i32
    return %arg0, %c0_i32 : i32, i32
  }
  func.func @transform_10(%arg0: i32) -> (i32, i32) {
    %c0_i32 = arith.constant 0 : i32
    %c0_i32_0 = arith.constant 0 : i32
    return %arg0, %c0_i32 : i32, i32
  }
}

module attributes {stable_mosaic.version = 11 : i64} {
  func.func @_classifier_kernel(%arg0: i32, %arg1: memref<2x32xf32, #tpu.memory_space<vmem>>, %arg2: memref<2x32xf32, #tpu.memory_space<vmem>>, %arg3: memref<32x16xbf16, #tpu.memory_space<vmem>>, %arg4: memref<64x16xbf16, #tpu.memory_space<vmem>>, %arg5: memref<1x16xf32, #tpu.memory_space<vmem>>, %arg6: memref<1x16xf32, #tpu.memory_space<vmem>>, %arg7: memref<16x3xbf16, #tpu.memory_space<vmem>>, %arg8: memref<32x3xbf16, #tpu.memory_space<vmem>>, %arg9: memref<1x3xf32, #tpu.memory_space<vmem>>, %arg10: memref<1x3xf32, #tpu.memory_space<vmem>>, %arg11: memref<2x3xf32, #tpu.memory_space<vmem>>, %arg12: memref<2x3xf32, #tpu.memory_space<vmem>>) attributes {dimension_semantics = [#tpu.dimension_semantics<arbitrary>], iteration_bounds = array<i64: 1>, scalar_prefetch = 0 : i64, scratch_operands = 0 : i64, tpu.core_type = #tpu.core_type<tc>, window_params = [{pipeline_mode = #tpu.pipeline_mode<synchronous>, transform_indices = @transform_0, window_bounds = array<i64: 2, 32>}, {pipeline_mode = #tpu.pipeline_mode<synchronous>, transform_indices = @transform_1, window_bounds = array<i64: 2, 32>}, {pipeline_mode = #tpu.pipeline_mode<synchronous>, transform_indices = @transform_2, window_bounds = array<i64: 32, 16>}, {pipeline_mode = #tpu.pipeline_mode<synchronous>, transform_indices = @transform_3, window_bounds = array<i64: 64, 16>}, {pipeline_mode = #tpu.pipeline_mode<synchronous>, transform_indices = @transform_4, window_bounds = array<i64: 1, 16>}, {pipeline_mode = #tpu.pipeline_mode<synchronous>, transform_indices = @transform_5, window_bounds = array<i64: 1, 16>}, {pipeline_mode = #tpu.pipeline_mode<synchronous>, transform_indices = @transform_6, window_bounds = array<i64: 16, 3>}, {pipeline_mode = #tpu.pipeline_mode<synchronous>, transform_indices = @transform_7, window_bounds = array<i64: 32, 3>}, {pipeline_mode = #tpu.pipeline_mode<synchronous>, transform_indices = @transform_8, window_bounds = array<i64: 1, 3>}, {pipeline_mode = #tpu.pipeline_mode<synchronous>, transform_indices = @transform_9, window_bounds = array<i64: 1, 3>}, {pipeline_mode = #tpu.pipeline_mode<synchronous>, transform_indices = @transform_10, window_bounds = array<i64: 2, 3>}, {pipeline_mode = #tpu.pipeline_mode<synchronous>, transform_indices = @transform_11, window_bounds = array<i64: 2, 3>}]} {
    %c0 = arith.constant 0 : index
    %c0_0 = arith.constant 0 : index
    %0 = vector.load %arg1[%c0, %c0_0] : memref<2x32xf32, #tpu.memory_space<vmem>>, vector<2x32xf32>
    %c0_1 = arith.constant 0 : index
    %c0_2 = arith.constant 0 : index
    %1 = vector.load %arg2[%c0_1, %c0_2] : memref<2x32xf32, #tpu.memory_space<vmem>>, vector<2x32xf32>
    %c0_3 = arith.constant 0 : index
    %c0_4 = arith.constant 0 : index
    %2 = vector.load %arg3[%c0_3, %c0_4] : memref<32x16xbf16, #tpu.memory_space<vmem>>, vector<32x16xbf16>
    %c0_5 = arith.constant 0 : index
    %c0_6 = arith.constant 0 : index
    %3 = vector.load %arg4[%c0_5, %c0_6] : memref<64x16xbf16, #tpu.memory_space<vmem>>, vector<64x16xbf16>
    %c0_7 = arith.constant 0 : index
    %c0_8 = arith.constant 0 : index
    %4 = vector.load %arg5[%c0_7, %c0_8] : memref<1x16xf32, #tpu.memory_space<vmem>>, vector<1x16xf32>
    %c0_9 = arith.constant 0 : index
    %c0_10 = arith.constant 0 : index
    %5 = vector.load %arg6[%c0_9, %c0_10] : memref<1x16xf32, #tpu.memory_space<vmem>>, vector<1x16xf32>
    %6 = arith.truncf %0 : vector<2x32xf32> to vector<2x32xbf16>
    %cst = arith.constant dense<0.000000e+00> : vector<2x16xf32>
    %7 = tpu.matmul %6, %2, %cst {dimension_numbers = #tpu.dot_dimension_numbers<[1], [0], [0], [1], [0, 0, 1, 1], [], []>} : vector<2x32xbf16>, vector<32x16xbf16>, vector<2x16xf32> -> vector<2x16xf32>
    %8 = arith.mulf %0, %0 : vector<2x32xf32>
    %9 = tpu.concatenate %8, %1 in 1 : vector<2x32xf32>, vector<2x32xf32> -> vector<2x64xf32>
    %10 = arith.truncf %9 : vector<2x64xf32> to vector<2x64xbf16>
    %cst_11 = arith.constant dense<0.000000e+00> : vector<2x16xf32>
    %11 = tpu.matmul %10, %3, %cst_11 {dimension_numbers = #tpu.dot_dimension_numbers<[1], [0], [0], [1], [0, 0, 1, 1], [], []>} : vector<2x64xbf16>, vector<64x16xbf16>, vector<2x16xf32> -> vector<2x16xf32>
    %12 = vector.broadcast %4 : vector<1x16xf32> to vector<2x16xf32>
    %13 = arith.addf %7, %12 : vector<2x16xf32>
    %14 = vector.broadcast %5 : vector<1x16xf32> to vector<2x16xf32>
    %15 = arith.addf %11, %14 : vector<2x16xf32>
    %cst_12 = arith.constant 0.000000e+00 : f32
    %16 = vector.broadcast %cst_12 : f32 to vector<2x16xf32>
    %17 = arith.cmpf ogt, %13, %16 : vector<2x16xf32>
    %18 = arith.extui %17 : vector<2x16xi1> to vector<2x16xi32>
    %19 = arith.sitofp %18 : vector<2x16xi32> to vector<2x16xf32>
    %20 = arith.mulf %13, %19 : vector<2x16xf32>
    %21 = arith.mulf %15, %19 : vector<2x16xf32>
    %c0_13 = arith.constant 0 : index
    %c0_14 = arith.constant 0 : index
    %22 = vector.load %arg7[%c0_13, %c0_14] : memref<16x3xbf16, #tpu.memory_space<vmem>>, vector<16x3xbf16>
    %c0_15 = arith.constant 0 : index
    %c0_16 = arith.constant 0 : index
    %23 = vector.load %arg8[%c0_15, %c0_16] : memref<32x3xbf16, #tpu.memory_space<vmem>>, vector<32x3xbf16>
    %c0_17 = arith.constant 0 : index
    %c0_18 = arith.constant 0 : index
    %24 = vector.load %arg9[%c0_17, %c0_18] : memref<1x3xf32, #tpu.memory_space<vmem>>, vector<1x3xf32>
    %c0_19 = arith.constant 0 : index
    %c0_20 = arith.constant 0 : index
    %25 = vector.load %arg10[%c0_19, %c0_20] : memref<1x3xf32, #tpu.memory_space<vmem>>, vector<1x3xf32>
    %26 = arith.truncf %20 : vector<2x16xf32> to vector<2x16xbf16>
    %cst_21 = arith.constant dense<0.000000e+00> : vector<2x3xf32>
    %27 = tpu.matmul %26, %22, %cst_21 {dimension_numbers = #tpu.dot_dimension_numbers<[1], [0], [0], [1], [0, 0, 1, 1], [], []>} : vector<2x16xbf16>, vector<16x3xbf16>, vector<2x3xf32> -> vector<2x3xf32>
    %28 = arith.mulf %20, %20 : vector<2x16xf32>
    %29 = tpu.concatenate %28, %21 in 1 : vector<2x16xf32>, vector<2x16xf32> -> vector<2x32xf32>
    %30 = arith.truncf %29 : vector<2x32xf32> to vector<2x32xbf16>
    %cst_22 = arith.constant dense<0.000000e+00> : vector<2x3xf32>
    %31 = tpu.matmul %30, %23, %cst_22 {dimension_numbers = #tpu.dot_dimension_numbers<[1], [0], [0], [1], [0, 0, 1, 1], [], []>} : vector<2x32xbf16>, vector<32x3xbf16>, vector<2x3xf32> -> vector<2x3xf32>
    %32 = vector.broadcast %24 : vector<1x3xf32> to vector<2x3xf32>
    %33 = arith.addf %27, %32 : vector<2x3xf32>
    %34 = vector.broadcast %25 : vector<1x3xf32> to vector<2x3xf32>
    %35 = arith.addf %31, %34 : vector<2x3xf32>
    %c0_23 = arith.constant 0 : index
    %c0_24 = arith.constant 0 : index
    %36 = vector.load %arg11[%c0_23, %c0_24] : memref<2x3xf32, #tpu.memory_space<vmem>>, vector<2x3xf32>
    tpu.vector_store %arg11[%c0_23, %c0_24], %33 {strides = array<i32>} : memref<2x3xf32, #tpu.memory_space<vmem>>, vector<2x3xf32>,
    %c0_25 = arith.constant 0 : index
    %c0_26 = arith.constant 0 : index
    %37 = vector.load %arg12[%c0_25, %c0_26] : memref<2x3xf32, #tpu.memory_space<vmem>>, vector<2x3xf32>
    tpu.vector_store %arg12[%c0_25, %c0_26], %35 {strides = array<i32>} : memref<2x3xf32, #tpu.memory_space<vmem>>, vector<2x3xf32>,
    return
  }
  func.func @transform_0(%arg0: i32) -> (i32, i32) {
    %c0_i32 = arith.constant 0 : i32
    %c0_i32_0 = arith.constant 0 : i32
    %c0_i32_1 = arith.constant 0 : i32
    return %c0_i32, %c0_i32_0 : i32, i32
  }
  func.func @transform_1(%arg0: i32) -> (i32, i32) {
    %c0_i32 = arith.constant 0 : i32
    %c0_i32_0 = arith.constant 0 : i32
    %c0_i32_1 = arith.constant 0 : i32
    return %c0_i32, %c0_i32_0 : i32, i32
  }
  func.func @transform_2(%arg0: i32) -> (i32, i32) {
    %c0_i32 = arith.constant 0 : i32
    %c0_i32_0 = arith.constant 0 : i32
    %c0_i32_1 = arith.constant 0 : i32
    return %c0_i32, %c0_i32_0 : i32, i32
  }
  func.func @transform_3(%arg0: i32) -> (i32, i32) {
    %c0_i32 = arith.constant 0 : i32
    %c0_i32_0 = arith.constant 0 : i32
    %c0_i32_1 = arith.constant 0 : i32
    return %c0_i32, %c0_i32_0 : i32, i32
  }
  func.func @transform_4(%arg0: i32) -> (i32, i32) {
    %c0_i32 = arith.constant 0 : i32
    %c0_i32_0 = arith.constant 0 : i32
    %c0_i32_1 = arith.constant 0 : i32
    return %c0_i32, %c0_i32_0 : i32, i32
  }
  func.func @transform_5(%arg0: i32) -> (i32, i32) {
    %c0_i32 = arith.constant 0 : i32
    %c0_i32_0 = arith.constant 0 : i32
    %c0_i32_1 = arith.constant 0 : i32
    return %c0_i32, %c0_i32_0 : i32, i32
  }
  func.func @transform_6(%arg0: i32) -> (i32, i32) {
    %c0_i32 = arith.constant 0 : i32
    %c0_i32_0 = arith.constant 0 : i32
    %c0_i32_1 = arith.constant 0 : i32
    return %c0_i32, %c0_i32_0 : i32, i32
  }
  func.func @transform_7(%arg0: i32) -> (i32, i32) {
    %c0_i32 = arith.constant 0 : i32
    %c0_i32_0 = arith.constant 0 : i32
    %c0_i32_1 = arith.constant 0 : i32
    return %c0_i32, %c0_i32_0 : i32, i32
  }
  func.func @transform_8(%arg0: i32) -> (i32, i32) {
    %c0_i32 = arith.constant 0 : i32
    %c0_i32_0 = arith.constant 0 : i32
    %c0_i32_1 = arith.constant 0 : i32
    return %c0_i32, %c0_i32_0 : i32, i32
  }
  func.func @transform_9(%arg0: i32) -> (i32, i32) {
    %c0_i32 = arith.constant 0 : i32
    %c0_i32_0 = arith.constant 0 : i32
    %c0_i32_1 = arith.constant 0 : i32
    return %c0_i32, %c0_i32_0 : i32, i32
  }
  func.func @transform_10(%arg0: i32) -> (i32, i32) {
    %c0_i32 = arith.constant 0 : i32
    %c0_i32_0 = arith.constant 0 : i32
    %c0_i32_1 = arith.constant 0 : i32
    return %c0_i32, %c0_i32_0 : i32, i32
  }
  func.func @transform_11(%arg0: i32) -> (i32, i32) {
    %c0_i32 = arith.constant 0 : i32
    %c0_i32_0 = arith.constant 0 : i32
    %c0_i32_1 = arith.constant 0 : i32
    return %c0_i32, %c0_i32_0 : i32, i32
  }
}

</mosaic_0001>

<llo_original>
// kernel: _lambda_.4
$region0: #{_lambda_.4}
  #allocation0 [shape = 'u32[]', space=smem, size = 0x4, offset = 0x4, fixed_abs, tag = 'smem constant byte address 0x4 - core index']
  #allocation1 [shape = 'u32[144,128]{1,0:T(1,128)}', space=vmem, size = 0x12000, scoped, tag = 'internal scratch']
  %s0 = inlined_call_operand.vmem [shape: f32[16,4], index: 0, kind: input, shape index: {}]
  %s1 = inlined_call_operand.vmem [shape: bf16[4,16], index: 1, kind: input, shape index: {}]
  %s2 = inlined_call_operand.vmem [shape: bf16[8,16], index: 2, kind: input, shape index: {}]
  %s3 = inlined_call_operand.vmem [shape: f32[1,16], index: 3, kind: input, shape index: {}]
  %s4 = inlined_call_operand.vmem [shape: f32[1,16], index: 4, kind: input, shape index: {}]
  %s5 = inlined_call_operand.vmem [shape: bf16[16,32], index: 5, kind: input, shape index: {}]
  %s6 = inlined_call_operand.vmem [shape: bf16[32,32], index: 6, kind: input, shape index: {}]
  %s7 = inlined_call_operand.vmem [shape: f32[1,32], index: 7, kind: input, shape index: {}]
  %s8 = inlined_call_operand.vmem [shape: f32[1,32], index: 8, kind: input, shape index: {}]
  %s9 = inlined_call_operand.vmem [shape: f32[16,32], index: 9, kind: input, shape index: {}]
  %s10 = inlined_call_operand.vmem [shape: f32[16,32], index: 10, kind: output, shape index: {0}]
  %s11 = inlined_call_operand.vmem [shape: f32[16,32], index: 11, kind: output, shape index: {1}]
  %12 = xla_tuple %s10, %s11
  %s13 = sld [smem:[#allocation0]]
  $region58: #{_lambda_.4} parent=0
    _
  %s15 = ssub.s32 1, %s13
  %s16 = scalar_select 0, %s15, %s13
  // Predicated region
  $region2: #{_lambda_.4} parent=0 // pred_check
    _
  $region3: #{_lambda_.4} parent=0 // pred_check_branch
    %18 = sbr.rel (0) target = $region5
  $region4: #{_lambda_.4} parent=0 // pred_region
    _
  $region5: #{_lambda_.4} parent=0 // pred_fallthru
    _
  // Predicated region
  $region6: #{_lambda_.4} parent=0 // pred_check
    _
  $region7: #{_lambda_.4} parent=0 // pred_check_branch
    %20 = sbr.rel (0) target = $region9
  $region8: #{_lambda_.4} parent=0 // pred_region
    _
  $region9: #{_lambda_.4} parent=0 // pred_fallthru
    _
  // Predicated region
  $region10: #{_lambda_.4} parent=0 // pred_check
    _
  $region11: #{_lambda_.4} parent=0 // pred_check_branch
    %22 = sbr.rel (0) target = $region13
  $region12: #{_lambda_.4} parent=0 // pred_region
    _
  $region13: #{_lambda_.4} parent=0 // pred_fallthru
    _
  // Predicated region
  $region14: #{_lambda_.4} parent=0 // pred_check
    _
  $region15: #{_lambda_.4} parent=0 // pred_check_branch
    %24 = sbr.rel (0) target = $region17
  $region16: #{_lambda_.4} parent=0 // pred_region
    _
  $region17: #{_lambda_.4} parent=0 // pred_fallthru
    _
  // Predicated region
  $region18: #{_lambda_.4} parent=0 // pred_check
    _
  $region19: #{_lambda_.4} parent=0 // pred_check_branch
    %26 = sbr.rel (0) target = $region21
  $region20: #{_lambda_.4} parent=0 // pred_region
    _
  $region21: #{_lambda_.4} parent=0 // pred_fallthru
    _
  // Predicated region
  $region22: #{_lambda_.4} parent=0 // pred_check
    _
  $region23: #{_lambda_.4} parent=0 // pred_check_branch
    %28 = sbr.rel (0) target = $region25
  $region24: #{_lambda_.4} parent=0 // pred_region
    _
  $region25: #{_lambda_.4} parent=0 // pred_fallthru
    _
  // Predicated region
  $region26: #{_lambda_.4} parent=0 // pred_check
    _
  $region27: #{_lambda_.4} parent=0 // pred_check_branch
    %30 = sbr.rel (0) target = $region29
  $region28: #{_lambda_.4} parent=0 // pred_region
    _
  $region29: #{_lambda_.4} parent=0 // pred_fallthru
    _
  // Predicated region
  $region30: #{_lambda_.4} parent=0 // pred_check
    _
  $region31: #{_lambda_.4} parent=0 // pred_check_branch
    %32 = sbr.rel (0) target = $region33
  $region32: #{_lambda_.4} parent=0 // pred_region
    _
  $region33: #{_lambda_.4} parent=0 // pred_fallthru
    _
  // Predicated region
  $region34: #{_lambda_.4} parent=0 // pred_check
    _
  $region35: #{_lambda_.4} parent=0 // pred_check_branch
    %34 = sbr.rel (0) target = $region37
  $region36: #{_lambda_.4} parent=0 // pred_region
    _
  $region37: #{_lambda_.4} parent=0 // pred_fallthru
    _
  // Predicated region
  $region38: #{_lambda_.4} parent=0 // pred_check
    _
  $region39: #{_lambda_.4} parent=0 // pred_check_branch
    %36 = sbr.rel (0) target = $region41
  $region40: #{_lambda_.4} parent=0 // pred_region
    _
  $region41: #{_lambda_.4} parent=0 // pred_fallthru
    _
  %v38 = vld [vmem:[%s0] sm:$0xff]
  %v39 = vld [vmem:[%s0 + $0x8] sm:$0xff]
  %v40 = vld [vmem:[%s1] sm:$0x3]
  %v41 = vld [vmem:[%s2] sm:$0xf]
  %v42 = vld [vmem:[%s3] sm:$0x1]
  %v43 = vld [vmem:[%s4] sm:$0x1]
  %v44 = vpack.c.bf16 %v39, %v38
  %v45 = vmul.f32 %v38, %v38
  %v46 = vmul.f32 %v39, %v39
  %vm47 = vcmask 31744
  %v48 = vsel %vm47, %v45, 0.0
  %v49 = vsel %vm47, %v46, 0.0
  %v50 = vpack.c.bf16 %v49, %v48
  %v52 = vlaneseq
  %v53 = vshrl.u32 %v52, 7
  %v54 = vsub.s32 0, %v53
  %v55 = vrot.slane %v42, %v54
  %v58 = vsel %vm47, %v44, 0
  %vm60 = vcmask 1041408
  %v62 = vsel %vm60, %v40, 0
  %64 = vmatprep.subr.bf16.mxu0 0
  %65 = vmatpush1.bf16.msra.mxu0 0
  %66 = vmatprep.subr.bf16.mxu0 0
  %67 = vmatpush1.bf16.msra.mxu0 0
  %68 = vmatprep.subr.bf16.mxu0 0
  %69 = vmatpush1.bf16.msra.mxu0 0
  %70 = vmatprep.subr.bf16.mxu0 0
  %71 = vmatpush1.bf16.msra.mxu0 0
  %72 = vmatprep.subr.bf16.mxu0 0
  %73 = vmatpush1.bf16.msra.mxu0 0
  %74 = vmatprep.subr.bf16.mxu0 0
  %75 = vmatpush1.bf16.msra.mxu0 0
  %76 = vmatprep.subr.bf16.mxu0 0
  %77 = vmatpush1.bf16.msra.mxu0 0
  %78 = vmatprep.subr.bf16.mxu0 0
  %79 = vmatpush1.bf16.msra.mxu0 %v62
  %80 = vmatprep.subr.bf16.mxu0 0
  %81 = vmatpush2.bf16.msra.mxu0 0
  %82 = vmatprep.subr.bf16.mxu0 0
  %83 = vmatpush2.bf16.msra.mxu0 0
  %84 = vmatprep.subr.bf16.mxu0 0
  %85 = vmatpush2.bf16.msra.mxu0 0
  %86 = vmatprep.subr.bf16.mxu0 0
  %87 = vmatpush2.bf16.msra.mxu0 0
  %88 = vmatprep.subr.bf16.mxu0 0
  %89 = vmatpush2.bf16.msra.mxu0 0
  %90 = vmatprep.subr.bf16.mxu0 0
  %91 = vmatpush2.bf16.msra.mxu0 0
  %92 = vmatprep.subr.bf16.mxu0 0
  %93 = vmatpush2.bf16.msra.mxu0 0
  %94 = vmatprep.subr.bf16.mxu0 0
  %95 = vmatpush2.bf16.msra.mxu0 0
  %96 = vmatprep.mubr.bf16.mxu0 0
  %97 = vmatmul.mubr.bf16.gmra.mxu0 %v58
  %v98 = vpop.f32.mrf.mxu0
  %v99 = vadd.f32 %v55, %v98
  %v100 = vpop.f32.mrf.mxu0
  %v101 = vpop.f32.mrf.mxu0
  %v102 = vadd.f32 %v55, %v101
  %v103 = vpop.f32.mrf.mxu0
  %104 = vdwg.mxu0
  %v106 = vlaneseq
  %v107 = vshrl.u32 %v106, 7
  %v108 = vsub.s32 0, %v107
  %v109 = vrot.slane %v43, %v108
  %vm111 = vcmask 64512
  %v113 = vsel %vm111, %v50, 0
  %vm115 = vcmask 1043456
  %v117 = vsel %vm115, %v41, 0
  %119 = vmatprep.subr.bf16.mxu0 0
  %120 = vmatpush1.bf16.msra.mxu0 0
  %121 = vmatprep.subr.bf16.mxu0 0
  %122 = vmatpush1.bf16.msra.mxu0 0
  %123 = vmatprep.subr.bf16.mxu0 0
  %124 = vmatpush1.bf16.msra.mxu0 0
  %125 = vmatprep.subr.bf16.mxu0 0
  %126 = vmatpush1.bf16.msra.mxu0 0
  %127 = vmatprep.subr.bf16.mxu0 0
  %128 = vmatpush1.bf16.msra.mxu0 0
  %129 = vmatprep.subr.bf16.mxu0 0
  %130 = vmatpush1.bf16.msra.mxu0 0
  %131 = vmatprep.subr.bf16.mxu0 0
  %132 = vmatpush1.bf16.msra.mxu0 0
  %133 = vmatprep.subr.bf16.mxu0 0
  %134 = vmatpush1.bf16.msra.mxu0 %v117
  %135 = vmatprep.subr.bf16.mxu0 0
  %136 = vmatpush2.bf16.msra.mxu0 0
  %137 = vmatprep.subr.bf16.mxu0 0
  %138 = vmatpush2.bf16.msra.mxu0 0
  %139 = vmatprep.subr.bf16.mxu0 0
  %140 = vmatpush2.bf16.msra.mxu0 0
  %141 = vmatprep.subr.bf16.mxu0 0
  %142 = vmatpush2.bf16.msra.mxu0 0
  %143 = vmatprep.subr.bf16.mxu0 0
  %144 = vmatpush2.bf16.msra.mxu0 0
  %145 = vmatprep.subr.bf16.mxu0 0
  %146 = vmatpush2.bf16.msra.mxu0 0
  %147 = vmatprep.subr.bf16.mxu0 0
  %148 = vmatpush2.bf16.msra.mxu0 0
  %149 = vmatprep.subr.bf16.mxu0 0
  %150 = vmatpush2.bf16.msra.mxu0 0
  %151 = vmatprep.mubr.bf16.mxu0 0
  %152 = vmatmul.mubr.bf16.gmra.mxu0 %v113
  %v153 = vpop.f32.mrf.mxu0
  %v154 = vadd.f32 %v109, %v153
  %v155 = vpop.f32.mrf.mxu0
  %v156 = vpop.f32.mrf.mxu0
  %v157 = vadd.f32 %v109, %v156
  %v158 = vpop.f32.mrf.mxu0
  %159 = vdwg.mxu0
  %vm160 = vcmp.gt.f32.partialorder %v99, 0.0
  %vm161 = vcmp.gt.f32.partialorder %v102, 0.0
  %v162 = vsel %vm160, 1, 0
  %v163 = vsel %vm161, 1, 0
  %v164 = vcvt.s32.f32 %v162
  %v165 = vcvt.s32.f32 %v163
  %v166 = vmul.f32 %v99, %v164
  %v167 = vmul.f32 %v102, %v165
  %v168 = vmul.f32 %v154, %v164
  %v169 = vmul.f32 %v157, %v165
  %v170 = vld [vmem:[%s5] sm:$0xf]
  %v171 = vld [vmem:[%s5 + $0x4] sm:$0xf]
  %v172 = vld [vmem:[%s6] sm:$0xf]
  %v173 = vld [vmem:[%s6 + $0x4] sm:$0xf]
  %v174 = vld [vmem:[%s6 + $0x8] sm:$0xf]
  %v175 = vld [vmem:[%s6 + $0xc] sm:$0xf]
  %v176 = vld [vmem:[%s7] sm:$0x1]
  %v177 = vld [vmem:[%s8] sm:$0x1]
  %v178 = vpack.c.bf16 %v167, %v166
  %v179 = vmul.f32 %v166, %v166
  %v180 = vmul.f32 %v167, %v167
  %183 = vrot.lane.b32.xlu0 %v168, 16
  %v184 = vpop.permute.xlu0 %183
  %185 = vrot.lane.b32.xlu0 %v169, 16
  %v186 = vpop.permute.xlu0 %185
  %vm189 = vcmask 130048
  %v190 = vsel %vm189, %v179, %v184
  %v191 = vsel %vm189, %v180, %v186
  %v192 = vpack.c.bf16 %v191, %v190
  %v194 = vlaneseq
  %v195 = vshrl.u32 %v194, 7
  %v196 = vsub.s32 0, %v195
  %v197 = vrot.slane %v176, %v196
  %v201 = vunpack.c.l.b16 %v170
  %v202 = vunpack.c.l.b16 %v171
  %v203 = vpack.c.b16 %v202, %v201
  %v206 = vsel %vm189, %v178, 0
  %208 = vmatprep.subr.bf16.mxu0 0
  %209 = vmatpush1.bf16.msra.mxu0 0
  %210 = vmatprep.subr.bf16.mxu0 0
  %211 = vmatpush1.bf16.msra.mxu0 0
  %212 = vmatprep.subr.bf16.mxu0 0
  %213 = vmatpush1.bf16.msra.mxu0 0
  %214 = vmatprep.subr.bf16.mxu0 0
  %215 = vmatpush1.bf16.msra.mxu0 0
  %216 = vmatprep.subr.bf16.mxu0 0
  %217 = vmatpush1.bf16.msra.mxu0 0
  %218 = vmatprep.subr.bf16.mxu0 0
  %219 = vmatpush1.bf16.msra.mxu0 0
  %220 = vmatprep.subr.bf16.mxu0 0
  %221 = vmatpush1.bf16.msra.mxu0 0
  %222 = vmatprep.subr.bf16.mxu0 0
  %223 = vmatpush1.bf16.msra.mxu0 %v203
  %224 = vmatprep.subr.bf16.mxu0 0
  %225 = vmatpush2.bf16.msra.mxu0 0
  %226 = vmatprep.subr.bf16.mxu0 0
  %227 = vmatpush2.bf16.msra.mxu0 0
  %228 = vmatprep.subr.bf16.mxu0 0
  %229 = vmatpush2.bf16.msra.mxu0 0
  %230 = vmatprep.subr.bf16.mxu0 0
  %231 = vmatpush2.bf16.msra.mxu0 0
  %232 = vmatprep.subr.bf16.mxu0 0
  %233 = vmatpush2.bf16.msra.mxu0 0
  %234 = vmatprep.subr.bf16.mxu0 0
  %235 = vmatpush2.bf16.msra.mxu0 0
  %236 = vmatprep.subr.bf16.mxu0 0
  %237 = vmatpush2.bf16.msra.mxu0 0
  %238 = vmatprep.subr.bf16.mxu0 0
  %239 = vmatpush2.bf16.msra.mxu0 0
  %240 = vmatprep.mubr.bf16.mxu0 0
  %241 = vmatmul.mubr.bf16.gmra.mxu0 %v206
  %v242 = vpop.f32.mrf.mxu0
  %v243 = vadd.f32 %v197, %v242
  %v244 = vpop.f32.mrf.mxu0
  %v245 = vpop.f32.mrf.mxu0
  %v246 = vadd.f32 %v197, %v245
  %v247 = vpop.f32.mrf.mxu0
  %248 = vdwg.mxu0
  %v250 = vlaneseq
  %v251 = vshrl.u32 %v250, 7
  %v252 = vsub.s32 0, %v251
  %v253 = vrot.slane %v177, %v252
  %v259 = vunpack.c.l.b16 %v172
  %v260 = vunpack.c.l.b16 %v173
  %v261 = vunpack.c.l.b16 %v174
  %v262 = vunpack.c.l.b16 %v175
  %v263 = vpack.c.b16 %v260, %v259
  %v264 = vpack.c.b16 %v262, %v261
  %vm267 = vcmask 261120
  %v269 = vsel %vm267, %v192, 0
  %271 = vmatprep.subr.bf16.mxu0 0
  %272 = vmatpush1.bf16.msra.mxu0 0
  %273 = vmatprep.subr.bf16.mxu0 0
  %274 = vmatpush1.bf16.msra.mxu0 0
  %275 = vmatprep.subr.bf16.mxu0 0
  %276 = vmatpush1.bf16.msra.mxu0 0
  %277 = vmatprep.subr.bf16.mxu0 0
  %278 = vmatpush1.bf16.msra.mxu0 0
  %279 = vmatprep.subr.bf16.mxu0 0
  %280 = vmatpush1.bf16.msra.mxu0 0
  %281 = vmatprep.subr.bf16.mxu0 0
  %282 = vmatpush1.bf16.msra.mxu0 0
  %283 = vmatprep.subr.bf16.mxu0 0
  %284 = vmatpush1.bf16.msra.mxu0 %v264
  %285 = vmatprep.subr.bf16.mxu0 0
  %286 = vmatpush1.bf16.msra.mxu0 %v263
  %287 = vmatprep.subr.bf16.mxu0 0
  %288 = vmatpush2.bf16.msra.mxu0 0
  %289 = vmatprep.subr.bf16.mxu0 0
  %290 = vmatpush2.bf16.msra.mxu0 0
  %291 = vmatprep.subr.bf16.mxu0 0
  %292 = vmatpush2.bf16.msra.mxu0 0
  %293 = vmatprep.subr.bf16.mxu0 0
  %294 = vmatpush2.bf16.msra.mxu0 0
  %295 = vmatprep.subr.bf16.mxu0 0
  %296 = vmatpush2.bf16.msra.mxu0 0
  %297 = vmatprep.subr.bf16.mxu0 0
  %298 = vmatpush2.bf16.msra.mxu0 0
  %299 = vmatprep.subr.bf16.mxu0 0
  %300 = vmatpush2.bf16.msra.mxu0 0
  %301 = vmatprep.subr.bf16.mxu0 0
  %302 = vmatpush2.bf16.msra.mxu0 0
  %303 = vmatprep.mubr.bf16.mxu0 0
  %304 = vmatmul.mubr.bf16.gmra.mxu0 %v269
  %v305 = vpop.f32.mrf.mxu0
  %v306 = vadd.f32 %v253, %v305
  %v307 = vpop.f32.mrf.mxu0
  %v308 = vpop.f32.mrf.mxu0
  %v309 = vadd.f32 %v253, %v308
  %v310 = vpop.f32.mrf.mxu0
  %311 = vdwg.mxu0
  %v312 = vld [vmem:[%s9] sm:$0xff]
  %v313 = vld [vmem:[%s9 + $0x8] sm:$0xff]
  %v314 = vadd.f32 %v243, %v312
  %v315 = vadd.f32 %v246, %v313
  %316 = vst.msk [vmem:[%s10] sm:$0xff] %vm267, %v314
  %317 = vst.msk [vmem:[%s10 + $0x8] sm:$0xff] %vm267, %v315
  %318 = vst.msk [vmem:[%s11] sm:$0xff] %vm267, %v306
  %319 = vst.msk [vmem:[%s11 + $0x8] sm:$0xff] %vm267, %v309
  // Predicated region
  $region42: #{_lambda_.4} parent=0 // pred_check
    _
  $region43: #{_lambda_.4} parent=0 // pred_check_branch
    %321 = sbr.rel (0) target = $region45
  $region44: #{_lambda_.4} parent=0 // pred_region
    _
  $region45: #{_lambda_.4} parent=0 // pred_fallthru
    _
  // Predicated region
  $region46: #{_lambda_.4} parent=0 // pred_check
    _
  $region47: #{_lambda_.4} parent=0 // pred_check_branch
    %323 = sbr.rel (0) target = $region49
  $region48: #{_lambda_.4} parent=0 // pred_region
    _
  $region49: #{_lambda_.4} parent=0 // pred_fallthru
    _
  // Predicated region
  $region50: #{_lambda_.4} parent=0 // pred_check
    _
  $region51: #{_lambda_.4} parent=0 // pred_check_branch
    %325 = sbr.rel (0) target = $region53
  $region52: #{_lambda_.4} parent=0 // pred_region
    _
  $region53: #{_lambda_.4} parent=0 // pred_fallthru
    _
  // Predicated region
  $region54: #{_lambda_.4} parent=0 // pred_check
    _
  $region55: #{_lambda_.4} parent=0 // pred_check_branch
    %327 = sbr.rel (0) target = $region57
  $region56: #{_lambda_.4} parent=0 // pred_region
    _
  $region57: #{_lambda_.4} parent=0 // pred_fallthru
    _

// kernel: _lambda_.7
$region0: #{_lambda_.7}
  #allocation0 [shape = 'u32[]', space=smem, size = 0x4, offset = 0x4, fixed_abs, tag = 'smem constant byte address 0x4 - core index']
  #allocation1 [shape = 'u32[144,128]{1,0:T(1,128)}', space=vmem, size = 0x12000, scoped, tag = 'internal scratch']
  %s0 = inlined_call_operand.vmem [shape: f32[2,32], index: 0, kind: input, shape index: {}]
  %s1 = inlined_call_operand.vmem [shape: f32[2,32], index: 1, kind: input, shape index: {}]
  %s2 = inlined_call_operand.vmem [shape: bf16[32,16], index: 2, kind: input, shape index: {}]
  %s3 = inlined_call_operand.vmem [shape: bf16[64,16], index: 3, kind: input, shape index: {}]
  %s4 = inlined_call_operand.vmem [shape: f32[1,16], index: 4, kind: input, shape index: {}]
  %s5 = inlined_call_operand.vmem [shape: f32[1,16], index: 5, kind: input, shape index: {}]
  %s6 = inlined_call_operand.vmem [shape: bf16[16,3], index: 6, kind: input, shape index: {}]
  %s7 = inlined_call_operand.vmem [shape: bf16[32,3], index: 7, kind: input, shape index: {}]
  %s8 = inlined_call_operand.vmem [shape: f32[1,3], index: 8, kind: input, shape index: {}]
  %s9 = inlined_call_operand.vmem [shape: f32[1,3], index: 9, kind: input, shape index: {}]
  %s10 = inlined_call_operand.hbm [shape: f32[2,3], index: 10, kind: output, shape index: {0}]
  %s11 = inlined_call_operand.hbm [shape: f32[2,3], index: 11, kind: output, shape index: {1}]
  %12 = xla_tuple %s10, %s11
  %s13 = sld [smem:[#allocation0]]
  $region58: #{_lambda_.7} parent=0
    _
  %s15 = ssub.s32 1, %s13
  %s16 = scalar_select 0, %s15, %s13
  $region1: #{_lambda_.7} parent=0
    #allocation2 [shape = 'u8[1024]{0}', space=vmem, size = 0x400, scoped, tag = 'output window, operand 0, single buffered']
    #allocation3 [shape = 's32[1]{0}', space=sflag, size = 0x4, scoped, tag = 'scoped memory for _lambda_.7']
    #allocation4 [shape = 'u8[1024]{0}', space=vmem, size = 0x400, scoped, tag = 'output window, operand 1, single buffered']
    #allocation5 [shape = 's32[1]{0}', space=sflag, size = 0x4, scoped, tag = 'scoped memory for _lambda_.7']
    %17 = vsyncpa [#allocation3], 0
    %18 = vsyncpa [#allocation5], 0
    // Predicated region
    $region2: #{_lambda_.7} parent=1 // pred_check
      _
    $region3: #{_lambda_.7} parent=1 // pred_check_branch
      %20 = sbr.rel (0) target = $region5
    $region4: #{_lambda_.7} parent=1 // pred_region
      _
    $region5: #{_lambda_.7} parent=1 // pred_fallthru
      _
    // Predicated region
    $region6: #{_lambda_.7} parent=1 // pred_check
      _
    $region7: #{_lambda_.7} parent=1 // pred_check_branch
      %22 = sbr.rel (0) target = $region9
    $region8: #{_lambda_.7} parent=1 // pred_region
      _
    $region9: #{_lambda_.7} parent=1 // pred_fallthru
      _
    // Predicated region
    $region10: #{_lambda_.7} parent=1 // pred_check
      _
    $region11: #{_lambda_.7} parent=1 // pred_check_branch
      %24 = sbr.rel (0) target = $region13
    $region12: #{_lambda_.7} parent=1 // pred_region
      _
    $region13: #{_lambda_.7} parent=1 // pred_fallthru
      _
    // Predicated region
    $region14: #{_lambda_.7} parent=1 // pred_check
      _
    $region15: #{_lambda_.7} parent=1 // pred_check_branch
      %26 = sbr.rel (0) target = $region17
    $region16: #{_lambda_.7} parent=1 // pred_region
      _
    $region17: #{_lambda_.7} parent=1 // pred_fallthru
      _
    // Predicated region
    $region18: #{_lambda_.7} parent=1 // pred_check
      _
    $region19: #{_lambda_.7} parent=1 // pred_check_branch
      %28 = sbr.rel (0) target = $region21
    $region20: #{_lambda_.7} parent=1 // pred_region
      _
    $region21: #{_lambda_.7} parent=1 // pred_fallthru
      _
    // Predicated region
    $region22: #{_lambda_.7} parent=1 // pred_check
      _
    $region23: #{_lambda_.7} parent=1 // pred_check_branch
      %30 = sbr.rel (0) target = $region25
    $region24: #{_lambda_.7} parent=1 // pred_region
      _
    $region25: #{_lambda_.7} parent=1 // pred_fallthru
      _
    // Predicated region
    $region26: #{_lambda_.7} parent=1 // pred_check
      _
    $region27: #{_lambda_.7} parent=1 // pred_check_branch
      %32 = sbr.rel (0) target = $region29
    $region28: #{_lambda_.7} parent=1 // pred_region
      _
    $region29: #{_lambda_.7} parent=1 // pred_fallthru
      _
    // Predicated region
    $region30: #{_lambda_.7} parent=1 // pred_check
      _
    $region31: #{_lambda_.7} parent=1 // pred_check_branch
      %34 = sbr.rel (0) target = $region33
    $region32: #{_lambda_.7} parent=1 // pred_region
      _
    $region33: #{_lambda_.7} parent=1 // pred_fallthru
      _
    // Predicated region
    $region34: #{_lambda_.7} parent=1 // pred_check
      _
    $region35: #{_lambda_.7} parent=1 // pred_check_branch
      %36 = sbr.rel (0) target = $region37
    $region36: #{_lambda_.7} parent=1 // pred_region
      _
    $region37: #{_lambda_.7} parent=1 // pred_fallthru
      _
    // Predicated region
    $region38: #{_lambda_.7} parent=1 // pred_check
      _
    $region39: #{_lambda_.7} parent=1 // pred_check_branch
      %38 = sbr.rel (0) target = $region41
    $region40: #{_lambda_.7} parent=1 // pred_region
      _
    $region41: #{_lambda_.7} parent=1 // pred_fallthru
      _
    %v40 = vld [vmem:[%s0] sm:$0x3]
    %v41 = vld [vmem:[%s1] sm:$0x3]
    %v42 = vld [vmem:[%s2] sm:$0xf]
    %v43 = vld [vmem:[%s2 + $0x4] sm:$0xf]
    %v44 = vld [vmem:[%s2 + $0x8] sm:$0xf]
    %v45 = vld [vmem:[%s2 + $0xc] sm:$0xf]
    %v46 = vld [vmem:[%s3] sm:$0xf]
    %v47 = vld [vmem:[%s3 + $0x4] sm:$0xf]
    %v48 = vld [vmem:[%s3 + $0x8] sm:$0xf]
    %v49 = vld [vmem:[%s3 + $0xc] sm:$0xf]
    %v50 = vld [vmem:[%s3 + $0x10] sm:$0xf]
    %v51 = vld [vmem:[%s3 + $0x14] sm:$0xf]
    %v52 = vld [vmem:[%s3 + $0x18] sm:$0xf]
    %v53 = vld [vmem:[%s3 + $0x1c] sm:$0xf]
    %v54 = vld [vmem:[%s4] sm:$0x1]
    %v55 = vld [vmem:[%s5] sm:$0x1]
    %v56 = vpack.c.bf16 %v40, %v40
    %v57 = vmul.f32 %v40, %v40
    %59 = vrot.lane.b32.xlu0 %v41, 32
    %v60 = vpop.permute.xlu0 %59
    %vm62 = vcmask 261120
    %v63 = vsel %vm62, %v57, %v60
    %v64 = vpack.c.bf16 %v63, %v63
    %v66 = vlaneseq
    %v67 = vshrl.u32 %v66, 7
    %v68 = vsub.s32 0, %v67
    %v69 = vrot.slane %v54, %v68
    %v75 = vunpack.c.l.b16 %v42
    %v76 = vunpack.c.l.b16 %v43
    %v77 = vunpack.c.l.b16 %v44
    %v78 = vunpack.c.l.b16 %v45
    %v79 = vpack.c.b16 %v76, %v75
    %v80 = vpack.c.b16 %v78, %v77
    %v84 = vsel %vm62, %v56, 0
    %86 = vmatprep.subr.bf16.mxu0 0
    %87 = vmatpush1.bf16.msra.mxu0 0
    %88 = vmatprep.subr.bf16.mxu0 0
    %89 = vmatpush1.bf16.msra.mxu0 0
    %90 = vmatprep.subr.bf16.mxu0 0
    %91 = vmatpush1.bf16.msra.mxu0 0
    %92 = vmatprep.subr.bf16.mxu0 0
    %93 = vmatpush1.bf16.msra.mxu0 0
    %94 = vmatprep.subr.bf16.mxu0 0
    %95 = vmatpush1.bf16.msra.mxu0 0
    %96 = vmatprep.subr.bf16.mxu0 0
    %97 = vmatpush1.bf16.msra.mxu0 0
    %98 = vmatprep.subr.bf16.mxu0 0
    %99 = vmatpush1.bf16.msra.mxu0 %v80
    %100 = vmatprep.subr.bf16.mxu0 0
    %101 = vmatpush1.bf16.msra.mxu0 %v79
    %102 = vmatprep.subr.bf16.mxu0 0
    %103 = vmatpush2.bf16.msra.mxu0 0
    %104 = vmatprep.subr.bf16.mxu0 0
    %105 = vmatpush2.bf16.msra.mxu0 0
    %106 = vmatprep.subr.bf16.mxu0 0
    %107 = vmatpush2.bf16.msra.mxu0 0
    %108 = vmatprep.subr.bf16.mxu0 0
    %109 = vmatpush2.bf16.msra.mxu0 0
    %110 = vmatprep.subr.bf16.mxu0 0
    %111 = vmatpush2.bf16.msra.mxu0 0
    %112 = vmatprep.subr.bf16.mxu0 0
    %113 = vmatpush2.bf16.msra.mxu0 0
    %114 = vmatprep.subr.bf16.mxu0 0
    %115 = vmatpush2.bf16.msra.mxu0 0
    %116 = vmatprep.subr.bf16.mxu0 0
    %117 = vmatpush2.bf16.msra.mxu0 0
    %118 = vmatprep.mubr.bf16.mxu0 0
    %119 = vmatmul.mubr.bf16.gmra.mxu0 %v84
    %v120 = vpop.f32.mrf.mxu0
    %v121 = vadd.f32 %v69, %v120
    %v122 = vpop.f32.mrf.mxu0
    %v123 = vpop.f32.mrf.mxu0
    %v124 = vpop.f32.mrf.mxu0
    %125 = vdwg.mxu0
    %v127 = vlaneseq
    %v128 = vshrl.u32 %v127, 7
    %v129 = vsub.s32 0, %v128
    %v130 = vrot.slane %v55, %v129
    %v140 = vunpack.c.l.b16 %v46
    %v141 = vunpack.c.l.b16 %v47
    %v142 = vunpack.c.l.b16 %v48
    %v143 = vunpack.c.l.b16 %v49
    %v144 = vunpack.c.l.b16 %v50
    %v145 = vunpack.c.l.b16 %v51
    %v146 = vunpack.c.l.b16 %v52
    %v147 = vunpack.c.l.b16 %v53
    %v148 = vpack.c.b16 %v141, %v140
    %v149 = vpack.c.b16 %v143, %v142
    %v150 = vpack.c.b16 %v145, %v144
    %v151 = vpack.c.b16 %v147, %v146
    %vm156 = vcmask 523264
    %v158 = vsel %vm156, %v64, 0
    %160 = vmatprep.subr.bf16.mxu0 0
    %161 = vmatpush1.bf16.msra.mxu0 0
    %162 = vmatprep.subr.bf16.mxu0 0
    %163 = vmatpush1.bf16.msra.mxu0 0
    %164 = vmatprep.subr.bf16.mxu0 0
    %165 = vmatpush1.bf16.msra.mxu0 0
    %166 = vmatprep.subr.bf16.mxu0 0
    %167 = vmatpush1.bf16.msra.mxu0 0
    %168 = vmatprep.subr.bf16.mxu0 0
    %169 = vmatpush1.bf16.msra.mxu0 %v151
    %170 = vmatprep.subr.bf16.mxu0 0
    %171 = vmatpush1.bf16.msra.mxu0 %v150
    %172 = vmatprep.subr.bf16.mxu0 0
    %173 = vmatpush1.bf16.msra.mxu0 %v149
    %174 = vmatprep.subr.bf16.mxu0 0
    %175 = vmatpush1.bf16.msra.mxu0 %v148
    %176 = vmatprep.subr.bf16.mxu0 0
    %177 = vmatpush2.bf16.msra.mxu0 0
    %178 = vmatprep.subr.bf16.mxu0 0
    %179 = vmatpush2.bf16.msra.mxu0 0
    %180 = vmatprep.subr.bf16.mxu0 0
    %181 = vmatpush2.bf16.msra.mxu0 0
    %182 = vmatprep.subr.bf16.mxu0 0
    %183 = vmatpush2.bf16.msra.mxu0 0
    %184 = vmatprep.subr.bf16.mxu0 0
    %185 = vmatpush2.bf16.msra.mxu0 0
    %186 = vmatprep.subr.bf16.mxu0 0
    %187 = vmatpush2.bf16.msra.mxu0 0
    %188 = vmatprep.subr.bf16.mxu0 0
    %189 = vmatpush2.bf16.msra.mxu0 0
    %190 = vmatprep.subr.bf16.mxu0 0
    %191 = vmatpush2.bf16.msra.mxu0 0
    %192 = vmatprep.mubr.bf16.mxu0 0
    %193 = vmatmul.mubr.bf16.gmra.mxu0 %v158
    %v194 = vpop.f32.mrf.mxu0
    %v195 = vadd.f32 %v130, %v194
    %v196 = vpop.f32.mrf.mxu0
    %v197 = vpop.f32.mrf.mxu0
    %v198 = vpop.f32.mrf.mxu0
    %199 = vdwg.mxu0
    %vm200 = vcmp.gt.f32.partialorder %v121, 0.0
    %v201 = vsel %vm200, 1, 0
    %v202 = vcvt.s32.f32 %v201
    %v203 = vmul.f32 %v121, %v202
    %v204 = vmul.f32 %v195, %v202
    %v205 = vld [vmem:[%s6] sm:$0xf]
    %v206 = vld [vmem:[%s6 + $0x4] sm:$0xf]
    %v207 = vld [vmem:[%s7] sm:$0xf]
    %v208 = vld [vmem:[%s7 + $0x4] sm:$0xf]
    %v209 = vld [vmem:[%s7 + $0x8] sm:$0xf]
    %v210 = vld [vmem:[%s7 + $0xc] sm:$0xf]
    %v211 = vld [vmem:[%s8] sm:$0x1]
    %v212 = vld [vmem:[%s9] sm:$0x1]
    %v213 = vpack.c.bf16 %v203, %v203
    %v214 = vmul.f32 %v203, %v203
    %216 = vrot.lane.b32.xlu0 %v204, 16
    %v217 = vpop.permute.xlu0 %216
    %vm219 = vcmask 130048
    %v220 = vsel %vm219, %v214, %v217
    %v221 = vpack.c.bf16 %v220, %v220
    %v223 = vlaneseq
    %v224 = vshrl.u32 %v223, 7
    %v225 = vsub.s32 0, %v224
    %v226 = vrot.slane %v211, %v225
    %v230 = vunpack.c.l.b16 %v205
    %v231 = vunpack.c.l.b16 %v206
    %v232 = vpack.c.b16 %v231, %v230
    %v235 = vsel %vm219, %v213, 0
    %237 = vmatprep.subr.bf16.mxu0 0
    %238 = vmatpush1.bf16.msra.mxu0 0
    %239 = vmatprep.subr.bf16.mxu0 0
    %240 = vmatpush1.bf16.msra.mxu0 0
    %241 = vmatprep.subr.bf16.mxu0 0
    %242 = vmatpush1.bf16.msra.mxu0 0
    %243 = vmatprep.subr.bf16.mxu0 0
    %244 = vmatpush1.bf16.msra.mxu0 0
    %245 = vmatprep.subr.bf16.mxu0 0
    %246 = vmatpush1.bf16.msra.mxu0 0
    %247 = vmatprep.subr.bf16.mxu0 0
    %248 = vmatpush1.bf16.msra.mxu0 0
    %249 = vmatprep.subr.bf16.mxu0 0
    %250 = vmatpush1.bf16.msra.mxu0 0
    %251 = vmatprep.subr.bf16.mxu0 0
    %252 = vmatpush1.bf16.msra.mxu0 %v232
    %253 = vmatprep.subr.bf16.mxu0 0
    %254 = vmatpush2.bf16.msra.mxu0 0
    %255 = vmatprep.subr.bf16.mxu0 0
    %256 = vmatpush2.bf16.msra.mxu0 0
    %257 = vmatprep.subr.bf16.mxu0 0
    %258 = vmatpush2.bf16.msra.mxu0 0
    %259 = vmatprep.subr.bf16.mxu0 0
    %260 = vmatpush2.bf16.msra.mxu0 0
    %261 = vmatprep.subr.bf16.mxu0 0
    %262 = vmatpush2.bf16.msra.mxu0 0
    %263 = vmatprep.subr.bf16.mxu0 0
    %264 = vmatpush2.bf16.msra.mxu0 0
    %265 = vmatprep.subr.bf16.mxu0 0
    %266 = vmatpush2.bf16.msra.mxu0 0
    %267 = vmatprep.subr.bf16.mxu0 0
    %268 = vmatpush2.bf16.msra.mxu0 0
    %269 = vmatprep.mubr.bf16.mxu0 0
    %270 = vmatmul.mubr.bf16.gmra.mxu0 %v235
    %v271 = vpop.f32.mrf.mxu0
    %v272 = vadd.f32 %v226, %v271
    %v273 = vpop.f32.mrf.mxu0
    %v274 = vpop.f32.mrf.mxu0
    %v275 = vpop.f32.mrf.mxu0
    %276 = vdwg.mxu0
    %v278 = vlaneseq
    %v279 = vshrl.u32 %v278, 7
    %v280 = vsub.s32 0, %v279
    %v281 = vrot.slane %v212, %v280
    %v287 = vunpack.c.l.b16 %v207
    %v288 = vunpack.c.l.b16 %v208
    %v289 = vunpack.c.l.b16 %v209
    %v290 = vunpack.c.l.b16 %v210
    %v291 = vpack.c.b16 %v288, %v287
    %v292 = vpack.c.b16 %v290, %v289
    %v296 = vsel %vm62, %v221, 0
    %298 = vmatprep.subr.bf16.mxu0 0
    %299 = vmatpush1.bf16.msra.mxu0 0
    %300 = vmatprep.subr.bf16.mxu0 0
    %301 = vmatpush1.bf16.msra.mxu0 0
    %302 = vmatprep.subr.bf16.mxu0 0
    %303 = vmatpush1.bf16.msra.mxu0 0
    %304 = vmatprep.subr.bf16.mxu0 0
    %305 = vmatpush1.bf16.msra.mxu0 0
    %306 = vmatprep.subr.bf16.mxu0 0
    %307 = vmatpush1.bf16.msra.mxu0 0
    %308 = vmatprep.subr.bf16.mxu0 0
    %309 = vmatpush1.bf16.msra.mxu0 0
    %310 = vmatprep.subr.bf16.mxu0 0
    %311 = vmatpush1.bf16.msra.mxu0 %v292
    %312 = vmatprep.subr.bf16.mxu0 0
    %313 = vmatpush1.bf16.msra.mxu0 %v291
    %314 = vmatprep.subr.bf16.mxu0 0
    %315 = vmatpush2.bf16.msra.mxu0 0
    %316 = vmatprep.subr.bf16.mxu0 0
    %317 = vmatpush2.bf16.msra.mxu0 0
    %318 = vmatprep.subr.bf16.mxu0 0
    %319 = vmatpush2.bf16.msra.mxu0 0
    %320 = vmatprep.subr.bf16.mxu0 0
    %321 = vmatpush2.bf16.msra.mxu0 0
    %322 = vmatprep.subr.bf16.mxu0 0
    %323 = vmatpush2.bf16.msra.mxu0 0
    %324 = vmatprep.subr.bf16.mxu0 0
    %325 = vmatpush2.bf16.msra.mxu0 0
    %326 = vmatprep.subr.bf16.mxu0 0
    %327 = vmatpush2.bf16.msra.mxu0 0
    %328 = vmatprep.subr.bf16.mxu0 0
    %329 = vmatpush2.bf16.msra.mxu0 0
    %330 = vmatprep.mubr.bf16.mxu0 0
    %331 = vmatmul.mubr.bf16.gmra.mxu0 %v296
    %v332 = vpop.f32.mrf.mxu0
    %v333 = vadd.f32 %v281, %v332
    %v334 = vpop.f32.mrf.mxu0
    %v335 = vpop.f32.mrf.mxu0
    %v336 = vpop.f32.mrf.mxu0
    %337 = vdwg.mxu0
    %vm338 = vcmask 17408
    %339 = vst.msk [vmem:[#allocation2] sm:$0x3] %vm338, %v272
    %340 = vst.msk [vmem:[#allocation4] sm:$0x3] %vm338, %v333
    // Predicated region
    $region42: #{_lambda_.7} parent=1 // pred_check
      _
    $region43: #{_lambda_.7} parent=1 // pred_check_branch
      %342 = sbr.rel (0) target = $region45
    $region44: #{_lambda_.7} parent=1 // pred_region
      %s344 = ssub.s32 32, 32
      %345 = vsyncadd [#allocation3], %s344
      %s347 = sshll.u32 [#allocation2], 4
      %s348 = int_to_ptr.vmem [resolvable:$true] %s347
      %350 = dma.vmem_to_hbm [thread:$0]  %s348, 32, %s10, [#allocation3]
    $region45: #{_lambda_.7} parent=1 // pred_fallthru
      _
    // Predicated region
    $region46: #{_lambda_.7} parent=1 // pred_check
      _
    $region47: #{_lambda_.7} parent=1 // pred_check_branch
      %352 = sbr.rel (0) target = $region49
    $region48: #{_lambda_.7} parent=1 // pred_region
      %s354 = ssub.s32 32, 32
      %355 = vsyncadd [#allocation5], %s354
      %s357 = sshll.u32 [#allocation4], 4
      %s358 = int_to_ptr.vmem [resolvable:$true] %s357
      %360 = dma.vmem_to_hbm [thread:$0]  %s358, 32, %s11, [#allocation5]
    $region49: #{_lambda_.7} parent=1 // pred_fallthru
      _
    // Predicated region
    $region50: #{_lambda_.7} parent=1 // pred_check
      _
    $region51: #{_lambda_.7} parent=1 // pred_check_branch
      %362 = sbr.rel (0) target = $region53
    $region52: #{_lambda_.7} parent=1 // pred_region
      %363 = dma.done [#allocation3], 32
    $region53: #{_lambda_.7} parent=1 // pred_fallthru
      _
    // Predicated region
    $region54: #{_lambda_.7} parent=1 // pred_check
      _
    $region55: #{_lambda_.7} parent=1 // pred_check_branch
      %365 = sbr.rel (0) target = $region57
    $region56: #{_lambda_.7} parent=1 // pred_region
      %366 = dma.done [#allocation5], 32
    $region57: #{_lambda_.7} parent=1 // pred_fallthru
      _
    %367 = vsyncpa [#allocation3], 1
    %368 = vsyncpa [#allocation5], 1

// kernel: _lambda_.6
$region0: #{_lambda_.6}
  #allocation0 [shape = 'u32[]', space=smem, size = 0x4, offset = 0x4, fixed_abs, tag = 'smem constant byte address 0x4 - core index']
  #allocation1 [shape = 'u32[144,128]{1,0:T(1,128)}', space=vmem, size = 0x12000, scoped, tag = 'internal scratch']
  %s0 = inlined_call_operand.vmem [shape: f32[16,32], index: 0, kind: input, shape index: {}]
  %s1 = inlined_call_operand.vmem [shape: f32[16,32], index: 1, kind: input, shape index: {}]
  %s2 = inlined_call_operand.vmem [shape: f32[1,32], index: 2, kind: input, shape index: {}]
  %s3 = inlined_call_operand.vmem [shape: f32[1,32], index: 3, kind: input, shape index: {}]
  %s4 = inlined_call_operand.vmem [shape: f32[1,32], index: 4, kind: input, shape index: {}]
  %s5 = inlined_call_operand.vmem [shape: f32[1,32], index: 5, kind: input, shape index: {}]
  %s6 = inlined_call_operand.vmem [shape: f32[1,32], index: 6, kind: input, shape index: {}]
  %s7 = inlined_call_operand.vmem [shape: bf16[32,96], index: 7, kind: input, shape index: {}]
  %s8 = inlined_call_operand.vmem [shape: bf16[64,96], index: 8, kind: input, shape index: {}]
  %s9 = inlined_call_operand.vmem [shape: f32[2,32], index: 9, kind: output, shape index: {0}]
  %s10 = inlined_call_operand.vmem [shape: f32[2,32], index: 10, kind: output, shape index: {1}]
  %11 = xla_tuple %s9, %s10
  %s12 = sld [smem:[#allocation0]]
  $region54: #{_lambda_.6} parent=0
    _
  %s14 = ssub.s32 1, %s12
  %s15 = scalar_select 0, %s14, %s12
  // Predicated region
  $region2: #{_lambda_.6} parent=0 // pred_check
    _
  $region3: #{_lambda_.6} parent=0 // pred_check_branch
    %17 = sbr.rel (0) target = $region5
  $region4: #{_lambda_.6} parent=0 // pred_region
    _
  $region5: #{_lambda_.6} parent=0 // pred_fallthru
    _
  // Predicated region
  $region6: #{_lambda_.6} parent=0 // pred_check
    _
  $region7: #{_lambda_.6} parent=0 // pred_check_branch
    %19 = sbr.rel (0) target = $region9
  $region8: #{_lambda_.6} parent=0 // pred_region
    _
  $region9: #{_lambda_.6} parent=0 // pred_fallthru
    _
  // Predicated region
  $region10: #{_lambda_.6} parent=0 // pred_check
    _
  $region11: #{_lambda_.6} parent=0 // pred_check_branch
    %21 = sbr.rel (0) target = $region13
  $region12: #{_lambda_.6} parent=0 // pred_region
    _
  $region13: #{_lambda_.6} parent=0 // pred_fallthru
    _
  // Predicated region
  $region14: #{_lambda_.6} parent=0 // pred_check
    _
  $region15: #{_lambda_.6} parent=0 // pred_check_branch
    %23 = sbr.rel (0) target = $region17
  $region16: #{_lambda_.6} parent=0 // pred_region
    _
  $region17: #{_lambda_.6} parent=0 // pred_fallthru
    _
  // Predicated region
  $region18: #{_lambda_.6} parent=0 // pred_check
    _
  $region19: #{_lambda_.6} parent=0 // pred_check_branch
    %25 = sbr.rel (0) target = $region21
  $region20: #{_lambda_.6} parent=0 // pred_region
    _
  $region21: #{_lambda_.6} parent=0 // pred_fallthru
    _
  // Predicated region
  $region22: #{_lambda_.6} parent=0 // pred_check
    _
  $region23: #{_lambda_.6} parent=0 // pred_check_branch
    %27 = sbr.rel (0) target = $region25
  $region24: #{_lambda_.6} parent=0 // pred_region
    _
  $region25: #{_lambda_.6} parent=0 // pred_fallthru
    _
  // Predicated region
  $region26: #{_lambda_.6} parent=0 // pred_check
    _
  $region27: #{_lambda_.6} parent=0 // pred_check_branch
    %29 = sbr.rel (0) target = $region29
  $region28: #{_lambda_.6} parent=0 // pred_region
    _
  $region29: #{_lambda_.6} parent=0 // pred_fallthru
    _
  // Predicated region
  $region30: #{_lambda_.6} parent=0 // pred_check
    _
  $region31: #{_lambda_.6} parent=0 // pred_check_branch
    %31 = sbr.rel (0) target = $region33
  $region32: #{_lambda_.6} parent=0 // pred_region
    _
  $region33: #{_lambda_.6} parent=0 // pred_fallthru
    _
  // Predicated region
  $region34: #{_lambda_.6} parent=0 // pred_check
    _
  $region35: #{_lambda_.6} parent=0 // pred_check_branch
    %33 = sbr.rel (0) target = $region37
  $region36: #{_lambda_.6} parent=0 // pred_region
    _
  $region37: #{_lambda_.6} parent=0 // pred_fallthru
    _
  %v35 = vld [vmem:[%s0] sm:$0xff]
  %v36 = vld [vmem:[%s0 + $0x8] sm:$0xff]
  %v37 = vld [vmem:[%s1] sm:$0xff]
  %v38 = vld [vmem:[%s1 + $0x8] sm:$0xff]
  %v39 = vld [vmem:[%s2] sm:$0x1]
  %v40 = vld [vmem:[%s3] sm:$0x1]
  %v41 = vld [vmem:[%s4] sm:$0x1]
  %v42 = vld [vmem:[%s5] sm:$0x1]
  %v43 = vld [vmem:[%s6] sm:$0x1]
  %vm44 = vcmask 261120
  %v45 = vsel %vm44, %v35, 0.0
  %46 = vadd.xlane.f32.xlu0 %v45
  %v47 = vpop.xlane.xlu0 %46
  %v48 = vsel %vm44, %v36, 0.0
  %49 = vadd.xlane.f32.xlu0 %v48
  %v50 = vpop.xlane.xlu0 %49
  %v51 = vrcp.pop 32.0
  %v52 = vmul.f32 %v47, %v51
  %v53 = vmul.f32 %v50, %v51
  %v54 = vsub.f32 %v35, %v52
  %v55 = vsub.f32 %v36, %v53
  %v56 = vmul.f32 %v54, %v54
  %v57 = vmul.f32 %v55, %v55
  %v58 = vsel %vm44, %v56, 0.0
  %59 = vadd.xlane.f32.xlu0 %v58
  %v60 = vpop.xlane.xlu0 %59
  %v61 = vsel %vm44, %v57, 0.0
  %62 = vadd.xlane.f32.xlu0 %v61
  %v63 = vpop.xlane.xlu0 %62
  %v64 = vmul.f32 %v60, %v51
  %v65 = vmul.f32 %v63, %v51
  %v66 = vadd.f32 %v64, 1e-05
  %v67 = vadd.f32 %v65, 1e-05
  %v68 = vrsqrt.pop %v66
  %v69 = vrsqrt.pop %v67
  %v70 = vmul.f32 %v54, %v68
  %v71 = vmul.f32 %v55, %v69
  %v73 = vlaneseq
  %v74 = vshrl.u32 %v73, 7
  %v75 = vsub.s32 0, %v74
  %v76 = vrot.slane %v39, %v75
  %v78 = vmul.f32 %v76, %v70
  %v79 = vmul.f32 %v76, %v71
  %v81 = vlaneseq
  %v82 = vshrl.u32 %v81, 7
  %v83 = vsub.s32 0, %v82
  %v84 = vrot.slane %v40, %v83
  %v86 = vadd.f32 %v78, %v84
  %v87 = vadd.f32 %v79, %v84
  %v89 = vlaneseq
  %v90 = vshrl.u32 %v89, 7
  %v91 = vsub.s32 0, %v90
  %v92 = vrot.slane %v41, %v91
  %v94 = vmul.f32 %v92, %v37
  %v95 = vmul.f32 %v92, %v38
  %v96 = vmul.f32 %v68, %v68
  %v97 = vmul.f32 %v69, %v69
  %v98 = vmul.f32 %v94, %v96
  %v99 = vmul.f32 %v95, %v97
  %v100 = vmul.f32 %v70, %v70
  %v101 = vmul.f32 %v71, %v71
  %v103 = vlaneseq
  %v104 = vshrl.u32 %v103, 7
  %v105 = vsub.s32 0, %v104
  %v106 = vrot.slane %v42, %v105
  %v108 = vmul.f32 %v106, %v100
  %v109 = vmul.f32 %v106, %v101
  %v110 = vadd.f32 %v98, %v108
  %v111 = vadd.f32 %v99, %v109
  %v113 = vlaneseq
  %v114 = vshrl.u32 %v113, 7
  %v115 = vsub.s32 0, %v114
  %v116 = vrot.slane %v43, %v115
  %v118 = vadd.f32 %v110, %v116
  %v119 = vadd.f32 %v111, %v116
  %v120 = vld [vmem:[%s7] sm:$0xf]
  %v121 = vld [vmem:[%s7 + $0x4] sm:$0xf]
  %v122 = vld [vmem:[%s7 + $0x8] sm:$0xf]
  %v123 = vld [vmem:[%s7 + $0xc] sm:$0xf]
  %v124 = vld [vmem:[%s8] sm:$0xf]
  %v125 = vld [vmem:[%s8 + $0x4] sm:$0xf]
  %v126 = vld [vmem:[%s8 + $0x8] sm:$0xf]
  %v127 = vld [vmem:[%s8 + $0xc] sm:$0xf]
  %v128 = vld [vmem:[%s8 + $0x10] sm:$0xf]
  %v129 = vld [vmem:[%s8 + $0x14] sm:$0xf]
  %v130 = vld [vmem:[%s8 + $0x18] sm:$0xf]
  %v131 = vld [vmem:[%s8 + $0x1c] sm:$0xf]
  %v132 = vpack.c.bf16 %v87, %v86
  %v137 = vunpack.c.l.b16 %v120
  %v138 = vunpack.c.l.b16 %v121
  %v139 = vunpack.c.l.b16 %v122
  %v140 = vunpack.c.l.b16 %v123
  %v141 = vpack.c.b16 %v138, %v137
  %v142 = vpack.c.b16 %v140, %v139
  %v146 = vsel %vm44, %v132, 0
  %148 = vmatprep.subr.bf16.mxu0 0
  %149 = vmatpush1.bf16.msra.mxu0 0
  %150 = vmatprep.subr.bf16.mxu0 0
  %151 = vmatpush1.bf16.msra.mxu0 0
  %152 = vmatprep.subr.bf16.mxu0 0
  %153 = vmatpush1.bf16.msra.mxu0 0
  %154 = vmatprep.subr.bf16.mxu0 0
  %155 = vmatpush1.bf16.msra.mxu0 0
  %156 = vmatprep.subr.bf16.mxu0 0
  %157 = vmatpush1.bf16.msra.mxu0 0
  %158 = vmatprep.subr.bf16.mxu0 0
  %159 = vmatpush1.bf16.msra.mxu0 0
  %160 = vmatprep.subr.bf16.mxu0 0
  %161 = vmatpush1.bf16.msra.mxu0 %v142
  %162 = vmatprep.subr.bf16.mxu0 0
  %163 = vmatpush1.bf16.msra.mxu0 %v141
  %164 = vmatprep.subr.bf16.mxu0 0
  %165 = vmatpush2.bf16.msra.mxu0 0
  %166 = vmatprep.subr.bf16.mxu0 0
  %167 = vmatpush2.bf16.msra.mxu0 0
  %168 = vmatprep.subr.bf16.mxu0 0
  %169 = vmatpush2.bf16.msra.mxu0 0
  %170 = vmatprep.subr.bf16.mxu0 0
  %171 = vmatpush2.bf16.msra.mxu0 0
  %172 = vmatprep.subr.bf16.mxu0 0
  %173 = vmatpush2.bf16.msra.mxu0 0
  %174 = vmatprep.subr.bf16.mxu0 0
  %175 = vmatpush2.bf16.msra.mxu0 0
  %176 = vmatprep.subr.bf16.mxu0 0
  %177 = vmatpush2.bf16.msra.mxu0 0
  %178 = vmatprep.subr.bf16.mxu0 0
  %179 = vmatpush2.bf16.msra.mxu0 0
  %180 = vmatprep.mubr.bf16.mxu0 0
  %181 = vmatmul.mubr.bf16.gmra.mxu0 %v146
  %v182 = vpop.f32.mrf.mxu0
  %v183 = vadd.f32 0.0, %v182
  %v184 = vpop.f32.mrf.mxu0
  %v185 = vpop.f32.mrf.mxu0
  %v186 = vadd.f32 0.0, %v185
  %v187 = vpop.f32.mrf.mxu0
  %188 = vdwg.mxu0
  %v189 = vmul.f32 %v86, %v86
  %v190 = vmul.f32 %v87, %v87
  %193 = vrot.lane.b32.xlu0 %v118, 32
  %v194 = vpop.permute.xlu0 %193
  %195 = vrot.lane.b32.xlu0 %v119, 32
  %v196 = vpop.permute.xlu0 %195
  %v199 = vsel %vm44, %v189, %v194
  %v200 = vsel %vm44, %v190, %v196
  %v201 = vpack.c.bf16 %v200, %v199
  %v210 = vunpack.c.l.b16 %v124
  %v211 = vunpack.c.l.b16 %v125
  %v212 = vunpack.c.l.b16 %v126
  %v213 = vunpack.c.l.b16 %v127
  %v214 = vunpack.c.l.b16 %v128
  %v215 = vunpack.c.l.b16 %v129
  %v216 = vunpack.c.l.b16 %v130
  %v217 = vunpack.c.l.b16 %v131
  %v218 = vpack.c.b16 %v211, %v210
  %v219 = vpack.c.b16 %v213, %v212
  %v220 = vpack.c.b16 %v215, %v214
  %v221 = vpack.c.b16 %v217, %v216
  %vm226 = vcmask 523264
  %v228 = vsel %vm226, %v201, 0
  %230 = vmatprep.subr.bf16.mxu0 0
  %231 = vmatpush1.bf16.msra.mxu0 0
  %232 = vmatprep.subr.bf16.mxu0 0
  %233 = vmatpush1.bf16.msra.mxu0 0
  %234 = vmatprep.subr.bf16.mxu0 0
  %235 = vmatpush1.bf16.msra.mxu0 0
  %236 = vmatprep.subr.bf16.mxu0 0
  %237 = vmatpush1.bf16.msra.mxu0 0
  %238 = vmatprep.subr.bf16.mxu0 0
  %239 = vmatpush1.bf16.msra.mxu0 %v221
  %240 = vmatprep.subr.bf16.mxu0 0
  %241 = vmatpush1.bf16.msra.mxu0 %v220
  %242 = vmatprep.subr.bf16.mxu0 0
  %243 = vmatpush1.bf16.msra.mxu0 %v219
  %244 = vmatprep.subr.bf16.mxu0 0
  %245 = vmatpush1.bf16.msra.mxu0 %v218
  %246 = vmatprep.subr.bf16.mxu0 0
  %247 = vmatpush2.bf16.msra.mxu0 0
  %248 = vmatprep.subr.bf16.mxu0 0
  %249 = vmatpush2.bf16.msra.mxu0 0
  %250 = vmatprep.subr.bf16.mxu0 0
  %251 = vmatpush2.bf16.msra.mxu0 0
  %252 = vmatprep.subr.bf16.mxu0 0
  %253 = vmatpush2.bf16.msra.mxu0 0
  %254 = vmatprep.subr.bf16.mxu0 0
  %255 = vmatpush2.bf16.msra.mxu0 0
  %256 = vmatprep.subr.bf16.mxu0 0
  %257 = vmatpush2.bf16.msra.mxu0 0
  %258 = vmatprep.subr.bf16.mxu0 0
  %259 = vmatpush2.bf16.msra.mxu0 0
  %260 = vmatprep.subr.bf16.mxu0 0
  %261 = vmatpush2.bf16.msra.mxu0 0
  %262 = vmatprep.mubr.bf16.mxu0 0
  %263 = vmatmul.mubr.bf16.gmra.mxu0 %v228
  %v264 = vpop.f32.mrf.mxu0
  %v265 = vadd.f32 0.0, %v264
  %v266 = vpop.f32.mrf.mxu0
  %v267 = vpop.f32.mrf.mxu0
  %v268 = vadd.f32 0.0, %v267
  %v269 = vpop.f32.mrf.mxu0
  %270 = vdwg.mxu0
  %272 = vrot.lane.b32.xlu0 %v183, 96
  %v273 = vpop.permute.xlu0 %272
  %vm274 = vcmask 64512
  %v275 = vsel %vm274, %v183, 0
  %v277 = vsel %vm274, %v273, 0
  %279 = vmatprep.subr.mxu0 0.0
  %280 = vmatpush1.xpose.msra.mxu0 0.0
  %281 = vmatprep.subr.mxu0 0.0
  %282 = vmatpush1.xpose.msra.mxu0 0.0
  %283 = vmatprep.subr.mxu0 0.0
  %284 = vmatpush1.xpose.msra.mxu0 0.0
  %285 = vmatprep.subr.mxu0 0.0
  %286 = vmatpush1.xpose.msra.mxu0 0.0
  %287 = vmatprep.subr.mxu0 0.0
  %288 = vmatpush1.xpose.msra.mxu0 0.0
  %289 = vmatprep.subr.mxu0 0.0
  %290 = vmatpush1.xpose.msra.mxu0 0.0
  %291 = vmatprep.subr.mxu0 0.0
  %292 = vmatpush1.xpose.msra.mxu0 0.0
  %293 = vmatprep.subr.mxu0 0.0
  %294 = vmatpush1.xpose.msra.mxu0 0.0
  %295 = vmatprep.subr.mxu0 0.0
  %296 = vmatpush1.xpose.msra.mxu0 0.0
  %297 = vmatprep.subr.mxu0 0.0
  %298 = vmatpush1.xpose.msra.mxu0 0.0
  %299 = vmatprep.subr.mxu0 0.0
  %300 = vmatpush1.xpose.msra.mxu0 0.0
  %301 = vmatprep.subr.mxu0 0.0
  %302 = vmatpush1.xpose.msra.mxu0 0.0
  %303 = vmatprep.subr.mxu0 0.0
  %304 = vmatpush1.xpose.msra.mxu0 0.0
  %305 = vmatprep.subr.mxu0 0.0
  %306 = vmatpush1.xpose.msra.mxu0 0.0
  %307 = vmatprep.subr.mxu0 0.0
  %308 = vmatpush1.xpose.msra.mxu0 0.0
  %309 = vmatprep.subr.mxu0 0.0
  %310 = vmatpush1.xpose.msra.mxu0 %v277
  %311 = vmatprep.subr.mxu0 0.0
  %312 = vmatpush2.xpose.msra.mxu0 0.0
  %313 = vmatprep.subr.mxu0 0.0
  %314 = vmatpush2.xpose.msra.mxu0 0.0
  %315 = vmatprep.subr.mxu0 0.0
  %316 = vmatpush2.xpose.msra.mxu0 0.0
  %317 = vmatprep.subr.mxu0 0.0
  %318 = vmatpush2.xpose.msra.mxu0 0.0
  %319 = vmatprep.subr.mxu0 0.0
  %320 = vmatpush2.xpose.msra.mxu0 0.0
  %321 = vmatprep.subr.mxu0 0.0
  %322 = vmatpush2.xpose.msra.mxu0 0.0
  %323 = vmatprep.subr.mxu0 0.0
  %324 = vmatpush2.xpose.msra.mxu0 0.0
  %325 = vmatprep.subr.mxu0 0.0
  %326 = vmatpush2.xpose.msra.mxu0 0.0
  %327 = vmatprep.subr.mxu0 0.0
  %328 = vmatpush2.xpose.msra.mxu0 0.0
  %329 = vmatprep.subr.mxu0 0.0
  %330 = vmatpush2.xpose.msra.mxu0 0.0
  %331 = vmatprep.subr.mxu0 0.0
  %332 = vmatpush2.xpose.msra.mxu0 0.0
  %333 = vmatprep.subr.mxu0 0.0
  %334 = vmatpush2.xpose.msra.mxu0 0.0
  %335 = vmatprep.subr.mxu0 0.0
  %336 = vmatpush2.xpose.msra.mxu0 0.0
  %337 = vmatprep.subr.mxu0 0.0
  %338 = vmatpush2.xpose.msra.mxu0 0.0
  %339 = vmatprep.subr.mxu0 0.0
  %340 = vmatpush2.xpose.msra.mxu0 0.0
  %341 = vmatprep.subr.mxu0 0.0
  %342 = vmatpush2.xpose.msra.mxu0 0.0
  %343 = vmatprep.mubr.f32.mxu0 0.0
  %344 = vmatmul.mubr.f32.gmra.mxu0 %v275
  %v345 = vpop.f32.mrf.mxu0
  %v346 = vadd.f32 0.0, %v345
  %v347 = vpop.f32.mrf.mxu0
  %348 = vdwg.mxu0
  %v349 = vmul.f32 %v346, 0.17677669
  %v350 = vmul.f32 %v183, %v183
  %352 = vrot.lane.b32.xlu0 %v265, 8
  %v353 = vpop.permute.xlu0 %352
  %v355 = vsel %vm274, %v350, %v353
  %v356 = vadd.f32 %v350, %v265
  %357 = vrot.lane.b32.xlu0 %v265, 96
  %v358 = vpop.permute.xlu0 %357
  %361 = vrot.lane.b32.xlu0 %v356, 104
  %v362 = vpop.permute.xlu0 %361
  %v364 = vsel %vm274, %v358, %v362
  %vm365 = vcmask 130048
  %v367 = vsel %vm365, %v355, 0
  %v370 = vsel %vm365, %v364, 0
  %372 = vmatprep.subr.mxu0 0.0
  %373 = vmatpush1.xpose.msra.mxu0 0.0
  %374 = vmatprep.subr.mxu0 0.0
  %375 = vmatpush1.xpose.msra.mxu0 0.0
  %376 = vmatprep.subr.mxu0 0.0
  %377 = vmatpush1.xpose.msra.mxu0 0.0
  %378 = vmatprep.subr.mxu0 0.0
  %379 = vmatpush1.xpose.msra.mxu0 0.0
  %380 = vmatprep.subr.mxu0 0.0
  %381 = vmatpush1.xpose.msra.mxu0 0.0
  %382 = vmatprep.subr.mxu0 0.0
  %383 = vmatpush1.xpose.msra.mxu0 0.0
  %384 = vmatprep.subr.mxu0 0.0
  %385 = vmatpush1.xpose.msra.mxu0 0.0
  %386 = vmatprep.subr.mxu0 0.0
  %387 = vmatpush1.xpose.msra.mxu0 0.0
  %388 = vmatprep.subr.mxu0 0.0
  %389 = vmatpush1.xpose.msra.mxu0 0.0
  %390 = vmatprep.subr.mxu0 0.0
  %391 = vmatpush1.xpose.msra.mxu0 0.0
  %392 = vmatprep.subr.mxu0 0.0
  %393 = vmatpush1.xpose.msra.mxu0 0.0
  %394 = vmatprep.subr.mxu0 0.0
  %395 = vmatpush1.xpose.msra.mxu0 0.0
  %396 = vmatprep.subr.mxu0 0.0
  %397 = vmatpush1.xpose.msra.mxu0 0.0
  %398 = vmatprep.subr.mxu0 0.0
  %399 = vmatpush1.xpose.msra.mxu0 0.0
  %400 = vmatprep.subr.mxu0 0.0
  %401 = vmatpush1.xpose.msra.mxu0 0.0
  %402 = vmatprep.subr.mxu0 0.0
  %403 = vmatpush1.xpose.msra.mxu0 %v370
  %404 = vmatprep.subr.mxu0 0.0
  %405 = vmatpush2.xpose.msra.mxu0 0.0
  %406 = vmatprep.subr.mxu0 0.0
  %407 = vmatpush2.xpose.msra.mxu0 0.0
  %408 = vmatprep.subr.mxu0 0.0
  %409 = vmatpush2.xpose.msra.mxu0 0.0
  %410 = vmatprep.subr.mxu0 0.0
  %411 = vmatpush2.xpose.msra.mxu0 0.0
  %412 = vmatprep.subr.mxu0 0.0
  %413 = vmatpush2.xpose.msra.mxu0 0.0
  %414 = vmatprep.subr.mxu0 0.0
  %415 = vmatpush2.xpose.msra.mxu0 0.0
  %416 = vmatprep.subr.mxu0 0.0
  %417 = vmatpush2.xpose.msra.mxu0 0.0
  %418 = vmatprep.subr.mxu0 0.0
  %419 = vmatpush2.xpose.msra.mxu0 0.0
  %420 = vmatprep.subr.mxu0 0.0
  %421 = vmatpush2.xpose.msra.mxu0 0.0
  %422 = vmatprep.subr.mxu0 0.0
  %423 = vmatpush2.xpose.msra.mxu0 0.0
  %424 = vmatprep.subr.mxu0 0.0
  %425 = vmatpush2.xpose.msra.mxu0 0.0
  %426 = vmatprep.subr.mxu0 0.0
  %427 = vmatpush2.xpose.msra.mxu0 0.0
  %428 = vmatprep.subr.mxu0 0.0
  %429 = vmatpush2.xpose.msra.mxu0 0.0
  %430 = vmatprep.subr.mxu0 0.0
  %431 = vmatpush2.xpose.msra.mxu0 0.0
  %432 = vmatprep.subr.mxu0 0.0
  %433 = vmatpush2.xpose.msra.mxu0 0.0
  %434 = vmatprep.subr.mxu0 0.0
  %435 = vmatpush2.xpose.msra.mxu0 0.0
  %436 = vmatprep.mubr.f32.mxu0 0.0
  %437 = vmatmul.mubr.f32.gmra.mxu0 %v367
  %v438 = vpop.f32.mrf.mxu0
  %v439 = vadd.f32 0.0, %v438
  %v440 = vpop.f32.mrf.mxu0
  %441 = vdwg.mxu0
  %v442 = vmul.f32 %v439, 0.03125
  %v443 = vsel %vm274, %v349, -inf
  %444 = vmax.xlane.f32.xlu0 %v443
  %v445 = vpop.xlane.xlu0 %444
  %v446 = vsub.f32 %v349, %v445
  %v447 = vmul.f32 %v446, 1.442695
  %v448 = vpow.pop %v447
  %v449 = vsel %vm274, %v448, 0.0
  %450 = vadd.xlane.f32.xlu0 %v449
  %v451 = vpop.xlane.xlu0 %450
  %v452 = vrcp.pop %v451
  %v453 = vmul.f32 %v448, %v452
  %v454 = vmul.f32 %v453, %v453
  %v455 = vmul.f32 %v454, %v442
  %v456 = vsel %vm274, %v455, 0.0
  %457 = vadd.xlane.f32.xlu0 %v456
  %v458 = vpop.xlane.xlu0 %457
  %v459 = vmul.f32 %v453, 2.0
  %v460 = vsub.f32 1.0, %v459
  %v461 = vmul.f32 %v460, %v442
  %v462 = vadd.f32 %v461, %v458
  %v463 = vmul.f32 %v454, %v462
  %v464 = vmax.f32 %v463, 0.0
  %465 = vrot.lane.b32.xlu0 %v183, 64
  %v466 = vpop.permute.xlu0 %465
  %v469 = vsel %vm274, %v453, 0
  %471 = vmatprep.subr.mxu0 0.0
  %472 = vmatpush1.msra.mxu0 0.0
  %473 = vmatprep.subr.mxu0 0.0
  %474 = vmatpush1.msra.mxu0 0.0
  %475 = vmatprep.subr.mxu0 0.0
  %476 = vmatpush1.msra.mxu0 0.0
  %477 = vmatprep.subr.mxu0 0.0
  %478 = vmatpush1.msra.mxu0 0.0
  %479 = vmatprep.subr.mxu0 0.0
  %480 = vmatpush1.msra.mxu0 0.0
  %481 = vmatprep.subr.mxu0 0.0
  %482 = vmatpush1.msra.mxu0 0.0
  %483 = vmatprep.subr.mxu0 0.0
  %484 = vmatpush1.msra.mxu0 0.0
  %485 = vmatprep.subr.mxu0 0.0
  %486 = vmatpush1.msra.mxu0 0.0
  %487 = vmatprep.subr.mxu0 0.0
  %488 = vmatpush1.msra.mxu0 0.0
  %489 = vmatprep.subr.mxu0 0.0
  %490 = vmatpush1.msra.mxu0 0.0
  %491 = vmatprep.subr.mxu0 0.0
  %492 = vmatpush1.msra.mxu0 0.0
  %493 = vmatprep.subr.mxu0 0.0
  %494 = vmatpush1.msra.mxu0 0.0
  %495 = vmatprep.subr.mxu0 0.0
  %496 = vmatpush1.msra.mxu0 0.0
  %497 = vmatprep.subr.mxu0 0.0
  %498 = vmatpush1.msra.mxu0 0.0
  %499 = vmatprep.subr.mxu0 0.0
  %500 = vmatpush1.msra.mxu0 0.0
  %501 = vmatprep.subr.mxu0 0.0
  %502 = vmatpush1.msra.mxu0 %v466
  %503 = vmatprep.subr.mxu0 0.0
  %504 = vmatpush2.msra.mxu0 0.0
  %505 = vmatprep.subr.mxu0 0.0
  %506 = vmatpush2.msra.mxu0 0.0
  %507 = vmatprep.subr.mxu0 0.0
  %508 = vmatpush2.msra.mxu0 0.0
  %509 = vmatprep.subr.mxu0 0.0
  %510 = vmatpush2.msra.mxu0 0.0
  %511 = vmatprep.subr.mxu0 0.0
  %512 = vmatpush2.msra.mxu0 0.0
  %513 = vmatprep.subr.mxu0 0.0
  %514 = vmatpush2.msra.mxu0 0.0
  %515 = vmatprep.subr.mxu0 0.0
  %516 = vmatpush2.msra.mxu0 0.0
  %517 = vmatprep.subr.mxu0 0.0
  %518 = vmatpush2.msra.mxu0 0.0
  %519 = vmatprep.subr.mxu0 0.0
  %520 = vmatpush2.msra.mxu0 0.0
  %521 = vmatprep.subr.mxu0 0.0
  %522 = vmatpush2.msra.mxu0 0.0
  %523 = vmatprep.subr.mxu0 0.0
  %524 = vmatpush2.msra.mxu0 0.0
  %525 = vmatprep.subr.mxu0 0.0
  %526 = vmatpush2.msra.mxu0 0.0
  %527 = vmatprep.subr.mxu0 0.0
  %528 = vmatpush2.msra.mxu0 0.0
  %529 = vmatprep.subr.mxu0 0.0
  %530 = vmatpush2.msra.mxu0 0.0
  %531 = vmatprep.subr.mxu0 0.0
  %532 = vmatpush2.msra.mxu0 0.0
  %533 = vmatprep.subr.mxu0 0.0
  %534 = vmatpush2.msra.mxu0 0.0
  %535 = vmatprep.mubr.f32.mxu0 0.0
  %536 = vmatmul.mubr.f32.gmra.mxu0 %v469
  %v537 = vpop.f32.mrf.mxu0
  %v538 = vadd.f32 0.0, %v537
  %v539 = vpop.f32.mrf.mxu0
  %540 = vdwg.mxu0
  %542 = vrot.lane.b32.xlu0 %v464, 8
  %v543 = vpop.permute.xlu0 %542
  %v545 = vsel %vm274, %v454, %v543
  %546 = vrot.lane.b32.xlu0 %v265, 64
  %v547 = vpop.permute.xlu0 %546
  %548 = vrot.lane.b32.xlu0 %v356, 64
  %v549 = vpop.permute.xlu0 %548
  %v553 = vsel %vm365, %v545, 0
  %555 = vmatprep.subr.mxu0 0.0
  %556 = vmatpush1.msra.mxu0 0.0
  %557 = vmatprep.subr.mxu0 0.0
  %558 = vmatpush1.msra.mxu0 0.0
  %559 = vmatprep.subr.mxu0 0.0
  %560 = vmatpush1.msra.mxu0 0.0
  %561 = vmatprep.subr.mxu0 0.0
  %562 = vmatpush1.msra.mxu0 0.0
  %563 = vmatprep.subr.mxu0 0.0
  %564 = vmatpush1.msra.mxu0 0.0
  %565 = vmatprep.subr.mxu0 0.0
  %566 = vmatpush1.msra.mxu0 0.0
  %567 = vmatprep.subr.mxu0 0.0
  %568 = vmatpush1.msra.mxu0 0.0
  %569 = vmatprep.subr.mxu0 0.0
  %570 = vmatpush1.msra.mxu0 0.0
  %571 = vmatprep.subr.mxu0 0.0
  %572 = vmatpush1.msra.mxu0 0.0
  %573 = vmatprep.subr.mxu0 0.0
  %574 = vmatpush1.msra.mxu0 0.0
  %575 = vmatprep.subr.mxu0 0.0
  %576 = vmatpush1.msra.mxu0 0.0
  %577 = vmatprep.subr.mxu0 0.0
  %578 = vmatpush1.msra.mxu0 0.0
  %579 = vmatprep.subr.mxu0 0.0
  %580 = vmatpush1.msra.mxu0 0.0
  %581 = vmatprep.subr.mxu0 0.0
  %582 = vmatpush1.msra.mxu0 0.0
  %583 = vmatprep.subr.mxu0 0.0
  %584 = vmatpush1.msra.mxu0 %v549
  %585 = vmatprep.subr.mxu0 0.0
  %586 = vmatpush1.msra.mxu0 %v547
  %587 = vmatprep.subr.mxu0 0.0
  %588 = vmatpush2.msra.mxu0 0.0
  %589 = vmatprep.subr.mxu0 0.0
  %590 = vmatpush2.msra.mxu0 0.0
  %591 = vmatprep.subr.mxu0 0.0
  %592 = vmatpush2.msra.mxu0 0.0
  %593 = vmatprep.subr.mxu0 0.0
  %594 = vmatpush2.msra.mxu0 0.0
  %595 = vmatprep.subr.mxu0 0.0
  %596 = vmatpush2.msra.mxu0 0.0
  %597 = vmatprep.subr.mxu0 0.0
  %598 = vmatpush2.msra.mxu0 0.0
  %599 = vmatprep.subr.mxu0 0.0
  %600 = vmatpush2.msra.mxu0 0.0
  %601 = vmatprep.subr.mxu0 0.0
  %602 = vmatpush2.msra.mxu0 0.0
  %603 = vmatprep.subr.mxu0 0.0
  %604 = vmatpush2.msra.mxu0 0.0
  %605 = vmatprep.subr.mxu0 0.0
  %606 = vmatpush2.msra.mxu0 0.0
  %607 = vmatprep.subr.mxu0 0.0
  %608 = vmatpush2.msra.mxu0 0.0
  %609 = vmatprep.subr.mxu0 0.0
  %610 = vmatpush2.msra.mxu0 0.0
  %611 = vmatprep.subr.mxu0 0.0
  %612 = vmatpush2.msra.mxu0 0.0
  %613 = vmatprep.subr.mxu0 0.0
  %614 = vmatpush2.msra.mxu0 0.0
  %615 = vmatprep.subr.mxu0 0.0
  %616 = vmatpush2.msra.mxu0 0.0
  %617 = vmatprep.subr.mxu0 0.0
  %618 = vmatpush2.msra.mxu0 0.0
  %619 = vmatprep.mubr.f32.mxu0 0.0
  %620 = vmatmul.mubr.f32.gmra.mxu0 %v553
  %v621 = vpop.f32.mrf.mxu0
  %v622 = vadd.f32 0.0, %v621
  %v623 = vpop.f32.mrf.mxu0
  %624 = vdwg.mxu0
  %625 = vrot.lane.b32.xlu0 %v183, 120
  %v626 = vpop.permute.xlu0 %625
  %627 = vrot.lane.b32.xlu0 %v183, 88
  %v628 = vpop.permute.xlu0 %627
  %v629 = vsel %vm274, %v626, 0
  %v631 = vsel %vm274, %v628, 0
  %633 = vmatprep.subr.mxu0 0.0
  %634 = vmatpush1.xpose.msra.mxu0 0.0
  %635 = vmatprep.subr.mxu0 0.0
  %636 = vmatpush1.xpose.msra.mxu0 0.0
  %637 = vmatprep.subr.mxu0 0.0
  %638 = vmatpush1.xpose.msra.mxu0 0.0
  %639 = vmatprep.subr.mxu0 0.0
  %640 = vmatpush1.xpose.msra.mxu0 0.0
  %641 = vmatprep.subr.mxu0 0.0
  %642 = vmatpush1.xpose.msra.mxu0 0.0
  %643 = vmatprep.subr.mxu0 0.0
  %644 = vmatpush1.xpose.msra.mxu0 0.0
  %645 = vmatprep.subr.mxu0 0.0
  %646 = vmatpush1.xpose.msra.mxu0 0.0
  %647 = vmatprep.subr.mxu0 0.0
  %648 = vmatpush1.xpose.msra.mxu0 0.0
  %649 = vmatprep.subr.mxu0 0.0
  %650 = vmatpush1.xpose.msra.mxu0 0.0
  %651 = vmatprep.subr.mxu0 0.0
  %652 = vmatpush1.xpose.msra.mxu0 0.0
  %653 = vmatprep.subr.mxu0 0.0
  %654 = vmatpush1.xpose.msra.mxu0 0.0
  %655 = vmatprep.subr.mxu0 0.0
  %656 = vmatpush1.xpose.msra.mxu0 0.0
  %657 = vmatprep.subr.mxu0 0.0
  %658 = vmatpush1.xpose.msra.mxu0 0.0
  %659 = vmatprep.subr.mxu0 0.0
  %660 = vmatpush1.xpose.msra.mxu0 0.0
  %661 = vmatprep.subr.mxu0 0.0
  %662 = vmatpush1.xpose.msra.mxu0 0.0
  %663 = vmatprep.subr.mxu0 0.0
  %664 = vmatpush1.xpose.msra.mxu0 %v631
  %665 = vmatprep.subr.mxu0 0.0
  %666 = vmatpush2.xpose.msra.mxu0 0.0
  %667 = vmatprep.subr.mxu0 0.0
  %668 = vmatpush2.xpose.msra.mxu0 0.0
  %669 = vmatprep.subr.mxu0 0.0
  %670 = vmatpush2.xpose.msra.mxu0 0.0
  %671 = vmatprep.subr.mxu0 0.0
  %672 = vmatpush2.xpose.msra.mxu0 0.0
  %673 = vmatprep.subr.mxu0 0.0
  %674 = vmatpush2.xpose.msra.mxu0 0.0
  %675 = vmatprep.subr.mxu0 0.0
  %676 = vmatpush2.xpose.msra.mxu0 0.0
  %677 = vmatprep.subr.mxu0 0.0
  %678 = vmatpush2.xpose.msra.mxu0 0.0
  %679 = vmatprep.subr.mxu0 0.0
  %680 = vmatpush2.xpose.msra.mxu0 0.0
  %681 = vmatprep.subr.mxu0 0.0
  %682 = vmatpush2.xpose.msra.mxu0 0.0
  %683 = vmatprep.subr.mxu0 0.0
  %684 = vmatpush2.xpose.msra.mxu0 0.0
  %685 = vmatprep.subr.mxu0 0.0
  %686 = vmatpush2.xpose.msra.mxu0 0.0
  %687 = vmatprep.subr.mxu0 0.0
  %688 = vmatpush2.xpose.msra.mxu0 0.0
  %689 = vmatprep.subr.mxu0 0.0
  %690 = vmatpush2.xpose.msra.mxu0 0.0
  %691 = vmatprep.subr.mxu0 0.0
  %692 = vmatpush2.xpose.msra.mxu0 0.0
  %693 = vmatprep.subr.mxu0 0.0
  %694 = vmatpush2.xpose.msra.mxu0 0.0
  %695 = vmatprep.subr.mxu0 0.0
  %696 = vmatpush2.xpose.msra.mxu0 0.0
  %697 = vmatprep.mubr.f32.mxu0 0.0
  %698 = vmatmul.mubr.f32.gmra.mxu0 %v629
  %v699 = vpop.f32.mrf.mxu0
  %v700 = vadd.f32 0.0, %v699
  %v701 = vpop.f32.mrf.mxu0
  %702 = vdwg.mxu0
  %v703 = vmul.f32 %v700, 0.17677669
  %705 = vrot.lane.b32.xlu0 %v350, 120
  %v706 = vpop.permute.xlu0 %705
  %v708 = vsel %vm274, %v706, %v265
  %709 = vrot.lane.b32.xlu0 %v265, 88
  %v710 = vpop.permute.xlu0 %709
  %712 = vrot.lane.b32.xlu0 %v356, 96
  %v713 = vpop.permute.xlu0 %712
  %v715 = vsel %vm274, %v710, %v713
  %v717 = vsel %vm365, %v708, 0
  %v720 = vsel %vm365, %v715, 0
  %722 = vmatprep.subr.mxu0 0.0
  %723 = vmatpush1.xpose.msra.mxu0 0.0
  %724 = vmatprep.subr.mxu0 0.0
  %725 = vmatpush1.xpose.msra.mxu0 0.0
  %726 = vmatprep.subr.mxu0 0.0
  %727 = vmatpush1.xpose.msra.mxu0 0.0
  %728 = vmatprep.subr.mxu0 0.0
  %729 = vmatpush1.xpose.msra.mxu0 0.0
  %730 = vmatprep.subr.mxu0 0.0
  %731 = vmatpush1.xpose.msra.mxu0 0.0
  %732 = vmatprep.subr.mxu0 0.0
  %733 = vmatpush1.xpose.msra.mxu0 0.0
  %734 = vmatprep.subr.mxu0 0.0
  %735 = vmatpush1.xpose.msra.mxu0 0.0
  %736 = vmatprep.subr.mxu0 0.0
  %737 = vmatpush1.xpose.msra.mxu0 0.0
  %738 = vmatprep.subr.mxu0 0.0
  %739 = vmatpush1.xpose.msra.mxu0 0.0
  %740 = vmatprep.subr.mxu0 0.0
  %741 = vmatpush1.xpose.msra.mxu0 0.0
  %742 = vmatprep.subr.mxu0 0.0
  %743 = vmatpush1.xpose.msra.mxu0 0.0
  %744 = vmatprep.subr.mxu0 0.0
  %745 = vmatpush1.xpose.msra.mxu0 0.0
  %746 = vmatprep.subr.mxu0 0.0
  %747 = vmatpush1.xpose.msra.mxu0 0.0
  %748 = vmatprep.subr.mxu0 0.0
  %749 = vmatpush1.xpose.msra.mxu0 0.0
  %750 = vmatprep.subr.mxu0 0.0
  %751 = vmatpush1.xpose.msra.mxu0 0.0
  %752 = vmatprep.subr.mxu0 0.0
  %753 = vmatpush1.xpose.msra.mxu0 %v720
  %754 = vmatprep.subr.mxu0 0.0
  %755 = vmatpush2.xpose.msra.mxu0 0.0
  %756 = vmatprep.subr.mxu0 0.0
  %757 = vmatpush2.xpose.msra.mxu0 0.0
  %758 = vmatprep.subr.mxu0 0.0
  %759 = vmatpush2.xpose.msra.mxu0 0.0
  %760 = vmatprep.subr.mxu0 0.0
  %761 = vmatpush2.xpose.msra.mxu0 0.0
  %762 = vmatprep.subr.mxu0 0.0
  %763 = vmatpush2.xpose.msra.mxu0 0.0
  %764 = vmatprep.subr.mxu0 0.0
  %765 = vmatpush2.xpose.msra.mxu0 0.0
  %766 = vmatprep.subr.mxu0 0.0
  %767 = vmatpush2.xpose.msra.mxu0 0.0
  %768 = vmatprep.subr.mxu0 0.0
  %769 = vmatpush2.xpose.msra.mxu0 0.0
  %770 = vmatprep.subr.mxu0 0.0
  %771 = vmatpush2.xpose.msra.mxu0 0.0
  %772 = vmatprep.subr.mxu0 0.0
  %773 = vmatpush2.xpose.msra.mxu0 0.0
  %774 = vmatprep.subr.mxu0 0.0
  %775 = vmatpush2.xpose.msra.mxu0 0.0
  %776 = vmatprep.subr.mxu0 0.0
  %777 = vmatpush2.xpose.msra.mxu0 0.0
  %778 = vmatprep.subr.mxu0 0.0
  %779 = vmatpush2.xpose.msra.mxu0 0.0
  %780 = vmatprep.subr.mxu0 0.0
  %781 = vmatpush2.xpose.msra.mxu0 0.0
  %782 = vmatprep.subr.mxu0 0.0
  %783 = vmatpush2.xpose.msra.mxu0 0.0
  %784 = vmatprep.subr.mxu0 0.0
  %785 = vmatpush2.xpose.msra.mxu0 0.0
  %786 = vmatprep.mubr.f32.mxu0 0.0
  %787 = vmatmul.mubr.f32.gmra.mxu0 %v717
  %v788 = vpop.f32.mrf.mxu0
  %v789 = vadd.f32 0.0, %v788
  %v790 = vpop.f32.mrf.mxu0
  %791 = vdwg.mxu0
  %v792 = vmul.f32 %v789, 0.03125
  %v793 = vsel %vm274, %v703, -inf
  %794 = vmax.xlane.f32.xlu0 %v793
  %v795 = vpop.xlane.xlu0 %794
  %v796 = vsub.f32 %v703, %v795
  %v797 = vmul.f32 %v796, 1.442695
  %v798 = vpow.pop %v797
  %v799 = vsel %vm274, %v798, 0.0
  %800 = vadd.xlane.f32.xlu0 %v799
  %v801 = vpop.xlane.xlu0 %800
  %v802 = vrcp.pop %v801
  %v803 = vmul.f32 %v798, %v802
  %v804 = vmul.f32 %v803, %v803
  %v805 = vmul.f32 %v804, %v792
  %v806 = vsel %vm274, %v805, 0.0
  %807 = vadd.xlane.f32.xlu0 %v806
  %v808 = vpop.xlane.xlu0 %807
  %v809 = vmul.f32 %v803, 2.0
  %v810 = vsub.f32 1.0, %v809
  %v811 = vmul.f32 %v810, %v792
  %v812 = vadd.f32 %v811, %v808
  %v813 = vmul.f32 %v804, %v812
  %v814 = vmax.f32 %v813, 0.0
  %815 = vrot.lane.b32.xlu0 %v183, 56
  %v816 = vpop.permute.xlu0 %815
  %v819 = vsel %vm274, %v803, 0
  %821 = vmatprep.subr.mxu0 0.0
  %822 = vmatpush1.msra.mxu0 0.0
  %823 = vmatprep.subr.mxu0 0.0
  %824 = vmatpush1.msra.mxu0 0.0
  %825 = vmatprep.subr.mxu0 0.0
  %826 = vmatpush1.msra.mxu0 0.0
  %827 = vmatprep.subr.mxu0 0.0
  %828 = vmatpush1.msra.mxu0 0.0
  %829 = vmatprep.subr.mxu0 0.0
  %830 = vmatpush1.msra.mxu0 0.0
  %831 = vmatprep.subr.mxu0 0.0
  %832 = vmatpush1.msra.mxu0 0.0
  %833 = vmatprep.subr.mxu0 0.0
  %834 = vmatpush1.msra.mxu0 0.0
  %835 = vmatprep.subr.mxu0 0.0
  %836 = vmatpush1.msra.mxu0 0.0
  %837 = vmatprep.subr.mxu0 0.0
  %838 = vmatpush1.msra.mxu0 0.0
  %839 = vmatprep.subr.mxu0 0.0
  %840 = vmatpush1.msra.mxu0 0.0
  %841 = vmatprep.subr.mxu0 0.0
  %842 = vmatpush1.msra.mxu0 0.0
  %843 = vmatprep.subr.mxu0 0.0
  %844 = vmatpush1.msra.mxu0 0.0
  %845 = vmatprep.subr.mxu0 0.0
  %846 = vmatpush1.msra.mxu0 0.0
  %847 = vmatprep.subr.mxu0 0.0
  %848 = vmatpush1.msra.mxu0 0.0
  %849 = vmatprep.subr.mxu0 0.0
  %850 = vmatpush1.msra.mxu0 0.0
  %851 = vmatprep.subr.mxu0 0.0
  %852 = vmatpush1.msra.mxu0 %v816
  %853 = vmatprep.subr.mxu0 0.0
  %854 = vmatpush2.msra.mxu0 0.0
  %855 = vmatprep.subr.mxu0 0.0
  %856 = vmatpush2.msra.mxu0 0.0
  %857 = vmatprep.subr.mxu0 0.0
  %858 = vmatpush2.msra.mxu0 0.0
  %859 = vmatprep.subr.mxu0 0.0
  %860 = vmatpush2.msra.mxu0 0.0
  %861 = vmatprep.subr.mxu0 0.0
  %862 = vmatpush2.msra.mxu0 0.0
  %863 = vmatprep.subr.mxu0 0.0
  %864 = vmatpush2.msra.mxu0 0.0
  %865 = vmatprep.subr.mxu0 0.0
  %866 = vmatpush2.msra.mxu0 0.0
  %867 = vmatprep.subr.mxu0 0.0
  %868 = vmatpush2.msra.mxu0 0.0
  %869 = vmatprep.subr.mxu0 0.0
  %870 = vmatpush2.msra.mxu0 0.0
  %871 = vmatprep.subr.mxu0 0.0
  %872 = vmatpush2.msra.mxu0 0.0
  %873 = vmatprep.subr.mxu0 0.0
  %874 = vmatpush2.msra.mxu0 0.0
  %875 = vmatprep.subr.mxu0 0.0
  %876 = vmatpush2.msra.mxu0 0.0
  %877 = vmatprep.subr.mxu0 0.0
  %878 = vmatpush2.msra.mxu0 0.0
  %879 = vmatprep.subr.mxu0 0.0
  %880 = vmatpush2.msra.mxu0 0.0
  %881 = vmatprep.subr.mxu0 0.0
  %882 = vmatpush2.msra.mxu0 0.0
  %883 = vmatprep.subr.mxu0 0.0
  %884 = vmatpush2.msra.mxu0 0.0
  %885 = vmatprep.mubr.f32.mxu0 0.0
  %886 = vmatmul.mubr.f32.gmra.mxu0 %v819
  %v887 = vpop.f32.mrf.mxu0
  %v888 = vadd.f32 0.0, %v887
  %v889 = vpop.f32.mrf.mxu0
  %890 = vdwg.mxu0
  %892 = vrot.lane.b32.xlu0 %v814, 8
  %v893 = vpop.permute.xlu0 %892
  %v895 = vsel %vm274, %v804, %v893
  %896 = vrot.lane.b32.xlu0 %v265, 56
  %v897 = vpop.permute.xlu0 %896
  %898 = vrot.lane.b32.xlu0 %v356, 56
  %v899 = vpop.permute.xlu0 %898
  %v903 = vsel %vm365, %v895, 0
  %905 = vmatprep.subr.mxu0 0.0
  %906 = vmatpush1.msra.mxu0 0.0
  %907 = vmatprep.subr.mxu0 0.0
  %908 = vmatpush1.msra.mxu0 0.0
  %909 = vmatprep.subr.mxu0 0.0
  %910 = vmatpush1.msra.mxu0 0.0
  %911 = vmatprep.subr.mxu0 0.0
  %912 = vmatpush1.msra.mxu0 0.0
  %913 = vmatprep.subr.mxu0 0.0
  %914 = vmatpush1.msra.mxu0 0.0
  %915 = vmatprep.subr.mxu0 0.0
  %916 = vmatpush1.msra.mxu0 0.0
  %917 = vmatprep.subr.mxu0 0.0
  %918 = vmatpush1.msra.mxu0 0.0
  %919 = vmatprep.subr.mxu0 0.0
  %920 = vmatpush1.msra.mxu0 0.0
  %921 = vmatprep.subr.mxu0 0.0
  %922 = vmatpush1.msra.mxu0 0.0
  %923 = vmatprep.subr.mxu0 0.0
  %924 = vmatpush1.msra.mxu0 0.0
  %925 = vmatprep.subr.mxu0 0.0
  %926 = vmatpush1.msra.mxu0 0.0
  %927 = vmatprep.subr.mxu0 0.0
  %928 = vmatpush1.msra.mxu0 0.0
  %929 = vmatprep.subr.mxu0 0.0
  %930 = vmatpush1.msra.mxu0 0.0
  %931 = vmatprep.subr.mxu0 0.0
  %932 = vmatpush1.msra.mxu0 0.0
  %933 = vmatprep.subr.mxu0 0.0
  %934 = vmatpush1.msra.mxu0 %v899
  %935 = vmatprep.subr.mxu0 0.0
  %936 = vmatpush1.msra.mxu0 %v897
  %937 = vmatprep.subr.mxu0 0.0
  %938 = vmatpush2.msra.mxu0 0.0
  %939 = vmatprep.subr.mxu0 0.0
  %940 = vmatpush2.msra.mxu0 0.0
  %941 = vmatprep.subr.mxu0 0.0
  %942 = vmatpush2.msra.mxu0 0.0
  %943 = vmatprep.subr.mxu0 0.0
  %944 = vmatpush2.msra.mxu0 0.0
  %945 = vmatprep.subr.mxu0 0.0
  %946 = vmatpush2.msra.mxu0 0.0
  %947 = vmatprep.subr.mxu0 0.0
  %948 = vmatpush2.msra.mxu0 0.0
  %949 = vmatprep.subr.mxu0 0.0
  %950 = vmatpush2.msra.mxu0 0.0
  %951 = vmatprep.subr.mxu0 0.0
  %952 = vmatpush2.msra.mxu0 0.0
  %953 = vmatprep.subr.mxu0 0.0
  %954 = vmatpush2.msra.mxu0 0.0
  %955 = vmatprep.subr.mxu0 0.0
  %956 = vmatpush2.msra.mxu0 0.0
  %957 = vmatprep.subr.mxu0 0.0
  %958 = vmatpush2.msra.mxu0 0.0
  %959 = vmatprep.subr.mxu0 0.0
  %960 = vmatpush2.msra.mxu0 0.0
  %961 = vmatprep.subr.mxu0 0.0
  %962 = vmatpush2.msra.mxu0 0.0
  %963 = vmatprep.subr.mxu0 0.0
  %964 = vmatpush2.msra.mxu0 0.0
  %965 = vmatprep.subr.mxu0 0.0
  %966 = vmatpush2.msra.mxu0 0.0
  %967 = vmatprep.subr.mxu0 0.0
  %968 = vmatpush2.msra.mxu0 0.0
  %969 = vmatprep.mubr.f32.mxu0 0.0
  %970 = vmatmul.mubr.f32.gmra.mxu0 %v903
  %v971 = vpop.f32.mrf.mxu0
  %v972 = vadd.f32 0.0, %v971
  %v973 = vpop.f32.mrf.mxu0
  %974 = vdwg.mxu0
  %975 = vrot.lane.b32.xlu0 %v183, 112
  %v976 = vpop.permute.xlu0 %975
  %977 = vrot.lane.b32.xlu0 %v183, 80
  %v978 = vpop.permute.xlu0 %977
  %v979 = vsel %vm274, %v976, 0
  %v981 = vsel %vm274, %v978, 0
  %983 = vmatprep.subr.mxu0 0.0
  %984 = vmatpush1.xpose.msra.mxu0 0.0
  %985 = vmatprep.subr.mxu0 0.0
  %986 = vmatpush1.xpose.msra.mxu0 0.0
  %987 = vmatprep.subr.mxu0 0.0
  %988 = vmatpush1.xpose.msra.mxu0 0.0
  %989 = vmatprep.subr.mxu0 0.0
  %990 = vmatpush1.xpose.msra.mxu0 0.0
  %991 = vmatprep.subr.mxu0 0.0
  %992 = vmatpush1.xpose.msra.mxu0 0.0
  %993 = vmatprep.subr.mxu0 0.0
  %994 = vmatpush1.xpose.msra.mxu0 0.0
  %995 = vmatprep.subr.mxu0 0.0
  %996 = vmatpush1.xpose.msra.mxu0 0.0
  %997 = vmatprep.subr.mxu0 0.0
  %998 = vmatpush1.xpose.msra.mxu0 0.0
  %999 = vmatprep.subr.mxu0 0.0
  %1000 = vmatpush1.xpose.msra.mxu0 0.0
  %1001 = vmatprep.subr.mxu0 0.0
  %1002 = vmatpush1.xpose.msra.mxu0 0.0
  %1003 = vmatprep.subr.mxu0 0.0
  %1004 = vmatpush1.xpose.msra.mxu0 0.0
  %1005 = vmatprep.subr.mxu0 0.0
  %1006 = vmatpush1.xpose.msra.mxu0 0.0
  %1007 = vmatprep.subr.mxu0 0.0
  %1008 = vmatpush1.xpose.msra.mxu0 0.0
  %1009 = vmatprep.subr.mxu0 0.0
  %1010 = vmatpush1.xpose.msra.mxu0 0.0
  %1011 = vmatprep.subr.mxu0 0.0
  %1012 = vmatpush1.xpose.msra.mxu0 0.0
  %1013 = vmatprep.subr.mxu0 0.0
  %1014 = vmatpush1.xpose.msra.mxu0 %v981
  %1015 = vmatprep.subr.mxu0 0.0
  %1016 = vmatpush2.xpose.msra.mxu0 0.0
  %1017 = vmatprep.subr.mxu0 0.0
  %1018 = vmatpush2.xpose.msra.mxu0 0.0
  %1019 = vmatprep.subr.mxu0 0.0
  %1020 = vmatpush2.xpose.msra.mxu0 0.0
  %1021 = vmatprep.subr.mxu0 0.0
  %1022 = vmatpush2.xpose.msra.mxu0 0.0
  %1023 = vmatprep.subr.mxu0 0.0
  %1024 = vmatpush2.xpose.msra.mxu0 0.0
  %1025 = vmatprep.subr.mxu0 0.0
  %1026 = vmatpush2.xpose.msra.mxu0 0.0
  %1027 = vmatprep.subr.mxu0 0.0
  %1028 = vmatpush2.xpose.msra.mxu0 0.0
  %1029 = vmatprep.subr.mxu0 0.0
  %1030 = vmatpush2.xpose.msra.mxu0 0.0
  %1031 = vmatprep.subr.mxu0 0.0
  %1032 = vmatpush2.xpose.msra.mxu0 0.0
  %1033 = vmatprep.subr.mxu0 0.0
  %1034 = vmatpush2.xpose.msra.mxu0 0.0
  %1035 = vmatprep.subr.mxu0 0.0
  %1036 = vmatpush2.xpose.msra.mxu0 0.0
  %1037 = vmatprep.subr.mxu0 0.0
  %1038 = vmatpush2.xpose.msra.mxu0 0.0
  %1039 = vmatprep.subr.mxu0 0.0
  %1040 = vmatpush2.xpose.msra.mxu0 0.0
  %1041 = vmatprep.subr.mxu0 0.0
  %1042 = vmatpush2.xpose.msra.mxu0 0.0
  %1043 = vmatprep.subr.mxu0 0.0
  %1044 = vmatpush2.xpose.msra.mxu0 0.0
  %1045 = vmatprep.subr.mxu0 0.0
  %1046 = vmatpush2.xpose.msra.mxu0 0.0
  %1047 = vmatprep.mubr.f32.mxu0 0.0
  %1048 = vmatmul.mubr.f32.gmra.mxu0 %v979
  %v1049 = vpop.f32.mrf.mxu0
  %v1050 = vadd.f32 0.0, %v1049
  %v1051 = vpop.f32.mrf.mxu0
  %1052 = vdwg.mxu0
  %v1053 = vmul.f32 %v1050, 0.17677669
  %1054 = vrot.lane.b32.xlu0 %v350, 112
  %v1055 = vpop.permute.xlu0 %1054
  %1057 = vrot.lane.b32.xlu0 %v265, 120
  %v1058 = vpop.permute.xlu0 %1057
  %v1060 = vsel %vm274, %v1055, %v1058
  %1061 = vrot.lane.b32.xlu0 %v265, 80
  %v1062 = vpop.permute.xlu0 %1061
  %1064 = vrot.lane.b32.xlu0 %v356, 88
  %v1065 = vpop.permute.xlu0 %1064
  %v1067 = vsel %vm274, %v1062, %v1065
  %v1069 = vsel %vm365, %v1060, 0
  %v1072 = vsel %vm365, %v1067, 0
  %1074 = vmatprep.subr.mxu0 0.0
  %1075 = vmatpush1.xpose.msra.mxu0 0.0
  %1076 = vmatprep.subr.mxu0 0.0
  %1077 = vmatpush1.xpose.msra.mxu0 0.0
  %1078 = vmatprep.subr.mxu0 0.0
  %1079 = vmatpush1.xpose.msra.mxu0 0.0
  %1080 = vmatprep.subr.mxu0 0.0
  %1081 = vmatpush1.xpose.msra.mxu0 0.0
  %1082 = vmatprep.subr.mxu0 0.0
  %1083 = vmatpush1.xpose.msra.mxu0 0.0
  %1084 = vmatprep.subr.mxu0 0.0
  %1085 = vmatpush1.xpose.msra.mxu0 0.0
  %1086 = vmatprep.subr.mxu0 0.0
  %1087 = vmatpush1.xpose.msra.mxu0 0.0
  %1088 = vmatprep.subr.mxu0 0.0
  %1089 = vmatpush1.xpose.msra.mxu0 0.0
  %1090 = vmatprep.subr.mxu0 0.0
  %1091 = vmatpush1.xpose.msra.mxu0 0.0
  %1092 = vmatprep.subr.mxu0 0.0
  %1093 = vmatpush1.xpose.msra.mxu0 0.0
  %1094 = vmatprep.subr.mxu0 0.0
  %1095 = vmatpush1.xpose.msra.mxu0 0.0
  %1096 = vmatprep.subr.mxu0 0.0
  %1097 = vmatpush1.xpose.msra.mxu0 0.0
  %1098 = vmatprep.subr.mxu0 0.0
  %1099 = vmatpush1.xpose.msra.mxu0 0.0
  %1100 = vmatprep.subr.mxu0 0.0
  %1101 = vmatpush1.xpose.msra.mxu0 0.0
  %1102 = vmatprep.subr.mxu0 0.0
  %1103 = vmatpush1.xpose.msra.mxu0 0.0
  %1104 = vmatprep.subr.mxu0 0.0
  %1105 = vmatpush1.xpose.msra.mxu0 %v1072
  %1106 = vmatprep.subr.mxu0 0.0
  %1107 = vmatpush2.xpose.msra.mxu0 0.0
  %1108 = vmatprep.subr.mxu0 0.0
  %1109 = vmatpush2.xpose.msra.mxu0 0.0
  %1110 = vmatprep.subr.mxu0 0.0
  %1111 = vmatpush2.xpose.msra.mxu0 0.0
  %1112 = vmatprep.subr.mxu0 0.0
  %1113 = vmatpush2.xpose.msra.mxu0 0.0
  %1114 = vmatprep.subr.mxu0 0.0
  %1115 = vmatpush2.xpose.msra.mxu0 0.0
  %1116 = vmatprep.subr.mxu0 0.0
  %1117 = vmatpush2.xpose.msra.mxu0 0.0
  %1118 = vmatprep.subr.mxu0 0.0
  %1119 = vmatpush2.xpose.msra.mxu0 0.0
  %1120 = vmatprep.subr.mxu0 0.0
  %1121 = vmatpush2.xpose.msra.mxu0 0.0
  %1122 = vmatprep.subr.mxu0 0.0
  %1123 = vmatpush2.xpose.msra.mxu0 0.0
  %1124 = vmatprep.subr.mxu0 0.0
  %1125 = vmatpush2.xpose.msra.mxu0 0.0
  %1126 = vmatprep.subr.mxu0 0.0
  %1127 = vmatpush2.xpose.msra.mxu0 0.0
  %1128 = vmatprep.subr.mxu0 0.0
  %1129 = vmatpush2.xpose.msra.mxu0 0.0
  %1130 = vmatprep.subr.mxu0 0.0
  %1131 = vmatpush2.xpose.msra.mxu0 0.0
  %1132 = vmatprep.subr.mxu0 0.0
  %1133 = vmatpush2.xpose.msra.mxu0 0.0
  %1134 = vmatprep.subr.mxu0 0.0
  %1135 = vmatpush2.xpose.msra.mxu0 0.0
  %1136 = vmatprep.subr.mxu0 0.0
  %1137 = vmatpush2.xpose.msra.mxu0 0.0
  %1138 = vmatprep.mubr.f32.mxu0 0.0
  %1139 = vmatmul.mubr.f32.gmra.mxu0 %v1069
  %v1140 = vpop.f32.mrf.mxu0
  %v1141 = vadd.f32 0.0, %v1140
  %v1142 = vpop.f32.mrf.mxu0
  %1143 = vdwg.mxu0
  %v1144 = vmul.f32 %v1141, 0.03125
  %v1145 = vsel %vm274, %v1053, -inf
  %1146 = vmax.xlane.f32.xlu0 %v1145
  %v1147 = vpop.xlane.xlu0 %1146
  %v1148 = vsub.f32 %v1053, %v1147
  %v1149 = vmul.f32 %v1148, 1.442695
  %v1150 = vpow.pop %v1149
  %v1151 = vsel %vm274, %v1150, 0.0
  %1152 = vadd.xlane.f32.xlu0 %v1151
  %v1153 = vpop.xlane.xlu0 %1152
  %v1154 = vrcp.pop %v1153
  %v1155 = vmul.f32 %v1150, %v1154
  %v1156 = vmul.f32 %v1155, %v1155
  %v1157 = vmul.f32 %v1156, %v1144
  %v1158 = vsel %vm274, %v1157, 0.0
  %1159 = vadd.xlane.f32.xlu0 %v1158
  %v1160 = vpop.xlane.xlu0 %1159
  %v1161 = vmul.f32 %v1155, 2.0
  %v1162 = vsub.f32 1.0, %v1161
  %v1163 = vmul.f32 %v1162, %v1144
  %v1164 = vadd.f32 %v1163, %v1160
  %v1165 = vmul.f32 %v1156, %v1164
  %v1166 = vmax.f32 %v1165, 0.0
  %1167 = vrot.lane.b32.xlu0 %v183, 48
  %v1168 = vpop.permute.xlu0 %1167
  %v1171 = vsel %vm274, %v1155, 0
  %1173 = vmatprep.subr.mxu0 0.0
  %1174 = vmatpush1.msra.mxu0 0.0
  %1175 = vmatprep.subr.mxu0 0.0
  %1176 = vmatpush1.msra.mxu0 0.0
  %1177 = vmatprep.subr.mxu0 0.0
  %1178 = vmatpush1.msra.mxu0 0.0
  %1179 = vmatprep.subr.mxu0 0.0
  %1180 = vmatpush1.msra.mxu0 0.0
  %1181 = vmatprep.subr.mxu0 0.0
  %1182 = vmatpush1.msra.mxu0 0.0
  %1183 = vmatprep.subr.mxu0 0.0
  %1184 = vmatpush1.msra.mxu0 0.0
  %1185 = vmatprep.subr.mxu0 0.0
  %1186 = vmatpush1.msra.mxu0 0.0
  %1187 = vmatprep.subr.mxu0 0.0
  %1188 = vmatpush1.msra.mxu0 0.0
  %1189 = vmatprep.subr.mxu0 0.0
  %1190 = vmatpush1.msra.mxu0 0.0
  %1191 = vmatprep.subr.mxu0 0.0
  %1192 = vmatpush1.msra.mxu0 0.0
  %1193 = vmatprep.subr.mxu0 0.0
  %1194 = vmatpush1.msra.mxu0 0.0
  %1195 = vmatprep.subr.mxu0 0.0
  %1196 = vmatpush1.msra.mxu0 0.0
  %1197 = vmatprep.subr.mxu0 0.0
  %1198 = vmatpush1.msra.mxu0 0.0
  %1199 = vmatprep.subr.mxu0 0.0
  %1200 = vmatpush1.msra.mxu0 0.0
  %1201 = vmatprep.subr.mxu0 0.0
  %1202 = vmatpush1.msra.mxu0 0.0
  %1203 = vmatprep.subr.mxu0 0.0
  %1204 = vmatpush1.msra.mxu0 %v1168
  %1205 = vmatprep.subr.mxu0 0.0
  %1206 = vmatpush2.msra.mxu0 0.0
  %1207 = vmatprep.subr.mxu0 0.0
  %1208 = vmatpush2.msra.mxu0 0.0
  %1209 = vmatprep.subr.mxu0 0.0
  %1210 = vmatpush2.msra.mxu0 0.0
  %1211 = vmatprep.subr.mxu0 0.0
  %1212 = vmatpush2.msra.mxu0 0.0
  %1213 = vmatprep.subr.mxu0 0.0
  %1214 = vmatpush2.msra.mxu0 0.0
  %1215 = vmatprep.subr.mxu0 0.0
  %1216 = vmatpush2.msra.mxu0 0.0
  %1217 = vmatprep.subr.mxu0 0.0
  %1218 = vmatpush2.msra.mxu0 0.0
  %1219 = vmatprep.subr.mxu0 0.0
  %1220 = vmatpush2.msra.mxu0 0.0
  %1221 = vmatprep.subr.mxu0 0.0
  %1222 = vmatpush2.msra.mxu0 0.0
  %1223 = vmatprep.subr.mxu0 0.0
  %1224 = vmatpush2.msra.mxu0 0.0
  %1225 = vmatprep.subr.mxu0 0.0
  %1226 = vmatpush2.msra.mxu0 0.0
  %1227 = vmatprep.subr.mxu0 0.0
  %1228 = vmatpush2.msra.mxu0 0.0
  %1229 = vmatprep.subr.mxu0 0.0
  %1230 = vmatpush2.msra.mxu0 0.0
  %1231 = vmatprep.subr.mxu0 0.0
  %1232 = vmatpush2.msra.mxu0 0.0
  %1233 = vmatprep.subr.mxu0 0.0
  %1234 = vmatpush2.msra.mxu0 0.0
  %1235 = vmatprep.subr.mxu0 0.0
  %1236 = vmatpush2.msra.mxu0 0.0
  %1237 = vmatprep.mubr.f32.mxu0 0.0
  %1238 = vmatmul.mubr.f32.gmra.mxu0 %v1171
  %v1239 = vpop.f32.mrf.mxu0
  %v1240 = vadd.f32 0.0, %v1239
  %v1241 = vpop.f32.mrf.mxu0
  %1242 = vdwg.mxu0
  %1244 = vrot.lane.b32.xlu0 %v1166, 8
  %v1245 = vpop.permute.xlu0 %1244
  %v1247 = vsel %vm274, %v1156, %v1245
  %1248 = vrot.lane.b32.xlu0 %v265, 48
  %v1249 = vpop.permute.xlu0 %1248
  %1250 = vrot.lane.b32.xlu0 %v356, 48
  %v1251 = vpop.permute.xlu0 %1250
  %v1255 = vsel %vm365, %v1247, 0
  %1257 = vmatprep.subr.mxu0 0.0
  %1258 = vmatpush1.msra.mxu0 0.0
  %1259 = vmatprep.subr.mxu0 0.0
  %1260 = vmatpush1.msra.mxu0 0.0
  %1261 = vmatprep.subr.mxu0 0.0
  %1262 = vmatpush1.msra.mxu0 0.0
  %1263 = vmatprep.subr.mxu0 0.0
  %1264 = vmatpush1.msra.mxu0 0.0
  %1265 = vmatprep.subr.mxu0 0.0
  %1266 = vmatpush1.msra.mxu0 0.0
  %1267 = vmatprep.subr.mxu0 0.0
  %1268 = vmatpush1.msra.mxu0 0.0
  %1269 = vmatprep.subr.mxu0 0.0
  %1270 = vmatpush1.msra.mxu0 0.0
  %1271 = vmatprep.subr.mxu0 0.0
  %1272 = vmatpush1.msra.mxu0 0.0
  %1273 = vmatprep.subr.mxu0 0.0
  %1274 = vmatpush1.msra.mxu0 0.0
  %1275 = vmatprep.subr.mxu0 0.0
  %1276 = vmatpush1.msra.mxu0 0.0
  %1277 = vmatprep.subr.mxu0 0.0
  %1278 = vmatpush1.msra.mxu0 0.0
  %1279 = vmatprep.subr.mxu0 0.0
  %1280 = vmatpush1.msra.mxu0 0.0
  %1281 = vmatprep.subr.mxu0 0.0
  %1282 = vmatpush1.msra.mxu0 0.0
  %1283 = vmatprep.subr.mxu0 0.0
  %1284 = vmatpush1.msra.mxu0 0.0
  %1285 = vmatprep.subr.mxu0 0.0
  %1286 = vmatpush1.msra.mxu0 %v1251
  %1287 = vmatprep.subr.mxu0 0.0
  %1288 = vmatpush1.msra.mxu0 %v1249
  %1289 = vmatprep.subr.mxu0 0.0
  %1290 = vmatpush2.msra.mxu0 0.0
  %1291 = vmatprep.subr.mxu0 0.0
  %1292 = vmatpush2.msra.mxu0 0.0
  %1293 = vmatprep.subr.mxu0 0.0
  %1294 = vmatpush2.msra.mxu0 0.0
  %1295 = vmatprep.subr.mxu0 0.0
  %1296 = vmatpush2.msra.mxu0 0.0
  %1297 = vmatprep.subr.mxu0 0.0
  %1298 = vmatpush2.msra.mxu0 0.0
  %1299 = vmatprep.subr.mxu0 0.0
  %1300 = vmatpush2.msra.mxu0 0.0
  %1301 = vmatprep.subr.mxu0 0.0
  %1302 = vmatpush2.msra.mxu0 0.0
  %1303 = vmatprep.subr.mxu0 0.0
  %1304 = vmatpush2.msra.mxu0 0.0
  %1305 = vmatprep.subr.mxu0 0.0
  %1306 = vmatpush2.msra.mxu0 0.0
  %1307 = vmatprep.subr.mxu0 0.0
  %1308 = vmatpush2.msra.mxu0 0.0
  %1309 = vmatprep.subr.mxu0 0.0
  %1310 = vmatpush2.msra.mxu0 0.0
  %1311 = vmatprep.subr.mxu0 0.0
  %1312 = vmatpush2.msra.mxu0 0.0
  %1313 = vmatprep.subr.mxu0 0.0
  %1314 = vmatpush2.msra.mxu0 0.0
  %1315 = vmatprep.subr.mxu0 0.0
  %1316 = vmatpush2.msra.mxu0 0.0
  %1317 = vmatprep.subr.mxu0 0.0
  %1318 = vmatpush2.msra.mxu0 0.0
  %1319 = vmatprep.subr.mxu0 0.0
  %1320 = vmatpush2.msra.mxu0 0.0
  %1321 = vmatprep.mubr.f32.mxu0 0.0
  %1322 = vmatmul.mubr.f32.gmra.mxu0 %v1255
  %v1323 = vpop.f32.mrf.mxu0
  %v1324 = vadd.f32 0.0, %v1323
  %v1325 = vpop.f32.mrf.mxu0
  %1326 = vdwg.mxu0
  %1327 = vrot.lane.b32.xlu0 %v183, 104
  %v1328 = vpop.permute.xlu0 %1327
  %1329 = vrot.lane.b32.xlu0 %v183, 72
  %v1330 = vpop.permute.xlu0 %1329
  %v1331 = vsel %vm274, %v1328, 0
  %v1333 = vsel %vm274, %v1330, 0
  %1335 = vmatprep.subr.mxu0 0.0
  %1336 = vmatpush1.xpose.msra.mxu0 0.0
  %1337 = vmatprep.subr.mxu0 0.0
  %1338 = vmatpush1.xpose.msra.mxu0 0.0
  %1339 = vmatprep.subr.mxu0 0.0
  %1340 = vmatpush1.xpose.msra.mxu0 0.0
  %1341 = vmatprep.subr.mxu0 0.0
  %1342 = vmatpush1.xpose.msra.mxu0 0.0
  %1343 = vmatprep.subr.mxu0 0.0
  %1344 = vmatpush1.xpose.msra.mxu0 0.0
  %1345 = vmatprep.subr.mxu0 0.0
  %1346 = vmatpush1.xpose.msra.mxu0 0.0
  %1347 = vmatprep.subr.mxu0 0.0
  %1348 = vmatpush1.xpose.msra.mxu0 0.0
  %1349 = vmatprep.subr.mxu0 0.0
  %1350 = vmatpush1.xpose.msra.mxu0 0.0
  %1351 = vmatprep.subr.mxu0 0.0
  %1352 = vmatpush1.xpose.msra.mxu0 0.0
  %1353 = vmatprep.subr.mxu0 0.0
  %1354 = vmatpush1.xpose.msra.mxu0 0.0
  %1355 = vmatprep.subr.mxu0 0.0
  %1356 = vmatpush1.xpose.msra.mxu0 0.0
  %1357 = vmatprep.subr.mxu0 0.0
  %1358 = vmatpush1.xpose.msra.mxu0 0.0
  %1359 = vmatprep.subr.mxu0 0.0
  %1360 = vmatpush1.xpose.msra.mxu0 0.0
  %1361 = vmatprep.subr.mxu0 0.0
  %1362 = vmatpush1.xpose.msra.mxu0 0.0
  %1363 = vmatprep.subr.mxu0 0.0
  %1364 = vmatpush1.xpose.msra.mxu0 0.0
  %1365 = vmatprep.subr.mxu0 0.0
  %1366 = vmatpush1.xpose.msra.mxu0 %v1333
  %1367 = vmatprep.subr.mxu0 0.0
  %1368 = vmatpush2.xpose.msra.mxu0 0.0
  %1369 = vmatprep.subr.mxu0 0.0
  %1370 = vmatpush2.xpose.msra.mxu0 0.0
  %1371 = vmatprep.subr.mxu0 0.0
  %1372 = vmatpush2.xpose.msra.mxu0 0.0
  %1373 = vmatprep.subr.mxu0 0.0
  %1374 = vmatpush2.xpose.msra.mxu0 0.0
  %1375 = vmatprep.subr.mxu0 0.0
  %1376 = vmatpush2.xpose.msra.mxu0 0.0
  %1377 = vmatprep.subr.mxu0 0.0
  %1378 = vmatpush2.xpose.msra.mxu0 0.0
  %1379 = vmatprep.subr.mxu0 0.0
  %1380 = vmatpush2.xpose.msra.mxu0 0.0
  %1381 = vmatprep.subr.mxu0 0.0
  %1382 = vmatpush2.xpose.msra.mxu0 0.0
  %1383 = vmatprep.subr.mxu0 0.0
  %1384 = vmatpush2.xpose.msra.mxu0 0.0
  %1385 = vmatprep.subr.mxu0 0.0
  %1386 = vmatpush2.xpose.msra.mxu0 0.0
  %1387 = vmatprep.subr.mxu0 0.0
  %1388 = vmatpush2.xpose.msra.mxu0 0.0
  %1389 = vmatprep.subr.mxu0 0.0
  %1390 = vmatpush2.xpose.msra.mxu0 0.0
  %1391 = vmatprep.subr.mxu0 0.0
  %1392 = vmatpush2.xpose.msra.mxu0 0.0
  %1393 = vmatprep.subr.mxu0 0.0
  %1394 = vmatpush2.xpose.msra.mxu0 0.0
  %1395 = vmatprep.subr.mxu0 0.0
  %1396 = vmatpush2.xpose.msra.mxu0 0.0
  %1397 = vmatprep.subr.mxu0 0.0
  %1398 = vmatpush2.xpose.msra.mxu0 0.0
  %1399 = vmatprep.mubr.f32.mxu0 0.0
  %1400 = vmatmul.mubr.f32.gmra.mxu0 %v1331
  %v1401 = vpop.f32.mrf.mxu0
  %v1402 = vadd.f32 0.0, %v1401
  %v1403 = vpop.f32.mrf.mxu0
  %1404 = vdwg.mxu0
  %v1405 = vmul.f32 %v1402, 0.17677669
  %1406 = vrot.lane.b32.xlu0 %v350, 104
  %v1407 = vpop.permute.xlu0 %1406
  %1409 = vrot.lane.b32.xlu0 %v265, 112
  %v1410 = vpop.permute.xlu0 %1409
  %v1412 = vsel %vm274, %v1407, %v1410
  %1413 = vrot.lane.b32.xlu0 %v265, 72
  %v1414 = vpop.permute.xlu0 %1413
  %1416 = vrot.lane.b32.xlu0 %v356, 80
  %v1417 = vpop.permute.xlu0 %1416
  %v1419 = vsel %vm274, %v1414, %v1417
  %v1421 = vsel %vm365, %v1412, 0
  %v1424 = vsel %vm365, %v1419, 0
  %1426 = vmatprep.subr.mxu0 0.0
  %1427 = vmatpush1.xpose.msra.mxu0 0.0
  %1428 = vmatprep.subr.mxu0 0.0
  %1429 = vmatpush1.xpose.msra.mxu0 0.0
  %1430 = vmatprep.subr.mxu0 0.0
  %1431 = vmatpush1.xpose.msra.mxu0 0.0
  %1432 = vmatprep.subr.mxu0 0.0
  %1433 = vmatpush1.xpose.msra.mxu0 0.0
  %1434 = vmatprep.subr.mxu0 0.0
  %1435 = vmatpush1.xpose.msra.mxu0 0.0
  %1436 = vmatprep.subr.mxu0 0.0
  %1437 = vmatpush1.xpose.msra.mxu0 0.0
  %1438 = vmatprep.subr.mxu0 0.0
  %1439 = vmatpush1.xpose.msra.mxu0 0.0
  %1440 = vmatprep.subr.mxu0 0.0
  %1441 = vmatpush1.xpose.msra.mxu0 0.0
  %1442 = vmatprep.subr.mxu0 0.0
  %1443 = vmatpush1.xpose.msra.mxu0 0.0
  %1444 = vmatprep.subr.mxu0 0.0
  %1445 = vmatpush1.xpose.msra.mxu0 0.0
  %1446 = vmatprep.subr.mxu0 0.0
  %1447 = vmatpush1.xpose.msra.mxu0 0.0
  %1448 = vmatprep.subr.mxu0 0.0
  %1449 = vmatpush1.xpose.msra.mxu0 0.0
  %1450 = vmatprep.subr.mxu0 0.0
  %1451 = vmatpush1.xpose.msra.mxu0 0.0
  %1452 = vmatprep.subr.mxu0 0.0
  %1453 = vmatpush1.xpose.msra.mxu0 0.0
  %1454 = vmatprep.subr.mxu0 0.0
  %1455 = vmatpush1.xpose.msra.mxu0 0.0
  %1456 = vmatprep.subr.mxu0 0.0
  %1457 = vmatpush1.xpose.msra.mxu0 %v1424
  %1458 = vmatprep.subr.mxu0 0.0
  %1459 = vmatpush2.xpose.msra.mxu0 0.0
  %1460 = vmatprep.subr.mxu0 0.0
  %1461 = vmatpush2.xpose.msra.mxu0 0.0
  %1462 = vmatprep.subr.mxu0 0.0
  %1463 = vmatpush2.xpose.msra.mxu0 0.0
  %1464 = vmatprep.subr.mxu0 0.0
  %1465 = vmatpush2.xpose.msra.mxu0 0.0
  %1466 = vmatprep.subr.mxu0 0.0
  %1467 = vmatpush2.xpose.msra.mxu0 0.0
  %1468 = vmatprep.subr.mxu0 0.0
  %1469 = vmatpush2.xpose.msra.mxu0 0.0
  %1470 = vmatprep.subr.mxu0 0.0
  %1471 = vmatpush2.xpose.msra.mxu0 0.0
  %1472 = vmatprep.subr.mxu0 0.0
  %1473 = vmatpush2.xpose.msra.mxu0 0.0
  %1474 = vmatprep.subr.mxu0 0.0
  %1475 = vmatpush2.xpose.msra.mxu0 0.0
  %1476 = vmatprep.subr.mxu0 0.0
  %1477 = vmatpush2.xpose.msra.mxu0 0.0
  %1478 = vmatprep.subr.mxu0 0.0
  %1479 = vmatpush2.xpose.msra.mxu0 0.0
  %1480 = vmatprep.subr.mxu0 0.0
  %1481 = vmatpush2.xpose.msra.mxu0 0.0
  %1482 = vmatprep.subr.mxu0 0.0
  %1483 = vmatpush2.xpose.msra.mxu0 0.0
  %1484 = vmatprep.subr.mxu0 0.0
  %1485 = vmatpush2.xpose.msra.mxu0 0.0
  %1486 = vmatprep.subr.mxu0 0.0
  %1487 = vmatpush2.xpose.msra.mxu0 0.0
  %1488 = vmatprep.subr.mxu0 0.0
  %1489 = vmatpush2.xpose.msra.mxu0 0.0
  %1490 = vmatprep.mubr.f32.mxu0 0.0
  %1491 = vmatmul.mubr.f32.gmra.mxu0 %v1421
  %v1492 = vpop.f32.mrf.mxu0
  %v1493 = vadd.f32 0.0, %v1492
  %v1494 = vpop.f32.mrf.mxu0
  %1495 = vdwg.mxu0
  %v1496 = vmul.f32 %v1493, 0.03125
  %v1497 = vsel %vm274, %v1405, -inf
  %1498 = vmax.xlane.f32.xlu0 %v1497
  %v1499 = vpop.xlane.xlu0 %1498
  %v1500 = vsub.f32 %v1405, %v1499
  %v1501 = vmul.f32 %v1500, 1.442695
  %v1502 = vpow.pop %v1501
  %v1503 = vsel %vm274, %v1502, 0.0
  %1504 = vadd.xlane.f32.xlu0 %v1503
  %v1505 = vpop.xlane.xlu0 %1504
  %v1506 = vrcp.pop %v1505
  %v1507 = vmul.f32 %v1502, %v1506
  %v1508 = vmul.f32 %v1507, %v1507
  %v1509 = vmul.f32 %v1508, %v1496
  %v1510 = vsel %vm274, %v1509, 0.0
  %1511 = vadd.xlane.f32.xlu0 %v1510
  %v1512 = vpop.xlane.xlu0 %1511
  %v1513 = vmul.f32 %v1507, 2.0
  %v1514 = vsub.f32 1.0, %v1513
  %v1515 = vmul.f32 %v1514, %v1496
  %v1516 = vadd.f32 %v1515, %v1512
  %v1517 = vmul.f32 %v1508, %v1516
  %v1518 = vmax.f32 %v1517, 0.0
  %1519 = vrot.lane.b32.xlu0 %v183, 40
  %v1520 = vpop.permute.xlu0 %1519
  %v1523 = vsel %vm274, %v1507, 0
  %1525 = vmatprep.subr.mxu0 0.0
  %1526 = vmatpush1.msra.mxu0 0.0
  %1527 = vmatprep.subr.mxu0 0.0
  %1528 = vmatpush1.msra.mxu0 0.0
  %1529 = vmatprep.subr.mxu0 0.0
  %1530 = vmatpush1.msra.mxu0 0.0
  %1531 = vmatprep.subr.mxu0 0.0
  %1532 = vmatpush1.msra.mxu0 0.0
  %1533 = vmatprep.subr.mxu0 0.0
  %1534 = vmatpush1.msra.mxu0 0.0
  %1535 = vmatprep.subr.mxu0 0.0
  %1536 = vmatpush1.msra.mxu0 0.0
  %1537 = vmatprep.subr.mxu0 0.0
  %1538 = vmatpush1.msra.mxu0 0.0
  %1539 = vmatprep.subr.mxu0 0.0
  %1540 = vmatpush1.msra.mxu0 0.0
  %1541 = vmatprep.subr.mxu0 0.0
  %1542 = vmatpush1.msra.mxu0 0.0
  %1543 = vmatprep.subr.mxu0 0.0
  %1544 = vmatpush1.msra.mxu0 0.0
  %1545 = vmatprep.subr.mxu0 0.0
  %1546 = vmatpush1.msra.mxu0 0.0
  %1547 = vmatprep.subr.mxu0 0.0
  %1548 = vmatpush1.msra.mxu0 0.0
  %1549 = vmatprep.subr.mxu0 0.0
  %1550 = vmatpush1.msra.mxu0 0.0
  %1551 = vmatprep.subr.mxu0 0.0
  %1552 = vmatpush1.msra.mxu0 0.0
  %1553 = vmatprep.subr.mxu0 0.0
  %1554 = vmatpush1.msra.mxu0 0.0
  %1555 = vmatprep.subr.mxu0 0.0
  %1556 = vmatpush1.msra.mxu0 %v1520
  %1557 = vmatprep.subr.mxu0 0.0
  %1558 = vmatpush2.msra.mxu0 0.0
  %1559 = vmatprep.subr.mxu0 0.0
  %1560 = vmatpush2.msra.mxu0 0.0
  %1561 = vmatprep.subr.mxu0 0.0
  %1562 = vmatpush2.msra.mxu0 0.0
  %1563 = vmatprep.subr.mxu0 0.0
  %1564 = vmatpush2.msra.mxu0 0.0
  %1565 = vmatprep.subr.mxu0 0.0
  %1566 = vmatpush2.msra.mxu0 0.0
  %1567 = vmatprep.subr.mxu0 0.0
  %1568 = vmatpush2.msra.mxu0 0.0
  %1569 = vmatprep.subr.mxu0 0.0
  %1570 = vmatpush2.msra.mxu0 0.0
  %1571 = vmatprep.subr.mxu0 0.0
  %1572 = vmatpush2.msra.mxu0 0.0
  %1573 = vmatprep.subr.mxu0 0.0
  %1574 = vmatpush2.msra.mxu0 0.0
  %1575 = vmatprep.subr.mxu0 0.0
  %1576 = vmatpush2.msra.mxu0 0.0
  %1577 = vmatprep.subr.mxu0 0.0
  %1578 = vmatpush2.msra.mxu0 0.0
  %1579 = vmatprep.subr.mxu0 0.0
  %1580 = vmatpush2.msra.mxu0 0.0
  %1581 = vmatprep.subr.mxu0 0.0
  %1582 = vmatpush2.msra.mxu0 0.0
  %1583 = vmatprep.subr.mxu0 0.0
  %1584 = vmatpush2.msra.mxu0 0.0
  %1585 = vmatprep.subr.mxu0 0.0
  %1586 = vmatpush2.msra.mxu0 0.0
  %1587 = vmatprep.subr.mxu0 0.0
  %1588 = vmatpush2.msra.mxu0 0.0
  %1589 = vmatprep.mubr.f32.mxu0 0.0
  %1590 = vmatmul.mubr.f32.gmra.mxu0 %v1523
  %v1591 = vpop.f32.mrf.mxu0
  %v1592 = vadd.f32 0.0, %v1591
  %v1593 = vpop.f32.mrf.mxu0
  %1594 = vdwg.mxu0
  %1596 = vrot.lane.b32.xlu0 %v1518, 8
  %v1597 = vpop.permute.xlu0 %1596
  %v1599 = vsel %vm274, %v1508, %v1597
  %1600 = vrot.lane.b32.xlu0 %v265, 40
  %v1601 = vpop.permute.xlu0 %1600
  %1602 = vrot.lane.b32.xlu0 %v356, 40
  %v1603 = vpop.permute.xlu0 %1602
  %v1607 = vsel %vm365, %v1599, 0
  %1609 = vmatprep.subr.mxu0 0.0
  %1610 = vmatpush1.msra.mxu0 0.0
  %1611 = vmatprep.subr.mxu0 0.0
  %1612 = vmatpush1.msra.mxu0 0.0
  %1613 = vmatprep.subr.mxu0 0.0
  %1614 = vmatpush1.msra.mxu0 0.0
  %1615 = vmatprep.subr.mxu0 0.0
  %1616 = vmatpush1.msra.mxu0 0.0
  %1617 = vmatprep.subr.mxu0 0.0
  %1618 = vmatpush1.msra.mxu0 0.0
  %1619 = vmatprep.subr.mxu0 0.0
  %1620 = vmatpush1.msra.mxu0 0.0
  %1621 = vmatprep.subr.mxu0 0.0
  %1622 = vmatpush1.msra.mxu0 0.0
  %1623 = vmatprep.subr.mxu0 0.0
  %1624 = vmatpush1.msra.mxu0 0.0
  %1625 = vmatprep.subr.mxu0 0.0
  %1626 = vmatpush1.msra.mxu0 0.0
  %1627 = vmatprep.subr.mxu0 0.0
  %1628 = vmatpush1.msra.mxu0 0.0
  %1629 = vmatprep.subr.mxu0 0.0
  %1630 = vmatpush1.msra.mxu0 0.0
  %1631 = vmatprep.subr.mxu0 0.0
  %1632 = vmatpush1.msra.mxu0 0.0
  %1633 = vmatprep.subr.mxu0 0.0
  %1634 = vmatpush1.msra.mxu0 0.0
  %1635 = vmatprep.subr.mxu0 0.0
  %1636 = vmatpush1.msra.mxu0 0.0
  %1637 = vmatprep.subr.mxu0 0.0
  %1638 = vmatpush1.msra.mxu0 %v1603
  %1639 = vmatprep.subr.mxu0 0.0
  %1640 = vmatpush1.msra.mxu0 %v1601
  %1641 = vmatprep.subr.mxu0 0.0
  %1642 = vmatpush2.msra.mxu0 0.0
  %1643 = vmatprep.subr.mxu0 0.0
  %1644 = vmatpush2.msra.mxu0 0.0
  %1645 = vmatprep.subr.mxu0 0.0
  %1646 = vmatpush2.msra.mxu0 0.0
  %1647 = vmatprep.subr.mxu0 0.0
  %1648 = vmatpush2.msra.mxu0 0.0
  %1649 = vmatprep.subr.mxu0 0.0
  %1650 = vmatpush2.msra.mxu0 0.0
  %1651 = vmatprep.subr.mxu0 0.0
  %1652 = vmatpush2.msra.mxu0 0.0
  %1653 = vmatprep.subr.mxu0 0.0
  %1654 = vmatpush2.msra.mxu0 0.0
  %1655 = vmatprep.subr.mxu0 0.0
  %1656 = vmatpush2.msra.mxu0 0.0
  %1657 = vmatprep.subr.mxu0 0.0
  %1658 = vmatpush2.msra.mxu0 0.0
  %1659 = vmatprep.subr.mxu0 0.0
  %1660 = vmatpush2.msra.mxu0 0.0
  %1661 = vmatprep.subr.mxu0 0.0
  %1662 = vmatpush2.msra.mxu0 0.0
  %1663 = vmatprep.subr.mxu0 0.0
  %1664 = vmatpush2.msra.mxu0 0.0
  %1665 = vmatprep.subr.mxu0 0.0
  %1666 = vmatpush2.msra.mxu0 0.0
  %1667 = vmatprep.subr.mxu0 0.0
  %1668 = vmatpush2.msra.mxu0 0.0
  %1669 = vmatprep.subr.mxu0 0.0
  %1670 = vmatpush2.msra.mxu0 0.0
  %1671 = vmatprep.subr.mxu0 0.0
  %1672 = vmatpush2.msra.mxu0 0.0
  %1673 = vmatprep.mubr.f32.mxu0 0.0
  %1674 = vmatmul.mubr.f32.gmra.mxu0 %v1607
  %v1675 = vpop.f32.mrf.mxu0
  %v1676 = vadd.f32 0.0, %v1675
  %v1677 = vpop.f32.mrf.mxu0
  %1678 = vdwg.mxu0
  %1680 = vrot.lane.b32.xlu0 %v888, 8
  %v1681 = vpop.permute.xlu0 %1680
  %1684 = vrot.lane.b32.xlu0 %v1240, 16
  %v1685 = vpop.permute.xlu0 %1684
  %1688 = vrot.lane.b32.xlu0 %v1592, 24
  %v1689 = vpop.permute.xlu0 %1688
  %v1691 = vsel %vm274, %v538, %v1681
  %v1692 = vsel %vm365, %v1691, %v1685
  %vm1693 = vcmask 195584
  %v1694 = vsel %vm1693, %v1692, %v1689
  %1696 = vrot.lane.b32.xlu0 %v972, 8
  %v1697 = vpop.permute.xlu0 %1696
  %1700 = vrot.lane.b32.xlu0 %v1324, 16
  %v1701 = vpop.permute.xlu0 %1700
  %1704 = vrot.lane.b32.xlu0 %v1676, 24
  %v1705 = vpop.permute.xlu0 %1704
  %v1707 = vsel %vm274, %v622, %v1697
  %v1708 = vsel %vm365, %v1707, %v1701
  %v1709 = vsel %vm1693, %v1708, %v1705
  %1711 = vrot.lane.b32.xlu0 %v186, 96
  %v1712 = vpop.permute.xlu0 %1711
  %v1713 = vsel %vm274, %v186, 0
  %v1715 = vsel %vm274, %v1712, 0
  %1717 = vmatprep.subr.mxu0 0.0
  %1718 = vmatpush1.xpose.msra.mxu0 0.0
  %1719 = vmatprep.subr.mxu0 0.0
  %1720 = vmatpush1.xpose.msra.mxu0 0.0
  %1721 = vmatprep.subr.mxu0 0.0
  %1722 = vmatpush1.xpose.msra.mxu0 0.0
  %1723 = vmatprep.subr.mxu0 0.0
  %1724 = vmatpush1.xpose.msra.mxu0 0.0
  %1725 = vmatprep.subr.mxu0 0.0
  %1726 = vmatpush1.xpose.msra.mxu0 0.0
  %1727 = vmatprep.subr.mxu0 0.0
  %1728 = vmatpush1.xpose.msra.mxu0 0.0
  %1729 = vmatprep.subr.mxu0 0.0
  %1730 = vmatpush1.xpose.msra.mxu0 0.0
  %1731 = vmatprep.subr.mxu0 0.0
  %1732 = vmatpush1.xpose.msra.mxu0 0.0
  %1733 = vmatprep.subr.mxu0 0.0
  %1734 = vmatpush1.xpose.msra.mxu0 0.0
  %1735 = vmatprep.subr.mxu0 0.0
  %1736 = vmatpush1.xpose.msra.mxu0 0.0
  %1737 = vmatprep.subr.mxu0 0.0
  %1738 = vmatpush1.xpose.msra.mxu0 0.0
  %1739 = vmatprep.subr.mxu0 0.0
  %1740 = vmatpush1.xpose.msra.mxu0 0.0
  %1741 = vmatprep.subr.mxu0 0.0
  %1742 = vmatpush1.xpose.msra.mxu0 0.0
  %1743 = vmatprep.subr.mxu0 0.0
  %1744 = vmatpush1.xpose.msra.mxu0 0.0
  %1745 = vmatprep.subr.mxu0 0.0
  %1746 = vmatpush1.xpose.msra.mxu0 0.0
  %1747 = vmatprep.subr.mxu0 0.0
  %1748 = vmatpush1.xpose.msra.mxu0 %v1715
  %1749 = vmatprep.subr.mxu0 0.0
  %1750 = vmatpush2.xpose.msra.mxu0 0.0
  %1751 = vmatprep.subr.mxu0 0.0
  %1752 = vmatpush2.xpose.msra.mxu0 0.0
  %1753 = vmatprep.subr.mxu0 0.0
  %1754 = vmatpush2.xpose.msra.mxu0 0.0
  %1755 = vmatprep.subr.mxu0 0.0
  %1756 = vmatpush2.xpose.msra.mxu0 0.0
  %1757 = vmatprep.subr.mxu0 0.0
  %1758 = vmatpush2.xpose.msra.mxu0 0.0
  %1759 = vmatprep.subr.mxu0 0.0
  %1760 = vmatpush2.xpose.msra.mxu0 0.0
  %1761 = vmatprep.subr.mxu0 0.0
  %1762 = vmatpush2.xpose.msra.mxu0 0.0
  %1763 = vmatprep.subr.mxu0 0.0
  %1764 = vmatpush2.xpose.msra.mxu0 0.0
  %1765 = vmatprep.subr.mxu0 0.0
  %1766 = vmatpush2.xpose.msra.mxu0 0.0
  %1767 = vmatprep.subr.mxu0 0.0
  %1768 = vmatpush2.xpose.msra.mxu0 0.0
  %1769 = vmatprep.subr.mxu0 0.0
  %1770 = vmatpush2.xpose.msra.mxu0 0.0
  %1771 = vmatprep.subr.mxu0 0.0
  %1772 = vmatpush2.xpose.msra.mxu0 0.0
  %1773 = vmatprep.subr.mxu0 0.0
  %1774 = vmatpush2.xpose.msra.mxu0 0.0
  %1775 = vmatprep.subr.mxu0 0.0
  %1776 = vmatpush2.xpose.msra.mxu0 0.0
  %1777 = vmatprep.subr.mxu0 0.0
  %1778 = vmatpush2.xpose.msra.mxu0 0.0
  %1779 = vmatprep.subr.mxu0 0.0
  %1780 = vmatpush2.xpose.msra.mxu0 0.0
  %1781 = vmatprep.mubr.f32.mxu0 0.0
  %1782 = vmatmul.mubr.f32.gmra.mxu0 %v1713
  %v1783 = vpop.f32.mrf.mxu0
  %v1784 = vadd.f32 0.0, %v1783
  %v1785 = vpop.f32.mrf.mxu0
  %1786 = vdwg.mxu0
  %v1787 = vmul.f32 %v1784, 0.17677669
  %v1788 = vmul.f32 %v186, %v186
  %1790 = vrot.lane.b32.xlu0 %v268, 8
  %v1791 = vpop.permute.xlu0 %1790
  %v1793 = vsel %vm274, %v1788, %v1791
  %v1794 = vadd.f32 %v1788, %v268
  %1795 = vrot.lane.b32.xlu0 %v268, 96
  %v1796 = vpop.permute.xlu0 %1795
  %1799 = vrot.lane.b32.xlu0 %v1794, 104
  %v1800 = vpop.permute.xlu0 %1799
  %v1802 = vsel %vm274, %v1796, %v1800
  %v1804 = vsel %vm365, %v1793, 0
  %v1807 = vsel %vm365, %v1802, 0
  %1809 = vmatprep.subr.mxu0 0.0
  %1810 = vmatpush1.xpose.msra.mxu0 0.0
  %1811 = vmatprep.subr.mxu0 0.0
  %1812 = vmatpush1.xpose.msra.mxu0 0.0
  %1813 = vmatprep.subr.mxu0 0.0
  %1814 = vmatpush1.xpose.msra.mxu0 0.0
  %1815 = vmatprep.subr.mxu0 0.0
  %1816 = vmatpush1.xpose.msra.mxu0 0.0
  %1817 = vmatprep.subr.mxu0 0.0
  %1818 = vmatpush1.xpose.msra.mxu0 0.0
  %1819 = vmatprep.subr.mxu0 0.0
  %1820 = vmatpush1.xpose.msra.mxu0 0.0
  %1821 = vmatprep.subr.mxu0 0.0
  %1822 = vmatpush1.xpose.msra.mxu0 0.0
  %1823 = vmatprep.subr.mxu0 0.0
  %1824 = vmatpush1.xpose.msra.mxu0 0.0
  %1825 = vmatprep.subr.mxu0 0.0
  %1826 = vmatpush1.xpose.msra.mxu0 0.0
  %1827 = vmatprep.subr.mxu0 0.0
  %1828 = vmatpush1.xpose.msra.mxu0 0.0
  %1829 = vmatprep.subr.mxu0 0.0
  %1830 = vmatpush1.xpose.msra.mxu0 0.0
  %1831 = vmatprep.subr.mxu0 0.0
  %1832 = vmatpush1.xpose.msra.mxu0 0.0
  %1833 = vmatprep.subr.mxu0 0.0
  %1834 = vmatpush1.xpose.msra.mxu0 0.0
  %1835 = vmatprep.subr.mxu0 0.0
  %1836 = vmatpush1.xpose.msra.mxu0 0.0
  %1837 = vmatprep.subr.mxu0 0.0
  %1838 = vmatpush1.xpose.msra.mxu0 0.0
  %1839 = vmatprep.subr.mxu0 0.0
  %1840 = vmatpush1.xpose.msra.mxu0 %v1807
  %1841 = vmatprep.subr.mxu0 0.0
  %1842 = vmatpush2.xpose.msra.mxu0 0.0
  %1843 = vmatprep.subr.mxu0 0.0
  %1844 = vmatpush2.xpose.msra.mxu0 0.0
  %1845 = vmatprep.subr.mxu0 0.0
  %1846 = vmatpush2.xpose.msra.mxu0 0.0
  %1847 = vmatprep.subr.mxu0 0.0
  %1848 = vmatpush2.xpose.msra.mxu0 0.0
  %1849 = vmatprep.subr.mxu0 0.0
  %1850 = vmatpush2.xpose.msra.mxu0 0.0
  %1851 = vmatprep.subr.mxu0 0.0
  %1852 = vmatpush2.xpose.msra.mxu0 0.0
  %1853 = vmatprep.subr.mxu0 0.0
  %1854 = vmatpush2.xpose.msra.mxu0 0.0
  %1855 = vmatprep.subr.mxu0 0.0
  %1856 = vmatpush2.xpose.msra.mxu0 0.0
  %1857 = vmatprep.subr.mxu0 0.0
  %1858 = vmatpush2.xpose.msra.mxu0 0.0
  %1859 = vmatprep.subr.mxu0 0.0
  %1860 = vmatpush2.xpose.msra.mxu0 0.0
  %1861 = vmatprep.subr.mxu0 0.0
  %1862 = vmatpush2.xpose.msra.mxu0 0.0
  %1863 = vmatprep.subr.mxu0 0.0
  %1864 = vmatpush2.xpose.msra.mxu0 0.0
  %1865 = vmatprep.subr.mxu0 0.0
  %1866 = vmatpush2.xpose.msra.mxu0 0.0
  %1867 = vmatprep.subr.mxu0 0.0
  %1868 = vmatpush2.xpose.msra.mxu0 0.0
  %1869 = vmatprep.subr.mxu0 0.0
  %1870 = vmatpush2.xpose.msra.mxu0 0.0
  %1871 = vmatprep.subr.mxu0 0.0
  %1872 = vmatpush2.xpose.msra.mxu0 0.0
  %1873 = vmatprep.mubr.f32.mxu0 0.0
  %1874 = vmatmul.mubr.f32.gmra.mxu0 %v1804
  %v1875 = vpop.f32.mrf.mxu0
  %v1876 = vadd.f32 0.0, %v1875
  %v1877 = vpop.f32.mrf.mxu0
  %1878 = vdwg.mxu0
  %v1879 = vmul.f32 %v1876, 0.03125
  %v1880 = vsel %vm274, %v1787, -inf
  %1881 = vmax.xlane.f32.xlu0 %v1880
  %v1882 = vpop.xlane.xlu0 %1881
  %v1883 = vsub.f32 %v1787, %v1882
  %v1884 = vmul.f32 %v1883, 1.442695
  %v1885 = vpow.pop %v1884
  %v1886 = vsel %vm274, %v1885, 0.0
  %1887 = vadd.xlane.f32.xlu0 %v1886
  %v1888 = vpop.xlane.xlu0 %1887
  %v1889 = vrcp.pop %v1888
  %v1890 = vmul.f32 %v1885, %v1889
  %v1891 = vmul.f32 %v1890, %v1890
  %v1892 = vmul.f32 %v1891, %v1879
  %v1893 = vsel %vm274, %v1892, 0.0
  %1894 = vadd.xlane.f32.xlu0 %v1893
  %v1895 = vpop.xlane.xlu0 %1894
  %v1896 = vmul.f32 %v1890, 2.0
  %v1897 = vsub.f32 1.0, %v1896
  %v1898 = vmul.f32 %v1897, %v1879
  %v1899 = vadd.f32 %v1898, %v1895
  %v1900 = vmul.f32 %v1891, %v1899
  %v1901 = vmax.f32 %v1900, 0.0
  %1902 = vrot.lane.b32.xlu0 %v186, 64
  %v1903 = vpop.permute.xlu0 %1902
  %v1906 = vsel %vm274, %v1890, 0
  %1908 = vmatprep.subr.mxu0 0.0
  %1909 = vmatpush1.msra.mxu0 0.0
  %1910 = vmatprep.subr.mxu0 0.0
  %1911 = vmatpush1.msra.mxu0 0.0
  %1912 = vmatprep.subr.mxu0 0.0
  %1913 = vmatpush1.msra.mxu0 0.0
  %1914 = vmatprep.subr.mxu0 0.0
  %1915 = vmatpush1.msra.mxu0 0.0
  %1916 = vmatprep.subr.mxu0 0.0
  %1917 = vmatpush1.msra.mxu0 0.0
  %1918 = vmatprep.subr.mxu0 0.0
  %1919 = vmatpush1.msra.mxu0 0.0
  %1920 = vmatprep.subr.mxu0 0.0
  %1921 = vmatpush1.msra.mxu0 0.0
  %1922 = vmatprep.subr.mxu0 0.0
  %1923 = vmatpush1.msra.mxu0 0.0
  %1924 = vmatprep.subr.mxu0 0.0
  %1925 = vmatpush1.msra.mxu0 0.0
  %1926 = vmatprep.subr.mxu0 0.0
  %1927 = vmatpush1.msra.mxu0 0.0
  %1928 = vmatprep.subr.mxu0 0.0
  %1929 = vmatpush1.msra.mxu0 0.0
  %1930 = vmatprep.subr.mxu0 0.0
  %1931 = vmatpush1.msra.mxu0 0.0
  %1932 = vmatprep.subr.mxu0 0.0
  %1933 = vmatpush1.msra.mxu0 0.0
  %1934 = vmatprep.subr.mxu0 0.0
  %1935 = vmatpush1.msra.mxu0 0.0
  %1936 = vmatprep.subr.mxu0 0.0
  %1937 = vmatpush1.msra.mxu0 0.0
  %1938 = vmatprep.subr.mxu0 0.0
  %1939 = vmatpush1.msra.mxu0 %v1903
  %1940 = vmatprep.subr.mxu0 0.0
  %1941 = vmatpush2.msra.mxu0 0.0
  %1942 = vmatprep.subr.mxu0 0.0
  %1943 = vmatpush2.msra.mxu0 0.0
  %1944 = vmatprep.subr.mxu0 0.0
  %1945 = vmatpush2.msra.mxu0 0.0
  %1946 = vmatprep.subr.mxu0 0.0
  %1947 = vmatpush2.msra.mxu0 0.0
  %1948 = vmatprep.subr.mxu0 0.0
  %1949 = vmatpush2.msra.mxu0 0.0
  %1950 = vmatprep.subr.mxu0 0.0
  %1951 = vmatpush2.msra.mxu0 0.0
  %1952 = vmatprep.subr.mxu0 0.0
  %1953 = vmatpush2.msra.mxu0 0.0
  %1954 = vmatprep.subr.mxu0 0.0
  %1955 = vmatpush2.msra.mxu0 0.0
  %1956 = vmatprep.subr.mxu0 0.0
  %1957 = vmatpush2.msra.mxu0 0.0
  %1958 = vmatprep.subr.mxu0 0.0
  %1959 = vmatpush2.msra.mxu0 0.0
  %1960 = vmatprep.subr.mxu0 0.0
  %1961 = vmatpush2.msra.mxu0 0.0
  %1962 = vmatprep.subr.mxu0 0.0
  %1963 = vmatpush2.msra.mxu0 0.0
  %1964 = vmatprep.subr.mxu0 0.0
  %1965 = vmatpush2.msra.mxu0 0.0
  %1966 = vmatprep.subr.mxu0 0.0
  %1967 = vmatpush2.msra.mxu0 0.0
  %1968 = vmatprep.subr.mxu0 0.0
  %1969 = vmatpush2.msra.mxu0 0.0
  %1970 = vmatprep.subr.mxu0 0.0
  %1971 = vmatpush2.msra.mxu0 0.0
  %1972 = vmatprep.mubr.f32.mxu0 0.0
  %1973 = vmatmul.mubr.f32.gmra.mxu0 %v1906
  %v1974 = vpop.f32.mrf.mxu0
  %v1975 = vadd.f32 0.0, %v1974
  %v1976 = vpop.f32.mrf.mxu0
  %1977 = vdwg.mxu0
  %1979 = vrot.lane.b32.xlu0 %v1901, 8
  %v1980 = vpop.permute.xlu0 %1979
  %v1982 = vsel %vm274, %v1891, %v1980
  %1983 = vrot.lane.b32.xlu0 %v268, 64
  %v1984 = vpop.permute.xlu0 %1983
  %1985 = vrot.lane.b32.xlu0 %v1794, 64
  %v1986 = vpop.permute.xlu0 %1985
  %v1990 = vsel %vm365, %v1982, 0
  %1992 = vmatprep.subr.mxu0 0.0
  %1993 = vmatpush1.msra.mxu0 0.0
  %1994 = vmatprep.subr.mxu0 0.0
  %1995 = vmatpush1.msra.mxu0 0.0
  %1996 = vmatprep.subr.mxu0 0.0
  %1997 = vmatpush1.msra.mxu0 0.0
  %1998 = vmatprep.subr.mxu0 0.0
  %1999 = vmatpush1.msra.mxu0 0.0
  %2000 = vmatprep.subr.mxu0 0.0
  %2001 = vmatpush1.msra.mxu0 0.0
  %2002 = vmatprep.subr.mxu0 0.0
  %2003 = vmatpush1.msra.mxu0 0.0
  %2004 = vmatprep.subr.mxu0 0.0
  %2005 = vmatpush1.msra.mxu0 0.0
  %2006 = vmatprep.subr.mxu0 0.0
  %2007 = vmatpush1.msra.mxu0 0.0
  %2008 = vmatprep.subr.mxu0 0.0
  %2009 = vmatpush1.msra.mxu0 0.0
  %2010 = vmatprep.subr.mxu0 0.0
  %2011 = vmatpush1.msra.mxu0 0.0
  %2012 = vmatprep.subr.mxu0 0.0
  %2013 = vmatpush1.msra.mxu0 0.0
  %2014 = vmatprep.subr.mxu0 0.0
  %2015 = vmatpush1.msra.mxu0 0.0
  %2016 = vmatprep.subr.mxu0 0.0
  %2017 = vmatpush1.msra.mxu0 0.0
  %2018 = vmatprep.subr.mxu0 0.0
  %2019 = vmatpush1.msra.mxu0 0.0
  %2020 = vmatprep.subr.mxu0 0.0
  %2021 = vmatpush1.msra.mxu0 %v1986
  %2022 = vmatprep.subr.mxu0 0.0
  %2023 = vmatpush1.msra.mxu0 %v1984
  %2024 = vmatprep.subr.mxu0 0.0
  %2025 = vmatpush2.msra.mxu0 0.0
  %2026 = vmatprep.subr.mxu0 0.0
  %2027 = vmatpush2.msra.mxu0 0.0
  %2028 = vmatprep.subr.mxu0 0.0
  %2029 = vmatpush2.msra.mxu0 0.0
  %2030 = vmatprep.subr.mxu0 0.0
  %2031 = vmatpush2.msra.mxu0 0.0
  %2032 = vmatprep.subr.mxu0 0.0
  %2033 = vmatpush2.msra.mxu0 0.0
  %2034 = vmatprep.subr.mxu0 0.0
  %2035 = vmatpush2.msra.mxu0 0.0
  %2036 = vmatprep.subr.mxu0 0.0
  %2037 = vmatpush2.msra.mxu0 0.0
  %2038 = vmatprep.subr.mxu0 0.0
  %2039 = vmatpush2.msra.mxu0 0.0
  %2040 = vmatprep.subr.mxu0 0.0
  %2041 = vmatpush2.msra.mxu0 0.0
  %2042 = vmatprep.subr.mxu0 0.0
  %2043 = vmatpush2.msra.mxu0 0.0
  %2044 = vmatprep.subr.mxu0 0.0
  %2045 = vmatpush2.msra.mxu0 0.0
  %2046 = vmatprep.subr.mxu0 0.0
  %2047 = vmatpush2.msra.mxu0 0.0
  %2048 = vmatprep.subr.mxu0 0.0
  %2049 = vmatpush2.msra.mxu0 0.0
  %2050 = vmatprep.subr.mxu0 0.0
  %2051 = vmatpush2.msra.mxu0 0.0
  %2052 = vmatprep.subr.mxu0 0.0
  %2053 = vmatpush2.msra.mxu0 0.0
  %2054 = vmatprep.subr.mxu0 0.0
  %2055 = vmatpush2.msra.mxu0 0.0
  %2056 = vmatprep.mubr.f32.mxu0 0.0
  %2057 = vmatmul.mubr.f32.gmra.mxu0 %v1990
  %v2058 = vpop.f32.mrf.mxu0
  %v2059 = vadd.f32 0.0, %v2058
  %v2060 = vpop.f32.mrf.mxu0
  %2061 = vdwg.mxu0
  %2062 = vrot.lane.b32.xlu0 %v186, 120
  %v2063 = vpop.permute.xlu0 %2062
  %2064 = vrot.lane.b32.xlu0 %v186, 88
  %v2065 = vpop.permute.xlu0 %2064
  %v2066 = vsel %vm274, %v2063, 0
  %v2068 = vsel %vm274, %v2065, 0
  %2070 = vmatprep.subr.mxu0 0.0
  %2071 = vmatpush1.xpose.msra.mxu0 0.0
  %2072 = vmatprep.subr.mxu0 0.0
  %2073 = vmatpush1.xpose.msra.mxu0 0.0
  %2074 = vmatprep.subr.mxu0 0.0
  %2075 = vmatpush1.xpose.msra.mxu0 0.0
  %2076 = vmatprep.subr.mxu0 0.0
  %2077 = vmatpush1.xpose.msra.mxu0 0.0
  %2078 = vmatprep.subr.mxu0 0.0
  %2079 = vmatpush1.xpose.msra.mxu0 0.0
  %2080 = vmatprep.subr.mxu0 0.0
  %2081 = vmatpush1.xpose.msra.mxu0 0.0
  %2082 = vmatprep.subr.mxu0 0.0
  %2083 = vmatpush1.xpose.msra.mxu0 0.0
  %2084 = vmatprep.subr.mxu0 0.0
  %2085 = vmatpush1.xpose.msra.mxu0 0.0
  %2086 = vmatprep.subr.mxu0 0.0
  %2087 = vmatpush1.xpose.msra.mxu0 0.0
  %2088 = vmatprep.subr.mxu0 0.0
  %2089 = vmatpush1.xpose.msra.mxu0 0.0
  %2090 = vmatprep.subr.mxu0 0.0
  %2091 = vmatpush1.xpose.msra.mxu0 0.0
  %2092 = vmatprep.subr.mxu0 0.0
  %2093 = vmatpush1.xpose.msra.mxu0 0.0
  %2094 = vmatprep.subr.mxu0 0.0
  %2095 = vmatpush1.xpose.msra.mxu0 0.0
  %2096 = vmatprep.subr.mxu0 0.0
  %2097 = vmatpush1.xpose.msra.mxu0 0.0
  %2098 = vmatprep.subr.mxu0 0.0
  %2099 = vmatpush1.xpose.msra.mxu0 0.0
  %2100 = vmatprep.subr.mxu0 0.0
  %2101 = vmatpush1.xpose.msra.mxu0 %v2068
  %2102 = vmatprep.subr.mxu0 0.0
  %2103 = vmatpush2.xpose.msra.mxu0 0.0
  %2104 = vmatprep.subr.mxu0 0.0
  %2105 = vmatpush2.xpose.msra.mxu0 0.0
  %2106 = vmatprep.subr.mxu0 0.0
  %2107 = vmatpush2.xpose.msra.mxu0 0.0
  %2108 = vmatprep.subr.mxu0 0.0
  %2109 = vmatpush2.xpose.msra.mxu0 0.0
  %2110 = vmatprep.subr.mxu0 0.0
  %2111 = vmatpush2.xpose.msra.mxu0 0.0
  %2112 = vmatprep.subr.mxu0 0.0
  %2113 = vmatpush2.xpose.msra.mxu0 0.0
  %2114 = vmatprep.subr.mxu0 0.0
  %2115 = vmatpush2.xpose.msra.mxu0 0.0
  %2116 = vmatprep.subr.mxu0 0.0
  %2117 = vmatpush2.xpose.msra.mxu0 0.0
  %2118 = vmatprep.subr.mxu0 0.0
  %2119 = vmatpush2.xpose.msra.mxu0 0.0
  %2120 = vmatprep.subr.mxu0 0.0
  %2121 = vmatpush2.xpose.msra.mxu0 0.0
  %2122 = vmatprep.subr.mxu0 0.0
  %2123 = vmatpush2.xpose.msra.mxu0 0.0
  %2124 = vmatprep.subr.mxu0 0.0
  %2125 = vmatpush2.xpose.msra.mxu0 0.0
  %2126 = vmatprep.subr.mxu0 0.0
  %2127 = vmatpush2.xpose.msra.mxu0 0.0
  %2128 = vmatprep.subr.mxu0 0.0
  %2129 = vmatpush2.xpose.msra.mxu0 0.0
  %2130 = vmatprep.subr.mxu0 0.0
  %2131 = vmatpush2.xpose.msra.mxu0 0.0
  %2132 = vmatprep.subr.mxu0 0.0
  %2133 = vmatpush2.xpose.msra.mxu0 0.0
  %2134 = vmatprep.mubr.f32.mxu0 0.0
  %2135 = vmatmul.mubr.f32.gmra.mxu0 %v2066
  %v2136 = vpop.f32.mrf.mxu0
  %v2137 = vadd.f32 0.0, %v2136
  %v2138 = vpop.f32.mrf.mxu0
  %2139 = vdwg.mxu0
  %v2140 = vmul.f32 %v2137, 0.17677669
  %2142 = vrot.lane.b32.xlu0 %v1788, 120
  %v2143 = vpop.permute.xlu0 %2142
  %v2145 = vsel %vm274, %v2143, %v268
  %2146 = vrot.lane.b32.xlu0 %v268, 88
  %v2147 = vpop.permute.xlu0 %2146
  %2149 = vrot.lane.b32.xlu0 %v1794, 96
  %v2150 = vpop.permute.xlu0 %2149
  %v2152 = vsel %vm274, %v2147, %v2150
  %v2154 = vsel %vm365, %v2145, 0
  %v2157 = vsel %vm365, %v2152, 0
  %2159 = vmatprep.subr.mxu0 0.0
  %2160 = vmatpush1.xpose.msra.mxu0 0.0
  %2161 = vmatprep.subr.mxu0 0.0
  %2162 = vmatpush1.xpose.msra.mxu0 0.0
  %2163 = vmatprep.subr.mxu0 0.0
  %2164 = vmatpush1.xpose.msra.mxu0 0.0
  %2165 = vmatprep.subr.mxu0 0.0
  %2166 = vmatpush1.xpose.msra.mxu0 0.0
  %2167 = vmatprep.subr.mxu0 0.0
  %2168 = vmatpush1.xpose.msra.mxu0 0.0
  %2169 = vmatprep.subr.mxu0 0.0
  %2170 = vmatpush1.xpose.msra.mxu0 0.0
  %2171 = vmatprep.subr.mxu0 0.0
  %2172 = vmatpush1.xpose.msra.mxu0 0.0
  %2173 = vmatprep.subr.mxu0 0.0
  %2174 = vmatpush1.xpose.msra.mxu0 0.0
  %2175 = vmatprep.subr.mxu0 0.0
  %2176 = vmatpush1.xpose.msra.mxu0 0.0
  %2177 = vmatprep.subr.mxu0 0.0
  %2178 = vmatpush1.xpose.msra.mxu0 0.0
  %2179 = vmatprep.subr.mxu0 0.0
  %2180 = vmatpush1.xpose.msra.mxu0 0.0
  %2181 = vmatprep.subr.mxu0 0.0
  %2182 = vmatpush1.xpose.msra.mxu0 0.0
  %2183 = vmatprep.subr.mxu0 0.0
  %2184 = vmatpush1.xpose.msra.mxu0 0.0
  %2185 = vmatprep.subr.mxu0 0.0
  %2186 = vmatpush1.xpose.msra.mxu0 0.0
  %2187 = vmatprep.subr.mxu0 0.0
  %2188 = vmatpush1.xpose.msra.mxu0 0.0
  %2189 = vmatprep.subr.mxu0 0.0
  %2190 = vmatpush1.xpose.msra.mxu0 %v2157
  %2191 = vmatprep.subr.mxu0 0.0
  %2192 = vmatpush2.xpose.msra.mxu0 0.0
  %2193 = vmatprep.subr.mxu0 0.0
  %2194 = vmatpush2.xpose.msra.mxu0 0.0
  %2195 = vmatprep.subr.mxu0 0.0
  %2196 = vmatpush2.xpose.msra.mxu0 0.0
  %2197 = vmatprep.subr.mxu0 0.0
  %2198 = vmatpush2.xpose.msra.mxu0 0.0
  %2199 = vmatprep.subr.mxu0 0.0
  %2200 = vmatpush2.xpose.msra.mxu0 0.0
  %2201 = vmatprep.subr.mxu0 0.0
  %2202 = vmatpush2.xpose.msra.mxu0 0.0
  %2203 = vmatprep.subr.mxu0 0.0
  %2204 = vmatpush2.xpose.msra.mxu0 0.0
  %2205 = vmatprep.subr.mxu0 0.0
  %2206 = vmatpush2.xpose.msra.mxu0 0.0
  %2207 = vmatprep.subr.mxu0 0.0
  %2208 = vmatpush2.xpose.msra.mxu0 0.0
  %2209 = vmatprep.subr.mxu0 0.0
  %2210 = vmatpush2.xpose.msra.mxu0 0.0
  %2211 = vmatprep.subr.mxu0 0.0
  %2212 = vmatpush2.xpose.msra.mxu0 0.0
  %2213 = vmatprep.subr.mxu0 0.0
  %2214 = vmatpush2.xpose.msra.mxu0 0.0
  %2215 = vmatprep.subr.mxu0 0.0
  %2216 = vmatpush2.xpose.msra.mxu0 0.0
  %2217 = vmatprep.subr.mxu0 0.0
  %2218 = vmatpush2.xpose.msra.mxu0 0.0
  %2219 = vmatprep.subr.mxu0 0.0
  %2220 = vmatpush2.xpose.msra.mxu0 0.0
  %2221 = vmatprep.subr.mxu0 0.0
  %2222 = vmatpush2.xpose.msra.mxu0 0.0
  %2223 = vmatprep.mubr.f32.mxu0 0.0
  %2224 = vmatmul.mubr.f32.gmra.mxu0 %v2154
  %v2225 = vpop.f32.mrf.mxu0
  %v2226 = vadd.f32 0.0, %v2225
  %v2227 = vpop.f32.mrf.mxu0
  %2228 = vdwg.mxu0
  %v2229 = vmul.f32 %v2226, 0.03125
  %v2230 = vsel %vm274, %v2140, -inf
  %2231 = vmax.xlane.f32.xlu0 %v2230
  %v2232 = vpop.xlane.xlu0 %2231
  %v2233 = vsub.f32 %v2140, %v2232
  %v2234 = vmul.f32 %v2233, 1.442695
  %v2235 = vpow.pop %v2234
  %v2236 = vsel %vm274, %v2235, 0.0
  %2237 = vadd.xlane.f32.xlu0 %v2236
  %v2238 = vpop.xlane.xlu0 %2237
  %v2239 = vrcp.pop %v2238
  %v2240 = vmul.f32 %v2235, %v2239
  %v2241 = vmul.f32 %v2240, %v2240
  %v2242 = vmul.f32 %v2241, %v2229
  %v2243 = vsel %vm274, %v2242, 0.0
  %2244 = vadd.xlane.f32.xlu0 %v2243
  %v2245 = vpop.xlane.xlu0 %2244
  %v2246 = vmul.f32 %v2240, 2.0
  %v2247 = vsub.f32 1.0, %v2246
  %v2248 = vmul.f32 %v2247, %v2229
  %v2249 = vadd.f32 %v2248, %v2245
  %v2250 = vmul.f32 %v2241, %v2249
  %v2251 = vmax.f32 %v2250, 0.0
  %2252 = vrot.lane.b32.xlu0 %v186, 56
  %v2253 = vpop.permute.xlu0 %2252
  %v2256 = vsel %vm274, %v2240, 0
  %2258 = vmatprep.subr.mxu0 0.0
  %2259 = vmatpush1.msra.mxu0 0.0
  %2260 = vmatprep.subr.mxu0 0.0
  %2261 = vmatpush1.msra.mxu0 0.0
  %2262 = vmatprep.subr.mxu0 0.0
  %2263 = vmatpush1.msra.mxu0 0.0
  %2264 = vmatprep.subr.mxu0 0.0
  %2265 = vmatpush1.msra.mxu0 0.0
  %2266 = vmatprep.subr.mxu0 0.0
  %2267 = vmatpush1.msra.mxu0 0.0
  %2268 = vmatprep.subr.mxu0 0.0
  %2269 = vmatpush1.msra.mxu0 0.0
  %2270 = vmatprep.subr.mxu0 0.0
  %2271 = vmatpush1.msra.mxu0 0.0
  %2272 = vmatprep.subr.mxu0 0.0
  %2273 = vmatpush1.msra.mxu0 0.0
  %2274 = vmatprep.subr.mxu0 0.0
  %2275 = vmatpush1.msra.mxu0 0.0
  %2276 = vmatprep.subr.mxu0 0.0
  %2277 = vmatpush1.msra.mxu0 0.0
  %2278 = vmatprep.subr.mxu0 0.0
  %2279 = vmatpush1.msra.mxu0 0.0
  %2280 = vmatprep.subr.mxu0 0.0
  %2281 = vmatpush1.msra.mxu0 0.0
  %2282 = vmatprep.subr.mxu0 0.0
  %2283 = vmatpush1.msra.mxu0 0.0
  %2284 = vmatprep.subr.mxu0 0.0
  %2285 = vmatpush1.msra.mxu0 0.0
  %2286 = vmatprep.subr.mxu0 0.0
  %2287 = vmatpush1.msra.mxu0 0.0
  %2288 = vmatprep.subr.mxu0 0.0
  %2289 = vmatpush1.msra.mxu0 %v2253
  %2290 = vmatprep.subr.mxu0 0.0
  %2291 = vmatpush2.msra.mxu0 0.0
  %2292 = vmatprep.subr.mxu0 0.0
  %2293 = vmatpush2.msra.mxu0 0.0
  %2294 = vmatprep.subr.mxu0 0.0
  %2295 = vmatpush2.msra.mxu0 0.0
  %2296 = vmatprep.subr.mxu0 0.0
  %2297 = vmatpush2.msra.mxu0 0.0
  %2298 = vmatprep.subr.mxu0 0.0
  %2299 = vmatpush2.msra.mxu0 0.0
  %2300 = vmatprep.subr.mxu0 0.0
  %2301 = vmatpush2.msra.mxu0 0.0
  %2302 = vmatprep.subr.mxu0 0.0
  %2303 = vmatpush2.msra.mxu0 0.0
  %2304 = vmatprep.subr.mxu0 0.0
  %2305 = vmatpush2.msra.mxu0 0.0
  %2306 = vmatprep.subr.mxu0 0.0
  %2307 = vmatpush2.msra.mxu0 0.0
  %2308 = vmatprep.subr.mxu0 0.0
  %2309 = vmatpush2.msra.mxu0 0.0
  %2310 = vmatprep.subr.mxu0 0.0
  %2311 = vmatpush2.msra.mxu0 0.0
  %2312 = vmatprep.subr.mxu0 0.0
  %2313 = vmatpush2.msra.mxu0 0.0
  %2314 = vmatprep.subr.mxu0 0.0
  %2315 = vmatpush2.msra.mxu0 0.0
  %2316 = vmatprep.subr.mxu0 0.0
  %2317 = vmatpush2.msra.mxu0 0.0
  %2318 = vmatprep.subr.mxu0 0.0
  %2319 = vmatpush2.msra.mxu0 0.0
  %2320 = vmatprep.subr.mxu0 0.0
  %2321 = vmatpush2.msra.mxu0 0.0
  %2322 = vmatprep.mubr.f32.mxu0 0.0
  %2323 = vmatmul.mubr.f32.gmra.mxu0 %v2256
  %v2324 = vpop.f32.mrf.mxu0
  %v2325 = vadd.f32 0.0, %v2324
  %v2326 = vpop.f32.mrf.mxu0
  %2327 = vdwg.mxu0
  %2329 = vrot.lane.b32.xlu0 %v2251, 8
  %v2330 = vpop.permute.xlu0 %2329
  %v2332 = vsel %vm274, %v2241, %v2330
  %2333 = vrot.lane.b32.xlu0 %v268, 56
  %v2334 = vpop.permute.xlu0 %2333
  %2335 = vrot.lane.b32.xlu0 %v1794, 56
  %v2336 = vpop.permute.xlu0 %2335
  %v2340 = vsel %vm365, %v2332, 0
  %2342 = vmatprep.subr.mxu0 0.0
  %2343 = vmatpush1.msra.mxu0 0.0
  %2344 = vmatprep.subr.mxu0 0.0
  %2345 = vmatpush1.msra.mxu0 0.0
  %2346 = vmatprep.subr.mxu0 0.0
  %2347 = vmatpush1.msra.mxu0 0.0
  %2348 = vmatprep.subr.mxu0 0.0
  %2349 = vmatpush1.msra.mxu0 0.0
  %2350 = vmatprep.subr.mxu0 0.0
  %2351 = vmatpush1.msra.mxu0 0.0
  %2352 = vmatprep.subr.mxu0 0.0
  %2353 = vmatpush1.msra.mxu0 0.0
  %2354 = vmatprep.subr.mxu0 0.0
  %2355 = vmatpush1.msra.mxu0 0.0
  %2356 = vmatprep.subr.mxu0 0.0
  %2357 = vmatpush1.msra.mxu0 0.0
  %2358 = vmatprep.subr.mxu0 0.0
  %2359 = vmatpush1.msra.mxu0 0.0
  %2360 = vmatprep.subr.mxu0 0.0
  %2361 = vmatpush1.msra.mxu0 0.0
  %2362 = vmatprep.subr.mxu0 0.0
  %2363 = vmatpush1.msra.mxu0 0.0
  %2364 = vmatprep.subr.mxu0 0.0
  %2365 = vmatpush1.msra.mxu0 0.0
  %2366 = vmatprep.subr.mxu0 0.0
  %2367 = vmatpush1.msra.mxu0 0.0
  %2368 = vmatprep.subr.mxu0 0.0
  %2369 = vmatpush1.msra.mxu0 0.0
  %2370 = vmatprep.subr.mxu0 0.0
  %2371 = vmatpush1.msra.mxu0 %v2336
  %2372 = vmatprep.subr.mxu0 0.0
  %2373 = vmatpush1.msra.mxu0 %v2334
  %2374 = vmatprep.subr.mxu0 0.0
  %2375 = vmatpush2.msra.mxu0 0.0
  %2376 = vmatprep.subr.mxu0 0.0
  %2377 = vmatpush2.msra.mxu0 0.0
  %2378 = vmatprep.subr.mxu0 0.0
  %2379 = vmatpush2.msra.mxu0 0.0
  %2380 = vmatprep.subr.mxu0 0.0
  %2381 = vmatpush2.msra.mxu0 0.0
  %2382 = vmatprep.subr.mxu0 0.0
  %2383 = vmatpush2.msra.mxu0 0.0
  %2384 = vmatprep.subr.mxu0 0.0
  %2385 = vmatpush2.msra.mxu0 0.0
  %2386 = vmatprep.subr.mxu0 0.0
  %2387 = vmatpush2.msra.mxu0 0.0
  %2388 = vmatprep.subr.mxu0 0.0
  %2389 = vmatpush2.msra.mxu0 0.0
  %2390 = vmatprep.subr.mxu0 0.0
  %2391 = vmatpush2.msra.mxu0 0.0
  %2392 = vmatprep.subr.mxu0 0.0
  %2393 = vmatpush2.msra.mxu0 0.0
  %2394 = vmatprep.subr.mxu0 0.0
  %2395 = vmatpush2.msra.mxu0 0.0
  %2396 = vmatprep.subr.mxu0 0.0
  %2397 = vmatpush2.msra.mxu0 0.0
  %2398 = vmatprep.subr.mxu0 0.0
  %2399 = vmatpush2.msra.mxu0 0.0
  %2400 = vmatprep.subr.mxu0 0.0
  %2401 = vmatpush2.msra.mxu0 0.0
  %2402 = vmatprep.subr.mxu0 0.0
  %2403 = vmatpush2.msra.mxu0 0.0
  %2404 = vmatprep.subr.mxu0 0.0
  %2405 = vmatpush2.msra.mxu0 0.0
  %2406 = vmatprep.mubr.f32.mxu0 0.0
  %2407 = vmatmul.mubr.f32.gmra.mxu0 %v2340
  %v2408 = vpop.f32.mrf.mxu0
  %v2409 = vadd.f32 0.0, %v2408
  %v2410 = vpop.f32.mrf.mxu0
  %2411 = vdwg.mxu0
  %2412 = vrot.lane.b32.xlu0 %v186, 112
  %v2413 = vpop.permute.xlu0 %2412
  %2414 = vrot.lane.b32.xlu0 %v186, 80
  %v2415 = vpop.permute.xlu0 %2414
  %v2416 = vsel %vm274, %v2413, 0
  %v2418 = vsel %vm274, %v2415, 0
  %2420 = vmatprep.subr.mxu0 0.0
  %2421 = vmatpush1.xpose.msra.mxu0 0.0
  %2422 = vmatprep.subr.mxu0 0.0
  %2423 = vmatpush1.xpose.msra.mxu0 0.0
  %2424 = vmatprep.subr.mxu0 0.0
  %2425 = vmatpush1.xpose.msra.mxu0 0.0
  %2426 = vmatprep.subr.mxu0 0.0
  %2427 = vmatpush1.xpose.msra.mxu0 0.0
  %2428 = vmatprep.subr.mxu0 0.0
  %2429 = vmatpush1.xpose.msra.mxu0 0.0
  %2430 = vmatprep.subr.mxu0 0.0
  %2431 = vmatpush1.xpose.msra.mxu0 0.0
  %2432 = vmatprep.subr.mxu0 0.0
  %2433 = vmatpush1.xpose.msra.mxu0 0.0
  %2434 = vmatprep.subr.mxu0 0.0
  %2435 = vmatpush1.xpose.msra.mxu0 0.0
  %2436 = vmatprep.subr.mxu0 0.0
  %2437 = vmatpush1.xpose.msra.mxu0 0.0
  %2438 = vmatprep.subr.mxu0 0.0
  %2439 = vmatpush1.xpose.msra.mxu0 0.0
  %2440 = vmatprep.subr.mxu0 0.0
  %2441 = vmatpush1.xpose.msra.mxu0 0.0
  %2442 = vmatprep.subr.mxu0 0.0
  %2443 = vmatpush1.xpose.msra.mxu0 0.0
  %2444 = vmatprep.subr.mxu0 0.0
  %2445 = vmatpush1.xpose.msra.mxu0 0.0
  %2446 = vmatprep.subr.mxu0 0.0
  %2447 = vmatpush1.xpose.msra.mxu0 0.0
  %2448 = vmatprep.subr.mxu0 0.0
  %2449 = vmatpush1.xpose.msra.mxu0 0.0
  %2450 = vmatprep.subr.mxu0 0.0
  %2451 = vmatpush1.xpose.msra.mxu0 %v2418
  %2452 = vmatprep.subr.mxu0 0.0
  %2453 = vmatpush2.xpose.msra.mxu0 0.0
  %2454 = vmatprep.subr.mxu0 0.0
  %2455 = vmatpush2.xpose.msra.mxu0 0.0
  %2456 = vmatprep.subr.mxu0 0.0
  %2457 = vmatpush2.xpose.msra.mxu0 0.0
  %2458 = vmatprep.subr.mxu0 0.0
  %2459 = vmatpush2.xpose.msra.mxu0 0.0
  %2460 = vmatprep.subr.mxu0 0.0
  %2461 = vmatpush2.xpose.msra.mxu0 0.0
  %2462 = vmatprep.subr.mxu0 0.0
  %2463 = vmatpush2.xpose.msra.mxu0 0.0
  %2464 = vmatprep.subr.mxu0 0.0
  %2465 = vmatpush2.xpose.msra.mxu0 0.0
  %2466 = vmatprep.subr.mxu0 0.0
  %2467 = vmatpush2.xpose.msra.mxu0 0.0
  %2468 = vmatprep.subr.mxu0 0.0
  %2469 = vmatpush2.xpose.msra.mxu0 0.0
  %2470 = vmatprep.subr.mxu0 0.0
  %2471 = vmatpush2.xpose.msra.mxu0 0.0
  %2472 = vmatprep.subr.mxu0 0.0
  %2473 = vmatpush2.xpose.msra.mxu0 0.0
  %2474 = vmatprep.subr.mxu0 0.0
  %2475 = vmatpush2.xpose.msra.mxu0 0.0
  %2476 = vmatprep.subr.mxu0 0.0
  %2477 = vmatpush2.xpose.msra.mxu0 0.0
  %2478 = vmatprep.subr.mxu0 0.0
  %2479 = vmatpush2.xpose.msra.mxu0 0.0
  %2480 = vmatprep.subr.mxu0 0.0
  %2481 = vmatpush2.xpose.msra.mxu0 0.0
  %2482 = vmatprep.subr.mxu0 0.0
  %2483 = vmatpush2.xpose.msra.mxu0 0.0
  %2484 = vmatprep.mubr.f32.mxu0 0.0
  %2485 = vmatmul.mubr.f32.gmra.mxu0 %v2416
  %v2486 = vpop.f32.mrf.mxu0
  %v2487 = vadd.f32 0.0, %v2486
  %v2488 = vpop.f32.mrf.mxu0
  %2489 = vdwg.mxu0
  %v2490 = vmul.f32 %v2487, 0.17677669
  %2491 = vrot.lane.b32.xlu0 %v1788, 112
  %v2492 = vpop.permute.xlu0 %2491
  %2494 = vrot.lane.b32.xlu0 %v268, 120
  %v2495 = vpop.permute.xlu0 %2494
  %v2497 = vsel %vm274, %v2492, %v2495
  %2498 = vrot.lane.b32.xlu0 %v268, 80
  %v2499 = vpop.permute.xlu0 %2498
  %2501 = vrot.lane.b32.xlu0 %v1794, 88
  %v2502 = vpop.permute.xlu0 %2501
  %v2504 = vsel %vm274, %v2499, %v2502
  %v2506 = vsel %vm365, %v2497, 0
  %v2509 = vsel %vm365, %v2504, 0
  %2511 = vmatprep.subr.mxu0 0.0
  %2512 = vmatpush1.xpose.msra.mxu0 0.0
  %2513 = vmatprep.subr.mxu0 0.0
  %2514 = vmatpush1.xpose.msra.mxu0 0.0
  %2515 = vmatprep.subr.mxu0 0.0
  %2516 = vmatpush1.xpose.msra.mxu0 0.0
  %2517 = vmatprep.subr.mxu0 0.0
  %2518 = vmatpush1.xpose.msra.mxu0 0.0
  %2519 = vmatprep.subr.mxu0 0.0
  %2520 = vmatpush1.xpose.msra.mxu0 0.0
  %2521 = vmatprep.subr.mxu0 0.0
  %2522 = vmatpush1.xpose.msra.mxu0 0.0
  %2523 = vmatprep.subr.mxu0 0.0
  %2524 = vmatpush1.xpose.msra.mxu0 0.0
  %2525 = vmatprep.subr.mxu0 0.0
  %2526 = vmatpush1.xpose.msra.mxu0 0.0
  %2527 = vmatprep.subr.mxu0 0.0
  %2528 = vmatpush1.xpose.msra.mxu0 0.0
  %2529 = vmatprep.subr.mxu0 0.0
  %2530 = vmatpush1.xpose.msra.mxu0 0.0
  %2531 = vmatprep.subr.mxu0 0.0
  %2532 = vmatpush1.xpose.msra.mxu0 0.0
  %2533 = vmatprep.subr.mxu0 0.0
  %2534 = vmatpush1.xpose.msra.mxu0 0.0
  %2535 = vmatprep.subr.mxu0 0.0
  %2536 = vmatpush1.xpose.msra.mxu0 0.0
  %2537 = vmatprep.subr.mxu0 0.0
  %2538 = vmatpush1.xpose.msra.mxu0 0.0
  %2539 = vmatprep.subr.mxu0 0.0
  %2540 = vmatpush1.xpose.msra.mxu0 0.0
  %2541 = vmatprep.subr.mxu0 0.0
  %2542 = vmatpush1.xpose.msra.mxu0 %v2509
  %2543 = vmatprep.subr.mxu0 0.0
  %2544 = vmatpush2.xpose.msra.mxu0 0.0
  %2545 = vmatprep.subr.mxu0 0.0
  %2546 = vmatpush2.xpose.msra.mxu0 0.0
  %2547 = vmatprep.subr.mxu0 0.0
  %2548 = vmatpush2.xpose.msra.mxu0 0.0
  %2549 = vmatprep.subr.mxu0 0.0
  %2550 = vmatpush2.xpose.msra.mxu0 0.0
  %2551 = vmatprep.subr.mxu0 0.0
  %2552 = vmatpush2.xpose.msra.mxu0 0.0
  %2553 = vmatprep.subr.mxu0 0.0
  %2554 = vmatpush2.xpose.msra.mxu0 0.0
  %2555 = vmatprep.subr.mxu0 0.0
  %2556 = vmatpush2.xpose.msra.mxu0 0.0
  %2557 = vmatprep.subr.mxu0 0.0
  %2558 = vmatpush2.xpose.msra.mxu0 0.0
  %2559 = vmatprep.subr.mxu0 0.0
  %2560 = vmatpush2.xpose.msra.mxu0 0.0
  %2561 = vmatprep.subr.mxu0 0.0
  %2562 = vmatpush2.xpose.msra.mxu0 0.0
  %2563 = vmatprep.subr.mxu0 0.0
  %2564 = vmatpush2.xpose.msra.mxu0 0.0
  %2565 = vmatprep.subr.mxu0 0.0
  %2566 = vmatpush2.xpose.msra.mxu0 0.0
  %2567 = vmatprep.subr.mxu0 0.0
  %2568 = vmatpush2.xpose.msra.mxu0 0.0
  %2569 = vmatprep.subr.mxu0 0.0
  %2570 = vmatpush2.xpose.msra.mxu0 0.0
  %2571 = vmatprep.subr.mxu0 0.0
  %2572 = vmatpush2.xpose.msra.mxu0 0.0
  %2573 = vmatprep.subr.mxu0 0.0
  %2574 = vmatpush2.xpose.msra.mxu0 0.0
  %2575 = vmatprep.mubr.f32.mxu0 0.0
  %2576 = vmatmul.mubr.f32.gmra.mxu0 %v2506
  %v2577 = vpop.f32.mrf.mxu0
  %v2578 = vadd.f32 0.0, %v2577
  %v2579 = vpop.f32.mrf.mxu0
  %2580 = vdwg.mxu0
  %v2581 = vmul.f32 %v2578, 0.03125
  %v2582 = vsel %vm274, %v2490, -inf
  %2583 = vmax.xlane.f32.xlu0 %v2582
  %v2584 = vpop.xlane.xlu0 %2583
  %v2585 = vsub.f32 %v2490, %v2584
  %v2586 = vmul.f32 %v2585, 1.442695
  %v2587 = vpow.pop %v2586
  %v2588 = vsel %vm274, %v2587, 0.0
  %2589 = vadd.xlane.f32.xlu0 %v2588
  %v2590 = vpop.xlane.xlu0 %2589
  %v2591 = vrcp.pop %v2590
  %v2592 = vmul.f32 %v2587, %v2591
  %v2593 = vmul.f32 %v2592, %v2592
  %v2594 = vmul.f32 %v2593, %v2581
  %v2595 = vsel %vm274, %v2594, 0.0
  %2596 = vadd.xlane.f32.xlu0 %v2595
  %v2597 = vpop.xlane.xlu0 %2596
  %v2598 = vmul.f32 %v2592, 2.0
  %v2599 = vsub.f32 1.0, %v2598
  %v2600 = vmul.f32 %v2599, %v2581
  %v2601 = vadd.f32 %v2600, %v2597
  %v2602 = vmul.f32 %v2593, %v2601
  %v2603 = vmax.f32 %v2602, 0.0
  %2604 = vrot.lane.b32.xlu0 %v186, 48
  %v2605 = vpop.permute.xlu0 %2604
  %v2608 = vsel %vm274, %v2592, 0
  %2610 = vmatprep.subr.mxu0 0.0
  %2611 = vmatpush1.msra.mxu0 0.0
  %2612 = vmatprep.subr.mxu0 0.0
  %2613 = vmatpush1.msra.mxu0 0.0
  %2614 = vmatprep.subr.mxu0 0.0
  %2615 = vmatpush1.msra.mxu0 0.0
  %2616 = vmatprep.subr.mxu0 0.0
  %2617 = vmatpush1.msra.mxu0 0.0
  %2618 = vmatprep.subr.mxu0 0.0
  %2619 = vmatpush1.msra.mxu0 0.0
  %2620 = vmatprep.subr.mxu0 0.0
  %2621 = vmatpush1.msra.mxu0 0.0
  %2622 = vmatprep.subr.mxu0 0.0
  %2623 = vmatpush1.msra.mxu0 0.0
  %2624 = vmatprep.subr.mxu0 0.0
  %2625 = vmatpush1.msra.mxu0 0.0
  %2626 = vmatprep.subr.mxu0 0.0
  %2627 = vmatpush1.msra.mxu0 0.0
  %2628 = vmatprep.subr.mxu0 0.0
  %2629 = vmatpush1.msra.mxu0 0.0
  %2630 = vmatprep.subr.mxu0 0.0
  %2631 = vmatpush1.msra.mxu0 0.0
  %2632 = vmatprep.subr.mxu0 0.0
  %2633 = vmatpush1.msra.mxu0 0.0
  %2634 = vmatprep.subr.mxu0 0.0
  %2635 = vmatpush1.msra.mxu0 0.0
  %2636 = vmatprep.subr.mxu0 0.0
  %2637 = vmatpush1.msra.mxu0 0.0
  %2638 = vmatprep.subr.mxu0 0.0
  %2639 = vmatpush1.msra.mxu0 0.0
  %2640 = vmatprep.subr.mxu0 0.0
  %2641 = vmatpush1.msra.mxu0 %v2605
  %2642 = vmatprep.subr.mxu0 0.0
  %2643 = vmatpush2.msra.mxu0 0.0
  %2644 = vmatprep.subr.mxu0 0.0
  %2645 = vmatpush2.msra.mxu0 0.0
  %2646 = vmatprep.subr.mxu0 0.0
  %2647 = vmatpush2.msra.mxu0 0.0
  %2648 = vmatprep.subr.mxu0 0.0
  %2649 = vmatpush2.msra.mxu0 0.0
  %2650 = vmatprep.subr.mxu0 0.0
  %2651 = vmatpush2.msra.mxu0 0.0
  %2652 = vmatprep.subr.mxu0 0.0
  %2653 = vmatpush2.msra.mxu0 0.0
  %2654 = vmatprep.subr.mxu0 0.0
  %2655 = vmatpush2.msra.mxu0 0.0
  %2656 = vmatprep.subr.mxu0 0.0
  %2657 = vmatpush2.msra.mxu0 0.0
  %2658 = vmatprep.subr.mxu0 0.0
  %2659 = vmatpush2.msra.mxu0 0.0
  %2660 = vmatprep.subr.mxu0 0.0
  %2661 = vmatpush2.msra.mxu0 0.0
  %2662 = vmatprep.subr.mxu0 0.0
  %2663 = vmatpush2.msra.mxu0 0.0
  %2664 = vmatprep.subr.mxu0 0.0
  %2665 = vmatpush2.msra.mxu0 0.0
  %2666 = vmatprep.subr.mxu0 0.0
  %2667 = vmatpush2.msra.mxu0 0.0
  %2668 = vmatprep.subr.mxu0 0.0
  %2669 = vmatpush2.msra.mxu0 0.0
  %2670 = vmatprep.subr.mxu0 0.0
  %2671 = vmatpush2.msra.mxu0 0.0
  %2672 = vmatprep.subr.mxu0 0.0
  %2673 = vmatpush2.msra.mxu0 0.0
  %2674 = vmatprep.mubr.f32.mxu0 0.0
  %2675 = vmatmul.mubr.f32.gmra.mxu0 %v2608
  %v2676 = vpop.f32.mrf.mxu0
  %v2677 = vadd.f32 0.0, %v2676
  %v2678 = vpop.f32.mrf.mxu0
  %2679 = vdwg.mxu0
  %2681 = vrot.lane.b32.xlu0 %v2603, 8
  %v2682 = vpop.permute.xlu0 %2681
  %v2684 = vsel %vm274, %v2593, %v2682
  %2685 = vrot.lane.b32.xlu0 %v268, 48
  %v2686 = vpop.permute.xlu0 %2685
  %2687 = vrot.lane.b32.xlu0 %v1794, 48
  %v2688 = vpop.permute.xlu0 %2687
  %v2692 = vsel %vm365, %v2684, 0
  %2694 = vmatprep.subr.mxu0 0.0
  %2695 = vmatpush1.msra.mxu0 0.0
  %2696 = vmatprep.subr.mxu0 0.0
  %2697 = vmatpush1.msra.mxu0 0.0
  %2698 = vmatprep.subr.mxu0 0.0
  %2699 = vmatpush1.msra.mxu0 0.0
  %2700 = vmatprep.subr.mxu0 0.0
  %2701 = vmatpush1.msra.mxu0 0.0
  %2702 = vmatprep.subr.mxu0 0.0
  %2703 = vmatpush1.msra.mxu0 0.0
  %2704 = vmatprep.subr.mxu0 0.0
  %2705 = vmatpush1.msra.mxu0 0.0
  %2706 = vmatprep.subr.mxu0 0.0
  %2707 = vmatpush1.msra.mxu0 0.0
  %2708 = vmatprep.subr.mxu0 0.0
  %2709 = vmatpush1.msra.mxu0 0.0
  %2710 = vmatprep.subr.mxu0 0.0
  %2711 = vmatpush1.msra.mxu0 0.0
  %2712 = vmatprep.subr.mxu0 0.0
  %2713 = vmatpush1.msra.mxu0 0.0
  %2714 = vmatprep.subr.mxu0 0.0
  %2715 = vmatpush1.msra.mxu0 0.0
  %2716 = vmatprep.subr.mxu0 0.0
  %2717 = vmatpush1.msra.mxu0 0.0
  %2718 = vmatprep.subr.mxu0 0.0
  %2719 = vmatpush1.msra.mxu0 0.0
  %2720 = vmatprep.subr.mxu0 0.0
  %2721 = vmatpush1.msra.mxu0 0.0
  %2722 = vmatprep.subr.mxu0 0.0
  %2723 = vmatpush1.msra.mxu0 %v2688
  %2724 = vmatprep.subr.mxu0 0.0
  %2725 = vmatpush1.msra.mxu0 %v2686
  %2726 = vmatprep.subr.mxu0 0.0
  %2727 = vmatpush2.msra.mxu0 0.0
  %2728 = vmatprep.subr.mxu0 0.0
  %2729 = vmatpush2.msra.mxu0 0.0
  %2730 = vmatprep.subr.mxu0 0.0
  %2731 = vmatpush2.msra.mxu0 0.0
  %2732 = vmatprep.subr.mxu0 0.0
  %2733 = vmatpush2.msra.mxu0 0.0
  %2734 = vmatprep.subr.mxu0 0.0
  %2735 = vmatpush2.msra.mxu0 0.0
  %2736 = vmatprep.subr.mxu0 0.0
  %2737 = vmatpush2.msra.mxu0 0.0
  %2738 = vmatprep.subr.mxu0 0.0
  %2739 = vmatpush2.msra.mxu0 0.0
  %2740 = vmatprep.subr.mxu0 0.0
  %2741 = vmatpush2.msra.mxu0 0.0
  %2742 = vmatprep.subr.mxu0 0.0
  %2743 = vmatpush2.msra.mxu0 0.0
  %2744 = vmatprep.subr.mxu0 0.0
  %2745 = vmatpush2.msra.mxu0 0.0
  %2746 = vmatprep.subr.mxu0 0.0
  %2747 = vmatpush2.msra.mxu0 0.0
  %2748 = vmatprep.subr.mxu0 0.0
  %2749 = vmatpush2.msra.mxu0 0.0
  %2750 = vmatprep.subr.mxu0 0.0
  %2751 = vmatpush2.msra.mxu0 0.0
  %2752 = vmatprep.subr.mxu0 0.0
  %2753 = vmatpush2.msra.mxu0 0.0
  %2754 = vmatprep.subr.mxu0 0.0
  %2755 = vmatpush2.msra.mxu0 0.0
  %2756 = vmatprep.subr.mxu0 0.0
  %2757 = vmatpush2.msra.mxu0 0.0
  %2758 = vmatprep.mubr.f32.mxu0 0.0
  %2759 = vmatmul.mubr.f32.gmra.mxu0 %v2692
  %v2760 = vpop.f32.mrf.mxu0
  %v2761 = vadd.f32 0.0, %v2760
  %v2762 = vpop.f32.mrf.mxu0
  %2763 = vdwg.mxu0
  %2764 = vrot.lane.b32.xlu0 %v186, 104
  %v2765 = vpop.permute.xlu0 %2764
  %2766 = vrot.lane.b32.xlu0 %v186, 72
  %v2767 = vpop.permute.xlu0 %2766
  %v2768 = vsel %vm274, %v2765, 0
  %v2770 = vsel %vm274, %v2767, 0
  %2772 = vmatprep.subr.mxu0 0.0
  %2773 = vmatpush1.xpose.msra.mxu0 0.0
  %2774 = vmatprep.subr.mxu0 0.0
  %2775 = vmatpush1.xpose.msra.mxu0 0.0
  %2776 = vmatprep.subr.mxu0 0.0
  %2777 = vmatpush1.xpose.msra.mxu0 0.0
  %2778 = vmatprep.subr.mxu0 0.0
  %2779 = vmatpush1.xpose.msra.mxu0 0.0
  %2780 = vmatprep.subr.mxu0 0.0
  %2781 = vmatpush1.xpose.msra.mxu0 0.0
  %2782 = vmatprep.subr.mxu0 0.0
  %2783 = vmatpush1.xpose.msra.mxu0 0.0
  %2784 = vmatprep.subr.mxu0 0.0
  %2785 = vmatpush1.xpose.msra.mxu0 0.0
  %2786 = vmatprep.subr.mxu0 0.0
  %2787 = vmatpush1.xpose.msra.mxu0 0.0
  %2788 = vmatprep.subr.mxu0 0.0
  %2789 = vmatpush1.xpose.msra.mxu0 0.0
  %2790 = vmatprep.subr.mxu0 0.0
  %2791 = vmatpush1.xpose.msra.mxu0 0.0
  %2792 = vmatprep.subr.mxu0 0.0
  %2793 = vmatpush1.xpose.msra.mxu0 0.0
  %2794 = vmatprep.subr.mxu0 0.0
  %2795 = vmatpush1.xpose.msra.mxu0 0.0
  %2796 = vmatprep.subr.mxu0 0.0
  %2797 = vmatpush1.xpose.msra.mxu0 0.0
  %2798 = vmatprep.subr.mxu0 0.0
  %2799 = vmatpush1.xpose.msra.mxu0 0.0
  %2800 = vmatprep.subr.mxu0 0.0
  %2801 = vmatpush1.xpose.msra.mxu0 0.0
  %2802 = vmatprep.subr.mxu0 0.0
  %2803 = vmatpush1.xpose.msra.mxu0 %v2770
  %2804 = vmatprep.subr.mxu0 0.0
  %2805 = vmatpush2.xpose.msra.mxu0 0.0
  %2806 = vmatprep.subr.mxu0 0.0
  %2807 = vmatpush2.xpose.msra.mxu0 0.0
  %2808 = vmatprep.subr.mxu0 0.0
  %2809 = vmatpush2.xpose.msra.mxu0 0.0
  %2810 = vmatprep.subr.mxu0 0.0
  %2811 = vmatpush2.xpose.msra.mxu0 0.0
  %2812 = vmatprep.subr.mxu0 0.0
  %2813 = vmatpush2.xpose.msra.mxu0 0.0
  %2814 = vmatprep.subr.mxu0 0.0
  %2815 = vmatpush2.xpose.msra.mxu0 0.0
  %2816 = vmatprep.subr.mxu0 0.0
  %2817 = vmatpush2.xpose.msra.mxu0 0.0
  %2818 = vmatprep.subr.mxu0 0.0
  %2819 = vmatpush2.xpose.msra.mxu0 0.0
  %2820 = vmatprep.subr.mxu0 0.0
  %2821 = vmatpush2.xpose.msra.mxu0 0.0
  %2822 = vmatprep.subr.mxu0 0.0
  %2823 = vmatpush2.xpose.msra.mxu0 0.0
  %2824 = vmatprep.subr.mxu0 0.0
  %2825 = vmatpush2.xpose.msra.mxu0 0.0
  %2826 = vmatprep.subr.mxu0 0.0
  %2827 = vmatpush2.xpose.msra.mxu0 0.0
  %2828 = vmatprep.subr.mxu0 0.0
  %2829 = vmatpush2.xpose.msra.mxu0 0.0
  %2830 = vmatprep.subr.mxu0 0.0
  %2831 = vmatpush2.xpose.msra.mxu0 0.0
  %2832 = vmatprep.subr.mxu0 0.0
  %2833 = vmatpush2.xpose.msra.mxu0 0.0
  %2834 = vmatprep.subr.mxu0 0.0
  %2835 = vmatpush2.xpose.msra.mxu0 0.0
  %2836 = vmatprep.mubr.f32.mxu0 0.0
  %2837 = vmatmul.mubr.f32.gmra.mxu0 %v2768
  %v2838 = vpop.f32.mrf.mxu0
  %v2839 = vadd.f32 0.0, %v2838
  %v2840 = vpop.f32.mrf.mxu0
  %2841 = vdwg.mxu0
  %v2842 = vmul.f32 %v2839, 0.17677669
  %2843 = vrot.lane.b32.xlu0 %v1788, 104
  %v2844 = vpop.permute.xlu0 %2843
  %2846 = vrot.lane.b32.xlu0 %v268, 112
  %v2847 = vpop.permute.xlu0 %2846
  %v2849 = vsel %vm274, %v2844, %v2847
  %2850 = vrot.lane.b32.xlu0 %v268, 72
  %v2851 = vpop.permute.xlu0 %2850
  %2853 = vrot.lane.b32.xlu0 %v1794, 80
  %v2854 = vpop.permute.xlu0 %2853
  %v2856 = vsel %vm274, %v2851, %v2854
  %v2858 = vsel %vm365, %v2849, 0
  %v2861 = vsel %vm365, %v2856, 0
  %2863 = vmatprep.subr.mxu0 0.0
  %2864 = vmatpush1.xpose.msra.mxu0 0.0
  %2865 = vmatprep.subr.mxu0 0.0
  %2866 = vmatpush1.xpose.msra.mxu0 0.0
  %2867 = vmatprep.subr.mxu0 0.0
  %2868 = vmatpush1.xpose.msra.mxu0 0.0
  %2869 = vmatprep.subr.mxu0 0.0
  %2870 = vmatpush1.xpose.msra.mxu0 0.0
  %2871 = vmatprep.subr.mxu0 0.0
  %2872 = vmatpush1.xpose.msra.mxu0 0.0
  %2873 = vmatprep.subr.mxu0 0.0
  %2874 = vmatpush1.xpose.msra.mxu0 0.0
  %2875 = vmatprep.subr.mxu0 0.0
  %2876 = vmatpush1.xpose.msra.mxu0 0.0
  %2877 = vmatprep.subr.mxu0 0.0
  %2878 = vmatpush1.xpose.msra.mxu0 0.0
  %2879 = vmatprep.subr.mxu0 0.0
  %2880 = vmatpush1.xpose.msra.mxu0 0.0
  %2881 = vmatprep.subr.mxu0 0.0
  %2882 = vmatpush1.xpose.msra.mxu0 0.0
  %2883 = vmatprep.subr.mxu0 0.0
  %2884 = vmatpush1.xpose.msra.mxu0 0.0
  %2885 = vmatprep.subr.mxu0 0.0
  %2886 = vmatpush1.xpose.msra.mxu0 0.0
  %2887 = vmatprep.subr.mxu0 0.0
  %2888 = vmatpush1.xpose.msra.mxu0 0.0
  %2889 = vmatprep.subr.mxu0 0.0
  %2890 = vmatpush1.xpose.msra.mxu0 0.0
  %2891 = vmatprep.subr.mxu0 0.0
  %2892 = vmatpush1.xpose.msra.mxu0 0.0
  %2893 = vmatprep.subr.mxu0 0.0
  %2894 = vmatpush1.xpose.msra.mxu0 %v2861
  %2895 = vmatprep.subr.mxu0 0.0
  %2896 = vmatpush2.xpose.msra.mxu0 0.0
  %2897 = vmatprep.subr.mxu0 0.0
  %2898 = vmatpush2.xpose.msra.mxu0 0.0
  %2899 = vmatprep.subr.mxu0 0.0
  %2900 = vmatpush2.xpose.msra.mxu0 0.0
  %2901 = vmatprep.subr.mxu0 0.0
  %2902 = vmatpush2.xpose.msra.mxu0 0.0
  %2903 = vmatprep.subr.mxu0 0.0
  %2904 = vmatpush2.xpose.msra.mxu0 0.0
  %2905 = vmatprep.subr.mxu0 0.0
  %2906 = vmatpush2.xpose.msra.mxu0 0.0
  %2907 = vmatprep.subr.mxu0 0.0
  %2908 = vmatpush2.xpose.msra.mxu0 0.0
  %2909 = vmatprep.subr.mxu0 0.0
  %2910 = vmatpush2.xpose.msra.mxu0 0.0
  %2911 = vmatprep.subr.mxu0 0.0
  %2912 = vmatpush2.xpose.msra.mxu0 0.0
  %2913 = vmatprep.subr.mxu0 0.0
  %2914 = vmatpush2.xpose.msra.mxu0 0.0
  %2915 = vmatprep.subr.mxu0 0.0
  %2916 = vmatpush2.xpose.msra.mxu0 0.0
  %2917 = vmatprep.subr.mxu0 0.0
  %2918 = vmatpush2.xpose.msra.mxu0 0.0
  %2919 = vmatprep.subr.mxu0 0.0
  %2920 = vmatpush2.xpose.msra.mxu0 0.0
  %2921 = vmatprep.subr.mxu0 0.0
  %2922 = vmatpush2.xpose.msra.mxu0 0.0
  %2923 = vmatprep.subr.mxu0 0.0
  %2924 = vmatpush2.xpose.msra.mxu0 0.0
  %2925 = vmatprep.subr.mxu0 0.0
  %2926 = vmatpush2.xpose.msra.mxu0 0.0
  %2927 = vmatprep.mubr.f32.mxu0 0.0
  %2928 = vmatmul.mubr.f32.gmra.mxu0 %v2858
  %v2929 = vpop.f32.mrf.mxu0
  %v2930 = vadd.f32 0.0, %v2929
  %v2931 = vpop.f32.mrf.mxu0
  %2932 = vdwg.mxu0
  %v2933 = vmul.f32 %v2930, 0.03125
  %v2934 = vsel %vm274, %v2842, -inf
  %2935 = vmax.xlane.f32.xlu0 %v2934
  %v2936 = vpop.xlane.xlu0 %2935
  %v2937 = vsub.f32 %v2842, %v2936
  %v2938 = vmul.f32 %v2937, 1.442695
  %v2939 = vpow.pop %v2938
  %v2940 = vsel %vm274, %v2939, 0.0
  %2941 = vadd.xlane.f32.xlu0 %v2940
  %v2942 = vpop.xlane.xlu0 %2941
  %v2943 = vrcp.pop %v2942
  %v2944 = vmul.f32 %v2939, %v2943
  %v2945 = vmul.f32 %v2944, %v2944
  %v2946 = vmul.f32 %v2945, %v2933
  %v2947 = vsel %vm274, %v2946, 0.0
  %2948 = vadd.xlane.f32.xlu0 %v2947
  %v2949 = vpop.xlane.xlu0 %2948
  %v2950 = vmul.f32 %v2944, 2.0
  %v2951 = vsub.f32 1.0, %v2950
  %v2952 = vmul.f32 %v2951, %v2933
  %v2953 = vadd.f32 %v2952, %v2949
  %v2954 = vmul.f32 %v2945, %v2953
  %v2955 = vmax.f32 %v2954, 0.0
  %2956 = vrot.lane.b32.xlu0 %v186, 40
  %v2957 = vpop.permute.xlu0 %2956
  %v2960 = vsel %vm274, %v2944, 0
  %2962 = vmatprep.subr.mxu0 0.0
  %2963 = vmatpush1.msra.mxu0 0.0
  %2964 = vmatprep.subr.mxu0 0.0
  %2965 = vmatpush1.msra.mxu0 0.0
  %2966 = vmatprep.subr.mxu0 0.0
  %2967 = vmatpush1.msra.mxu0 0.0
  %2968 = vmatprep.subr.mxu0 0.0
  %2969 = vmatpush1.msra.mxu0 0.0
  %2970 = vmatprep.subr.mxu0 0.0
  %2971 = vmatpush1.msra.mxu0 0.0
  %2972 = vmatprep.subr.mxu0 0.0
  %2973 = vmatpush1.msra.mxu0 0.0
  %2974 = vmatprep.subr.mxu0 0.0
  %2975 = vmatpush1.msra.mxu0 0.0
  %2976 = vmatprep.subr.mxu0 0.0
  %2977 = vmatpush1.msra.mxu0 0.0
  %2978 = vmatprep.subr.mxu0 0.0
  %2979 = vmatpush1.msra.mxu0 0.0
  %2980 = vmatprep.subr.mxu0 0.0
  %2981 = vmatpush1.msra.mxu0 0.0
  %2982 = vmatprep.subr.mxu0 0.0
  %2983 = vmatpush1.msra.mxu0 0.0
  %2984 = vmatprep.subr.mxu0 0.0
  %2985 = vmatpush1.msra.mxu0 0.0
  %2986 = vmatprep.subr.mxu0 0.0
  %2987 = vmatpush1.msra.mxu0 0.0
  %2988 = vmatprep.subr.mxu0 0.0
  %2989 = vmatpush1.msra.mxu0 0.0
  %2990 = vmatprep.subr.mxu0 0.0
  %2991 = vmatpush1.msra.mxu0 0.0
  %2992 = vmatprep.subr.mxu0 0.0
  %2993 = vmatpush1.msra.mxu0 %v2957
  %2994 = vmatprep.subr.mxu0 0.0
  %2995 = vmatpush2.msra.mxu0 0.0
  %2996 = vmatprep.subr.mxu0 0.0
  %2997 = vmatpush2.msra.mxu0 0.0
  %2998 = vmatprep.subr.mxu0 0.0
  %2999 = vmatpush2.msra.mxu0 0.0
  %3000 = vmatprep.subr.mxu0 0.0
  %3001 = vmatpush2.msra.mxu0 0.0
  %3002 = vmatprep.subr.mxu0 0.0
  %3003 = vmatpush2.msra.mxu0 0.0
  %3004 = vmatprep.subr.mxu0 0.0
  %3005 = vmatpush2.msra.mxu0 0.0
  %3006 = vmatprep.subr.mxu0 0.0
  %3007 = vmatpush2.msra.mxu0 0.0
  %3008 = vmatprep.subr.mxu0 0.0
  %3009 = vmatpush2.msra.mxu0 0.0
  %3010 = vmatprep.subr.mxu0 0.0
  %3011 = vmatpush2.msra.mxu0 0.0
  %3012 = vmatprep.subr.mxu0 0.0
  %3013 = vmatpush2.msra.mxu0 0.0
  %3014 = vmatprep.subr.mxu0 0.0
  %3015 = vmatpush2.msra.mxu0 0.0
  %3016 = vmatprep.subr.mxu0 0.0
  %3017 = vmatpush2.msra.mxu0 0.0
  %3018 = vmatprep.subr.mxu0 0.0
  %3019 = vmatpush2.msra.mxu0 0.0
  %3020 = vmatprep.subr.mxu0 0.0
  %3021 = vmatpush2.msra.mxu0 0.0
  %3022 = vmatprep.subr.mxu0 0.0
  %3023 = vmatpush2.msra.mxu0 0.0
  %3024 = vmatprep.subr.mxu0 0.0
  %3025 = vmatpush2.msra.mxu0 0.0
  %3026 = vmatprep.mubr.f32.mxu0 0.0
  %3027 = vmatmul.mubr.f32.gmra.mxu0 %v2960
  %v3028 = vpop.f32.mrf.mxu0
  %v3029 = vadd.f32 0.0, %v3028
  %v3030 = vpop.f32.mrf.mxu0
  %3031 = vdwg.mxu0
  %3033 = vrot.lane.b32.xlu0 %v2955, 8
  %v3034 = vpop.permute.xlu0 %3033
  %v3036 = vsel %vm274, %v2945, %v3034
  %3037 = vrot.lane.b32.xlu0 %v268, 40
  %v3038 = vpop.permute.xlu0 %3037
  %3039 = vrot.lane.b32.xlu0 %v1794, 40
  %v3040 = vpop.permute.xlu0 %3039
  %v3044 = vsel %vm365, %v3036, 0
  %3046 = vmatprep.subr.mxu0 0.0
  %3047 = vmatpush1.msra.mxu0 0.0
  %3048 = vmatprep.subr.mxu0 0.0
  %3049 = vmatpush1.msra.mxu0 0.0
  %3050 = vmatprep.subr.mxu0 0.0
  %3051 = vmatpush1.msra.mxu0 0.0
  %3052 = vmatprep.subr.mxu0 0.0
  %3053 = vmatpush1.msra.mxu0 0.0
  %3054 = vmatprep.subr.mxu0 0.0
  %3055 = vmatpush1.msra.mxu0 0.0
  %3056 = vmatprep.subr.mxu0 0.0
  %3057 = vmatpush1.msra.mxu0 0.0
  %3058 = vmatprep.subr.mxu0 0.0
  %3059 = vmatpush1.msra.mxu0 0.0
  %3060 = vmatprep.subr.mxu0 0.0
  %3061 = vmatpush1.msra.mxu0 0.0
  %3062 = vmatprep.subr.mxu0 0.0
  %3063 = vmatpush1.msra.mxu0 0.0
  %3064 = vmatprep.subr.mxu0 0.0
  %3065 = vmatpush1.msra.mxu0 0.0
  %3066 = vmatprep.subr.mxu0 0.0
  %3067 = vmatpush1.msra.mxu0 0.0
  %3068 = vmatprep.subr.mxu0 0.0
  %3069 = vmatpush1.msra.mxu0 0.0
  %3070 = vmatprep.subr.mxu0 0.0
  %3071 = vmatpush1.msra.mxu0 0.0
  %3072 = vmatprep.subr.mxu0 0.0
  %3073 = vmatpush1.msra.mxu0 0.0
  %3074 = vmatprep.subr.mxu0 0.0
  %3075 = vmatpush1.msra.mxu0 %v3040
  %3076 = vmatprep.subr.mxu0 0.0
  %3077 = vmatpush1.msra.mxu0 %v3038
  %3078 = vmatprep.subr.mxu0 0.0
  %3079 = vmatpush2.msra.mxu0 0.0
  %3080 = vmatprep.subr.mxu0 0.0
  %3081 = vmatpush2.msra.mxu0 0.0
  %3082 = vmatprep.subr.mxu0 0.0
  %3083 = vmatpush2.msra.mxu0 0.0
  %3084 = vmatprep.subr.mxu0 0.0
  %3085 = vmatpush2.msra.mxu0 0.0
  %3086 = vmatprep.subr.mxu0 0.0
  %3087 = vmatpush2.msra.mxu0 0.0
  %3088 = vmatprep.subr.mxu0 0.0
  %3089 = vmatpush2.msra.mxu0 0.0
  %3090 = vmatprep.subr.mxu0 0.0
  %3091 = vmatpush2.msra.mxu0 0.0
  %3092 = vmatprep.subr.mxu0 0.0
  %3093 = vmatpush2.msra.mxu0 0.0
  %3094 = vmatprep.subr.mxu0 0.0
  %3095 = vmatpush2.msra.mxu0 0.0
  %3096 = vmatprep.subr.mxu0 0.0
  %3097 = vmatpush2.msra.mxu0 0.0
  %3098 = vmatprep.subr.mxu0 0.0
  %3099 = vmatpush2.msra.mxu0 0.0
  %3100 = vmatprep.subr.mxu0 0.0
  %3101 = vmatpush2.msra.mxu0 0.0
  %3102 = vmatprep.subr.mxu0 0.0
  %3103 = vmatpush2.msra.mxu0 0.0
  %3104 = vmatprep.subr.mxu0 0.0
  %3105 = vmatpush2.msra.mxu0 0.0
  %3106 = vmatprep.subr.mxu0 0.0
  %3107 = vmatpush2.msra.mxu0 0.0
  %3108 = vmatprep.subr.mxu0 0.0
  %3109 = vmatpush2.msra.mxu0 0.0
  %3110 = vmatprep.mubr.f32.mxu0 0.0
  %3111 = vmatmul.mubr.f32.gmra.mxu0 %v3044
  %v3112 = vpop.f32.mrf.mxu0
  %v3113 = vadd.f32 0.0, %v3112
  %v3114 = vpop.f32.mrf.mxu0
  %3115 = vdwg.mxu0
  %3117 = vrot.lane.b32.xlu0 %v2325, 8
  %v3118 = vpop.permute.xlu0 %3117
  %3121 = vrot.lane.b32.xlu0 %v2677, 16
  %v3122 = vpop.permute.xlu0 %3121
  %3125 = vrot.lane.b32.xlu0 %v3029, 24
  %v3126 = vpop.permute.xlu0 %3125
  %v3128 = vsel %vm274, %v1975, %v3118
  %v3129 = vsel %vm365, %v3128, %v3122
  %v3130 = vsel %vm1693, %v3129, %v3126
  %3132 = vrot.lane.b32.xlu0 %v2409, 8
  %v3133 = vpop.permute.xlu0 %3132
  %3136 = vrot.lane.b32.xlu0 %v2761, 16
  %v3137 = vpop.permute.xlu0 %3136
  %3140 = vrot.lane.b32.xlu0 %v3113, 24
  %v3141 = vpop.permute.xlu0 %3140
  %v3143 = vsel %vm274, %v2059, %v3133
  %v3144 = vsel %vm365, %v3143, %v3137
  %v3145 = vsel %vm1693, %v3144, %v3141
  %v3146 = vadd.f32 %v86, %v1694
  %v3147 = vadd.f32 %v87, %v3130
  %v3148 = vadd.f32 %v118, %v1709
  %v3149 = vadd.f32 %v119, %v3145
  %v3150 = vsel %vm44, %v3146, 0.0
  %v3151 = vrot.slane %v3150, 4
  %v3152 = vadd.f32 %v3150, %v3151
  %v3153 = vrot.slane %v3152, 2
  %v3154 = vadd.f32 %v3152, %v3153
  %v3155 = vrot.slane %v3154, 1
  %v3156 = vadd.f32 %v3154, %v3155
  %v3157 = vrcp.pop 8.0
  %v3158 = vmul.f32 %v3156, %v3157
  %v3159 = vsel %vm44, %v3148, 0.0
  %v3160 = vrot.slane %v3159, 4
  %v3161 = vadd.f32 %v3159, %v3160
  %v3162 = vrot.slane %v3161, 2
  %v3163 = vadd.f32 %v3161, %v3162
  %v3164 = vrot.slane %v3163, 1
  %v3165 = vadd.f32 %v3163, %v3164
  %v3166 = vmul.f32 %v3165, %v3157
  %v3167 = vmul.f32 %v3166, 0.125
  %v3168 = vsel %vm44, %v3147, 0.0
  %v3169 = vrot.slane %v3168, 4
  %v3170 = vadd.f32 %v3168, %v3169
  %v3171 = vrot.slane %v3170, 2
  %v3172 = vadd.f32 %v3170, %v3171
  %v3173 = vrot.slane %v3172, 1
  %v3174 = vadd.f32 %v3172, %v3173
  %v3175 = vmul.f32 %v3174, %v3157
  %v3176 = vsel %vm44, %v3149, 0.0
  %v3177 = vrot.slane %v3176, 4
  %v3178 = vadd.f32 %v3176, %v3177
  %v3179 = vrot.slane %v3178, 2
  %v3180 = vadd.f32 %v3178, %v3179
  %v3181 = vrot.slane %v3180, 1
  %v3182 = vadd.f32 %v3180, %v3181
  %v3183 = vmul.f32 %v3182, %v3157
  %v3184 = vmul.f32 %v3183, 0.125
  %vm3185 = vcmask 1040384
  %v3186 = vsel %vm3185, %v3158, %v3175
  %vm3187 = vcmask 254976
  %3188 = vst.msk [vmem:[%s9] sm:$0x3] %vm3187, %v3186
  %v3189 = vsel %vm3185, %v3167, %v3184
  %3190 = vst.msk [vmem:[%s10] sm:$0x3] %vm3187, %v3189
  // Predicated region
  $region38: #{_lambda_.6} parent=0 // pred_check
    _
  $region39: #{_lambda_.6} parent=0 // pred_check_branch
    %3192 = sbr.rel (0) target = $region41
  $region40: #{_lambda_.6} parent=0 // pred_region
    _
  $region41: #{_lambda_.6} parent=0 // pred_fallthru
    _
  // Predicated region
  $region42: #{_lambda_.6} parent=0 // pred_check
    _
  $region43: #{_lambda_.6} parent=0 // pred_check_branch
    %3194 = sbr.rel (0) target = $region45
  $region44: #{_lambda_.6} parent=0 // pred_region
    _
  $region45: #{_lambda_.6} parent=0 // pred_fallthru
    _
  // Predicated region
  $region46: #{_lambda_.6} parent=0 // pred_check
    _
  $region47: #{_lambda_.6} parent=0 // pred_check_branch
    %3196 = sbr.rel (0) target = $region49
  $region48: #{_lambda_.6} parent=0 // pred_region
    _
  $region49: #{_lambda_.6} parent=0 // pred_fallthru
    _
  // Predicated region
  $region50: #{_lambda_.6} parent=0 // pred_check
    _
  $region51: #{_lambda_.6} parent=0 // pred_check_branch
    %3198 = sbr.rel (0) target = $region53
  $region52: #{_lambda_.6} parent=0 // pred_region
    _
  $region53: #{_lambda_.6} parent=0 // pred_fallthru
    _

// kernel: _lambda_.5
$region0: #{_lambda_.5}
  #allocation0 [shape = 'u32[]', space=smem, size = 0x4, offset = 0x4, fixed_abs, tag = 'smem constant byte address 0x4 - core index']
  #allocation1 [shape = 'u32[144,128]{1,0:T(1,128)}', space=vmem, size = 0x12000, scoped, tag = 'internal scratch']
  %s0 = inlined_call_operand.vmem [shape: f32[16,32], index: 0, kind: input, shape index: {}]
  %s1 = inlined_call_operand.vmem [shape: f32[16,32], index: 1, kind: input, shape index: {}]
  %s2 = inlined_call_operand.vmem [shape: bf16[32,96], index: 2, kind: input, shape index: {}]
  %s3 = inlined_call_operand.vmem [shape: bf16[64,96], index: 3, kind: input, shape index: {}]
  %s4 = inlined_call_operand.vmem [shape: f32[1,32], index: 4, kind: input, shape index: {}]
  %s5 = inlined_call_operand.vmem [shape: f32[1,32], index: 5, kind: input, shape index: {}]
  %s6 = inlined_call_operand.vmem [shape: f32[1,32], index: 6, kind: input, shape index: {}]
  %s7 = inlined_call_operand.vmem [shape: f32[1,32], index: 7, kind: input, shape index: {}]
  %s8 = inlined_call_operand.vmem [shape: f32[1,32], index: 8, kind: input, shape index: {}]
  %s9 = inlined_call_operand.vmem [shape: bf16[32,32], index: 9, kind: input, shape index: {}]
  %s10 = inlined_call_operand.vmem [shape: bf16[64,32], index: 10, kind: input, shape index: {}]
  %s11 = inlined_call_operand.vmem [shape: f32[1,32], index: 11, kind: input, shape index: {}]
  %s12 = inlined_call_operand.vmem [shape: f32[1,32], index: 12, kind: input, shape index: {}]
  %s13 = inlined_call_operand.vmem [shape: f32[16,32], index: 13, kind: output, shape index: {0}]
  %s14 = inlined_call_operand.vmem [shape: f32[16,32], index: 14, kind: output, shape index: {1}]
  %15 = xla_tuple %s13, %s14
  %s16 = sld [smem:[#allocation0]]
  $region70: #{_lambda_.5} parent=0
    _
  %s18 = ssub.s32 1, %s16
  %s19 = scalar_select 0, %s18, %s16
  // Predicated region
  $region2: #{_lambda_.5} parent=0 // pred_check
    _
  $region3: #{_lambda_.5} parent=0 // pred_check_branch
    %21 = sbr.rel (0) target = $region5
  $region4: #{_lambda_.5} parent=0 // pred_region
    _
  $region5: #{_lambda_.5} parent=0 // pred_fallthru
    _
  // Predicated region
  $region6: #{_lambda_.5} parent=0 // pred_check
    _
  $region7: #{_lambda_.5} parent=0 // pred_check_branch
    %23 = sbr.rel (0) target = $region9
  $region8: #{_lambda_.5} parent=0 // pred_region
    _
  $region9: #{_lambda_.5} parent=0 // pred_fallthru
    _
  // Predicated region
  $region10: #{_lambda_.5} parent=0 // pred_check
    _
  $region11: #{_lambda_.5} parent=0 // pred_check_branch
    %25 = sbr.rel (0) target = $region13
  $region12: #{_lambda_.5} parent=0 // pred_region
    _
  $region13: #{_lambda_.5} parent=0 // pred_fallthru
    _
  // Predicated region
  $region14: #{_lambda_.5} parent=0 // pred_check
    _
  $region15: #{_lambda_.5} parent=0 // pred_check_branch
    %27 = sbr.rel (0) target = $region17
  $region16: #{_lambda_.5} parent=0 // pred_region
    _
  $region17: #{_lambda_.5} parent=0 // pred_fallthru
    _
  // Predicated region
  $region18: #{_lambda_.5} parent=0 // pred_check
    _
  $region19: #{_lambda_.5} parent=0 // pred_check_branch
    %29 = sbr.rel (0) target = $region21
  $region20: #{_lambda_.5} parent=0 // pred_region
    _
  $region21: #{_lambda_.5} parent=0 // pred_fallthru
    _
  // Predicated region
  $region22: #{_lambda_.5} parent=0 // pred_check
    _
  $region23: #{_lambda_.5} parent=0 // pred_check_branch
    %31 = sbr.rel (0) target = $region25
  $region24: #{_lambda_.5} parent=0 // pred_region
    _
  $region25: #{_lambda_.5} parent=0 // pred_fallthru
    _
  // Predicated region
  $region26: #{_lambda_.5} parent=0 // pred_check
    _
  $region27: #{_lambda_.5} parent=0 // pred_check_branch
    %33 = sbr.rel (0) target = $region29
  $region28: #{_lambda_.5} parent=0 // pred_region
    _
  $region29: #{_lambda_.5} parent=0 // pred_fallthru
    _
  // Predicated region
  $region30: #{_lambda_.5} parent=0 // pred_check
    _
  $region31: #{_lambda_.5} parent=0 // pred_check_branch
    %35 = sbr.rel (0) target = $region33
  $region32: #{_lambda_.5} parent=0 // pred_region
    _
  $region33: #{_lambda_.5} parent=0 // pred_fallthru
    _
  // Predicated region
  $region34: #{_lambda_.5} parent=0 // pred_check
    _
  $region35: #{_lambda_.5} parent=0 // pred_check_branch
    %37 = sbr.rel (0) target = $region37
  $region36: #{_lambda_.5} parent=0 // pred_region
    _
  $region37: #{_lambda_.5} parent=0 // pred_fallthru
    _
  // Predicated region
  $region38: #{_lambda_.5} parent=0 // pred_check
    _
  $region39: #{_lambda_.5} parent=0 // pred_check_branch
    %39 = sbr.rel (0) target = $region41
  $region40: #{_lambda_.5} parent=0 // pred_region
    _
  $region41: #{_lambda_.5} parent=0 // pred_fallthru
    _
  // Predicated region
  $region42: #{_lambda_.5} parent=0 // pred_check
    _
  $region43: #{_lambda_.5} parent=0 // pred_check_branch
    %41 = sbr.rel (0) target = $region45
  $region44: #{_lambda_.5} parent=0 // pred_region
    _
  $region45: #{_lambda_.5} parent=0 // pred_fallthru
    _
  // Predicated region
  $region46: #{_lambda_.5} parent=0 // pred_check
    _
  $region47: #{_lambda_.5} parent=0 // pred_check_branch
    %43 = sbr.rel (0) target = $region49
  $region48: #{_lambda_.5} parent=0 // pred_region
    _
  $region49: #{_lambda_.5} parent=0 // pred_fallthru
    _
  // Predicated region
  $region50: #{_lambda_.5} parent=0 // pred_check
    _
  $region51: #{_lambda_.5} parent=0 // pred_check_branch
    %45 = sbr.rel (0) target = $region53
  $region52: #{_lambda_.5} parent=0 // pred_region
    _
  $region53: #{_lambda_.5} parent=0 // pred_fallthru
    _
  %v47 = vld [vmem:[%s0] sm:$0xff]
  %v48 = vld [vmem:[%s0 + $0x8] sm:$0xff]
  %v49 = vld [vmem:[%s1] sm:$0xff]
  %v50 = vld [vmem:[%s1 + $0x8] sm:$0xff]
  %v51 = vld [vmem:[%s2] sm:$0xf]
  %v52 = vld [vmem:[%s2 + $0x4] sm:$0xf]
  %v53 = vld [vmem:[%s2 + $0x8] sm:$0xf]
  %v54 = vld [vmem:[%s2 + $0xc] sm:$0xf]
  %v55 = vld [vmem:[%s3] sm:$0xf]
  %v56 = vld [vmem:[%s3 + $0x4] sm:$0xf]
  %v57 = vld [vmem:[%s3 + $0x8] sm:$0xf]
  %v58 = vld [vmem:[%s3 + $0xc] sm:$0xf]
  %v59 = vld [vmem:[%s3 + $0x10] sm:$0xf]
  %v60 = vld [vmem:[%s3 + $0x14] sm:$0xf]
  %v61 = vld [vmem:[%s3 + $0x18] sm:$0xf]
  %v62 = vld [vmem:[%s3 + $0x1c] sm:$0xf]
  %v63 = vpack.c.bf16 %v48, %v47
  %v68 = vunpack.c.l.b16 %v51
  %v69 = vunpack.c.l.b16 %v52
  %v70 = vunpack.c.l.b16 %v53
  %v71 = vunpack.c.l.b16 %v54
  %v72 = vpack.c.b16 %v69, %v68
  %v73 = vpack.c.b16 %v71, %v70
  %vm76 = vcmask 261120
  %v78 = vsel %vm76, %v63, 0
  %80 = vmatprep.subr.bf16.mxu0 0
  %81 = vmatpush1.bf16.msra.mxu0 0
  %82 = vmatprep.subr.bf16.mxu0 0
  %83 = vmatpush1.bf16.msra.mxu0 0
  %84 = vmatprep.subr.bf16.mxu0 0
  %85 = vmatpush1.bf16.msra.mxu0 0
  %86 = vmatprep.subr.bf16.mxu0 0
  %87 = vmatpush1.bf16.msra.mxu0 0
  %88 = vmatprep.subr.bf16.mxu0 0
  %89 = vmatpush1.bf16.msra.mxu0 0
  %90 = vmatprep.subr.bf16.mxu0 0
  %91 = vmatpush1.bf16.msra.mxu0 0
  %92 = vmatprep.subr.bf16.mxu0 0
  %93 = vmatpush1.bf16.msra.mxu0 %v73
  %94 = vmatprep.subr.bf16.mxu0 0
  %95 = vmatpush1.bf16.msra.mxu0 %v72
  %96 = vmatprep.subr.bf16.mxu0 0
  %97 = vmatpush2.bf16.msra.mxu0 0
  %98 = vmatprep.subr.bf16.mxu0 0
  %99 = vmatpush2.bf16.msra.mxu0 0
  %100 = vmatprep.subr.bf16.mxu0 0
  %101 = vmatpush2.bf16.msra.mxu0 0
  %102 = vmatprep.subr.bf16.mxu0 0
  %103 = vmatpush2.bf16.msra.mxu0 0
  %104 = vmatprep.subr.bf16.mxu0 0
  %105 = vmatpush2.bf16.msra.mxu0 0
  %106 = vmatprep.subr.bf16.mxu0 0
  %107 = vmatpush2.bf16.msra.mxu0 0
  %108 = vmatprep.subr.bf16.mxu0 0
  %109 = vmatpush2.bf16.msra.mxu0 0
  %110 = vmatprep.subr.bf16.mxu0 0
  %111 = vmatpush2.bf16.msra.mxu0 0
  %112 = vmatprep.mubr.bf16.mxu0 0
  %113 = vmatmul.mubr.bf16.gmra.mxu0 %v78
  %v114 = vpop.f32.mrf.mxu0
  %v115 = vadd.f32 0.0, %v114
  %v116 = vpop.f32.mrf.mxu0
  %v117 = vpop.f32.mrf.mxu0
  %v118 = vadd.f32 0.0, %v117
  %v119 = vpop.f32.mrf.mxu0
  %120 = vdwg.mxu0
  %v121 = vmul.f32 %v47, %v47
  %v122 = vmul.f32 %v48, %v48
  %125 = vrot.lane.b32.xlu0 %v49, 32
  %v126 = vpop.permute.xlu0 %125
  %127 = vrot.lane.b32.xlu0 %v50, 32
  %v128 = vpop.permute.xlu0 %127
  %v131 = vsel %vm76, %v121, %v126
  %v132 = vsel %vm76, %v122, %v128
  %v133 = vpack.c.bf16 %v132, %v131
  %v142 = vunpack.c.l.b16 %v55
  %v143 = vunpack.c.l.b16 %v56
  %v144 = vunpack.c.l.b16 %v57
  %v145 = vunpack.c.l.b16 %v58
  %v146 = vunpack.c.l.b16 %v59
  %v147 = vunpack.c.l.b16 %v60
  %v148 = vunpack.c.l.b16 %v61
  %v149 = vunpack.c.l.b16 %v62
  %v150 = vpack.c.b16 %v143, %v142
  %v151 = vpack.c.b16 %v145, %v144
  %v152 = vpack.c.b16 %v147, %v146
  %v153 = vpack.c.b16 %v149, %v148
  %vm158 = vcmask 523264
  %v160 = vsel %vm158, %v133, 0
  %162 = vmatprep.subr.bf16.mxu0 0
  %163 = vmatpush1.bf16.msra.mxu0 0
  %164 = vmatprep.subr.bf16.mxu0 0
  %165 = vmatpush1.bf16.msra.mxu0 0
  %166 = vmatprep.subr.bf16.mxu0 0
  %167 = vmatpush1.bf16.msra.mxu0 0
  %168 = vmatprep.subr.bf16.mxu0 0
  %169 = vmatpush1.bf16.msra.mxu0 0
  %170 = vmatprep.subr.bf16.mxu0 0
  %171 = vmatpush1.bf16.msra.mxu0 %v153
  %172 = vmatprep.subr.bf16.mxu0 0
  %173 = vmatpush1.bf16.msra.mxu0 %v152
  %174 = vmatprep.subr.bf16.mxu0 0
  %175 = vmatpush1.bf16.msra.mxu0 %v151
  %176 = vmatprep.subr.bf16.mxu0 0
  %177 = vmatpush1.bf16.msra.mxu0 %v150
  %178 = vmatprep.subr.bf16.mxu0 0
  %179 = vmatpush2.bf16.msra.mxu0 0
  %180 = vmatprep.subr.bf16.mxu0 0
  %181 = vmatpush2.bf16.msra.mxu0 0
  %182 = vmatprep.subr.bf16.mxu0 0
  %183 = vmatpush2.bf16.msra.mxu0 0
  %184 = vmatprep.subr.bf16.mxu0 0
  %185 = vmatpush2.bf16.msra.mxu0 0
  %186 = vmatprep.subr.bf16.mxu0 0
  %187 = vmatpush2.bf16.msra.mxu0 0
  %188 = vmatprep.subr.bf16.mxu0 0
  %189 = vmatpush2.bf16.msra.mxu0 0
  %190 = vmatprep.subr.bf16.mxu0 0
  %191 = vmatpush2.bf16.msra.mxu0 0
  %192 = vmatprep.subr.bf16.mxu0 0
  %193 = vmatpush2.bf16.msra.mxu0 0
  %194 = vmatprep.mubr.bf16.mxu0 0
  %195 = vmatmul.mubr.bf16.gmra.mxu0 %v160
  %v196 = vpop.f32.mrf.mxu0
  %v197 = vadd.f32 0.0, %v196
  %v198 = vpop.f32.mrf.mxu0
  %v199 = vpop.f32.mrf.mxu0
  %v200 = vadd.f32 0.0, %v199
  %v201 = vpop.f32.mrf.mxu0
  %202 = vdwg.mxu0
  %204 = vrot.lane.b32.xlu0 %v115, 96
  %v205 = vpop.permute.xlu0 %204
  %vm206 = vcmask 64512
  %v207 = vsel %vm206, %v115, 0
  %v209 = vsel %vm206, %v205, 0
  %211 = vmatprep.subr.mxu0 0.0
  %212 = vmatpush1.xpose.msra.mxu0 0.0
  %213 = vmatprep.subr.mxu0 0.0
  %214 = vmatpush1.xpose.msra.mxu0 0.0
  %215 = vmatprep.subr.mxu0 0.0
  %216 = vmatpush1.xpose.msra.mxu0 0.0
  %217 = vmatprep.subr.mxu0 0.0
  %218 = vmatpush1.xpose.msra.mxu0 0.0
  %219 = vmatprep.subr.mxu0 0.0
  %220 = vmatpush1.xpose.msra.mxu0 0.0
  %221 = vmatprep.subr.mxu0 0.0
  %222 = vmatpush1.xpose.msra.mxu0 0.0
  %223 = vmatprep.subr.mxu0 0.0
  %224 = vmatpush1.xpose.msra.mxu0 0.0
  %225 = vmatprep.subr.mxu0 0.0
  %226 = vmatpush1.xpose.msra.mxu0 0.0
  %227 = vmatprep.subr.mxu0 0.0
  %228 = vmatpush1.xpose.msra.mxu0 0.0
  %229 = vmatprep.subr.mxu0 0.0
  %230 = vmatpush1.xpose.msra.mxu0 0.0
  %231 = vmatprep.subr.mxu0 0.0
  %232 = vmatpush1.xpose.msra.mxu0 0.0
  %233 = vmatprep.subr.mxu0 0.0
  %234 = vmatpush1.xpose.msra.mxu0 0.0
  %235 = vmatprep.subr.mxu0 0.0
  %236 = vmatpush1.xpose.msra.mxu0 0.0
  %237 = vmatprep.subr.mxu0 0.0
  %238 = vmatpush1.xpose.msra.mxu0 0.0
  %239 = vmatprep.subr.mxu0 0.0
  %240 = vmatpush1.xpose.msra.mxu0 0.0
  %241 = vmatprep.subr.mxu0 0.0
  %242 = vmatpush1.xpose.msra.mxu0 %v209
  %243 = vmatprep.subr.mxu0 0.0
  %244 = vmatpush2.xpose.msra.mxu0 0.0
  %245 = vmatprep.subr.mxu0 0.0
  %246 = vmatpush2.xpose.msra.mxu0 0.0
  %247 = vmatprep.subr.mxu0 0.0
  %248 = vmatpush2.xpose.msra.mxu0 0.0
  %249 = vmatprep.subr.mxu0 0.0
  %250 = vmatpush2.xpose.msra.mxu0 0.0
  %251 = vmatprep.subr.mxu0 0.0
  %252 = vmatpush2.xpose.msra.mxu0 0.0
  %253 = vmatprep.subr.mxu0 0.0
  %254 = vmatpush2.xpose.msra.mxu0 0.0
  %255 = vmatprep.subr.mxu0 0.0
  %256 = vmatpush2.xpose.msra.mxu0 0.0
  %257 = vmatprep.subr.mxu0 0.0
  %258 = vmatpush2.xpose.msra.mxu0 0.0
  %259 = vmatprep.subr.mxu0 0.0
  %260 = vmatpush2.xpose.msra.mxu0 0.0
  %261 = vmatprep.subr.mxu0 0.0
  %262 = vmatpush2.xpose.msra.mxu0 0.0
  %263 = vmatprep.subr.mxu0 0.0
  %264 = vmatpush2.xpose.msra.mxu0 0.0
  %265 = vmatprep.subr.mxu0 0.0
  %266 = vmatpush2.xpose.msra.mxu0 0.0
  %267 = vmatprep.subr.mxu0 0.0
  %268 = vmatpush2.xpose.msra.mxu0 0.0
  %269 = vmatprep.subr.mxu0 0.0
  %270 = vmatpush2.xpose.msra.mxu0 0.0
  %271 = vmatprep.subr.mxu0 0.0
  %272 = vmatpush2.xpose.msra.mxu0 0.0
  %273 = vmatprep.subr.mxu0 0.0
  %274 = vmatpush2.xpose.msra.mxu0 0.0
  %275 = vmatprep.mubr.f32.mxu0 0.0
  %276 = vmatmul.mubr.f32.gmra.mxu0 %v207
  %v277 = vpop.f32.mrf.mxu0
  %v278 = vadd.f32 0.0, %v277
  %v279 = vpop.f32.mrf.mxu0
  %280 = vdwg.mxu0
  %v281 = vmul.f32 %v278, 0.17677669
  %v282 = vmul.f32 %v115, %v115
  %284 = vrot.lane.b32.xlu0 %v197, 8
  %v285 = vpop.permute.xlu0 %284
  %v287 = vsel %vm206, %v282, %v285
  %v288 = vadd.f32 %v282, %v197
  %289 = vrot.lane.b32.xlu0 %v197, 96
  %v290 = vpop.permute.xlu0 %289
  %293 = vrot.lane.b32.xlu0 %v288, 104
  %v294 = vpop.permute.xlu0 %293
  %v296 = vsel %vm206, %v290, %v294
  %vm297 = vcmask 130048
  %v299 = vsel %vm297, %v287, 0
  %v302 = vsel %vm297, %v296, 0
  %304 = vmatprep.subr.mxu0 0.0
  %305 = vmatpush1.xpose.msra.mxu0 0.0
  %306 = vmatprep.subr.mxu0 0.0
  %307 = vmatpush1.xpose.msra.mxu0 0.0
  %308 = vmatprep.subr.mxu0 0.0
  %309 = vmatpush1.xpose.msra.mxu0 0.0
  %310 = vmatprep.subr.mxu0 0.0
  %311 = vmatpush1.xpose.msra.mxu0 0.0
  %312 = vmatprep.subr.mxu0 0.0
  %313 = vmatpush1.xpose.msra.mxu0 0.0
  %314 = vmatprep.subr.mxu0 0.0
  %315 = vmatpush1.xpose.msra.mxu0 0.0
  %316 = vmatprep.subr.mxu0 0.0
  %317 = vmatpush1.xpose.msra.mxu0 0.0
  %318 = vmatprep.subr.mxu0 0.0
  %319 = vmatpush1.xpose.msra.mxu0 0.0
  %320 = vmatprep.subr.mxu0 0.0
  %321 = vmatpush1.xpose.msra.mxu0 0.0
  %322 = vmatprep.subr.mxu0 0.0
  %323 = vmatpush1.xpose.msra.mxu0 0.0
  %324 = vmatprep.subr.mxu0 0.0
  %325 = vmatpush1.xpose.msra.mxu0 0.0
  %326 = vmatprep.subr.mxu0 0.0
  %327 = vmatpush1.xpose.msra.mxu0 0.0
  %328 = vmatprep.subr.mxu0 0.0
  %329 = vmatpush1.xpose.msra.mxu0 0.0
  %330 = vmatprep.subr.mxu0 0.0
  %331 = vmatpush1.xpose.msra.mxu0 0.0
  %332 = vmatprep.subr.mxu0 0.0
  %333 = vmatpush1.xpose.msra.mxu0 0.0
  %334 = vmatprep.subr.mxu0 0.0
  %335 = vmatpush1.xpose.msra.mxu0 %v302
  %336 = vmatprep.subr.mxu0 0.0
  %337 = vmatpush2.xpose.msra.mxu0 0.0
  %338 = vmatprep.subr.mxu0 0.0
  %339 = vmatpush2.xpose.msra.mxu0 0.0
  %340 = vmatprep.subr.mxu0 0.0
  %341 = vmatpush2.xpose.msra.mxu0 0.0
  %342 = vmatprep.subr.mxu0 0.0
  %343 = vmatpush2.xpose.msra.mxu0 0.0
  %344 = vmatprep.subr.mxu0 0.0
  %345 = vmatpush2.xpose.msra.mxu0 0.0
  %346 = vmatprep.subr.mxu0 0.0
  %347 = vmatpush2.xpose.msra.mxu0 0.0
  %348 = vmatprep.subr.mxu0 0.0
  %349 = vmatpush2.xpose.msra.mxu0 0.0
  %350 = vmatprep.subr.mxu0 0.0
  %351 = vmatpush2.xpose.msra.mxu0 0.0
  %352 = vmatprep.subr.mxu0 0.0
  %353 = vmatpush2.xpose.msra.mxu0 0.0
  %354 = vmatprep.subr.mxu0 0.0
  %355 = vmatpush2.xpose.msra.mxu0 0.0
  %356 = vmatprep.subr.mxu0 0.0
  %357 = vmatpush2.xpose.msra.mxu0 0.0
  %358 = vmatprep.subr.mxu0 0.0
  %359 = vmatpush2.xpose.msra.mxu0 0.0
  %360 = vmatprep.subr.mxu0 0.0
  %361 = vmatpush2.xpose.msra.mxu0 0.0
  %362 = vmatprep.subr.mxu0 0.0
  %363 = vmatpush2.xpose.msra.mxu0 0.0
  %364 = vmatprep.subr.mxu0 0.0
  %365 = vmatpush2.xpose.msra.mxu0 0.0
  %366 = vmatprep.subr.mxu0 0.0
  %367 = vmatpush2.xpose.msra.mxu0 0.0
  %368 = vmatprep.mubr.f32.mxu0 0.0
  %369 = vmatmul.mubr.f32.gmra.mxu0 %v299
  %v370 = vpop.f32.mrf.mxu0
  %v371 = vadd.f32 0.0, %v370
  %v372 = vpop.f32.mrf.mxu0
  %373 = vdwg.mxu0
  %v374 = vmul.f32 %v371, 0.03125
  %v375 = vsel %vm206, %v281, -inf
  %376 = vmax.xlane.f32.xlu0 %v375
  %v377 = vpop.xlane.xlu0 %376
  %v378 = vsub.f32 %v281, %v377
  %v379 = vmul.f32 %v378, 1.442695
  %v380 = vpow.pop %v379
  %v381 = vsel %vm206, %v380, 0.0
  %382 = vadd.xlane.f32.xlu0 %v381
  %v383 = vpop.xlane.xlu0 %382
  %v384 = vrcp.pop %v383
  %v385 = vmul.f32 %v380, %v384
  %v386 = vmul.f32 %v385, %v385
  %v387 = vmul.f32 %v386, %v374
  %v388 = vsel %vm206, %v387, 0.0
  %389 = vadd.xlane.f32.xlu0 %v388
  %v390 = vpop.xlane.xlu0 %389
  %v391 = vmul.f32 %v385, 2.0
  %v392 = vsub.f32 1.0, %v391
  %v393 = vmul.f32 %v392, %v374
  %v394 = vadd.f32 %v393, %v390
  %v395 = vmul.f32 %v386, %v394
  %v396 = vmax.f32 %v395, 0.0
  %397 = vrot.lane.b32.xlu0 %v115, 64
  %v398 = vpop.permute.xlu0 %397
  %v401 = vsel %vm206, %v385, 0
  %403 = vmatprep.subr.mxu0 0.0
  %404 = vmatpush1.msra.mxu0 0.0
  %405 = vmatprep.subr.mxu0 0.0
  %406 = vmatpush1.msra.mxu0 0.0
  %407 = vmatprep.subr.mxu0 0.0
  %408 = vmatpush1.msra.mxu0 0.0
  %409 = vmatprep.subr.mxu0 0.0
  %410 = vmatpush1.msra.mxu0 0.0
  %411 = vmatprep.subr.mxu0 0.0
  %412 = vmatpush1.msra.mxu0 0.0
  %413 = vmatprep.subr.mxu0 0.0
  %414 = vmatpush1.msra.mxu0 0.0
  %415 = vmatprep.subr.mxu0 0.0
  %416 = vmatpush1.msra.mxu0 0.0
  %417 = vmatprep.subr.mxu0 0.0
  %418 = vmatpush1.msra.mxu0 0.0
  %419 = vmatprep.subr.mxu0 0.0
  %420 = vmatpush1.msra.mxu0 0.0
  %421 = vmatprep.subr.mxu0 0.0
  %422 = vmatpush1.msra.mxu0 0.0
  %423 = vmatprep.subr.mxu0 0.0
  %424 = vmatpush1.msra.mxu0 0.0
  %425 = vmatprep.subr.mxu0 0.0
  %426 = vmatpush1.msra.mxu0 0.0
  %427 = vmatprep.subr.mxu0 0.0
  %428 = vmatpush1.msra.mxu0 0.0
  %429 = vmatprep.subr.mxu0 0.0
  %430 = vmatpush1.msra.mxu0 0.0
  %431 = vmatprep.subr.mxu0 0.0
  %432 = vmatpush1.msra.mxu0 0.0
  %433 = vmatprep.subr.mxu0 0.0
  %434 = vmatpush1.msra.mxu0 %v398
  %435 = vmatprep.subr.mxu0 0.0
  %436 = vmatpush2.msra.mxu0 0.0
  %437 = vmatprep.subr.mxu0 0.0
  %438 = vmatpush2.msra.mxu0 0.0
  %439 = vmatprep.subr.mxu0 0.0
  %440 = vmatpush2.msra.mxu0 0.0
  %441 = vmatprep.subr.mxu0 0.0
  %442 = vmatpush2.msra.mxu0 0.0
  %443 = vmatprep.subr.mxu0 0.0
  %444 = vmatpush2.msra.mxu0 0.0
  %445 = vmatprep.subr.mxu0 0.0
  %446 = vmatpush2.msra.mxu0 0.0
  %447 = vmatprep.subr.mxu0 0.0
  %448 = vmatpush2.msra.mxu0 0.0
  %449 = vmatprep.subr.mxu0 0.0
  %450 = vmatpush2.msra.mxu0 0.0
  %451 = vmatprep.subr.mxu0 0.0
  %452 = vmatpush2.msra.mxu0 0.0
  %453 = vmatprep.subr.mxu0 0.0
  %454 = vmatpush2.msra.mxu0 0.0
  %455 = vmatprep.subr.mxu0 0.0
  %456 = vmatpush2.msra.mxu0 0.0
  %457 = vmatprep.subr.mxu0 0.0
  %458 = vmatpush2.msra.mxu0 0.0
  %459 = vmatprep.subr.mxu0 0.0
  %460 = vmatpush2.msra.mxu0 0.0
  %461 = vmatprep.subr.mxu0 0.0
  %462 = vmatpush2.msra.mxu0 0.0
  %463 = vmatprep.subr.mxu0 0.0
  %464 = vmatpush2.msra.mxu0 0.0
  %465 = vmatprep.subr.mxu0 0.0
  %466 = vmatpush2.msra.mxu0 0.0
  %467 = vmatprep.mubr.f32.mxu0 0.0
  %468 = vmatmul.mubr.f32.gmra.mxu0 %v401
  %v469 = vpop.f32.mrf.mxu0
  %v470 = vadd.f32 0.0, %v469
  %v471 = vpop.f32.mrf.mxu0
  %472 = vdwg.mxu0
  %474 = vrot.lane.b32.xlu0 %v396, 8
  %v475 = vpop.permute.xlu0 %474
  %v477 = vsel %vm206, %v386, %v475
  %478 = vrot.lane.b32.xlu0 %v197, 64
  %v479 = vpop.permute.xlu0 %478
  %480 = vrot.lane.b32.xlu0 %v288, 64
  %v481 = vpop.permute.xlu0 %480
  %v485 = vsel %vm297, %v477, 0
  %487 = vmatprep.subr.mxu0 0.0
  %488 = vmatpush1.msra.mxu0 0.0
  %489 = vmatprep.subr.mxu0 0.0
  %490 = vmatpush1.msra.mxu0 0.0
  %491 = vmatprep.subr.mxu0 0.0
  %492 = vmatpush1.msra.mxu0 0.0
  %493 = vmatprep.subr.mxu0 0.0
  %494 = vmatpush1.msra.mxu0 0.0
  %495 = vmatprep.subr.mxu0 0.0
  %496 = vmatpush1.msra.mxu0 0.0
  %497 = vmatprep.subr.mxu0 0.0
  %498 = vmatpush1.msra.mxu0 0.0
  %499 = vmatprep.subr.mxu0 0.0
  %500 = vmatpush1.msra.mxu0 0.0
  %501 = vmatprep.subr.mxu0 0.0
  %502 = vmatpush1.msra.mxu0 0.0
  %503 = vmatprep.subr.mxu0 0.0
  %504 = vmatpush1.msra.mxu0 0.0
  %505 = vmatprep.subr.mxu0 0.0
  %506 = vmatpush1.msra.mxu0 0.0
  %507 = vmatprep.subr.mxu0 0.0
  %508 = vmatpush1.msra.mxu0 0.0
  %509 = vmatprep.subr.mxu0 0.0
  %510 = vmatpush1.msra.mxu0 0.0
  %511 = vmatprep.subr.mxu0 0.0
  %512 = vmatpush1.msra.mxu0 0.0
  %513 = vmatprep.subr.mxu0 0.0
  %514 = vmatpush1.msra.mxu0 0.0
  %515 = vmatprep.subr.mxu0 0.0
  %516 = vmatpush1.msra.mxu0 %v481
  %517 = vmatprep.subr.mxu0 0.0
  %518 = vmatpush1.msra.mxu0 %v479
  %519 = vmatprep.subr.mxu0 0.0
  %520 = vmatpush2.msra.mxu0 0.0
  %521 = vmatprep.subr.mxu0 0.0
  %522 = vmatpush2.msra.mxu0 0.0
  %523 = vmatprep.subr.mxu0 0.0
  %524 = vmatpush2.msra.mxu0 0.0
  %525 = vmatprep.subr.mxu0 0.0
  %526 = vmatpush2.msra.mxu0 0.0
  %527 = vmatprep.subr.mxu0 0.0
  %528 = vmatpush2.msra.mxu0 0.0
  %529 = vmatprep.subr.mxu0 0.0
  %530 = vmatpush2.msra.mxu0 0.0
  %531 = vmatprep.subr.mxu0 0.0
  %532 = vmatpush2.msra.mxu0 0.0
  %533 = vmatprep.subr.mxu0 0.0
  %534 = vmatpush2.msra.mxu0 0.0
  %535 = vmatprep.subr.mxu0 0.0
  %536 = vmatpush2.msra.mxu0 0.0
  %537 = vmatprep.subr.mxu0 0.0
  %538 = vmatpush2.msra.mxu0 0.0
  %539 = vmatprep.subr.mxu0 0.0
  %540 = vmatpush2.msra.mxu0 0.0
  %541 = vmatprep.subr.mxu0 0.0
  %542 = vmatpush2.msra.mxu0 0.0
  %543 = vmatprep.subr.mxu0 0.0
  %544 = vmatpush2.msra.mxu0 0.0
  %545 = vmatprep.subr.mxu0 0.0
  %546 = vmatpush2.msra.mxu0 0.0
  %547 = vmatprep.subr.mxu0 0.0
  %548 = vmatpush2.msra.mxu0 0.0
  %549 = vmatprep.subr.mxu0 0.0
  %550 = vmatpush2.msra.mxu0 0.0
  %551 = vmatprep.mubr.f32.mxu0 0.0
  %552 = vmatmul.mubr.f32.gmra.mxu0 %v485
  %v553 = vpop.f32.mrf.mxu0
  %v554 = vadd.f32 0.0, %v553
  %v555 = vpop.f32.mrf.mxu0
  %556 = vdwg.mxu0
  %557 = vrot.lane.b32.xlu0 %v115, 120
  %v558 = vpop.permute.xlu0 %557
  %559 = vrot.lane.b32.xlu0 %v115, 88
  %v560 = vpop.permute.xlu0 %559
  %v561 = vsel %vm206, %v558, 0
  %v563 = vsel %vm206, %v560, 0
  %565 = vmatprep.subr.mxu0 0.0
  %566 = vmatpush1.xpose.msra.mxu0 0.0
  %567 = vmatprep.subr.mxu0 0.0
  %568 = vmatpush1.xpose.msra.mxu0 0.0
  %569 = vmatprep.subr.mxu0 0.0
  %570 = vmatpush1.xpose.msra.mxu0 0.0
  %571 = vmatprep.subr.mxu0 0.0
  %572 = vmatpush1.xpose.msra.mxu0 0.0
  %573 = vmatprep.subr.mxu0 0.0
  %574 = vmatpush1.xpose.msra.mxu0 0.0
  %575 = vmatprep.subr.mxu0 0.0
  %576 = vmatpush1.xpose.msra.mxu0 0.0
  %577 = vmatprep.subr.mxu0 0.0
  %578 = vmatpush1.xpose.msra.mxu0 0.0
  %579 = vmatprep.subr.mxu0 0.0
  %580 = vmatpush1.xpose.msra.mxu0 0.0
  %581 = vmatprep.subr.mxu0 0.0
  %582 = vmatpush1.xpose.msra.mxu0 0.0
  %583 = vmatprep.subr.mxu0 0.0
  %584 = vmatpush1.xpose.msra.mxu0 0.0
  %585 = vmatprep.subr.mxu0 0.0
  %586 = vmatpush1.xpose.msra.mxu0 0.0
  %587 = vmatprep.subr.mxu0 0.0
  %588 = vmatpush1.xpose.msra.mxu0 0.0
  %589 = vmatprep.subr.mxu0 0.0
  %590 = vmatpush1.xpose.msra.mxu0 0.0
  %591 = vmatprep.subr.mxu0 0.0
  %592 = vmatpush1.xpose.msra.mxu0 0.0
  %593 = vmatprep.subr.mxu0 0.0
  %594 = vmatpush1.xpose.msra.mxu0 0.0
  %595 = vmatprep.subr.mxu0 0.0
  %596 = vmatpush1.xpose.msra.mxu0 %v563
  %597 = vmatprep.subr.mxu0 0.0
  %598 = vmatpush2.xpose.msra.mxu0 0.0
  %599 = vmatprep.subr.mxu0 0.0
  %600 = vmatpush2.xpose.msra.mxu0 0.0
  %601 = vmatprep.subr.mxu0 0.0
  %602 = vmatpush2.xpose.msra.mxu0 0.0
  %603 = vmatprep.subr.mxu0 0.0
  %604 = vmatpush2.xpose.msra.mxu0 0.0
  %605 = vmatprep.subr.mxu0 0.0
  %606 = vmatpush2.xpose.msra.mxu0 0.0
  %607 = vmatprep.subr.mxu0 0.0
  %608 = vmatpush2.xpose.msra.mxu0 0.0
  %609 = vmatprep.subr.mxu0 0.0
  %610 = vmatpush2.xpose.msra.mxu0 0.0
  %611 = vmatprep.subr.mxu0 0.0
  %612 = vmatpush2.xpose.msra.mxu0 0.0
  %613 = vmatprep.subr.mxu0 0.0
  %614 = vmatpush2.xpose.msra.mxu0 0.0
  %615 = vmatprep.subr.mxu0 0.0
  %616 = vmatpush2.xpose.msra.mxu0 0.0
  %617 = vmatprep.subr.mxu0 0.0
  %618 = vmatpush2.xpose.msra.mxu0 0.0
  %619 = vmatprep.subr.mxu0 0.0
  %620 = vmatpush2.xpose.msra.mxu0 0.0
  %621 = vmatprep.subr.mxu0 0.0
  %622 = vmatpush2.xpose.msra.mxu0 0.0
  %623 = vmatprep.subr.mxu0 0.0
  %624 = vmatpush2.xpose.msra.mxu0 0.0
  %625 = vmatprep.subr.mxu0 0.0
  %626 = vmatpush2.xpose.msra.mxu0 0.0
  %627 = vmatprep.subr.mxu0 0.0
  %628 = vmatpush2.xpose.msra.mxu0 0.0
  %629 = vmatprep.mubr.f32.mxu0 0.0
  %630 = vmatmul.mubr.f32.gmra.mxu0 %v561
  %v631 = vpop.f32.mrf.mxu0
  %v632 = vadd.f32 0.0, %v631
  %v633 = vpop.f32.mrf.mxu0
  %634 = vdwg.mxu0
  %v635 = vmul.f32 %v632, 0.17677669
  %637 = vrot.lane.b32.xlu0 %v282, 120
  %v638 = vpop.permute.xlu0 %637
  %v640 = vsel %vm206, %v638, %v197
  %641 = vrot.lane.b32.xlu0 %v197, 88
  %v642 = vpop.permute.xlu0 %641
  %644 = vrot.lane.b32.xlu0 %v288, 96
  %v645 = vpop.permute.xlu0 %644
  %v647 = vsel %vm206, %v642, %v645
  %v649 = vsel %vm297, %v640, 0
  %v652 = vsel %vm297, %v647, 0
  %654 = vmatprep.subr.mxu0 0.0
  %655 = vmatpush1.xpose.msra.mxu0 0.0
  %656 = vmatprep.subr.mxu0 0.0
  %657 = vmatpush1.xpose.msra.mxu0 0.0
  %658 = vmatprep.subr.mxu0 0.0
  %659 = vmatpush1.xpose.msra.mxu0 0.0
  %660 = vmatprep.subr.mxu0 0.0
  %661 = vmatpush1.xpose.msra.mxu0 0.0
  %662 = vmatprep.subr.mxu0 0.0
  %663 = vmatpush1.xpose.msra.mxu0 0.0
  %664 = vmatprep.subr.mxu0 0.0
  %665 = vmatpush1.xpose.msra.mxu0 0.0
  %666 = vmatprep.subr.mxu0 0.0
  %667 = vmatpush1.xpose.msra.mxu0 0.0
  %668 = vmatprep.subr.mxu0 0.0
  %669 = vmatpush1.xpose.msra.mxu0 0.0
  %670 = vmatprep.subr.mxu0 0.0
  %671 = vmatpush1.xpose.msra.mxu0 0.0
  %672 = vmatprep.subr.mxu0 0.0
  %673 = vmatpush1.xpose.msra.mxu0 0.0
  %674 = vmatprep.subr.mxu0 0.0
  %675 = vmatpush1.xpose.msra.mxu0 0.0
  %676 = vmatprep.subr.mxu0 0.0
  %677 = vmatpush1.xpose.msra.mxu0 0.0
  %678 = vmatprep.subr.mxu0 0.0
  %679 = vmatpush1.xpose.msra.mxu0 0.0
  %680 = vmatprep.subr.mxu0 0.0
  %681 = vmatpush1.xpose.msra.mxu0 0.0
  %682 = vmatprep.subr.mxu0 0.0
  %683 = vmatpush1.xpose.msra.mxu0 0.0
  %684 = vmatprep.subr.mxu0 0.0
  %685 = vmatpush1.xpose.msra.mxu0 %v652
  %686 = vmatprep.subr.mxu0 0.0
  %687 = vmatpush2.xpose.msra.mxu0 0.0
  %688 = vmatprep.subr.mxu0 0.0
  %689 = vmatpush2.xpose.msra.mxu0 0.0
  %690 = vmatprep.subr.mxu0 0.0
  %691 = vmatpush2.xpose.msra.mxu0 0.0
  %692 = vmatprep.subr.mxu0 0.0
  %693 = vmatpush2.xpose.msra.mxu0 0.0
  %694 = vmatprep.subr.mxu0 0.0
  %695 = vmatpush2.xpose.msra.mxu0 0.0
  %696 = vmatprep.subr.mxu0 0.0
  %697 = vmatpush2.xpose.msra.mxu0 0.0
  %698 = vmatprep.subr.mxu0 0.0
  %699 = vmatpush2.xpose.msra.mxu0 0.0
  %700 = vmatprep.subr.mxu0 0.0
  %701 = vmatpush2.xpose.msra.mxu0 0.0
  %702 = vmatprep.subr.mxu0 0.0
  %703 = vmatpush2.xpose.msra.mxu0 0.0
  %704 = vmatprep.subr.mxu0 0.0
  %705 = vmatpush2.xpose.msra.mxu0 0.0
  %706 = vmatprep.subr.mxu0 0.0
  %707 = vmatpush2.xpose.msra.mxu0 0.0
  %708 = vmatprep.subr.mxu0 0.0
  %709 = vmatpush2.xpose.msra.mxu0 0.0
  %710 = vmatprep.subr.mxu0 0.0
  %711 = vmatpush2.xpose.msra.mxu0 0.0
  %712 = vmatprep.subr.mxu0 0.0
  %713 = vmatpush2.xpose.msra.mxu0 0.0
  %714 = vmatprep.subr.mxu0 0.0
  %715 = vmatpush2.xpose.msra.mxu0 0.0
  %716 = vmatprep.subr.mxu0 0.0
  %717 = vmatpush2.xpose.msra.mxu0 0.0
  %718 = vmatprep.mubr.f32.mxu0 0.0
  %719 = vmatmul.mubr.f32.gmra.mxu0 %v649
  %v720 = vpop.f32.mrf.mxu0
  %v721 = vadd.f32 0.0, %v720
  %v722 = vpop.f32.mrf.mxu0
  %723 = vdwg.mxu0
  %v724 = vmul.f32 %v721, 0.03125
  %v725 = vsel %vm206, %v635, -inf
  %726 = vmax.xlane.f32.xlu0 %v725
  %v727 = vpop.xlane.xlu0 %726
  %v728 = vsub.f32 %v635, %v727
  %v729 = vmul.f32 %v728, 1.442695
  %v730 = vpow.pop %v729
  %v731 = vsel %vm206, %v730, 0.0
  %732 = vadd.xlane.f32.xlu0 %v731
  %v733 = vpop.xlane.xlu0 %732
  %v734 = vrcp.pop %v733
  %v735 = vmul.f32 %v730, %v734
  %v736 = vmul.f32 %v735, %v735
  %v737 = vmul.f32 %v736, %v724
  %v738 = vsel %vm206, %v737, 0.0
  %739 = vadd.xlane.f32.xlu0 %v738
  %v740 = vpop.xlane.xlu0 %739
  %v741 = vmul.f32 %v735, 2.0
  %v742 = vsub.f32 1.0, %v741
  %v743 = vmul.f32 %v742, %v724
  %v744 = vadd.f32 %v743, %v740
  %v745 = vmul.f32 %v736, %v744
  %v746 = vmax.f32 %v745, 0.0
  %747 = vrot.lane.b32.xlu0 %v115, 56
  %v748 = vpop.permute.xlu0 %747
  %v751 = vsel %vm206, %v735, 0
  %753 = vmatprep.subr.mxu0 0.0
  %754 = vmatpush1.msra.mxu0 0.0
  %755 = vmatprep.subr.mxu0 0.0
  %756 = vmatpush1.msra.mxu0 0.0
  %757 = vmatprep.subr.mxu0 0.0
  %758 = vmatpush1.msra.mxu0 0.0
  %759 = vmatprep.subr.mxu0 0.0
  %760 = vmatpush1.msra.mxu0 0.0
  %761 = vmatprep.subr.mxu0 0.0
  %762 = vmatpush1.msra.mxu0 0.0
  %763 = vmatprep.subr.mxu0 0.0
  %764 = vmatpush1.msra.mxu0 0.0
  %765 = vmatprep.subr.mxu0 0.0
  %766 = vmatpush1.msra.mxu0 0.0
  %767 = vmatprep.subr.mxu0 0.0
  %768 = vmatpush1.msra.mxu0 0.0
  %769 = vmatprep.subr.mxu0 0.0
  %770 = vmatpush1.msra.mxu0 0.0
  %771 = vmatprep.subr.mxu0 0.0
  %772 = vmatpush1.msra.mxu0 0.0
  %773 = vmatprep.subr.mxu0 0.0
  %774 = vmatpush1.msra.mxu0 0.0
  %775 = vmatprep.subr.mxu0 0.0
  %776 = vmatpush1.msra.mxu0 0.0
  %777 = vmatprep.subr.mxu0 0.0
  %778 = vmatpush1.msra.mxu0 0.0
  %779 = vmatprep.subr.mxu0 0.0
  %780 = vmatpush1.msra.mxu0 0.0
  %781 = vmatprep.subr.mxu0 0.0
  %782 = vmatpush1.msra.mxu0 0.0
  %783 = vmatprep.subr.mxu0 0.0
  %784 = vmatpush1.msra.mxu0 %v748
  %785 = vmatprep.subr.mxu0 0.0
  %786 = vmatpush2.msra.mxu0 0.0
  %787 = vmatprep.subr.mxu0 0.0
  %788 = vmatpush2.msra.mxu0 0.0
  %789 = vmatprep.subr.mxu0 0.0
  %790 = vmatpush2.msra.mxu0 0.0
  %791 = vmatprep.subr.mxu0 0.0
  %792 = vmatpush2.msra.mxu0 0.0
  %793 = vmatprep.subr.mxu0 0.0
  %794 = vmatpush2.msra.mxu0 0.0
  %795 = vmatprep.subr.mxu0 0.0
  %796 = vmatpush2.msra.mxu0 0.0
  %797 = vmatprep.subr.mxu0 0.0
  %798 = vmatpush2.msra.mxu0 0.0
  %799 = vmatprep.subr.mxu0 0.0
  %800 = vmatpush2.msra.mxu0 0.0
  %801 = vmatprep.subr.mxu0 0.0
  %802 = vmatpush2.msra.mxu0 0.0
  %803 = vmatprep.subr.mxu0 0.0
  %804 = vmatpush2.msra.mxu0 0.0
  %805 = vmatprep.subr.mxu0 0.0
  %806 = vmatpush2.msra.mxu0 0.0
  %807 = vmatprep.subr.mxu0 0.0
  %808 = vmatpush2.msra.mxu0 0.0
  %809 = vmatprep.subr.mxu0 0.0
  %810 = vmatpush2.msra.mxu0 0.0
  %811 = vmatprep.subr.mxu0 0.0
  %812 = vmatpush2.msra.mxu0 0.0
  %813 = vmatprep.subr.mxu0 0.0
  %814 = vmatpush2.msra.mxu0 0.0
  %815 = vmatprep.subr.mxu0 0.0
  %816 = vmatpush2.msra.mxu0 0.0
  %817 = vmatprep.mubr.f32.mxu0 0.0
  %818 = vmatmul.mubr.f32.gmra.mxu0 %v751
  %v819 = vpop.f32.mrf.mxu0
  %v820 = vadd.f32 0.0, %v819
  %v821 = vpop.f32.mrf.mxu0
  %822 = vdwg.mxu0
  %824 = vrot.lane.b32.xlu0 %v746, 8
  %v825 = vpop.permute.xlu0 %824
  %v827 = vsel %vm206, %v736, %v825
  %828 = vrot.lane.b32.xlu0 %v197, 56
  %v829 = vpop.permute.xlu0 %828
  %830 = vrot.lane.b32.xlu0 %v288, 56
  %v831 = vpop.permute.xlu0 %830
  %v835 = vsel %vm297, %v827, 0
  %837 = vmatprep.subr.mxu0 0.0
  %838 = vmatpush1.msra.mxu0 0.0
  %839 = vmatprep.subr.mxu0 0.0
  %840 = vmatpush1.msra.mxu0 0.0
  %841 = vmatprep.subr.mxu0 0.0
  %842 = vmatpush1.msra.mxu0 0.0
  %843 = vmatprep.subr.mxu0 0.0
  %844 = vmatpush1.msra.mxu0 0.0
  %845 = vmatprep.subr.mxu0 0.0
  %846 = vmatpush1.msra.mxu0 0.0
  %847 = vmatprep.subr.mxu0 0.0
  %848 = vmatpush1.msra.mxu0 0.0
  %849 = vmatprep.subr.mxu0 0.0
  %850 = vmatpush1.msra.mxu0 0.0
  %851 = vmatprep.subr.mxu0 0.0
  %852 = vmatpush1.msra.mxu0 0.0
  %853 = vmatprep.subr.mxu0 0.0
  %854 = vmatpush1.msra.mxu0 0.0
  %855 = vmatprep.subr.mxu0 0.0
  %856 = vmatpush1.msra.mxu0 0.0
  %857 = vmatprep.subr.mxu0 0.0
  %858 = vmatpush1.msra.mxu0 0.0
  %859 = vmatprep.subr.mxu0 0.0
  %860 = vmatpush1.msra.mxu0 0.0
  %861 = vmatprep.subr.mxu0 0.0
  %862 = vmatpush1.msra.mxu0 0.0
  %863 = vmatprep.subr.mxu0 0.0
  %864 = vmatpush1.msra.mxu0 0.0
  %865 = vmatprep.subr.mxu0 0.0
  %866 = vmatpush1.msra.mxu0 %v831
  %867 = vmatprep.subr.mxu0 0.0
  %868 = vmatpush1.msra.mxu0 %v829
  %869 = vmatprep.subr.mxu0 0.0
  %870 = vmatpush2.msra.mxu0 0.0
  %871 = vmatprep.subr.mxu0 0.0
  %872 = vmatpush2.msra.mxu0 0.0
  %873 = vmatprep.subr.mxu0 0.0
  %874 = vmatpush2.msra.mxu0 0.0
  %875 = vmatprep.subr.mxu0 0.0
  %876 = vmatpush2.msra.mxu0 0.0
  %877 = vmatprep.subr.mxu0 0.0
  %878 = vmatpush2.msra.mxu0 0.0
  %879 = vmatprep.subr.mxu0 0.0
  %880 = vmatpush2.msra.mxu0 0.0
  %881 = vmatprep.subr.mxu0 0.0
  %882 = vmatpush2.msra.mxu0 0.0
  %883 = vmatprep.subr.mxu0 0.0
  %884 = vmatpush2.msra.mxu0 0.0
  %885 = vmatprep.subr.mxu0 0.0
  %886 = vmatpush2.msra.mxu0 0.0
  %887 = vmatprep.subr.mxu0 0.0
  %888 = vmatpush2.msra.mxu0 0.0
  %889 = vmatprep.subr.mxu0 0.0
  %890 = vmatpush2.msra.mxu0 0.0
  %891 = vmatprep.subr.mxu0 0.0
  %892 = vmatpush2.msra.mxu0 0.0
  %893 = vmatprep.subr.mxu0 0.0
  %894 = vmatpush2.msra.mxu0 0.0
  %895 = vmatprep.subr.mxu0 0.0
  %896 = vmatpush2.msra.mxu0 0.0
  %897 = vmatprep.subr.mxu0 0.0
  %898 = vmatpush2.msra.mxu0 0.0
  %899 = vmatprep.subr.mxu0 0.0
  %900 = vmatpush2.msra.mxu0 0.0
  %901 = vmatprep.mubr.f32.mxu0 0.0
  %902 = vmatmul.mubr.f32.gmra.mxu0 %v835
  %v903 = vpop.f32.mrf.mxu0
  %v904 = vadd.f32 0.0, %v903
  %v905 = vpop.f32.mrf.mxu0
  %906 = vdwg.mxu0
  %907 = vrot.lane.b32.xlu0 %v115, 112
  %v908 = vpop.permute.xlu0 %907
  %909 = vrot.lane.b32.xlu0 %v115, 80
  %v910 = vpop.permute.xlu0 %909
  %v911 = vsel %vm206, %v908, 0
  %v913 = vsel %vm206, %v910, 0
  %915 = vmatprep.subr.mxu0 0.0
  %916 = vmatpush1.xpose.msra.mxu0 0.0
  %917 = vmatprep.subr.mxu0 0.0
  %918 = vmatpush1.xpose.msra.mxu0 0.0
  %919 = vmatprep.subr.mxu0 0.0
  %920 = vmatpush1.xpose.msra.mxu0 0.0
  %921 = vmatprep.subr.mxu0 0.0
  %922 = vmatpush1.xpose.msra.mxu0 0.0
  %923 = vmatprep.subr.mxu0 0.0
  %924 = vmatpush1.xpose.msra.mxu0 0.0
  %925 = vmatprep.subr.mxu0 0.0
  %926 = vmatpush1.xpose.msra.mxu0 0.0
  %927 = vmatprep.subr.mxu0 0.0
  %928 = vmatpush1.xpose.msra.mxu0 0.0
  %929 = vmatprep.subr.mxu0 0.0
  %930 = vmatpush1.xpose.msra.mxu0 0.0
  %931 = vmatprep.subr.mxu0 0.0
  %932 = vmatpush1.xpose.msra.mxu0 0.0
  %933 = vmatprep.subr.mxu0 0.0
  %934 = vmatpush1.xpose.msra.mxu0 0.0
  %935 = vmatprep.subr.mxu0 0.0
  %936 = vmatpush1.xpose.msra.mxu0 0.0
  %937 = vmatprep.subr.mxu0 0.0
  %938 = vmatpush1.xpose.msra.mxu0 0.0
  %939 = vmatprep.subr.mxu0 0.0
  %940 = vmatpush1.xpose.msra.mxu0 0.0
  %941 = vmatprep.subr.mxu0 0.0
  %942 = vmatpush1.xpose.msra.mxu0 0.0
  %943 = vmatprep.subr.mxu0 0.0
  %944 = vmatpush1.xpose.msra.mxu0 0.0
  %945 = vmatprep.subr.mxu0 0.0
  %946 = vmatpush1.xpose.msra.mxu0 %v913
  %947 = vmatprep.subr.mxu0 0.0
  %948 = vmatpush2.xpose.msra.mxu0 0.0
  %949 = vmatprep.subr.mxu0 0.0
  %950 = vmatpush2.xpose.msra.mxu0 0.0
  %951 = vmatprep.subr.mxu0 0.0
  %952 = vmatpush2.xpose.msra.mxu0 0.0
  %953 = vmatprep.subr.mxu0 0.0
  %954 = vmatpush2.xpose.msra.mxu0 0.0
  %955 = vmatprep.subr.mxu0 0.0
  %956 = vmatpush2.xpose.msra.mxu0 0.0
  %957 = vmatprep.subr.mxu0 0.0
  %958 = vmatpush2.xpose.msra.mxu0 0.0
  %959 = vmatprep.subr.mxu0 0.0
  %960 = vmatpush2.xpose.msra.mxu0 0.0
  %961 = vmatprep.subr.mxu0 0.0
  %962 = vmatpush2.xpose.msra.mxu0 0.0
  %963 = vmatprep.subr.mxu0 0.0
  %964 = vmatpush2.xpose.msra.mxu0 0.0
  %965 = vmatprep.subr.mxu0 0.0
  %966 = vmatpush2.xpose.msra.mxu0 0.0
  %967 = vmatprep.subr.mxu0 0.0
  %968 = vmatpush2.xpose.msra.mxu0 0.0
  %969 = vmatprep.subr.mxu0 0.0
  %970 = vmatpush2.xpose.msra.mxu0 0.0
  %971 = vmatprep.subr.mxu0 0.0
  %972 = vmatpush2.xpose.msra.mxu0 0.0
  %973 = vmatprep.subr.mxu0 0.0
  %974 = vmatpush2.xpose.msra.mxu0 0.0
  %975 = vmatprep.subr.mxu0 0.0
  %976 = vmatpush2.xpose.msra.mxu0 0.0
  %977 = vmatprep.subr.mxu0 0.0
  %978 = vmatpush2.xpose.msra.mxu0 0.0
  %979 = vmatprep.mubr.f32.mxu0 0.0
  %980 = vmatmul.mubr.f32.gmra.mxu0 %v911
  %v981 = vpop.f32.mrf.mxu0
  %v982 = vadd.f32 0.0, %v981
  %v983 = vpop.f32.mrf.mxu0
  %984 = vdwg.mxu0
  %v985 = vmul.f32 %v982, 0.17677669
  %986 = vrot.lane.b32.xlu0 %v282, 112
  %v987 = vpop.permute.xlu0 %986
  %989 = vrot.lane.b32.xlu0 %v197, 120
  %v990 = vpop.permute.xlu0 %989
  %v992 = vsel %vm206, %v987, %v990
  %993 = vrot.lane.b32.xlu0 %v197, 80
  %v994 = vpop.permute.xlu0 %993
  %996 = vrot.lane.b32.xlu0 %v288, 88
  %v997 = vpop.permute.xlu0 %996
  %v999 = vsel %vm206, %v994, %v997
  %v1001 = vsel %vm297, %v992, 0
  %v1004 = vsel %vm297, %v999, 0
  %1006 = vmatprep.subr.mxu0 0.0
  %1007 = vmatpush1.xpose.msra.mxu0 0.0
  %1008 = vmatprep.subr.mxu0 0.0
  %1009 = vmatpush1.xpose.msra.mxu0 0.0
  %1010 = vmatprep.subr.mxu0 0.0
  %1011 = vmatpush1.xpose.msra.mxu0 0.0
  %1012 = vmatprep.subr.mxu0 0.0
  %1013 = vmatpush1.xpose.msra.mxu0 0.0
  %1014 = vmatprep.subr.mxu0 0.0
  %1015 = vmatpush1.xpose.msra.mxu0 0.0
  %1016 = vmatprep.subr.mxu0 0.0
  %1017 = vmatpush1.xpose.msra.mxu0 0.0
  %1018 = vmatprep.subr.mxu0 0.0
  %1019 = vmatpush1.xpose.msra.mxu0 0.0
  %1020 = vmatprep.subr.mxu0 0.0
  %1021 = vmatpush1.xpose.msra.mxu0 0.0
  %1022 = vmatprep.subr.mxu0 0.0
  %1023 = vmatpush1.xpose.msra.mxu0 0.0
  %1024 = vmatprep.subr.mxu0 0.0
  %1025 = vmatpush1.xpose.msra.mxu0 0.0
  %1026 = vmatprep.subr.mxu0 0.0
  %1027 = vmatpush1.xpose.msra.mxu0 0.0
  %1028 = vmatprep.subr.mxu0 0.0
  %1029 = vmatpush1.xpose.msra.mxu0 0.0
  %1030 = vmatprep.subr.mxu0 0.0
  %1031 = vmatpush1.xpose.msra.mxu0 0.0
  %1032 = vmatprep.subr.mxu0 0.0
  %1033 = vmatpush1.xpose.msra.mxu0 0.0
  %1034 = vmatprep.subr.mxu0 0.0
  %1035 = vmatpush1.xpose.msra.mxu0 0.0
  %1036 = vmatprep.subr.mxu0 0.0
  %1037 = vmatpush1.xpose.msra.mxu0 %v1004
  %1038 = vmatprep.subr.mxu0 0.0
  %1039 = vmatpush2.xpose.msra.mxu0 0.0
  %1040 = vmatprep.subr.mxu0 0.0
  %1041 = vmatpush2.xpose.msra.mxu0 0.0
  %1042 = vmatprep.subr.mxu0 0.0
  %1043 = vmatpush2.xpose.msra.mxu0 0.0
  %1044 = vmatprep.subr.mxu0 0.0
  %1045 = vmatpush2.xpose.msra.mxu0 0.0
  %1046 = vmatprep.subr.mxu0 0.0
  %1047 = vmatpush2.xpose.msra.mxu0 0.0
  %1048 = vmatprep.subr.mxu0 0.0
  %1049 = vmatpush2.xpose.msra.mxu0 0.0
  %1050 = vmatprep.subr.mxu0 0.0
  %1051 = vmatpush2.xpose.msra.mxu0 0.0
  %1052 = vmatprep.subr.mxu0 0.0
  %1053 = vmatpush2.xpose.msra.mxu0 0.0
  %1054 = vmatprep.subr.mxu0 0.0
  %1055 = vmatpush2.xpose.msra.mxu0 0.0
  %1056 = vmatprep.subr.mxu0 0.0
  %1057 = vmatpush2.xpose.msra.mxu0 0.0
  %1058 = vmatprep.subr.mxu0 0.0
  %1059 = vmatpush2.xpose.msra.mxu0 0.0
  %1060 = vmatprep.subr.mxu0 0.0
  %1061 = vmatpush2.xpose.msra.mxu0 0.0
  %1062 = vmatprep.subr.mxu0 0.0
  %1063 = vmatpush2.xpose.msra.mxu0 0.0
  %1064 = vmatprep.subr.mxu0 0.0
  %1065 = vmatpush2.xpose.msra.mxu0 0.0
  %1066 = vmatprep.subr.mxu0 0.0
  %1067 = vmatpush2.xpose.msra.mxu0 0.0
  %1068 = vmatprep.subr.mxu0 0.0
  %1069 = vmatpush2.xpose.msra.mxu0 0.0
  %1070 = vmatprep.mubr.f32.mxu0 0.0
  %1071 = vmatmul.mubr.f32.gmra.mxu0 %v1001
  %v1072 = vpop.f32.mrf.mxu0
  %v1073 = vadd.f32 0.0, %v1072
  %v1074 = vpop.f32.mrf.mxu0
  %1075 = vdwg.mxu0
  %v1076 = vmul.f32 %v1073, 0.03125
  %v1077 = vsel %vm206, %v985, -inf
  %1078 = vmax.xlane.f32.xlu0 %v1077
  %v1079 = vpop.xlane.xlu0 %1078
  %v1080 = vsub.f32 %v985, %v1079
  %v1081 = vmul.f32 %v1080, 1.442695
  %v1082 = vpow.pop %v1081
  %v1083 = vsel %vm206, %v1082, 0.0
  %1084 = vadd.xlane.f32.xlu0 %v1083
  %v1085 = vpop.xlane.xlu0 %1084
  %v1086 = vrcp.pop %v1085
  %v1087 = vmul.f32 %v1082, %v1086
  %v1088 = vmul.f32 %v1087, %v1087
  %v1089 = vmul.f32 %v1088, %v1076
  %v1090 = vsel %vm206, %v1089, 0.0
  %1091 = vadd.xlane.f32.xlu0 %v1090
  %v1092 = vpop.xlane.xlu0 %1091
  %v1093 = vmul.f32 %v1087, 2.0
  %v1094 = vsub.f32 1.0, %v1093
  %v1095 = vmul.f32 %v1094, %v1076
  %v1096 = vadd.f32 %v1095, %v1092
  %v1097 = vmul.f32 %v1088, %v1096
  %v1098 = vmax.f32 %v1097, 0.0
  %1099 = vrot.lane.b32.xlu0 %v115, 48
  %v1100 = vpop.permute.xlu0 %1099
  %v1103 = vsel %vm206, %v1087, 0
  %1105 = vmatprep.subr.mxu0 0.0
  %1106 = vmatpush1.msra.mxu0 0.0
  %1107 = vmatprep.subr.mxu0 0.0
  %1108 = vmatpush1.msra.mxu0 0.0
  %1109 = vmatprep.subr.mxu0 0.0
  %1110 = vmatpush1.msra.mxu0 0.0
  %1111 = vmatprep.subr.mxu0 0.0
  %1112 = vmatpush1.msra.mxu0 0.0
  %1113 = vmatprep.subr.mxu0 0.0
  %1114 = vmatpush1.msra.mxu0 0.0
  %1115 = vmatprep.subr.mxu0 0.0
  %1116 = vmatpush1.msra.mxu0 0.0
  %1117 = vmatprep.subr.mxu0 0.0
  %1118 = vmatpush1.msra.mxu0 0.0
  %1119 = vmatprep.subr.mxu0 0.0
  %1120 = vmatpush1.msra.mxu0 0.0
  %1121 = vmatprep.subr.mxu0 0.0
  %1122 = vmatpush1.msra.mxu0 0.0
  %1123 = vmatprep.subr.mxu0 0.0
  %1124 = vmatpush1.msra.mxu0 0.0
  %1125 = vmatprep.subr.mxu0 0.0
  %1126 = vmatpush1.msra.mxu0 0.0
  %1127 = vmatprep.subr.mxu0 0.0
  %1128 = vmatpush1.msra.mxu0 0.0
  %1129 = vmatprep.subr.mxu0 0.0
  %1130 = vmatpush1.msra.mxu0 0.0
  %1131 = vmatprep.subr.mxu0 0.0
  %1132 = vmatpush1.msra.mxu0 0.0
  %1133 = vmatprep.subr.mxu0 0.0
  %1134 = vmatpush1.msra.mxu0 0.0
  %1135 = vmatprep.subr.mxu0 0.0
  %1136 = vmatpush1.msra.mxu0 %v1100
  %1137 = vmatprep.subr.mxu0 0.0
  %1138 = vmatpush2.msra.mxu0 0.0
  %1139 = vmatprep.subr.mxu0 0.0
  %1140 = vmatpush2.msra.mxu0 0.0
  %1141 = vmatprep.subr.mxu0 0.0
  %1142 = vmatpush2.msra.mxu0 0.0
  %1143 = vmatprep.subr.mxu0 0.0
  %1144 = vmatpush2.msra.mxu0 0.0
  %1145 = vmatprep.subr.mxu0 0.0
  %1146 = vmatpush2.msra.mxu0 0.0
  %1147 = vmatprep.subr.mxu0 0.0
  %1148 = vmatpush2.msra.mxu0 0.0
  %1149 = vmatprep.subr.mxu0 0.0
  %1150 = vmatpush2.msra.mxu0 0.0
  %1151 = vmatprep.subr.mxu0 0.0
  %1152 = vmatpush2.msra.mxu0 0.0
  %1153 = vmatprep.subr.mxu0 0.0
  %1154 = vmatpush2.msra.mxu0 0.0
  %1155 = vmatprep.subr.mxu0 0.0
  %1156 = vmatpush2.msra.mxu0 0.0
  %1157 = vmatprep.subr.mxu0 0.0
  %1158 = vmatpush2.msra.mxu0 0.0
  %1159 = vmatprep.subr.mxu0 0.0
  %1160 = vmatpush2.msra.mxu0 0.0
  %1161 = vmatprep.subr.mxu0 0.0
  %1162 = vmatpush2.msra.mxu0 0.0
  %1163 = vmatprep.subr.mxu0 0.0
  %1164 = vmatpush2.msra.mxu0 0.0
  %1165 = vmatprep.subr.mxu0 0.0
  %1166 = vmatpush2.msra.mxu0 0.0
  %1167 = vmatprep.subr.mxu0 0.0
  %1168 = vmatpush2.msra.mxu0 0.0
  %1169 = vmatprep.mubr.f32.mxu0 0.0
  %1170 = vmatmul.mubr.f32.gmra.mxu0 %v1103
  %v1171 = vpop.f32.mrf.mxu0
  %v1172 = vadd.f32 0.0, %v1171
  %v1173 = vpop.f32.mrf.mxu0
  %1174 = vdwg.mxu0
  %1176 = vrot.lane.b32.xlu0 %v1098, 8
  %v1177 = vpop.permute.xlu0 %1176
  %v1179 = vsel %vm206, %v1088, %v1177
  %1180 = vrot.lane.b32.xlu0 %v197, 48
  %v1181 = vpop.permute.xlu0 %1180
  %1182 = vrot.lane.b32.xlu0 %v288, 48
  %v1183 = vpop.permute.xlu0 %1182
  %v1187 = vsel %vm297, %v1179, 0
  %1189 = vmatprep.subr.mxu0 0.0
  %1190 = vmatpush1.msra.mxu0 0.0
  %1191 = vmatprep.subr.mxu0 0.0
  %1192 = vmatpush1.msra.mxu0 0.0
  %1193 = vmatprep.subr.mxu0 0.0
  %1194 = vmatpush1.msra.mxu0 0.0
  %1195 = vmatprep.subr.mxu0 0.0
  %1196 = vmatpush1.msra.mxu0 0.0
  %1197 = vmatprep.subr.mxu0 0.0
  %1198 = vmatpush1.msra.mxu0 0.0
  %1199 = vmatprep.subr.mxu0 0.0
  %1200 = vmatpush1.msra.mxu0 0.0
  %1201 = vmatprep.subr.mxu0 0.0
  %1202 = vmatpush1.msra.mxu0 0.0
  %1203 = vmatprep.subr.mxu0 0.0
  %1204 = vmatpush1.msra.mxu0 0.0
  %1205 = vmatprep.subr.mxu0 0.0
  %1206 = vmatpush1.msra.mxu0 0.0
  %1207 = vmatprep.subr.mxu0 0.0
  %1208 = vmatpush1.msra.mxu0 0.0
  %1209 = vmatprep.subr.mxu0 0.0
  %1210 = vmatpush1.msra.mxu0 0.0
  %1211 = vmatprep.subr.mxu0 0.0
  %1212 = vmatpush1.msra.mxu0 0.0
  %1213 = vmatprep.subr.mxu0 0.0
  %1214 = vmatpush1.msra.mxu0 0.0
  %1215 = vmatprep.subr.mxu0 0.0
  %1216 = vmatpush1.msra.mxu0 0.0
  %1217 = vmatprep.subr.mxu0 0.0
  %1218 = vmatpush1.msra.mxu0 %v1183
  %1219 = vmatprep.subr.mxu0 0.0
  %1220 = vmatpush1.msra.mxu0 %v1181
  %1221 = vmatprep.subr.mxu0 0.0
  %1222 = vmatpush2.msra.mxu0 0.0
  %1223 = vmatprep.subr.mxu0 0.0
  %1224 = vmatpush2.msra.mxu0 0.0
  %1225 = vmatprep.subr.mxu0 0.0
  %1226 = vmatpush2.msra.mxu0 0.0
  %1227 = vmatprep.subr.mxu0 0.0
  %1228 = vmatpush2.msra.mxu0 0.0
  %1229 = vmatprep.subr.mxu0 0.0
  %1230 = vmatpush2.msra.mxu0 0.0
  %1231 = vmatprep.subr.mxu0 0.0
  %1232 = vmatpush2.msra.mxu0 0.0
  %1233 = vmatprep.subr.mxu0 0.0
  %1234 = vmatpush2.msra.mxu0 0.0
  %1235 = vmatprep.subr.mxu0 0.0
  %1236 = vmatpush2.msra.mxu0 0.0
  %1237 = vmatprep.subr.mxu0 0.0
  %1238 = vmatpush2.msra.mxu0 0.0
  %1239 = vmatprep.subr.mxu0 0.0
  %1240 = vmatpush2.msra.mxu0 0.0
  %1241 = vmatprep.subr.mxu0 0.0
  %1242 = vmatpush2.msra.mxu0 0.0
  %1243 = vmatprep.subr.mxu0 0.0
  %1244 = vmatpush2.msra.mxu0 0.0
  %1245 = vmatprep.subr.mxu0 0.0
  %1246 = vmatpush2.msra.mxu0 0.0
  %1247 = vmatprep.subr.mxu0 0.0
  %1248 = vmatpush2.msra.mxu0 0.0
  %1249 = vmatprep.subr.mxu0 0.0
  %1250 = vmatpush2.msra.mxu0 0.0
  %1251 = vmatprep.subr.mxu0 0.0
  %1252 = vmatpush2.msra.mxu0 0.0
  %1253 = vmatprep.mubr.f32.mxu0 0.0
  %1254 = vmatmul.mubr.f32.gmra.mxu0 %v1187
  %v1255 = vpop.f32.mrf.mxu0
  %v1256 = vadd.f32 0.0, %v1255
  %v1257 = vpop.f32.mrf.mxu0
  %1258 = vdwg.mxu0
  %1259 = vrot.lane.b32.xlu0 %v115, 104
  %v1260 = vpop.permute.xlu0 %1259
  %1261 = vrot.lane.b32.xlu0 %v115, 72
  %v1262 = vpop.permute.xlu0 %1261
  %v1263 = vsel %vm206, %v1260, 0
  %v1265 = vsel %vm206, %v1262, 0
  %1267 = vmatprep.subr.mxu0 0.0
  %1268 = vmatpush1.xpose.msra.mxu0 0.0
  %1269 = vmatprep.subr.mxu0 0.0
  %1270 = vmatpush1.xpose.msra.mxu0 0.0
  %1271 = vmatprep.subr.mxu0 0.0
  %1272 = vmatpush1.xpose.msra.mxu0 0.0
  %1273 = vmatprep.subr.mxu0 0.0
  %1274 = vmatpush1.xpose.msra.mxu0 0.0
  %1275 = vmatprep.subr.mxu0 0.0
  %1276 = vmatpush1.xpose.msra.mxu0 0.0
  %1277 = vmatprep.subr.mxu0 0.0
  %1278 = vmatpush1.xpose.msra.mxu0 0.0
  %1279 = vmatprep.subr.mxu0 0.0
  %1280 = vmatpush1.xpose.msra.mxu0 0.0
  %1281 = vmatprep.subr.mxu0 0.0
  %1282 = vmatpush1.xpose.msra.mxu0 0.0
  %1283 = vmatprep.subr.mxu0 0.0
  %1284 = vmatpush1.xpose.msra.mxu0 0.0
  %1285 = vmatprep.subr.mxu0 0.0
  %1286 = vmatpush1.xpose.msra.mxu0 0.0
  %1287 = vmatprep.subr.mxu0 0.0
  %1288 = vmatpush1.xpose.msra.mxu0 0.0
  %1289 = vmatprep.subr.mxu0 0.0
  %1290 = vmatpush1.xpose.msra.mxu0 0.0
  %1291 = vmatprep.subr.mxu0 0.0
  %1292 = vmatpush1.xpose.msra.mxu0 0.0
  %1293 = vmatprep.subr.mxu0 0.0
  %1294 = vmatpush1.xpose.msra.mxu0 0.0
  %1295 = vmatprep.subr.mxu0 0.0
  %1296 = vmatpush1.xpose.msra.mxu0 0.0
  %1297 = vmatprep.subr.mxu0 0.0
  %1298 = vmatpush1.xpose.msra.mxu0 %v1265
  %1299 = vmatprep.subr.mxu0 0.0
  %1300 = vmatpush2.xpose.msra.mxu0 0.0
  %1301 = vmatprep.subr.mxu0 0.0
  %1302 = vmatpush2.xpose.msra.mxu0 0.0
  %1303 = vmatprep.subr.mxu0 0.0
  %1304 = vmatpush2.xpose.msra.mxu0 0.0
  %1305 = vmatprep.subr.mxu0 0.0
  %1306 = vmatpush2.xpose.msra.mxu0 0.0
  %1307 = vmatprep.subr.mxu0 0.0
  %1308 = vmatpush2.xpose.msra.mxu0 0.0
  %1309 = vmatprep.subr.mxu0 0.0
  %1310 = vmatpush2.xpose.msra.mxu0 0.0
  %1311 = vmatprep.subr.mxu0 0.0
  %1312 = vmatpush2.xpose.msra.mxu0 0.0
  %1313 = vmatprep.subr.mxu0 0.0
  %1314 = vmatpush2.xpose.msra.mxu0 0.0
  %1315 = vmatprep.subr.mxu0 0.0
  %1316 = vmatpush2.xpose.msra.mxu0 0.0
  %1317 = vmatprep.subr.mxu0 0.0
  %1318 = vmatpush2.xpose.msra.mxu0 0.0
  %1319 = vmatprep.subr.mxu0 0.0
  %1320 = vmatpush2.xpose.msra.mxu0 0.0
  %1321 = vmatprep.subr.mxu0 0.0
  %1322 = vmatpush2.xpose.msra.mxu0 0.0
  %1323 = vmatprep.subr.mxu0 0.0
  %1324 = vmatpush2.xpose.msra.mxu0 0.0
  %1325 = vmatprep.subr.mxu0 0.0
  %1326 = vmatpush2.xpose.msra.mxu0 0.0
  %1327 = vmatprep.subr.mxu0 0.0
  %1328 = vmatpush2.xpose.msra.mxu0 0.0
  %1329 = vmatprep.subr.mxu0 0.0
  %1330 = vmatpush2.xpose.msra.mxu0 0.0
  %1331 = vmatprep.mubr.f32.mxu0 0.0
  %1332 = vmatmul.mubr.f32.gmra.mxu0 %v1263
  %v1333 = vpop.f32.mrf.mxu0
  %v1334 = vadd.f32 0.0, %v1333
  %v1335 = vpop.f32.mrf.mxu0
  %1336 = vdwg.mxu0
  %v1337 = vmul.f32 %v1334, 0.17677669
  %1338 = vrot.lane.b32.xlu0 %v282, 104
  %v1339 = vpop.permute.xlu0 %1338
  %1341 = vrot.lane.b32.xlu0 %v197, 112
  %v1342 = vpop.permute.xlu0 %1341
  %v1344 = vsel %vm206, %v1339, %v1342
  %1345 = vrot.lane.b32.xlu0 %v197, 72
  %v1346 = vpop.permute.xlu0 %1345
  %1348 = vrot.lane.b32.xlu0 %v288, 80
  %v1349 = vpop.permute.xlu0 %1348
  %v1351 = vsel %vm206, %v1346, %v1349
  %v1353 = vsel %vm297, %v1344, 0
  %v1356 = vsel %vm297, %v1351, 0
  %1358 = vmatprep.subr.mxu0 0.0
  %1359 = vmatpush1.xpose.msra.mxu0 0.0
  %1360 = vmatprep.subr.mxu0 0.0
  %1361 = vmatpush1.xpose.msra.mxu0 0.0
  %1362 = vmatprep.subr.mxu0 0.0
  %1363 = vmatpush1.xpose.msra.mxu0 0.0
  %1364 = vmatprep.subr.mxu0 0.0
  %1365 = vmatpush1.xpose.msra.mxu0 0.0
  %1366 = vmatprep.subr.mxu0 0.0
  %1367 = vmatpush1.xpose.msra.mxu0 0.0
  %1368 = vmatprep.subr.mxu0 0.0
  %1369 = vmatpush1.xpose.msra.mxu0 0.0
  %1370 = vmatprep.subr.mxu0 0.0
  %1371 = vmatpush1.xpose.msra.mxu0 0.0
  %1372 = vmatprep.subr.mxu0 0.0
  %1373 = vmatpush1.xpose.msra.mxu0 0.0
  %1374 = vmatprep.subr.mxu0 0.0
  %1375 = vmatpush1.xpose.msra.mxu0 0.0
  %1376 = vmatprep.subr.mxu0 0.0
  %1377 = vmatpush1.xpose.msra.mxu0 0.0
  %1378 = vmatprep.subr.mxu0 0.0
  %1379 = vmatpush1.xpose.msra.mxu0 0.0
  %1380 = vmatprep.subr.mxu0 0.0
  %1381 = vmatpush1.xpose.msra.mxu0 0.0
  %1382 = vmatprep.subr.mxu0 0.0
  %1383 = vmatpush1.xpose.msra.mxu0 0.0
  %1384 = vmatprep.subr.mxu0 0.0
  %1385 = vmatpush1.xpose.msra.mxu0 0.0
  %1386 = vmatprep.subr.mxu0 0.0
  %1387 = vmatpush1.xpose.msra.mxu0 0.0
  %1388 = vmatprep.subr.mxu0 0.0
  %1389 = vmatpush1.xpose.msra.mxu0 %v1356
  %1390 = vmatprep.subr.mxu0 0.0
  %1391 = vmatpush2.xpose.msra.mxu0 0.0
  %1392 = vmatprep.subr.mxu0 0.0
  %1393 = vmatpush2.xpose.msra.mxu0 0.0
  %1394 = vmatprep.subr.mxu0 0.0
  %1395 = vmatpush2.xpose.msra.mxu0 0.0
  %1396 = vmatprep.subr.mxu0 0.0
  %1397 = vmatpush2.xpose.msra.mxu0 0.0
  %1398 = vmatprep.subr.mxu0 0.0
  %1399 = vmatpush2.xpose.msra.mxu0 0.0
  %1400 = vmatprep.subr.mxu0 0.0
  %1401 = vmatpush2.xpose.msra.mxu0 0.0
  %1402 = vmatprep.subr.mxu0 0.0
  %1403 = vmatpush2.xpose.msra.mxu0 0.0
  %1404 = vmatprep.subr.mxu0 0.0
  %1405 = vmatpush2.xpose.msra.mxu0 0.0
  %1406 = vmatprep.subr.mxu0 0.0
  %1407 = vmatpush2.xpose.msra.mxu0 0.0
  %1408 = vmatprep.subr.mxu0 0.0
  %1409 = vmatpush2.xpose.msra.mxu0 0.0
  %1410 = vmatprep.subr.mxu0 0.0
  %1411 = vmatpush2.xpose.msra.mxu0 0.0
  %1412 = vmatprep.subr.mxu0 0.0
  %1413 = vmatpush2.xpose.msra.mxu0 0.0
  %1414 = vmatprep.subr.mxu0 0.0
  %1415 = vmatpush2.xpose.msra.mxu0 0.0
  %1416 = vmatprep.subr.mxu0 0.0
  %1417 = vmatpush2.xpose.msra.mxu0 0.0
  %1418 = vmatprep.subr.mxu0 0.0
  %1419 = vmatpush2.xpose.msra.mxu0 0.0
  %1420 = vmatprep.subr.mxu0 0.0
  %1421 = vmatpush2.xpose.msra.mxu0 0.0
  %1422 = vmatprep.mubr.f32.mxu0 0.0
  %1423 = vmatmul.mubr.f32.gmra.mxu0 %v1353
  %v1424 = vpop.f32.mrf.mxu0
  %v1425 = vadd.f32 0.0, %v1424
  %v1426 = vpop.f32.mrf.mxu0
  %1427 = vdwg.mxu0
  %v1428 = vmul.f32 %v1425, 0.03125
  %v1429 = vsel %vm206, %v1337, -inf
  %1430 = vmax.xlane.f32.xlu0 %v1429
  %v1431 = vpop.xlane.xlu0 %1430
  %v1432 = vsub.f32 %v1337, %v1431
  %v1433 = vmul.f32 %v1432, 1.442695
  %v1434 = vpow.pop %v1433
  %v1435 = vsel %vm206, %v1434, 0.0
  %1436 = vadd.xlane.f32.xlu0 %v1435
  %v1437 = vpop.xlane.xlu0 %1436
  %v1438 = vrcp.pop %v1437
  %v1439 = vmul.f32 %v1434, %v1438
  %v1440 = vmul.f32 %v1439, %v1439
  %v1441 = vmul.f32 %v1440, %v1428
  %v1442 = vsel %vm206, %v1441, 0.0
  %1443 = vadd.xlane.f32.xlu0 %v1442
  %v1444 = vpop.xlane.xlu0 %1443
  %v1445 = vmul.f32 %v1439, 2.0
  %v1446 = vsub.f32 1.0, %v1445
  %v1447 = vmul.f32 %v1446, %v1428
  %v1448 = vadd.f32 %v1447, %v1444
  %v1449 = vmul.f32 %v1440, %v1448
  %v1450 = vmax.f32 %v1449, 0.0
  %1451 = vrot.lane.b32.xlu0 %v115, 40
  %v1452 = vpop.permute.xlu0 %1451
  %v1455 = vsel %vm206, %v1439, 0
  %1457 = vmatprep.subr.mxu0 0.0
  %1458 = vmatpush1.msra.mxu0 0.0
  %1459 = vmatprep.subr.mxu0 0.0
  %1460 = vmatpush1.msra.mxu0 0.0
  %1461 = vmatprep.subr.mxu0 0.0
  %1462 = vmatpush1.msra.mxu0 0.0
  %1463 = vmatprep.subr.mxu0 0.0
  %1464 = vmatpush1.msra.mxu0 0.0
  %1465 = vmatprep.subr.mxu0 0.0
  %1466 = vmatpush1.msra.mxu0 0.0
  %1467 = vmatprep.subr.mxu0 0.0
  %1468 = vmatpush1.msra.mxu0 0.0
  %1469 = vmatprep.subr.mxu0 0.0
  %1470 = vmatpush1.msra.mxu0 0.0
  %1471 = vmatprep.subr.mxu0 0.0
  %1472 = vmatpush1.msra.mxu0 0.0
  %1473 = vmatprep.subr.mxu0 0.0
  %1474 = vmatpush1.msra.mxu0 0.0
  %1475 = vmatprep.subr.mxu0 0.0
  %1476 = vmatpush1.msra.mxu0 0.0
  %1477 = vmatprep.subr.mxu0 0.0
  %1478 = vmatpush1.msra.mxu0 0.0
  %1479 = vmatprep.subr.mxu0 0.0
  %1480 = vmatpush1.msra.mxu0 0.0
  %1481 = vmatprep.subr.mxu0 0.0
  %1482 = vmatpush1.msra.mxu0 0.0
  %1483 = vmatprep.subr.mxu0 0.0
  %1484 = vmatpush1.msra.mxu0 0.0
  %1485 = vmatprep.subr.mxu0 0.0
  %1486 = vmatpush1.msra.mxu0 0.0
  %1487 = vmatprep.subr.mxu0 0.0
  %1488 = vmatpush1.msra.mxu0 %v1452
  %1489 = vmatprep.subr.mxu0 0.0
  %1490 = vmatpush2.msra.mxu0 0.0
  %1491 = vmatprep.subr.mxu0 0.0
  %1492 = vmatpush2.msra.mxu0 0.0
  %1493 = vmatprep.subr.mxu0 0.0
  %1494 = vmatpush2.msra.mxu0 0.0
  %1495 = vmatprep.subr.mxu0 0.0
  %1496 = vmatpush2.msra.mxu0 0.0
  %1497 = vmatprep.subr.mxu0 0.0
  %1498 = vmatpush2.msra.mxu0 0.0
  %1499 = vmatprep.subr.mxu0 0.0
  %1500 = vmatpush2.msra.mxu0 0.0
  %1501 = vmatprep.subr.mxu0 0.0
  %1502 = vmatpush2.msra.mxu0 0.0
  %1503 = vmatprep.subr.mxu0 0.0
  %1504 = vmatpush2.msra.mxu0 0.0
  %1505 = vmatprep.subr.mxu0 0.0
  %1506 = vmatpush2.msra.mxu0 0.0
  %1507 = vmatprep.subr.mxu0 0.0
  %1508 = vmatpush2.msra.mxu0 0.0
  %1509 = vmatprep.subr.mxu0 0.0
  %1510 = vmatpush2.msra.mxu0 0.0
  %1511 = vmatprep.subr.mxu0 0.0
  %1512 = vmatpush2.msra.mxu0 0.0
  %1513 = vmatprep.subr.mxu0 0.0
  %1514 = vmatpush2.msra.mxu0 0.0
  %1515 = vmatprep.subr.mxu0 0.0
  %1516 = vmatpush2.msra.mxu0 0.0
  %1517 = vmatprep.subr.mxu0 0.0
  %1518 = vmatpush2.msra.mxu0 0.0
  %1519 = vmatprep.subr.mxu0 0.0
  %1520 = vmatpush2.msra.mxu0 0.0
  %1521 = vmatprep.mubr.f32.mxu0 0.0
  %1522 = vmatmul.mubr.f32.gmra.mxu0 %v1455
  %v1523 = vpop.f32.mrf.mxu0
  %v1524 = vadd.f32 0.0, %v1523
  %v1525 = vpop.f32.mrf.mxu0
  %1526 = vdwg.mxu0
  %1528 = vrot.lane.b32.xlu0 %v1450, 8
  %v1529 = vpop.permute.xlu0 %1528
  %v1531 = vsel %vm206, %v1440, %v1529
  %1532 = vrot.lane.b32.xlu0 %v197, 40
  %v1533 = vpop.permute.xlu0 %1532
  %1534 = vrot.lane.b32.xlu0 %v288, 40
  %v1535 = vpop.permute.xlu0 %1534
  %v1539 = vsel %vm297, %v1531, 0
  %1541 = vmatprep.subr.mxu0 0.0
  %1542 = vmatpush1.msra.mxu0 0.0
  %1543 = vmatprep.subr.mxu0 0.0
  %1544 = vmatpush1.msra.mxu0 0.0
  %1545 = vmatprep.subr.mxu0 0.0
  %1546 = vmatpush1.msra.mxu0 0.0
  %1547 = vmatprep.subr.mxu0 0.0
  %1548 = vmatpush1.msra.mxu0 0.0
  %1549 = vmatprep.subr.mxu0 0.0
  %1550 = vmatpush1.msra.mxu0 0.0
  %1551 = vmatprep.subr.mxu0 0.0
  %1552 = vmatpush1.msra.mxu0 0.0
  %1553 = vmatprep.subr.mxu0 0.0
  %1554 = vmatpush1.msra.mxu0 0.0
  %1555 = vmatprep.subr.mxu0 0.0
  %1556 = vmatpush1.msra.mxu0 0.0
  %1557 = vmatprep.subr.mxu0 0.0
  %1558 = vmatpush1.msra.mxu0 0.0
  %1559 = vmatprep.subr.mxu0 0.0
  %1560 = vmatpush1.msra.mxu0 0.0
  %1561 = vmatprep.subr.mxu0 0.0
  %1562 = vmatpush1.msra.mxu0 0.0
  %1563 = vmatprep.subr.mxu0 0.0
  %1564 = vmatpush1.msra.mxu0 0.0
  %1565 = vmatprep.subr.mxu0 0.0
  %1566 = vmatpush1.msra.mxu0 0.0
  %1567 = vmatprep.subr.mxu0 0.0
  %1568 = vmatpush1.msra.mxu0 0.0
  %1569 = vmatprep.subr.mxu0 0.0
  %1570 = vmatpush1.msra.mxu0 %v1535
  %1571 = vmatprep.subr.mxu0 0.0
  %1572 = vmatpush1.msra.mxu0 %v1533
  %1573 = vmatprep.subr.mxu0 0.0
  %1574 = vmatpush2.msra.mxu0 0.0
  %1575 = vmatprep.subr.mxu0 0.0
  %1576 = vmatpush2.msra.mxu0 0.0
  %1577 = vmatprep.subr.mxu0 0.0
  %1578 = vmatpush2.msra.mxu0 0.0
  %1579 = vmatprep.subr.mxu0 0.0
  %1580 = vmatpush2.msra.mxu0 0.0
  %1581 = vmatprep.subr.mxu0 0.0
  %1582 = vmatpush2.msra.mxu0 0.0
  %1583 = vmatprep.subr.mxu0 0.0
  %1584 = vmatpush2.msra.mxu0 0.0
  %1585 = vmatprep.subr.mxu0 0.0
  %1586 = vmatpush2.msra.mxu0 0.0
  %1587 = vmatprep.subr.mxu0 0.0
  %1588 = vmatpush2.msra.mxu0 0.0
  %1589 = vmatprep.subr.mxu0 0.0
  %1590 = vmatpush2.msra.mxu0 0.0
  %1591 = vmatprep.subr.mxu0 0.0
  %1592 = vmatpush2.msra.mxu0 0.0
  %1593 = vmatprep.subr.mxu0 0.0
  %1594 = vmatpush2.msra.mxu0 0.0
  %1595 = vmatprep.subr.mxu0 0.0
  %1596 = vmatpush2.msra.mxu0 0.0
  %1597 = vmatprep.subr.mxu0 0.0
  %1598 = vmatpush2.msra.mxu0 0.0
  %1599 = vmatprep.subr.mxu0 0.0
  %1600 = vmatpush2.msra.mxu0 0.0
  %1601 = vmatprep.subr.mxu0 0.0
  %1602 = vmatpush2.msra.mxu0 0.0
  %1603 = vmatprep.subr.mxu0 0.0
  %1604 = vmatpush2.msra.mxu0 0.0
  %1605 = vmatprep.mubr.f32.mxu0 0.0
  %1606 = vmatmul.mubr.f32.gmra.mxu0 %v1539
  %v1607 = vpop.f32.mrf.mxu0
  %v1608 = vadd.f32 0.0, %v1607
  %v1609 = vpop.f32.mrf.mxu0
  %1610 = vdwg.mxu0
  %1612 = vrot.lane.b32.xlu0 %v820, 8
  %v1613 = vpop.permute.xlu0 %1612
  %1616 = vrot.lane.b32.xlu0 %v1172, 16
  %v1617 = vpop.permute.xlu0 %1616
  %1620 = vrot.lane.b32.xlu0 %v1524, 24
  %v1621 = vpop.permute.xlu0 %1620
  %v1623 = vsel %vm206, %v470, %v1613
  %v1624 = vsel %vm297, %v1623, %v1617
  %vm1625 = vcmask 195584
  %v1626 = vsel %vm1625, %v1624, %v1621
  %1628 = vrot.lane.b32.xlu0 %v904, 8
  %v1629 = vpop.permute.xlu0 %1628
  %1632 = vrot.lane.b32.xlu0 %v1256, 16
  %v1633 = vpop.permute.xlu0 %1632
  %1636 = vrot.lane.b32.xlu0 %v1608, 24
  %v1637 = vpop.permute.xlu0 %1636
  %v1639 = vsel %vm206, %v554, %v1629
  %v1640 = vsel %vm297, %v1639, %v1633
  %v1641 = vsel %vm1625, %v1640, %v1637
  %1643 = vrot.lane.b32.xlu0 %v118, 96
  %v1644 = vpop.permute.xlu0 %1643
  %v1645 = vsel %vm206, %v118, 0
  %v1647 = vsel %vm206, %v1644, 0
  %1649 = vmatprep.subr.mxu0 0.0
  %1650 = vmatpush1.xpose.msra.mxu0 0.0
  %1651 = vmatprep.subr.mxu0 0.0
  %1652 = vmatpush1.xpose.msra.mxu0 0.0
  %1653 = vmatprep.subr.mxu0 0.0
  %1654 = vmatpush1.xpose.msra.mxu0 0.0
  %1655 = vmatprep.subr.mxu0 0.0
  %1656 = vmatpush1.xpose.msra.mxu0 0.0
  %1657 = vmatprep.subr.mxu0 0.0
  %1658 = vmatpush1.xpose.msra.mxu0 0.0
  %1659 = vmatprep.subr.mxu0 0.0
  %1660 = vmatpush1.xpose.msra.mxu0 0.0
  %1661 = vmatprep.subr.mxu0 0.0
  %1662 = vmatpush1.xpose.msra.mxu0 0.0
  %1663 = vmatprep.subr.mxu0 0.0
  %1664 = vmatpush1.xpose.msra.mxu0 0.0
  %1665 = vmatprep.subr.mxu0 0.0
  %1666 = vmatpush1.xpose.msra.mxu0 0.0
  %1667 = vmatprep.subr.mxu0 0.0
  %1668 = vmatpush1.xpose.msra.mxu0 0.0
  %1669 = vmatprep.subr.mxu0 0.0
  %1670 = vmatpush1.xpose.msra.mxu0 0.0
  %1671 = vmatprep.subr.mxu0 0.0
  %1672 = vmatpush1.xpose.msra.mxu0 0.0
  %1673 = vmatprep.subr.mxu0 0.0
  %1674 = vmatpush1.xpose.msra.mxu0 0.0
  %1675 = vmatprep.subr.mxu0 0.0
  %1676 = vmatpush1.xpose.msra.mxu0 0.0
  %1677 = vmatprep.subr.mxu0 0.0
  %1678 = vmatpush1.xpose.msra.mxu0 0.0
  %1679 = vmatprep.subr.mxu0 0.0
  %1680 = vmatpush1.xpose.msra.mxu0 %v1647
  %1681 = vmatprep.subr.mxu0 0.0
  %1682 = vmatpush2.xpose.msra.mxu0 0.0
  %1683 = vmatprep.subr.mxu0 0.0
  %1684 = vmatpush2.xpose.msra.mxu0 0.0
  %1685 = vmatprep.subr.mxu0 0.0
  %1686 = vmatpush2.xpose.msra.mxu0 0.0
  %1687 = vmatprep.subr.mxu0 0.0
  %1688 = vmatpush2.xpose.msra.mxu0 0.0
  %1689 = vmatprep.subr.mxu0 0.0
  %1690 = vmatpush2.xpose.msra.mxu0 0.0
  %1691 = vmatprep.subr.mxu0 0.0
  %1692 = vmatpush2.xpose.msra.mxu0 0.0
  %1693 = vmatprep.subr.mxu0 0.0
  %1694 = vmatpush2.xpose.msra.mxu0 0.0
  %1695 = vmatprep.subr.mxu0 0.0
  %1696 = vmatpush2.xpose.msra.mxu0 0.0
  %1697 = vmatprep.subr.mxu0 0.0
  %1698 = vmatpush2.xpose.msra.mxu0 0.0
  %1699 = vmatprep.subr.mxu0 0.0
  %1700 = vmatpush2.xpose.msra.mxu0 0.0
  %1701 = vmatprep.subr.mxu0 0.0
  %1702 = vmatpush2.xpose.msra.mxu0 0.0
  %1703 = vmatprep.subr.mxu0 0.0
  %1704 = vmatpush2.xpose.msra.mxu0 0.0
  %1705 = vmatprep.subr.mxu0 0.0
  %1706 = vmatpush2.xpose.msra.mxu0 0.0
  %1707 = vmatprep.subr.mxu0 0.0
  %1708 = vmatpush2.xpose.msra.mxu0 0.0
  %1709 = vmatprep.subr.mxu0 0.0
  %1710 = vmatpush2.xpose.msra.mxu0 0.0
  %1711 = vmatprep.subr.mxu0 0.0
  %1712 = vmatpush2.xpose.msra.mxu0 0.0
  %1713 = vmatprep.mubr.f32.mxu0 0.0
  %1714 = vmatmul.mubr.f32.gmra.mxu0 %v1645
  %v1715 = vpop.f32.mrf.mxu0
  %v1716 = vadd.f32 0.0, %v1715
  %v1717 = vpop.f32.mrf.mxu0
  %1718 = vdwg.mxu0
  %v1719 = vmul.f32 %v1716, 0.17677669
  %v1720 = vmul.f32 %v118, %v118
  %1722 = vrot.lane.b32.xlu0 %v200, 8
  %v1723 = vpop.permute.xlu0 %1722
  %v1725 = vsel %vm206, %v1720, %v1723
  %v1726 = vadd.f32 %v1720, %v200
  %1727 = vrot.lane.b32.xlu0 %v200, 96
  %v1728 = vpop.permute.xlu0 %1727
  %1731 = vrot.lane.b32.xlu0 %v1726, 104
  %v1732 = vpop.permute.xlu0 %1731
  %v1734 = vsel %vm206, %v1728, %v1732
  %v1736 = vsel %vm297, %v1725, 0
  %v1739 = vsel %vm297, %v1734, 0
  %1741 = vmatprep.subr.mxu0 0.0
  %1742 = vmatpush1.xpose.msra.mxu0 0.0
  %1743 = vmatprep.subr.mxu0 0.0
  %1744 = vmatpush1.xpose.msra.mxu0 0.0
  %1745 = vmatprep.subr.mxu0 0.0
  %1746 = vmatpush1.xpose.msra.mxu0 0.0
  %1747 = vmatprep.subr.mxu0 0.0
  %1748 = vmatpush1.xpose.msra.mxu0 0.0
  %1749 = vmatprep.subr.mxu0 0.0
  %1750 = vmatpush1.xpose.msra.mxu0 0.0
  %1751 = vmatprep.subr.mxu0 0.0
  %1752 = vmatpush1.xpose.msra.mxu0 0.0
  %1753 = vmatprep.subr.mxu0 0.0
  %1754 = vmatpush1.xpose.msra.mxu0 0.0
  %1755 = vmatprep.subr.mxu0 0.0
  %1756 = vmatpush1.xpose.msra.mxu0 0.0
  %1757 = vmatprep.subr.mxu0 0.0
  %1758 = vmatpush1.xpose.msra.mxu0 0.0
  %1759 = vmatprep.subr.mxu0 0.0
  %1760 = vmatpush1.xpose.msra.mxu0 0.0
  %1761 = vmatprep.subr.mxu0 0.0
  %1762 = vmatpush1.xpose.msra.mxu0 0.0
  %1763 = vmatprep.subr.mxu0 0.0
  %1764 = vmatpush1.xpose.msra.mxu0 0.0
  %1765 = vmatprep.subr.mxu0 0.0
  %1766 = vmatpush1.xpose.msra.mxu0 0.0
  %1767 = vmatprep.subr.mxu0 0.0
  %1768 = vmatpush1.xpose.msra.mxu0 0.0
  %1769 = vmatprep.subr.mxu0 0.0
  %1770 = vmatpush1.xpose.msra.mxu0 0.0
  %1771 = vmatprep.subr.mxu0 0.0
  %1772 = vmatpush1.xpose.msra.mxu0 %v1739
  %1773 = vmatprep.subr.mxu0 0.0
  %1774 = vmatpush2.xpose.msra.mxu0 0.0
  %1775 = vmatprep.subr.mxu0 0.0
  %1776 = vmatpush2.xpose.msra.mxu0 0.0
  %1777 = vmatprep.subr.mxu0 0.0
  %1778 = vmatpush2.xpose.msra.mxu0 0.0
  %1779 = vmatprep.subr.mxu0 0.0
  %1780 = vmatpush2.xpose.msra.mxu0 0.0
  %1781 = vmatprep.subr.mxu0 0.0
  %1782 = vmatpush2.xpose.msra.mxu0 0.0
  %1783 = vmatprep.subr.mxu0 0.0
  %1784 = vmatpush2.xpose.msra.mxu0 0.0
  %1785 = vmatprep.subr.mxu0 0.0
  %1786 = vmatpush2.xpose.msra.mxu0 0.0
  %1787 = vmatprep.subr.mxu0 0.0
  %1788 = vmatpush2.xpose.msra.mxu0 0.0
  %1789 = vmatprep.subr.mxu0 0.0
  %1790 = vmatpush2.xpose.msra.mxu0 0.0
  %1791 = vmatprep.subr.mxu0 0.0
  %1792 = vmatpush2.xpose.msra.mxu0 0.0
  %1793 = vmatprep.subr.mxu0 0.0
  %1794 = vmatpush2.xpose.msra.mxu0 0.0
  %1795 = vmatprep.subr.mxu0 0.0
  %1796 = vmatpush2.xpose.msra.mxu0 0.0
  %1797 = vmatprep.subr.mxu0 0.0
  %1798 = vmatpush2.xpose.msra.mxu0 0.0
  %1799 = vmatprep.subr.mxu0 0.0
  %1800 = vmatpush2.xpose.msra.mxu0 0.0
  %1801 = vmatprep.subr.mxu0 0.0
  %1802 = vmatpush2.xpose.msra.mxu0 0.0
  %1803 = vmatprep.subr.mxu0 0.0
  %1804 = vmatpush2.xpose.msra.mxu0 0.0
  %1805 = vmatprep.mubr.f32.mxu0 0.0
  %1806 = vmatmul.mubr.f32.gmra.mxu0 %v1736
  %v1807 = vpop.f32.mrf.mxu0
  %v1808 = vadd.f32 0.0, %v1807
  %v1809 = vpop.f32.mrf.mxu0
  %1810 = vdwg.mxu0
  %v1811 = vmul.f32 %v1808, 0.03125
  %v1812 = vsel %vm206, %v1719, -inf
  %1813 = vmax.xlane.f32.xlu0 %v1812
  %v1814 = vpop.xlane.xlu0 %1813
  %v1815 = vsub.f32 %v1719, %v1814
  %v1816 = vmul.f32 %v1815, 1.442695
  %v1817 = vpow.pop %v1816
  %v1818 = vsel %vm206, %v1817, 0.0
  %1819 = vadd.xlane.f32.xlu0 %v1818
  %v1820 = vpop.xlane.xlu0 %1819
  %v1821 = vrcp.pop %v1820
  %v1822 = vmul.f32 %v1817, %v1821
  %v1823 = vmul.f32 %v1822, %v1822
  %v1824 = vmul.f32 %v1823, %v1811
  %v1825 = vsel %vm206, %v1824, 0.0
  %1826 = vadd.xlane.f32.xlu0 %v1825
  %v1827 = vpop.xlane.xlu0 %1826
  %v1828 = vmul.f32 %v1822, 2.0
  %v1829 = vsub.f32 1.0, %v1828
  %v1830 = vmul.f32 %v1829, %v1811
  %v1831 = vadd.f32 %v1830, %v1827
  %v1832 = vmul.f32 %v1823, %v1831
  %v1833 = vmax.f32 %v1832, 0.0
  %1834 = vrot.lane.b32.xlu0 %v118, 64
  %v1835 = vpop.permute.xlu0 %1834
  %v1838 = vsel %vm206, %v1822, 0
  %1840 = vmatprep.subr.mxu0 0.0
  %1841 = vmatpush1.msra.mxu0 0.0
  %1842 = vmatprep.subr.mxu0 0.0
  %1843 = vmatpush1.msra.mxu0 0.0
  %1844 = vmatprep.subr.mxu0 0.0
  %1845 = vmatpush1.msra.mxu0 0.0
  %1846 = vmatprep.subr.mxu0 0.0
  %1847 = vmatpush1.msra.mxu0 0.0
  %1848 = vmatprep.subr.mxu0 0.0
  %1849 = vmatpush1.msra.mxu0 0.0
  %1850 = vmatprep.subr.mxu0 0.0
  %1851 = vmatpush1.msra.mxu0 0.0
  %1852 = vmatprep.subr.mxu0 0.0
  %1853 = vmatpush1.msra.mxu0 0.0
  %1854 = vmatprep.subr.mxu0 0.0
  %1855 = vmatpush1.msra.mxu0 0.0
  %1856 = vmatprep.subr.mxu0 0.0
  %1857 = vmatpush1.msra.mxu0 0.0
  %1858 = vmatprep.subr.mxu0 0.0
  %1859 = vmatpush1.msra.mxu0 0.0
  %1860 = vmatprep.subr.mxu0 0.0
  %1861 = vmatpush1.msra.mxu0 0.0
  %1862 = vmatprep.subr.mxu0 0.0
  %1863 = vmatpush1.msra.mxu0 0.0
  %1864 = vmatprep.subr.mxu0 0.0
  %1865 = vmatpush1.msra.mxu0 0.0
  %1866 = vmatprep.subr.mxu0 0.0
  %1867 = vmatpush1.msra.mxu0 0.0
  %1868 = vmatprep.subr.mxu0 0.0
  %1869 = vmatpush1.msra.mxu0 0.0
  %1870 = vmatprep.subr.mxu0 0.0
  %1871 = vmatpush1.msra.mxu0 %v1835
  %1872 = vmatprep.subr.mxu0 0.0
  %1873 = vmatpush2.msra.mxu0 0.0
  %1874 = vmatprep.subr.mxu0 0.0
  %1875 = vmatpush2.msra.mxu0 0.0
  %1876 = vmatprep.subr.mxu0 0.0
  %1877 = vmatpush2.msra.mxu0 0.0
  %1878 = vmatprep.subr.mxu0 0.0
  %1879 = vmatpush2.msra.mxu0 0.0
  %1880 = vmatprep.subr.mxu0 0.0
  %1881 = vmatpush2.msra.mxu0 0.0
  %1882 = vmatprep.subr.mxu0 0.0
  %1883 = vmatpush2.msra.mxu0 0.0
  %1884 = vmatprep.subr.mxu0 0.0
  %1885 = vmatpush2.msra.mxu0 0.0
  %1886 = vmatprep.subr.mxu0 0.0
  %1887 = vmatpush2.msra.mxu0 0.0
  %1888 = vmatprep.subr.mxu0 0.0
  %1889 = vmatpush2.msra.mxu0 0.0
  %1890 = vmatprep.subr.mxu0 0.0
  %1891 = vmatpush2.msra.mxu0 0.0
  %1892 = vmatprep.subr.mxu0 0.0
  %1893 = vmatpush2.msra.mxu0 0.0
  %1894 = vmatprep.subr.mxu0 0.0
  %1895 = vmatpush2.msra.mxu0 0.0
  %1896 = vmatprep.subr.mxu0 0.0
  %1897 = vmatpush2.msra.mxu0 0.0
  %1898 = vmatprep.subr.mxu0 0.0
  %1899 = vmatpush2.msra.mxu0 0.0
  %1900 = vmatprep.subr.mxu0 0.0
  %1901 = vmatpush2.msra.mxu0 0.0
  %1902 = vmatprep.subr.mxu0 0.0
  %1903 = vmatpush2.msra.mxu0 0.0
  %1904 = vmatprep.mubr.f32.mxu0 0.0
  %1905 = vmatmul.mubr.f32.gmra.mxu0 %v1838
  %v1906 = vpop.f32.mrf.mxu0
  %v1907 = vadd.f32 0.0, %v1906
  %v1908 = vpop.f32.mrf.mxu0
  %1909 = vdwg.mxu0
  %1911 = vrot.lane.b32.xlu0 %v1833, 8
  %v1912 = vpop.permute.xlu0 %1911
  %v1914 = vsel %vm206, %v1823, %v1912
  %1915 = vrot.lane.b32.xlu0 %v200, 64
  %v1916 = vpop.permute.xlu0 %1915
  %1917 = vrot.lane.b32.xlu0 %v1726, 64
  %v1918 = vpop.permute.xlu0 %1917
  %v1922 = vsel %vm297, %v1914, 0
  %1924 = vmatprep.subr.mxu0 0.0
  %1925 = vmatpush1.msra.mxu0 0.0
  %1926 = vmatprep.subr.mxu0 0.0
  %1927 = vmatpush1.msra.mxu0 0.0
  %1928 = vmatprep.subr.mxu0 0.0
  %1929 = vmatpush1.msra.mxu0 0.0
  %1930 = vmatprep.subr.mxu0 0.0
  %1931 = vmatpush1.msra.mxu0 0.0
  %1932 = vmatprep.subr.mxu0 0.0
  %1933 = vmatpush1.msra.mxu0 0.0
  %1934 = vmatprep.subr.mxu0 0.0
  %1935 = vmatpush1.msra.mxu0 0.0
  %1936 = vmatprep.subr.mxu0 0.0
  %1937 = vmatpush1.msra.mxu0 0.0
  %1938 = vmatprep.subr.mxu0 0.0
  %1939 = vmatpush1.msra.mxu0 0.0
  %1940 = vmatprep.subr.mxu0 0.0
  %1941 = vmatpush1.msra.mxu0 0.0
  %1942 = vmatprep.subr.mxu0 0.0
  %1943 = vmatpush1.msra.mxu0 0.0
  %1944 = vmatprep.subr.mxu0 0.0
  %1945 = vmatpush1.msra.mxu0 0.0
  %1946 = vmatprep.subr.mxu0 0.0
  %1947 = vmatpush1.msra.mxu0 0.0
  %1948 = vmatprep.subr.mxu0 0.0
  %1949 = vmatpush1.msra.mxu0 0.0
  %1950 = vmatprep.subr.mxu0 0.0
  %1951 = vmatpush1.msra.mxu0 0.0
  %1952 = vmatprep.subr.mxu0 0.0
  %1953 = vmatpush1.msra.mxu0 %v1918
  %1954 = vmatprep.subr.mxu0 0.0
  %1955 = vmatpush1.msra.mxu0 %v1916
  %1956 = vmatprep.subr.mxu0 0.0
  %1957 = vmatpush2.msra.mxu0 0.0
  %1958 = vmatprep.subr.mxu0 0.0
  %1959 = vmatpush2.msra.mxu0 0.0
  %1960 = vmatprep.subr.mxu0 0.0
  %1961 = vmatpush2.msra.mxu0 0.0
  %1962 = vmatprep.subr.mxu0 0.0
  %1963 = vmatpush2.msra.mxu0 0.0
  %1964 = vmatprep.subr.mxu0 0.0
  %1965 = vmatpush2.msra.mxu0 0.0
  %1966 = vmatprep.subr.mxu0 0.0
  %1967 = vmatpush2.msra.mxu0 0.0
  %1968 = vmatprep.subr.mxu0 0.0
  %1969 = vmatpush2.msra.mxu0 0.0
  %1970 = vmatprep.subr.mxu0 0.0
  %1971 = vmatpush2.msra.mxu0 0.0
  %1972 = vmatprep.subr.mxu0 0.0
  %1973 = vmatpush2.msra.mxu0 0.0
  %1974 = vmatprep.subr.mxu0 0.0
  %1975 = vmatpush2.msra.mxu0 0.0
  %1976 = vmatprep.subr.mxu0 0.0
  %1977 = vmatpush2.msra.mxu0 0.0
  %1978 = vmatprep.subr.mxu0 0.0
  %1979 = vmatpush2.msra.mxu0 0.0
  %1980 = vmatprep.subr.mxu0 0.0
  %1981 = vmatpush2.msra.mxu0 0.0
  %1982 = vmatprep.subr.mxu0 0.0
  %1983 = vmatpush2.msra.mxu0 0.0
  %1984 = vmatprep.subr.mxu0 0.0
  %1985 = vmatpush2.msra.mxu0 0.0
  %1986 = vmatprep.subr.mxu0 0.0
  %1987 = vmatpush2.msra.mxu0 0.0
  %1988 = vmatprep.mubr.f32.mxu0 0.0
  %1989 = vmatmul.mubr.f32.gmra.mxu0 %v1922
  %v1990 = vpop.f32.mrf.mxu0
  %v1991 = vadd.f32 0.0, %v1990
  %v1992 = vpop.f32.mrf.mxu0
  %1993 = vdwg.mxu0
  %1994 = vrot.lane.b32.xlu0 %v118, 120
  %v1995 = vpop.permute.xlu0 %1994
  %1996 = vrot.lane.b32.xlu0 %v118, 88
  %v1997 = vpop.permute.xlu0 %1996
  %v1998 = vsel %vm206, %v1995, 0
  %v2000 = vsel %vm206, %v1997, 0
  %2002 = vmatprep.subr.mxu0 0.0
  %2003 = vmatpush1.xpose.msra.mxu0 0.0
  %2004 = vmatprep.subr.mxu0 0.0
  %2005 = vmatpush1.xpose.msra.mxu0 0.0
  %2006 = vmatprep.subr.mxu0 0.0
  %2007 = vmatpush1.xpose.msra.mxu0 0.0
  %2008 = vmatprep.subr.mxu0 0.0
  %2009 = vmatpush1.xpose.msra.mxu0 0.0
  %2010 = vmatprep.subr.mxu0 0.0
  %2011 = vmatpush1.xpose.msra.mxu0 0.0
  %2012 = vmatprep.subr.mxu0 0.0
  %2013 = vmatpush1.xpose.msra.mxu0 0.0
  %2014 = vmatprep.subr.mxu0 0.0
  %2015 = vmatpush1.xpose.msra.mxu0 0.0
  %2016 = vmatprep.subr.mxu0 0.0
  %2017 = vmatpush1.xpose.msra.mxu0 0.0
  %2018 = vmatprep.subr.mxu0 0.0
  %2019 = vmatpush1.xpose.msra.mxu0 0.0
  %2020 = vmatprep.subr.mxu0 0.0
  %2021 = vmatpush1.xpose.msra.mxu0 0.0
  %2022 = vmatprep.subr.mxu0 0.0
  %2023 = vmatpush1.xpose.msra.mxu0 0.0
  %2024 = vmatprep.subr.mxu0 0.0
  %2025 = vmatpush1.xpose.msra.mxu0 0.0
  %2026 = vmatprep.subr.mxu0 0.0
  %2027 = vmatpush1.xpose.msra.mxu0 0.0
  %2028 = vmatprep.subr.mxu0 0.0
  %2029 = vmatpush1.xpose.msra.mxu0 0.0
  %2030 = vmatprep.subr.mxu0 0.0
  %2031 = vmatpush1.xpose.msra.mxu0 0.0
  %2032 = vmatprep.subr.mxu0 0.0
  %2033 = vmatpush1.xpose.msra.mxu0 %v2000
  %2034 = vmatprep.subr.mxu0 0.0
  %2035 = vmatpush2.xpose.msra.mxu0 0.0
  %2036 = vmatprep.subr.mxu0 0.0
  %2037 = vmatpush2.xpose.msra.mxu0 0.0
  %2038 = vmatprep.subr.mxu0 0.0
  %2039 = vmatpush2.xpose.msra.mxu0 0.0
  %2040 = vmatprep.subr.mxu0 0.0
  %2041 = vmatpush2.xpose.msra.mxu0 0.0
  %2042 = vmatprep.subr.mxu0 0.0
  %2043 = vmatpush2.xpose.msra.mxu0 0.0
  %2044 = vmatprep.subr.mxu0 0.0
  %2045 = vmatpush2.xpose.msra.mxu0 0.0
  %2046 = vmatprep.subr.mxu0 0.0
  %2047 = vmatpush2.xpose.msra.mxu0 0.0
  %2048 = vmatprep.subr.mxu0 0.0
  %2049 = vmatpush2.xpose.msra.mxu0 0.0
  %2050 = vmatprep.subr.mxu0 0.0
  %2051 = vmatpush2.xpose.msra.mxu0 0.0
  %2052 = vmatprep.subr.mxu0 0.0
  %2053 = vmatpush2.xpose.msra.mxu0 0.0
  %2054 = vmatprep.subr.mxu0 0.0
  %2055 = vmatpush2.xpose.msra.mxu0 0.0
  %2056 = vmatprep.subr.mxu0 0.0
  %2057 = vmatpush2.xpose.msra.mxu0 0.0
  %2058 = vmatprep.subr.mxu0 0.0
  %2059 = vmatpush2.xpose.msra.mxu0 0.0
  %2060 = vmatprep.subr.mxu0 0.0
  %2061 = vmatpush2.xpose.msra.mxu0 0.0
  %2062 = vmatprep.subr.mxu0 0.0
  %2063 = vmatpush2.xpose.msra.mxu0 0.0
  %2064 = vmatprep.subr.mxu0 0.0
  %2065 = vmatpush2.xpose.msra.mxu0 0.0
  %2066 = vmatprep.mubr.f32.mxu0 0.0
  %2067 = vmatmul.mubr.f32.gmra.mxu0 %v1998
  %v2068 = vpop.f32.mrf.mxu0
  %v2069 = vadd.f32 0.0, %v2068
  %v2070 = vpop.f32.mrf.mxu0
  %2071 = vdwg.mxu0
  %v2072 = vmul.f32 %v2069, 0.17677669
  %2074 = vrot.lane.b32.xlu0 %v1720, 120
  %v2075 = vpop.permute.xlu0 %2074
  %v2077 = vsel %vm206, %v2075, %v200
  %2078 = vrot.lane.b32.xlu0 %v200, 88
  %v2079 = vpop.permute.xlu0 %2078
  %2081 = vrot.lane.b32.xlu0 %v1726, 96
  %v2082 = vpop.permute.xlu0 %2081
  %v2084 = vsel %vm206, %v2079, %v2082
  %v2086 = vsel %vm297, %v2077, 0
  %v2089 = vsel %vm297, %v2084, 0
  %2091 = vmatprep.subr.mxu0 0.0
  %2092 = vmatpush1.xpose.msra.mxu0 0.0
  %2093 = vmatprep.subr.mxu0 0.0
  %2094 = vmatpush1.xpose.msra.mxu0 0.0
  %2095 = vmatprep.subr.mxu0 0.0
  %2096 = vmatpush1.xpose.msra.mxu0 0.0
  %2097 = vmatprep.subr.mxu0 0.0
  %2098 = vmatpush1.xpose.msra.mxu0 0.0
  %2099 = vmatprep.subr.mxu0 0.0
  %2100 = vmatpush1.xpose.msra.mxu0 0.0
  %2101 = vmatprep.subr.mxu0 0.0
  %2102 = vmatpush1.xpose.msra.mxu0 0.0
  %2103 = vmatprep.subr.mxu0 0.0
  %2104 = vmatpush1.xpose.msra.mxu0 0.0
  %2105 = vmatprep.subr.mxu0 0.0
  %2106 = vmatpush1.xpose.msra.mxu0 0.0
  %2107 = vmatprep.subr.mxu0 0.0
  %2108 = vmatpush1.xpose.msra.mxu0 0.0
  %2109 = vmatprep.subr.mxu0 0.0
  %2110 = vmatpush1.xpose.msra.mxu0 0.0
  %2111 = vmatprep.subr.mxu0 0.0
  %2112 = vmatpush1.xpose.msra.mxu0 0.0
  %2113 = vmatprep.subr.mxu0 0.0
  %2114 = vmatpush1.xpose.msra.mxu0 0.0
  %2115 = vmatprep.subr.mxu0 0.0
  %2116 = vmatpush1.xpose.msra.mxu0 0.0
  %2117 = vmatprep.subr.mxu0 0.0
  %2118 = vmatpush1.xpose.msra.mxu0 0.0
  %2119 = vmatprep.subr.mxu0 0.0
  %2120 = vmatpush1.xpose.msra.mxu0 0.0
  %2121 = vmatprep.subr.mxu0 0.0
  %2122 = vmatpush1.xpose.msra.mxu0 %v2089
  %2123 = vmatprep.subr.mxu0 0.0
  %2124 = vmatpush2.xpose.msra.mxu0 0.0
  %2125 = vmatprep.subr.mxu0 0.0
  %2126 = vmatpush2.xpose.msra.mxu0 0.0
  %2127 = vmatprep.subr.mxu0 0.0
  %2128 = vmatpush2.xpose.msra.mxu0 0.0
  %2129 = vmatprep.subr.mxu0 0.0
  %2130 = vmatpush2.xpose.msra.mxu0 0.0
  %2131 = vmatprep.subr.mxu0 0.0
  %2132 = vmatpush2.xpose.msra.mxu0 0.0
  %2133 = vmatprep.subr.mxu0 0.0
  %2134 = vmatpush2.xpose.msra.mxu0 0.0
  %2135 = vmatprep.subr.mxu0 0.0
  %2136 = vmatpush2.xpose.msra.mxu0 0.0
  %2137 = vmatprep.subr.mxu0 0.0
  %2138 = vmatpush2.xpose.msra.mxu0 0.0
  %2139 = vmatprep.subr.mxu0 0.0
  %2140 = vmatpush2.xpose.msra.mxu0 0.0
  %2141 = vmatprep.subr.mxu0 0.0
  %2142 = vmatpush2.xpose.msra.mxu0 0.0
  %2143 = vmatprep.subr.mxu0 0.0
  %2144 = vmatpush2.xpose.msra.mxu0 0.0
  %2145 = vmatprep.subr.mxu0 0.0
  %2146 = vmatpush2.xpose.msra.mxu0 0.0
  %2147 = vmatprep.subr.mxu0 0.0
  %2148 = vmatpush2.xpose.msra.mxu0 0.0
  %2149 = vmatprep.subr.mxu0 0.0
  %2150 = vmatpush2.xpose.msra.mxu0 0.0
  %2151 = vmatprep.subr.mxu0 0.0
  %2152 = vmatpush2.xpose.msra.mxu0 0.0
  %2153 = vmatprep.subr.mxu0 0.0
  %2154 = vmatpush2.xpose.msra.mxu0 0.0
  %2155 = vmatprep.mubr.f32.mxu0 0.0
  %2156 = vmatmul.mubr.f32.gmra.mxu0 %v2086
  %v2157 = vpop.f32.mrf.mxu0
  %v2158 = vadd.f32 0.0, %v2157
  %v2159 = vpop.f32.mrf.mxu0
  %2160 = vdwg.mxu0
  %v2161 = vmul.f32 %v2158, 0.03125
  %v2162 = vsel %vm206, %v2072, -inf
  %2163 = vmax.xlane.f32.xlu0 %v2162
  %v2164 = vpop.xlane.xlu0 %2163
  %v2165 = vsub.f32 %v2072, %v2164
  %v2166 = vmul.f32 %v2165, 1.442695
  %v2167 = vpow.pop %v2166
  %v2168 = vsel %vm206, %v2167, 0.0
  %2169 = vadd.xlane.f32.xlu0 %v2168
  %v2170 = vpop.xlane.xlu0 %2169
  %v2171 = vrcp.pop %v2170
  %v2172 = vmul.f32 %v2167, %v2171
  %v2173 = vmul.f32 %v2172, %v2172
  %v2174 = vmul.f32 %v2173, %v2161
  %v2175 = vsel %vm206, %v2174, 0.0
  %2176 = vadd.xlane.f32.xlu0 %v2175
  %v2177 = vpop.xlane.xlu0 %2176
  %v2178 = vmul.f32 %v2172, 2.0
  %v2179 = vsub.f32 1.0, %v2178
  %v2180 = vmul.f32 %v2179, %v2161
  %v2181 = vadd.f32 %v2180, %v2177
  %v2182 = vmul.f32 %v2173, %v2181
  %v2183 = vmax.f32 %v2182, 0.0
  %2184 = vrot.lane.b32.xlu0 %v118, 56
  %v2185 = vpop.permute.xlu0 %2184
  %v2188 = vsel %vm206, %v2172, 0
  %2190 = vmatprep.subr.mxu0 0.0
  %2191 = vmatpush1.msra.mxu0 0.0
  %2192 = vmatprep.subr.mxu0 0.0
  %2193 = vmatpush1.msra.mxu0 0.0
  %2194 = vmatprep.subr.mxu0 0.0
  %2195 = vmatpush1.msra.mxu0 0.0
  %2196 = vmatprep.subr.mxu0 0.0
  %2197 = vmatpush1.msra.mxu0 0.0
  %2198 = vmatprep.subr.mxu0 0.0
  %2199 = vmatpush1.msra.mxu0 0.0
  %2200 = vmatprep.subr.mxu0 0.0
  %2201 = vmatpush1.msra.mxu0 0.0
  %2202 = vmatprep.subr.mxu0 0.0
  %2203 = vmatpush1.msra.mxu0 0.0
  %2204 = vmatprep.subr.mxu0 0.0
  %2205 = vmatpush1.msra.mxu0 0.0
  %2206 = vmatprep.subr.mxu0 0.0
  %2207 = vmatpush1.msra.mxu0 0.0
  %2208 = vmatprep.subr.mxu0 0.0
  %2209 = vmatpush1.msra.mxu0 0.0
  %2210 = vmatprep.subr.mxu0 0.0
  %2211 = vmatpush1.msra.mxu0 0.0
  %2212 = vmatprep.subr.mxu0 0.0
  %2213 = vmatpush1.msra.mxu0 0.0
  %2214 = vmatprep.subr.mxu0 0.0
  %2215 = vmatpush1.msra.mxu0 0.0
  %2216 = vmatprep.subr.mxu0 0.0
  %2217 = vmatpush1.msra.mxu0 0.0
  %2218 = vmatprep.subr.mxu0 0.0
  %2219 = vmatpush1.msra.mxu0 0.0
  %2220 = vmatprep.subr.mxu0 0.0
  %2221 = vmatpush1.msra.mxu0 %v2185
  %2222 = vmatprep.subr.mxu0 0.0
  %2223 = vmatpush2.msra.mxu0 0.0
  %2224 = vmatprep.subr.mxu0 0.0
  %2225 = vmatpush2.msra.mxu0 0.0
  %2226 = vmatprep.subr.mxu0 0.0
  %2227 = vmatpush2.msra.mxu0 0.0
  %2228 = vmatprep.subr.mxu0 0.0
  %2229 = vmatpush2.msra.mxu0 0.0
  %2230 = vmatprep.subr.mxu0 0.0
  %2231 = vmatpush2.msra.mxu0 0.0
  %2232 = vmatprep.subr.mxu0 0.0
  %2233 = vmatpush2.msra.mxu0 0.0
  %2234 = vmatprep.subr.mxu0 0.0
  %2235 = vmatpush2.msra.mxu0 0.0
  %2236 = vmatprep.subr.mxu0 0.0
  %2237 = vmatpush2.msra.mxu0 0.0
  %2238 = vmatprep.subr.mxu0 0.0
  %2239 = vmatpush2.msra.mxu0 0.0
  %2240 = vmatprep.subr.mxu0 0.0
  %2241 = vmatpush2.msra.mxu0 0.0
  %2242 = vmatprep.subr.mxu0 0.0
  %2243 = vmatpush2.msra.mxu0 0.0
  %2244 = vmatprep.subr.mxu0 0.0
  %2245 = vmatpush2.msra.mxu0 0.0
  %2246 = vmatprep.subr.mxu0 0.0
  %2247 = vmatpush2.msra.mxu0 0.0
  %2248 = vmatprep.subr.mxu0 0.0
  %2249 = vmatpush2.msra.mxu0 0.0
  %2250 = vmatprep.subr.mxu0 0.0
  %2251 = vmatpush2.msra.mxu0 0.0
  %2252 = vmatprep.subr.mxu0 0.0
  %2253 = vmatpush2.msra.mxu0 0.0
  %2254 = vmatprep.mubr.f32.mxu0 0.0
  %2255 = vmatmul.mubr.f32.gmra.mxu0 %v2188
  %v2256 = vpop.f32.mrf.mxu0
  %v2257 = vadd.f32 0.0, %v2256
  %v2258 = vpop.f32.mrf.mxu0
  %2259 = vdwg.mxu0
  %2261 = vrot.lane.b32.xlu0 %v2183, 8
  %v2262 = vpop.permute.xlu0 %2261
  %v2264 = vsel %vm206, %v2173, %v2262
  %2265 = vrot.lane.b32.xlu0 %v200, 56
  %v2266 = vpop.permute.xlu0 %2265
  %2267 = vrot.lane.b32.xlu0 %v1726, 56
  %v2268 = vpop.permute.xlu0 %2267
  %v2272 = vsel %vm297, %v2264, 0
  %2274 = vmatprep.subr.mxu0 0.0
  %2275 = vmatpush1.msra.mxu0 0.0
  %2276 = vmatprep.subr.mxu0 0.0
  %2277 = vmatpush1.msra.mxu0 0.0
  %2278 = vmatprep.subr.mxu0 0.0
  %2279 = vmatpush1.msra.mxu0 0.0
  %2280 = vmatprep.subr.mxu0 0.0
  %2281 = vmatpush1.msra.mxu0 0.0
  %2282 = vmatprep.subr.mxu0 0.0
  %2283 = vmatpush1.msra.mxu0 0.0
  %2284 = vmatprep.subr.mxu0 0.0
  %2285 = vmatpush1.msra.mxu0 0.0
  %2286 = vmatprep.subr.mxu0 0.0
  %2287 = vmatpush1.msra.mxu0 0.0
  %2288 = vmatprep.subr.mxu0 0.0
  %2289 = vmatpush1.msra.mxu0 0.0
  %2290 = vmatprep.subr.mxu0 0.0
  %2291 = vmatpush1.msra.mxu0 0.0
  %2292 = vmatprep.subr.mxu0 0.0
  %2293 = vmatpush1.msra.mxu0 0.0
  %2294 = vmatprep.subr.mxu0 0.0
  %2295 = vmatpush1.msra.mxu0 0.0
  %2296 = vmatprep.subr.mxu0 0.0
  %2297 = vmatpush1.msra.mxu0 0.0
  %2298 = vmatprep.subr.mxu0 0.0
  %2299 = vmatpush1.msra.mxu0 0.0
  %2300 = vmatprep.subr.mxu0 0.0
  %2301 = vmatpush1.msra.mxu0 0.0
  %2302 = vmatprep.subr.mxu0 0.0
  %2303 = vmatpush1.msra.mxu0 %v2268
  %2304 = vmatprep.subr.mxu0 0.0
  %2305 = vmatpush1.msra.mxu0 %v2266
  %2306 = vmatprep.subr.mxu0 0.0
  %2307 = vmatpush2.msra.mxu0 0.0
  %2308 = vmatprep.subr.mxu0 0.0
  %2309 = vmatpush2.msra.mxu0 0.0
  %2310 = vmatprep.subr.mxu0 0.0
  %2311 = vmatpush2.msra.mxu0 0.0
  %2312 = vmatprep.subr.mxu0 0.0
  %2313 = vmatpush2.msra.mxu0 0.0
  %2314 = vmatprep.subr.mxu0 0.0
  %2315 = vmatpush2.msra.mxu0 0.0
  %2316 = vmatprep.subr.mxu0 0.0
  %2317 = vmatpush2.msra.mxu0 0.0
  %2318 = vmatprep.subr.mxu0 0.0
  %2319 = vmatpush2.msra.mxu0 0.0
  %2320 = vmatprep.subr.mxu0 0.0
  %2321 = vmatpush2.msra.mxu0 0.0
  %2322 = vmatprep.subr.mxu0 0.0
  %2323 = vmatpush2.msra.mxu0 0.0
  %2324 = vmatprep.subr.mxu0 0.0
  %2325 = vmatpush2.msra.mxu0 0.0
  %2326 = vmatprep.subr.mxu0 0.0
  %2327 = vmatpush2.msra.mxu0 0.0
  %2328 = vmatprep.subr.mxu0 0.0
  %2329 = vmatpush2.msra.mxu0 0.0
  %2330 = vmatprep.subr.mxu0 0.0
  %2331 = vmatpush2.msra.mxu0 0.0
  %2332 = vmatprep.subr.mxu0 0.0
  %2333 = vmatpush2.msra.mxu0 0.0
  %2334 = vmatprep.subr.mxu0 0.0
  %2335 = vmatpush2.msra.mxu0 0.0
  %2336 = vmatprep.subr.mxu0 0.0
  %2337 = vmatpush2.msra.mxu0 0.0
  %2338 = vmatprep.mubr.f32.mxu0 0.0
  %2339 = vmatmul.mubr.f32.gmra.mxu0 %v2272
  %v2340 = vpop.f32.mrf.mxu0
  %v2341 = vadd.f32 0.0, %v2340
  %v2342 = vpop.f32.mrf.mxu0
  %2343 = vdwg.mxu0
  %2344 = vrot.lane.b32.xlu0 %v118, 112
  %v2345 = vpop.permute.xlu0 %2344
  %2346 = vrot.lane.b32.xlu0 %v118, 80
  %v2347 = vpop.permute.xlu0 %2346
  %v2348 = vsel %vm206, %v2345, 0
  %v2350 = vsel %vm206, %v2347, 0
  %2352 = vmatprep.subr.mxu0 0.0
  %2353 = vmatpush1.xpose.msra.mxu0 0.0
  %2354 = vmatprep.subr.mxu0 0.0
  %2355 = vmatpush1.xpose.msra.mxu0 0.0
  %2356 = vmatprep.subr.mxu0 0.0
  %2357 = vmatpush1.xpose.msra.mxu0 0.0
  %2358 = vmatprep.subr.mxu0 0.0
  %2359 = vmatpush1.xpose.msra.mxu0 0.0
  %2360 = vmatprep.subr.mxu0 0.0
  %2361 = vmatpush1.xpose.msra.mxu0 0.0
  %2362 = vmatprep.subr.mxu0 0.0
  %2363 = vmatpush1.xpose.msra.mxu0 0.0
  %2364 = vmatprep.subr.mxu0 0.0
  %2365 = vmatpush1.xpose.msra.mxu0 0.0
  %2366 = vmatprep.subr.mxu0 0.0
  %2367 = vmatpush1.xpose.msra.mxu0 0.0
  %2368 = vmatprep.subr.mxu0 0.0
  %2369 = vmatpush1.xpose.msra.mxu0 0.0
  %2370 = vmatprep.subr.mxu0 0.0
  %2371 = vmatpush1.xpose.msra.mxu0 0.0
  %2372 = vmatprep.subr.mxu0 0.0
  %2373 = vmatpush1.xpose.msra.mxu0 0.0
  %2374 = vmatprep.subr.mxu0 0.0
  %2375 = vmatpush1.xpose.msra.mxu0 0.0
  %2376 = vmatprep.subr.mxu0 0.0
  %2377 = vmatpush1.xpose.msra.mxu0 0.0
  %2378 = vmatprep.subr.mxu0 0.0
  %2379 = vmatpush1.xpose.msra.mxu0 0.0
  %2380 = vmatprep.subr.mxu0 0.0
  %2381 = vmatpush1.xpose.msra.mxu0 0.0
  %2382 = vmatprep.subr.mxu0 0.0
  %2383 = vmatpush1.xpose.msra.mxu0 %v2350
  %2384 = vmatprep.subr.mxu0 0.0
  %2385 = vmatpush2.xpose.msra.mxu0 0.0
  %2386 = vmatprep.subr.mxu0 0.0
  %2387 = vmatpush2.xpose.msra.mxu0 0.0
  %2388 = vmatprep.subr.mxu0 0.0
  %2389 = vmatpush2.xpose.msra.mxu0 0.0
  %2390 = vmatprep.subr.mxu0 0.0
  %2391 = vmatpush2.xpose.msra.mxu0 0.0
  %2392 = vmatprep.subr.mxu0 0.0
  %2393 = vmatpush2.xpose.msra.mxu0 0.0
  %2394 = vmatprep.subr.mxu0 0.0
  %2395 = vmatpush2.xpose.msra.mxu0 0.0
  %2396 = vmatprep.subr.mxu0 0.0
  %2397 = vmatpush2.xpose.msra.mxu0 0.0
  %2398 = vmatprep.subr.mxu0 0.0
  %2399 = vmatpush2.xpose.msra.mxu0 0.0
  %2400 = vmatprep.subr.mxu0 0.0
  %2401 = vmatpush2.xpose.msra.mxu0 0.0
  %2402 = vmatprep.subr.mxu0 0.0
  %2403 = vmatpush2.xpose.msra.mxu0 0.0
  %2404 = vmatprep.subr.mxu0 0.0
  %2405 = vmatpush2.xpose.msra.mxu0 0.0
  %2406 = vmatprep.subr.mxu0 0.0
  %2407 = vmatpush2.xpose.msra.mxu0 0.0
  %2408 = vmatprep.subr.mxu0 0.0
  %2409 = vmatpush2.xpose.msra.mxu0 0.0
  %2410 = vmatprep.subr.mxu0 0.0
  %2411 = vmatpush2.xpose.msra.mxu0 0.0
  %2412 = vmatprep.subr.mxu0 0.0
  %2413 = vmatpush2.xpose.msra.mxu0 0.0
  %2414 = vmatprep.subr.mxu0 0.0
  %2415 = vmatpush2.xpose.msra.mxu0 0.0
  %2416 = vmatprep.mubr.f32.mxu0 0.0
  %2417 = vmatmul.mubr.f32.gmra.mxu0 %v2348
  %v2418 = vpop.f32.mrf.mxu0
  %v2419 = vadd.f32 0.0, %v2418
  %v2420 = vpop.f32.mrf.mxu0
  %2421 = vdwg.mxu0
  %v2422 = vmul.f32 %v2419, 0.17677669
  %2423 = vrot.lane.b32.xlu0 %v1720, 112
  %v2424 = vpop.permute.xlu0 %2423
  %2426 = vrot.lane.b32.xlu0 %v200, 120
  %v2427 = vpop.permute.xlu0 %2426
  %v2429 = vsel %vm206, %v2424, %v2427
  %2430 = vrot.lane.b32.xlu0 %v200, 80
  %v2431 = vpop.permute.xlu0 %2430
  %2433 = vrot.lane.b32.xlu0 %v1726, 88
  %v2434 = vpop.permute.xlu0 %2433
  %v2436 = vsel %vm206, %v2431, %v2434
  %v2438 = vsel %vm297, %v2429, 0
  %v2441 = vsel %vm297, %v2436, 0
  %2443 = vmatprep.subr.mxu0 0.0
  %2444 = vmatpush1.xpose.msra.mxu0 0.0
  %2445 = vmatprep.subr.mxu0 0.0
  %2446 = vmatpush1.xpose.msra.mxu0 0.0
  %2447 = vmatprep.subr.mxu0 0.0
  %2448 = vmatpush1.xpose.msra.mxu0 0.0
  %2449 = vmatprep.subr.mxu0 0.0
  %2450 = vmatpush1.xpose.msra.mxu0 0.0
  %2451 = vmatprep.subr.mxu0 0.0
  %2452 = vmatpush1.xpose.msra.mxu0 0.0
  %2453 = vmatprep.subr.mxu0 0.0
  %2454 = vmatpush1.xpose.msra.mxu0 0.0
  %2455 = vmatprep.subr.mxu0 0.0
  %2456 = vmatpush1.xpose.msra.mxu0 0.0
  %2457 = vmatprep.subr.mxu0 0.0
  %2458 = vmatpush1.xpose.msra.mxu0 0.0
  %2459 = vmatprep.subr.mxu0 0.0
  %2460 = vmatpush1.xpose.msra.mxu0 0.0
  %2461 = vmatprep.subr.mxu0 0.0
  %2462 = vmatpush1.xpose.msra.mxu0 0.0
  %2463 = vmatprep.subr.mxu0 0.0
  %2464 = vmatpush1.xpose.msra.mxu0 0.0
  %2465 = vmatprep.subr.mxu0 0.0
  %2466 = vmatpush1.xpose.msra.mxu0 0.0
  %2467 = vmatprep.subr.mxu0 0.0
  %2468 = vmatpush1.xpose.msra.mxu0 0.0
  %2469 = vmatprep.subr.mxu0 0.0
  %2470 = vmatpush1.xpose.msra.mxu0 0.0
  %2471 = vmatprep.subr.mxu0 0.0
  %2472 = vmatpush1.xpose.msra.mxu0 0.0
  %2473 = vmatprep.subr.mxu0 0.0
  %2474 = vmatpush1.xpose.msra.mxu0 %v2441
  %2475 = vmatprep.subr.mxu0 0.0
  %2476 = vmatpush2.xpose.msra.mxu0 0.0
  %2477 = vmatprep.subr.mxu0 0.0
  %2478 = vmatpush2.xpose.msra.mxu0 0.0
  %2479 = vmatprep.subr.mxu0 0.0
  %2480 = vmatpush2.xpose.msra.mxu0 0.0
  %2481 = vmatprep.subr.mxu0 0.0
  %2482 = vmatpush2.xpose.msra.mxu0 0.0
  %2483 = vmatprep.subr.mxu0 0.0
  %2484 = vmatpush2.xpose.msra.mxu0 0.0
  %2485 = vmatprep.subr.mxu0 0.0
  %2486 = vmatpush2.xpose.msra.mxu0 0.0
  %2487 = vmatprep.subr.mxu0 0.0
  %2488 = vmatpush2.xpose.msra.mxu0 0.0
  %2489 = vmatprep.subr.mxu0 0.0
  %2490 = vmatpush2.xpose.msra.mxu0 0.0
  %2491 = vmatprep.subr.mxu0 0.0
  %2492 = vmatpush2.xpose.msra.mxu0 0.0
  %2493 = vmatprep.subr.mxu0 0.0
  %2494 = vmatpush2.xpose.msra.mxu0 0.0
  %2495 = vmatprep.subr.mxu0 0.0
  %2496 = vmatpush2.xpose.msra.mxu0 0.0
  %2497 = vmatprep.subr.mxu0 0.0
  %2498 = vmatpush2.xpose.msra.mxu0 0.0
  %2499 = vmatprep.subr.mxu0 0.0
  %2500 = vmatpush2.xpose.msra.mxu0 0.0
  %2501 = vmatprep.subr.mxu0 0.0
  %2502 = vmatpush2.xpose.msra.mxu0 0.0
  %2503 = vmatprep.subr.mxu0 0.0
  %2504 = vmatpush2.xpose.msra.mxu0 0.0
  %2505 = vmatprep.subr.mxu0 0.0
  %2506 = vmatpush2.xpose.msra.mxu0 0.0
  %2507 = vmatprep.mubr.f32.mxu0 0.0
  %2508 = vmatmul.mubr.f32.gmra.mxu0 %v2438
  %v2509 = vpop.f32.mrf.mxu0
  %v2510 = vadd.f32 0.0, %v2509
  %v2511 = vpop.f32.mrf.mxu0
  %2512 = vdwg.mxu0
  %v2513 = vmul.f32 %v2510, 0.03125
  %v2514 = vsel %vm206, %v2422, -inf
  %2515 = vmax.xlane.f32.xlu0 %v2514
  %v2516 = vpop.xlane.xlu0 %2515
  %v2517 = vsub.f32 %v2422, %v2516
  %v2518 = vmul.f32 %v2517, 1.442695
  %v2519 = vpow.pop %v2518
  %v2520 = vsel %vm206, %v2519, 0.0
  %2521 = vadd.xlane.f32.xlu0 %v2520
  %v2522 = vpop.xlane.xlu0 %2521
  %v2523 = vrcp.pop %v2522
  %v2524 = vmul.f32 %v2519, %v2523
  %v2525 = vmul.f32 %v2524, %v2524
  %v2526 = vmul.f32 %v2525, %v2513
  %v2527 = vsel %vm206, %v2526, 0.0
  %2528 = vadd.xlane.f32.xlu0 %v2527
  %v2529 = vpop.xlane.xlu0 %2528
  %v2530 = vmul.f32 %v2524, 2.0
  %v2531 = vsub.f32 1.0, %v2530
  %v2532 = vmul.f32 %v2531, %v2513
  %v2533 = vadd.f32 %v2532, %v2529
  %v2534 = vmul.f32 %v2525, %v2533
  %v2535 = vmax.f32 %v2534, 0.0
  %2536 = vrot.lane.b32.xlu0 %v118, 48
  %v2537 = vpop.permute.xlu0 %2536
  %v2540 = vsel %vm206, %v2524, 0
  %2542 = vmatprep.subr.mxu0 0.0
  %2543 = vmatpush1.msra.mxu0 0.0
  %2544 = vmatprep.subr.mxu0 0.0
  %2545 = vmatpush1.msra.mxu0 0.0
  %2546 = vmatprep.subr.mxu0 0.0
  %2547 = vmatpush1.msra.mxu0 0.0
  %2548 = vmatprep.subr.mxu0 0.0
  %2549 = vmatpush1.msra.mxu0 0.0
  %2550 = vmatprep.subr.mxu0 0.0
  %2551 = vmatpush1.msra.mxu0 0.0
  %2552 = vmatprep.subr.mxu0 0.0
  %2553 = vmatpush1.msra.mxu0 0.0
  %2554 = vmatprep.subr.mxu0 0.0
  %2555 = vmatpush1.msra.mxu0 0.0
  %2556 = vmatprep.subr.mxu0 0.0
  %2557 = vmatpush1.msra.mxu0 0.0
  %2558 = vmatprep.subr.mxu0 0.0
  %2559 = vmatpush1.msra.mxu0 0.0
  %2560 = vmatprep.subr.mxu0 0.0
  %2561 = vmatpush1.msra.mxu0 0.0
  %2562 = vmatprep.subr.mxu0 0.0
  %2563 = vmatpush1.msra.mxu0 0.0
  %2564 = vmatprep.subr.mxu0 0.0
  %2565 = vmatpush1.msra.mxu0 0.0
  %2566 = vmatprep.subr.mxu0 0.0
  %2567 = vmatpush1.msra.mxu0 0.0
  %2568 = vmatprep.subr.mxu0 0.0
  %2569 = vmatpush1.msra.mxu0 0.0
  %2570 = vmatprep.subr.mxu0 0.0
  %2571 = vmatpush1.msra.mxu0 0.0
  %2572 = vmatprep.subr.mxu0 0.0
  %2573 = vmatpush1.msra.mxu0 %v2537
  %2574 = vmatprep.subr.mxu0 0.0
  %2575 = vmatpush2.msra.mxu0 0.0
  %2576 = vmatprep.subr.mxu0 0.0
  %2577 = vmatpush2.msra.mxu0 0.0
  %2578 = vmatprep.subr.mxu0 0.0
  %2579 = vmatpush2.msra.mxu0 0.0
  %2580 = vmatprep.subr.mxu0 0.0
  %2581 = vmatpush2.msra.mxu0 0.0
  %2582 = vmatprep.subr.mxu0 0.0
  %2583 = vmatpush2.msra.mxu0 0.0
  %2584 = vmatprep.subr.mxu0 0.0
  %2585 = vmatpush2.msra.mxu0 0.0
  %2586 = vmatprep.subr.mxu0 0.0
  %2587 = vmatpush2.msra.mxu0 0.0
  %2588 = vmatprep.subr.mxu0 0.0
  %2589 = vmatpush2.msra.mxu0 0.0
  %2590 = vmatprep.subr.mxu0 0.0
  %2591 = vmatpush2.msra.mxu0 0.0
  %2592 = vmatprep.subr.mxu0 0.0
  %2593 = vmatpush2.msra.mxu0 0.0
  %2594 = vmatprep.subr.mxu0 0.0
  %2595 = vmatpush2.msra.mxu0 0.0
  %2596 = vmatprep.subr.mxu0 0.0
  %2597 = vmatpush2.msra.mxu0 0.0
  %2598 = vmatprep.subr.mxu0 0.0
  %2599 = vmatpush2.msra.mxu0 0.0
  %2600 = vmatprep.subr.mxu0 0.0
  %2601 = vmatpush2.msra.mxu0 0.0
  %2602 = vmatprep.subr.mxu0 0.0
  %2603 = vmatpush2.msra.mxu0 0.0
  %2604 = vmatprep.subr.mxu0 0.0
  %2605 = vmatpush2.msra.mxu0 0.0
  %2606 = vmatprep.mubr.f32.mxu0 0.0
  %2607 = vmatmul.mubr.f32.gmra.mxu0 %v2540
  %v2608 = vpop.f32.mrf.mxu0
  %v2609 = vadd.f32 0.0, %v2608
  %v2610 = vpop.f32.mrf.mxu0
  %2611 = vdwg.mxu0
  %2613 = vrot.lane.b32.xlu0 %v2535, 8
  %v2614 = vpop.permute.xlu0 %2613
  %v2616 = vsel %vm206, %v2525, %v2614
  %2617 = vrot.lane.b32.xlu0 %v200, 48
  %v2618 = vpop.permute.xlu0 %2617
  %2619 = vrot.lane.b32.xlu0 %v1726, 48
  %v2620 = vpop.permute.xlu0 %2619
  %v2624 = vsel %vm297, %v2616, 0
  %2626 = vmatprep.subr.mxu0 0.0
  %2627 = vmatpush1.msra.mxu0 0.0
  %2628 = vmatprep.subr.mxu0 0.0
  %2629 = vmatpush1.msra.mxu0 0.0
  %2630 = vmatprep.subr.mxu0 0.0
  %2631 = vmatpush1.msra.mxu0 0.0
  %2632 = vmatprep.subr.mxu0 0.0
  %2633 = vmatpush1.msra.mxu0 0.0
  %2634 = vmatprep.subr.mxu0 0.0
  %2635 = vmatpush1.msra.mxu0 0.0
  %2636 = vmatprep.subr.mxu0 0.0
  %2637 = vmatpush1.msra.mxu0 0.0
  %2638 = vmatprep.subr.mxu0 0.0
  %2639 = vmatpush1.msra.mxu0 0.0
  %2640 = vmatprep.subr.mxu0 0.0
  %2641 = vmatpush1.msra.mxu0 0.0
  %2642 = vmatprep.subr.mxu0 0.0
  %2643 = vmatpush1.msra.mxu0 0.0
  %2644 = vmatprep.subr.mxu0 0.0
  %2645 = vmatpush1.msra.mxu0 0.0
  %2646 = vmatprep.subr.mxu0 0.0
  %2647 = vmatpush1.msra.mxu0 0.0
  %2648 = vmatprep.subr.mxu0 0.0
  %2649 = vmatpush1.msra.mxu0 0.0
  %2650 = vmatprep.subr.mxu0 0.0
  %2651 = vmatpush1.msra.mxu0 0.0
  %2652 = vmatprep.subr.mxu0 0.0
  %2653 = vmatpush1.msra.mxu0 0.0
  %2654 = vmatprep.subr.mxu0 0.0
  %2655 = vmatpush1.msra.mxu0 %v2620
  %2656 = vmatprep.subr.mxu0 0.0
  %2657 = vmatpush1.msra.mxu0 %v2618
  %2658 = vmatprep.subr.mxu0 0.0
  %2659 = vmatpush2.msra.mxu0 0.0
  %2660 = vmatprep.subr.mxu0 0.0
  %2661 = vmatpush2.msra.mxu0 0.0
  %2662 = vmatprep.subr.mxu0 0.0
  %2663 = vmatpush2.msra.mxu0 0.0
  %2664 = vmatprep.subr.mxu0 0.0
  %2665 = vmatpush2.msra.mxu0 0.0
  %2666 = vmatprep.subr.mxu0 0.0
  %2667 = vmatpush2.msra.mxu0 0.0
  %2668 = vmatprep.subr.mxu0 0.0
  %2669 = vmatpush2.msra.mxu0 0.0
  %2670 = vmatprep.subr.mxu0 0.0
  %2671 = vmatpush2.msra.mxu0 0.0
  %2672 = vmatprep.subr.mxu0 0.0
  %2673 = vmatpush2.msra.mxu0 0.0
  %2674 = vmatprep.subr.mxu0 0.0
  %2675 = vmatpush2.msra.mxu0 0.0
  %2676 = vmatprep.subr.mxu0 0.0
  %2677 = vmatpush2.msra.mxu0 0.0
  %2678 = vmatprep.subr.mxu0 0.0
  %2679 = vmatpush2.msra.mxu0 0.0
  %2680 = vmatprep.subr.mxu0 0.0
  %2681 = vmatpush2.msra.mxu0 0.0
  %2682 = vmatprep.subr.mxu0 0.0
  %2683 = vmatpush2.msra.mxu0 0.0
  %2684 = vmatprep.subr.mxu0 0.0
  %2685 = vmatpush2.msra.mxu0 0.0
  %2686 = vmatprep.subr.mxu0 0.0
  %2687 = vmatpush2.msra.mxu0 0.0
  %2688 = vmatprep.subr.mxu0 0.0
  %2689 = vmatpush2.msra.mxu0 0.0
  %2690 = vmatprep.mubr.f32.mxu0 0.0
  %2691 = vmatmul.mubr.f32.gmra.mxu0 %v2624
  %v2692 = vpop.f32.mrf.mxu0
  %v2693 = vadd.f32 0.0, %v2692
  %v2694 = vpop.f32.mrf.mxu0
  %2695 = vdwg.mxu0
  %2696 = vrot.lane.b32.xlu0 %v118, 104
  %v2697 = vpop.permute.xlu0 %2696
  %2698 = vrot.lane.b32.xlu0 %v118, 72
  %v2699 = vpop.permute.xlu0 %2698
  %v2700 = vsel %vm206, %v2697, 0
  %v2702 = vsel %vm206, %v2699, 0
  %2704 = vmatprep.subr.mxu0 0.0
  %2705 = vmatpush1.xpose.msra.mxu0 0.0
  %2706 = vmatprep.subr.mxu0 0.0
  %2707 = vmatpush1.xpose.msra.mxu0 0.0
  %2708 = vmatprep.subr.mxu0 0.0
  %2709 = vmatpush1.xpose.msra.mxu0 0.0
  %2710 = vmatprep.subr.mxu0 0.0
  %2711 = vmatpush1.xpose.msra.mxu0 0.0
  %2712 = vmatprep.subr.mxu0 0.0
  %2713 = vmatpush1.xpose.msra.mxu0 0.0
  %2714 = vmatprep.subr.mxu0 0.0
  %2715 = vmatpush1.xpose.msra.mxu0 0.0
  %2716 = vmatprep.subr.mxu0 0.0
  %2717 = vmatpush1.xpose.msra.mxu0 0.0
  %2718 = vmatprep.subr.mxu0 0.0
  %2719 = vmatpush1.xpose.msra.mxu0 0.0
  %2720 = vmatprep.subr.mxu0 0.0
  %2721 = vmatpush1.xpose.msra.mxu0 0.0
  %2722 = vmatprep.subr.mxu0 0.0
  %2723 = vmatpush1.xpose.msra.mxu0 0.0
  %2724 = vmatprep.subr.mxu0 0.0
  %2725 = vmatpush1.xpose.msra.mxu0 0.0
  %2726 = vmatprep.subr.mxu0 0.0
  %2727 = vmatpush1.xpose.msra.mxu0 0.0
  %2728 = vmatprep.subr.mxu0 0.0
  %2729 = vmatpush1.xpose.msra.mxu0 0.0
  %2730 = vmatprep.subr.mxu0 0.0
  %2731 = vmatpush1.xpose.msra.mxu0 0.0
  %2732 = vmatprep.subr.mxu0 0.0
  %2733 = vmatpush1.xpose.msra.mxu0 0.0
  %2734 = vmatprep.subr.mxu0 0.0
  %2735 = vmatpush1.xpose.msra.mxu0 %v2702
  %2736 = vmatprep.subr.mxu0 0.0
  %2737 = vmatpush2.xpose.msra.mxu0 0.0
  %2738 = vmatprep.subr.mxu0 0.0
  %2739 = vmatpush2.xpose.msra.mxu0 0.0
  %2740 = vmatprep.subr.mxu0 0.0
  %2741 = vmatpush2.xpose.msra.mxu0 0.0
  %2742 = vmatprep.subr.mxu0 0.0
  %2743 = vmatpush2.xpose.msra.mxu0 0.0
  %2744 = vmatprep.subr.mxu0 0.0
  %2745 = vmatpush2.xpose.msra.mxu0 0.0
  %2746 = vmatprep.subr.mxu0 0.0
  %2747 = vmatpush2.xpose.msra.mxu0 0.0
  %2748 = vmatprep.subr.mxu0 0.0
  %2749 = vmatpush2.xpose.msra.mxu0 0.0
  %2750 = vmatprep.subr.mxu0 0.0
  %2751 = vmatpush2.xpose.msra.mxu0 0.0
  %2752 = vmatprep.subr.mxu0 0.0
  %2753 = vmatpush2.xpose.msra.mxu0 0.0
  %2754 = vmatprep.subr.mxu0 0.0
  %2755 = vmatpush2.xpose.msra.mxu0 0.0
  %2756 = vmatprep.subr.mxu0 0.0
  %2757 = vmatpush2.xpose.msra.mxu0 0.0
  %2758 = vmatprep.subr.mxu0 0.0
  %2759 = vmatpush2.xpose.msra.mxu0 0.0
  %2760 = vmatprep.subr.mxu0 0.0
  %2761 = vmatpush2.xpose.msra.mxu0 0.0
  %2762 = vmatprep.subr.mxu0 0.0
  %2763 = vmatpush2.xpose.msra.mxu0 0.0
  %2764 = vmatprep.subr.mxu0 0.0
  %2765 = vmatpush2.xpose.msra.mxu0 0.0
  %2766 = vmatprep.subr.mxu0 0.0
  %2767 = vmatpush2.xpose.msra.mxu0 0.0
  %2768 = vmatprep.mubr.f32.mxu0 0.0
  %2769 = vmatmul.mubr.f32.gmra.mxu0 %v2700
  %v2770 = vpop.f32.mrf.mxu0
  %v2771 = vadd.f32 0.0, %v2770
  %v2772 = vpop.f32.mrf.mxu0
  %2773 = vdwg.mxu0
  %v2774 = vmul.f32 %v2771, 0.17677669
  %2775 = vrot.lane.b32.xlu0 %v1720, 104
  %v2776 = vpop.permute.xlu0 %2775
  %2778 = vrot.lane.b32.xlu0 %v200, 112
  %v2779 = vpop.permute.xlu0 %2778
  %v2781 = vsel %vm206, %v2776, %v2779
  %2782 = vrot.lane.b32.xlu0 %v200, 72
  %v2783 = vpop.permute.xlu0 %2782
  %2785 = vrot.lane.b32.xlu0 %v1726, 80
  %v2786 = vpop.permute.xlu0 %2785
  %v2788 = vsel %vm206, %v2783, %v2786
  %v2790 = vsel %vm297, %v2781, 0
  %v2793 = vsel %vm297, %v2788, 0
  %2795 = vmatprep.subr.mxu0 0.0
  %2796 = vmatpush1.xpose.msra.mxu0 0.0
  %2797 = vmatprep.subr.mxu0 0.0
  %2798 = vmatpush1.xpose.msra.mxu0 0.0
  %2799 = vmatprep.subr.mxu0 0.0
  %2800 = vmatpush1.xpose.msra.mxu0 0.0
  %2801 = vmatprep.subr.mxu0 0.0
  %2802 = vmatpush1.xpose.msra.mxu0 0.0
  %2803 = vmatprep.subr.mxu0 0.0
  %2804 = vmatpush1.xpose.msra.mxu0 0.0
  %2805 = vmatprep.subr.mxu0 0.0
  %2806 = vmatpush1.xpose.msra.mxu0 0.0
  %2807 = vmatprep.subr.mxu0 0.0
  %2808 = vmatpush1.xpose.msra.mxu0 0.0
  %2809 = vmatprep.subr.mxu0 0.0
  %2810 = vmatpush1.xpose.msra.mxu0 0.0
  %2811 = vmatprep.subr.mxu0 0.0
  %2812 = vmatpush1.xpose.msra.mxu0 0.0
  %2813 = vmatprep.subr.mxu0 0.0
  %2814 = vmatpush1.xpose.msra.mxu0 0.0
  %2815 = vmatprep.subr.mxu0 0.0
  %2816 = vmatpush1.xpose.msra.mxu0 0.0
  %2817 = vmatprep.subr.mxu0 0.0
  %2818 = vmatpush1.xpose.msra.mxu0 0.0
  %2819 = vmatprep.subr.mxu0 0.0
  %2820 = vmatpush1.xpose.msra.mxu0 0.0
  %2821 = vmatprep.subr.mxu0 0.0
  %2822 = vmatpush1.xpose.msra.mxu0 0.0
  %2823 = vmatprep.subr.mxu0 0.0
  %2824 = vmatpush1.xpose.msra.mxu0 0.0
  %2825 = vmatprep.subr.mxu0 0.0
  %2826 = vmatpush1.xpose.msra.mxu0 %v2793
  %2827 = vmatprep.subr.mxu0 0.0
  %2828 = vmatpush2.xpose.msra.mxu0 0.0
  %2829 = vmatprep.subr.mxu0 0.0
  %2830 = vmatpush2.xpose.msra.mxu0 0.0
  %2831 = vmatprep.subr.mxu0 0.0
  %2832 = vmatpush2.xpose.msra.mxu0 0.0
  %2833 = vmatprep.subr.mxu0 0.0
  %2834 = vmatpush2.xpose.msra.mxu0 0.0
  %2835 = vmatprep.subr.mxu0 0.0
  %2836 = vmatpush2.xpose.msra.mxu0 0.0
  %2837 = vmatprep.subr.mxu0 0.0
  %2838 = vmatpush2.xpose.msra.mxu0 0.0
  %2839 = vmatprep.subr.mxu0 0.0
  %2840 = vmatpush2.xpose.msra.mxu0 0.0
  %2841 = vmatprep.subr.mxu0 0.0
  %2842 = vmatpush2.xpose.msra.mxu0 0.0
  %2843 = vmatprep.subr.mxu0 0.0
  %2844 = vmatpush2.xpose.msra.mxu0 0.0
  %2845 = vmatprep.subr.mxu0 0.0
  %2846 = vmatpush2.xpose.msra.mxu0 0.0
  %2847 = vmatprep.subr.mxu0 0.0
  %2848 = vmatpush2.xpose.msra.mxu0 0.0
  %2849 = vmatprep.subr.mxu0 0.0
  %2850 = vmatpush2.xpose.msra.mxu0 0.0
  %2851 = vmatprep.subr.mxu0 0.0
  %2852 = vmatpush2.xpose.msra.mxu0 0.0
  %2853 = vmatprep.subr.mxu0 0.0
  %2854 = vmatpush2.xpose.msra.mxu0 0.0
  %2855 = vmatprep.subr.mxu0 0.0
  %2856 = vmatpush2.xpose.msra.mxu0 0.0
  %2857 = vmatprep.subr.mxu0 0.0
  %2858 = vmatpush2.xpose.msra.mxu0 0.0
  %2859 = vmatprep.mubr.f32.mxu0 0.0
  %2860 = vmatmul.mubr.f32.gmra.mxu0 %v2790
  %v2861 = vpop.f32.mrf.mxu0
  %v2862 = vadd.f32 0.0, %v2861
  %v2863 = vpop.f32.mrf.mxu0
  %2864 = vdwg.mxu0
  %v2865 = vmul.f32 %v2862, 0.03125
  %v2866 = vsel %vm206, %v2774, -inf
  %2867 = vmax.xlane.f32.xlu0 %v2866
  %v2868 = vpop.xlane.xlu0 %2867
  %v2869 = vsub.f32 %v2774, %v2868
  %v2870 = vmul.f32 %v2869, 1.442695
  %v2871 = vpow.pop %v2870
  %v2872 = vsel %vm206, %v2871, 0.0
  %2873 = vadd.xlane.f32.xlu0 %v2872
  %v2874 = vpop.xlane.xlu0 %2873
  %v2875 = vrcp.pop %v2874
  %v2876 = vmul.f32 %v2871, %v2875
  %v2877 = vmul.f32 %v2876, %v2876
  %v2878 = vmul.f32 %v2877, %v2865
  %v2879 = vsel %vm206, %v2878, 0.0
  %2880 = vadd.xlane.f32.xlu0 %v2879
  %v2881 = vpop.xlane.xlu0 %2880
  %v2882 = vmul.f32 %v2876, 2.0
  %v2883 = vsub.f32 1.0, %v2882
  %v2884 = vmul.f32 %v2883, %v2865
  %v2885 = vadd.f32 %v2884, %v2881
  %v2886 = vmul.f32 %v2877, %v2885
  %v2887 = vmax.f32 %v2886, 0.0
  %2888 = vrot.lane.b32.xlu0 %v118, 40
  %v2889 = vpop.permute.xlu0 %2888
  %v2892 = vsel %vm206, %v2876, 0
  %2894 = vmatprep.subr.mxu0 0.0
  %2895 = vmatpush1.msra.mxu0 0.0
  %2896 = vmatprep.subr.mxu0 0.0
  %2897 = vmatpush1.msra.mxu0 0.0
  %2898 = vmatprep.subr.mxu0 0.0
  %2899 = vmatpush1.msra.mxu0 0.0
  %2900 = vmatprep.subr.mxu0 0.0
  %2901 = vmatpush1.msra.mxu0 0.0
  %2902 = vmatprep.subr.mxu0 0.0
  %2903 = vmatpush1.msra.mxu0 0.0
  %2904 = vmatprep.subr.mxu0 0.0
  %2905 = vmatpush1.msra.mxu0 0.0
  %2906 = vmatprep.subr.mxu0 0.0
  %2907 = vmatpush1.msra.mxu0 0.0
  %2908 = vmatprep.subr.mxu0 0.0
  %2909 = vmatpush1.msra.mxu0 0.0
  %2910 = vmatprep.subr.mxu0 0.0
  %2911 = vmatpush1.msra.mxu0 0.0
  %2912 = vmatprep.subr.mxu0 0.0
  %2913 = vmatpush1.msra.mxu0 0.0
  %2914 = vmatprep.subr.mxu0 0.0
  %2915 = vmatpush1.msra.mxu0 0.0
  %2916 = vmatprep.subr.mxu0 0.0
  %2917 = vmatpush1.msra.mxu0 0.0
  %2918 = vmatprep.subr.mxu0 0.0
  %2919 = vmatpush1.msra.mxu0 0.0
  %2920 = vmatprep.subr.mxu0 0.0
  %2921 = vmatpush1.msra.mxu0 0.0
  %2922 = vmatprep.subr.mxu0 0.0
  %2923 = vmatpush1.msra.mxu0 0.0
  %2924 = vmatprep.subr.mxu0 0.0
  %2925 = vmatpush1.msra.mxu0 %v2889
  %2926 = vmatprep.subr.mxu0 0.0
  %2927 = vmatpush2.msra.mxu0 0.0
  %2928 = vmatprep.subr.mxu0 0.0
  %2929 = vmatpush2.msra.mxu0 0.0
  %2930 = vmatprep.subr.mxu0 0.0
  %2931 = vmatpush2.msra.mxu0 0.0
  %2932 = vmatprep.subr.mxu0 0.0
  %2933 = vmatpush2.msra.mxu0 0.0
  %2934 = vmatprep.subr.mxu0 0.0
  %2935 = vmatpush2.msra.mxu0 0.0
  %2936 = vmatprep.subr.mxu0 0.0
  %2937 = vmatpush2.msra.mxu0 0.0
  %2938 = vmatprep.subr.mxu0 0.0
  %2939 = vmatpush2.msra.mxu0 0.0
  %2940 = vmatprep.subr.mxu0 0.0
  %2941 = vmatpush2.msra.mxu0 0.0
  %2942 = vmatprep.subr.mxu0 0.0
  %2943 = vmatpush2.msra.mxu0 0.0
  %2944 = vmatprep.subr.mxu0 0.0
  %2945 = vmatpush2.msra.mxu0 0.0
  %2946 = vmatprep.subr.mxu0 0.0
  %2947 = vmatpush2.msra.mxu0 0.0
  %2948 = vmatprep.subr.mxu0 0.0
  %2949 = vmatpush2.msra.mxu0 0.0
  %2950 = vmatprep.subr.mxu0 0.0
  %2951 = vmatpush2.msra.mxu0 0.0
  %2952 = vmatprep.subr.mxu0 0.0
  %2953 = vmatpush2.msra.mxu0 0.0
  %2954 = vmatprep.subr.mxu0 0.0
  %2955 = vmatpush2.msra.mxu0 0.0
  %2956 = vmatprep.subr.mxu0 0.0
  %2957 = vmatpush2.msra.mxu0 0.0
  %2958 = vmatprep.mubr.f32.mxu0 0.0
  %2959 = vmatmul.mubr.f32.gmra.mxu0 %v2892
  %v2960 = vpop.f32.mrf.mxu0
  %v2961 = vadd.f32 0.0, %v2960
  %v2962 = vpop.f32.mrf.mxu0
  %2963 = vdwg.mxu0
  %2965 = vrot.lane.b32.xlu0 %v2887, 8
  %v2966 = vpop.permute.xlu0 %2965
  %v2968 = vsel %vm206, %v2877, %v2966
  %2969 = vrot.lane.b32.xlu0 %v200, 40
  %v2970 = vpop.permute.xlu0 %2969
  %2971 = vrot.lane.b32.xlu0 %v1726, 40
  %v2972 = vpop.permute.xlu0 %2971
  %v2976 = vsel %vm297, %v2968, 0
  %2978 = vmatprep.subr.mxu0 0.0
  %2979 = vmatpush1.msra.mxu0 0.0
  %2980 = vmatprep.subr.mxu0 0.0
  %2981 = vmatpush1.msra.mxu0 0.0
  %2982 = vmatprep.subr.mxu0 0.0
  %2983 = vmatpush1.msra.mxu0 0.0
  %2984 = vmatprep.subr.mxu0 0.0
  %2985 = vmatpush1.msra.mxu0 0.0
  %2986 = vmatprep.subr.mxu0 0.0
  %2987 = vmatpush1.msra.mxu0 0.0
  %2988 = vmatprep.subr.mxu0 0.0
  %2989 = vmatpush1.msra.mxu0 0.0
  %2990 = vmatprep.subr.mxu0 0.0
  %2991 = vmatpush1.msra.mxu0 0.0
  %2992 = vmatprep.subr.mxu0 0.0
  %2993 = vmatpush1.msra.mxu0 0.0
  %2994 = vmatprep.subr.mxu0 0.0
  %2995 = vmatpush1.msra.mxu0 0.0
  %2996 = vmatprep.subr.mxu0 0.0
  %2997 = vmatpush1.msra.mxu0 0.0
  %2998 = vmatprep.subr.mxu0 0.0
  %2999 = vmatpush1.msra.mxu0 0.0
  %3000 = vmatprep.subr.mxu0 0.0
  %3001 = vmatpush1.msra.mxu0 0.0
  %3002 = vmatprep.subr.mxu0 0.0
  %3003 = vmatpush1.msra.mxu0 0.0
  %3004 = vmatprep.subr.mxu0 0.0
  %3005 = vmatpush1.msra.mxu0 0.0
  %3006 = vmatprep.subr.mxu0 0.0
  %3007 = vmatpush1.msra.mxu0 %v2972
  %3008 = vmatprep.subr.mxu0 0.0
  %3009 = vmatpush1.msra.mxu0 %v2970
  %3010 = vmatprep.subr.mxu0 0.0
  %3011 = vmatpush2.msra.mxu0 0.0
  %3012 = vmatprep.subr.mxu0 0.0
  %3013 = vmatpush2.msra.mxu0 0.0
  %3014 = vmatprep.subr.mxu0 0.0
  %3015 = vmatpush2.msra.mxu0 0.0
  %3016 = vmatprep.subr.mxu0 0.0
  %3017 = vmatpush2.msra.mxu0 0.0
  %3018 = vmatprep.subr.mxu0 0.0
  %3019 = vmatpush2.msra.mxu0 0.0
  %3020 = vmatprep.subr.mxu0 0.0
  %3021 = vmatpush2.msra.mxu0 0.0
  %3022 = vmatprep.subr.mxu0 0.0
  %3023 = vmatpush2.msra.mxu0 0.0
  %3024 = vmatprep.subr.mxu0 0.0
  %3025 = vmatpush2.msra.mxu0 0.0
  %3026 = vmatprep.subr.mxu0 0.0
  %3027 = vmatpush2.msra.mxu0 0.0
  %3028 = vmatprep.subr.mxu0 0.0
  %3029 = vmatpush2.msra.mxu0 0.0
  %3030 = vmatprep.subr.mxu0 0.0
  %3031 = vmatpush2.msra.mxu0 0.0
  %3032 = vmatprep.subr.mxu0 0.0
  %3033 = vmatpush2.msra.mxu0 0.0
  %3034 = vmatprep.subr.mxu0 0.0
  %3035 = vmatpush2.msra.mxu0 0.0
  %3036 = vmatprep.subr.mxu0 0.0
  %3037 = vmatpush2.msra.mxu0 0.0
  %3038 = vmatprep.subr.mxu0 0.0
  %3039 = vmatpush2.msra.mxu0 0.0
  %3040 = vmatprep.subr.mxu0 0.0
  %3041 = vmatpush2.msra.mxu0 0.0
  %3042 = vmatprep.mubr.f32.mxu0 0.0
  %3043 = vmatmul.mubr.f32.gmra.mxu0 %v2976
  %v3044 = vpop.f32.mrf.mxu0
  %v3045 = vadd.f32 0.0, %v3044
  %v3046 = vpop.f32.mrf.mxu0
  %3047 = vdwg.mxu0
  %3049 = vrot.lane.b32.xlu0 %v2257, 8
  %v3050 = vpop.permute.xlu0 %3049
  %3053 = vrot.lane.b32.xlu0 %v2609, 16
  %v3054 = vpop.permute.xlu0 %3053
  %3057 = vrot.lane.b32.xlu0 %v2961, 24
  %v3058 = vpop.permute.xlu0 %3057
  %v3060 = vsel %vm206, %v1907, %v3050
  %v3061 = vsel %vm297, %v3060, %v3054
  %v3062 = vsel %vm1625, %v3061, %v3058
  %3064 = vrot.lane.b32.xlu0 %v2341, 8
  %v3065 = vpop.permute.xlu0 %3064
  %3068 = vrot.lane.b32.xlu0 %v2693, 16
  %v3069 = vpop.permute.xlu0 %3068
  %3072 = vrot.lane.b32.xlu0 %v3045, 24
  %v3073 = vpop.permute.xlu0 %3072
  %v3075 = vsel %vm206, %v1991, %v3065
  %v3076 = vsel %vm297, %v3075, %v3069
  %v3077 = vsel %vm1625, %v3076, %v3073
  %v3078 = vadd.f32 %v47, %v1626
  %v3079 = vadd.f32 %v48, %v3062
  %v3080 = vadd.f32 %v49, %v1641
  %v3081 = vadd.f32 %v50, %v3077
  %v3082 = vld [vmem:[%s4] sm:$0x1]
  %v3083 = vld [vmem:[%s5] sm:$0x1]
  %v3084 = vld [vmem:[%s6] sm:$0x1]
  %v3085 = vld [vmem:[%s7] sm:$0x1]
  %v3086 = vld [vmem:[%s8] sm:$0x1]
  %v3087 = vsel %vm76, %v3078, 0.0
  %3088 = vadd.xlane.f32.xlu0 %v3087
  %v3089 = vpop.xlane.xlu0 %3088
  %v3090 = vsel %vm76, %v3079, 0.0
  %3091 = vadd.xlane.f32.xlu0 %v3090
  %v3092 = vpop.xlane.xlu0 %3091
  %v3093 = vrcp.pop 32.0
  %v3094 = vmul.f32 %v3089, %v3093
  %v3095 = vmul.f32 %v3092, %v3093
  %v3096 = vsub.f32 %v3078, %v3094
  %v3097 = vsub.f32 %v3079, %v3095
  %v3098 = vmul.f32 %v3096, %v3096
  %v3099 = vmul.f32 %v3097, %v3097
  %v3100 = vsel %vm76, %v3098, 0.0
  %3101 = vadd.xlane.f32.xlu0 %v3100
  %v3102 = vpop.xlane.xlu0 %3101
  %v3103 = vsel %vm76, %v3099, 0.0
  %3104 = vadd.xlane.f32.xlu0 %v3103
  %v3105 = vpop.xlane.xlu0 %3104
  %v3106 = vmul.f32 %v3102, %v3093
  %v3107 = vmul.f32 %v3105, %v3093
  %v3108 = vadd.f32 %v3106, 1e-05
  %v3109 = vadd.f32 %v3107, 1e-05
  %v3110 = vrsqrt.pop %v3108
  %v3111 = vrsqrt.pop %v3109
  %v3112 = vmul.f32 %v3096, %v3110
  %v3113 = vmul.f32 %v3097, %v3111
  %v3115 = vlaneseq
  %v3116 = vshrl.u32 %v3115, 7
  %v3117 = vsub.s32 0, %v3116
  %v3118 = vrot.slane %v3082, %v3117
  %v3120 = vmul.f32 %v3118, %v3112
  %v3121 = vmul.f32 %v3118, %v3113
  %v3123 = vlaneseq
  %v3124 = vshrl.u32 %v3123, 7
  %v3125 = vsub.s32 0, %v3124
  %v3126 = vrot.slane %v3083, %v3125
  %v3128 = vadd.f32 %v3120, %v3126
  %v3129 = vadd.f32 %v3121, %v3126
  %v3131 = vlaneseq
  %v3132 = vshrl.u32 %v3131, 7
  %v3133 = vsub.s32 0, %v3132
  %v3134 = vrot.slane %v3084, %v3133
  %v3136 = vmul.f32 %v3134, %v3080
  %v3137 = vmul.f32 %v3134, %v3081
  %v3138 = vmul.f32 %v3110, %v3110
  %v3139 = vmul.f32 %v3111, %v3111
  %v3140 = vmul.f32 %v3136, %v3138
  %v3141 = vmul.f32 %v3137, %v3139
  %v3142 = vmul.f32 %v3112, %v3112
  %v3143 = vmul.f32 %v3113, %v3113
  %v3145 = vlaneseq
  %v3146 = vshrl.u32 %v3145, 7
  %v3147 = vsub.s32 0, %v3146
  %v3148 = vrot.slane %v3085, %v3147
  %v3150 = vmul.f32 %v3148, %v3142
  %v3151 = vmul.f32 %v3148, %v3143
  %v3152 = vadd.f32 %v3140, %v3150
  %v3153 = vadd.f32 %v3141, %v3151
  %v3155 = vlaneseq
  %v3156 = vshrl.u32 %v3155, 7
  %v3157 = vsub.s32 0, %v3156
  %v3158 = vrot.slane %v3086, %v3157
  %v3160 = vadd.f32 %v3152, %v3158
  %v3161 = vadd.f32 %v3153, %v3158
  %v3162 = vld [vmem:[%s9] sm:$0xf]
  %v3163 = vld [vmem:[%s9 + $0x4] sm:$0xf]
  %v3164 = vld [vmem:[%s9 + $0x8] sm:$0xf]
  %v3165 = vld [vmem:[%s9 + $0xc] sm:$0xf]
  %v3166 = vld [vmem:[%s10] sm:$0xf]
  %v3167 = vld [vmem:[%s10 + $0x4] sm:$0xf]
  %v3168 = vld [vmem:[%s10 + $0x8] sm:$0xf]
  %v3169 = vld [vmem:[%s10 + $0xc] sm:$0xf]
  %v3170 = vld [vmem:[%s10 + $0x10] sm:$0xf]
  %v3171 = vld [vmem:[%s10 + $0x14] sm:$0xf]
  %v3172 = vld [vmem:[%s10 + $0x18] sm:$0xf]
  %v3173 = vld [vmem:[%s10 + $0x1c] sm:$0xf]
  %v3174 = vld [vmem:[%s11] sm:$0x1]
  %v3175 = vld [vmem:[%s12] sm:$0x1]
  %v3176 = vpack.c.bf16 %v3129, %v3128
  %v3177 = vmul.f32 %v3128, %v3128
  %v3178 = vmul.f32 %v3129, %v3129
  %3181 = vrot.lane.b32.xlu0 %v3160, 32
  %v3182 = vpop.permute.xlu0 %3181
  %3183 = vrot.lane.b32.xlu0 %v3161, 32
  %v3184 = vpop.permute.xlu0 %3183
  %v3187 = vsel %vm76, %v3177, %v3182
  %v3188 = vsel %vm76, %v3178, %v3184
  %v3189 = vpack.c.bf16 %v3188, %v3187
  %v3191 = vlaneseq
  %v3192 = vshrl.u32 %v3191, 7
  %v3193 = vsub.s32 0, %v3192
  %v3194 = vrot.slane %v3174, %v3193
  %v3200 = vunpack.c.l.b16 %v3162
  %v3201 = vunpack.c.l.b16 %v3163
  %v3202 = vunpack.c.l.b16 %v3164
  %v3203 = vunpack.c.l.b16 %v3165
  %v3204 = vpack.c.b16 %v3201, %v3200
  %v3205 = vpack.c.b16 %v3203, %v3202
  %v3209 = vsel %vm76, %v3176, 0
  %3211 = vmatprep.subr.bf16.mxu0 0
  %3212 = vmatpush1.bf16.msra.mxu0 0
  %3213 = vmatprep.subr.bf16.mxu0 0
  %3214 = vmatpush1.bf16.msra.mxu0 0
  %3215 = vmatprep.subr.bf16.mxu0 0
  %3216 = vmatpush1.bf16.msra.mxu0 0
  %3217 = vmatprep.subr.bf16.mxu0 0
  %3218 = vmatpush1.bf16.msra.mxu0 0
  %3219 = vmatprep.subr.bf16.mxu0 0
  %3220 = vmatpush1.bf16.msra.mxu0 0
  %3221 = vmatprep.subr.bf16.mxu0 0
  %3222 = vmatpush1.bf16.msra.mxu0 0
  %3223 = vmatprep.subr.bf16.mxu0 0
  %3224 = vmatpush1.bf16.msra.mxu0 %v3205
  %3225 = vmatprep.subr.bf16.mxu0 0
  %3226 = vmatpush1.bf16.msra.mxu0 %v3204
  %3227 = vmatprep.subr.bf16.mxu0 0
  %3228 = vmatpush2.bf16.msra.mxu0 0
  %3229 = vmatprep.subr.bf16.mxu0 0
  %3230 = vmatpush2.bf16.msra.mxu0 0
  %3231 = vmatprep.subr.bf16.mxu0 0
  %3232 = vmatpush2.bf16.msra.mxu0 0
  %3233 = vmatprep.subr.bf16.mxu0 0
  %3234 = vmatpush2.bf16.msra.mxu0 0
  %3235 = vmatprep.subr.bf16.mxu0 0
  %3236 = vmatpush2.bf16.msra.mxu0 0
  %3237 = vmatprep.subr.bf16.mxu0 0
  %3238 = vmatpush2.bf16.msra.mxu0 0
  %3239 = vmatprep.subr.bf16.mxu0 0
  %3240 = vmatpush2.bf16.msra.mxu0 0
  %3241 = vmatprep.subr.bf16.mxu0 0
  %3242 = vmatpush2.bf16.msra.mxu0 0
  %3243 = vmatprep.mubr.bf16.mxu0 0
  %3244 = vmatmul.mubr.bf16.gmra.mxu0 %v3209
  %v3245 = vpop.f32.mrf.mxu0
  %v3246 = vadd.f32 %v3194, %v3245
  %v3247 = vpop.f32.mrf.mxu0
  %v3248 = vpop.f32.mrf.mxu0
  %v3249 = vadd.f32 %v3194, %v3248
  %v3250 = vpop.f32.mrf.mxu0
  %3251 = vdwg.mxu0
  %v3253 = vlaneseq
  %v3254 = vshrl.u32 %v3253, 7
  %v3255 = vsub.s32 0, %v3254
  %v3256 = vrot.slane %v3175, %v3255
  %v3266 = vunpack.c.l.b16 %v3166
  %v3267 = vunpack.c.l.b16 %v3167
  %v3268 = vunpack.c.l.b16 %v3168
  %v3269 = vunpack.c.l.b16 %v3169
  %v3270 = vunpack.c.l.b16 %v3170
  %v3271 = vunpack.c.l.b16 %v3171
  %v3272 = vunpack.c.l.b16 %v3172
  %v3273 = vunpack.c.l.b16 %v3173
  %v3274 = vpack.c.b16 %v3267, %v3266
  %v3275 = vpack.c.b16 %v3269, %v3268
  %v3276 = vpack.c.b16 %v3271, %v3270
  %v3277 = vpack.c.b16 %v3273, %v3272
  %v3283 = vsel %vm158, %v3189, 0
  %3285 = vmatprep.subr.bf16.mxu0 0
  %3286 = vmatpush1.bf16.msra.mxu0 0
  %3287 = vmatprep.subr.bf16.mxu0 0
  %3288 = vmatpush1.bf16.msra.mxu0 0
  %3289 = vmatprep.subr.bf16.mxu0 0
  %3290 = vmatpush1.bf16.msra.mxu0 0
  %3291 = vmatprep.subr.bf16.mxu0 0
  %3292 = vmatpush1.bf16.msra.mxu0 0
  %3293 = vmatprep.subr.bf16.mxu0 0
  %3294 = vmatpush1.bf16.msra.mxu0 %v3277
  %3295 = vmatprep.subr.bf16.mxu0 0
  %3296 = vmatpush1.bf16.msra.mxu0 %v3276
  %3297 = vmatprep.subr.bf16.mxu0 0
  %3298 = vmatpush1.bf16.msra.mxu0 %v3275
  %3299 = vmatprep.subr.bf16.mxu0 0
  %3300 = vmatpush1.bf16.msra.mxu0 %v3274
  %3301 = vmatprep.subr.bf16.mxu0 0
  %3302 = vmatpush2.bf16.msra.mxu0 0
  %3303 = vmatprep.subr.bf16.mxu0 0
  %3304 = vmatpush2.bf16.msra.mxu0 0
  %3305 = vmatprep.subr.bf16.mxu0 0
  %3306 = vmatpush2.bf16.msra.mxu0 0
  %3307 = vmatprep.subr.bf16.mxu0 0
  %3308 = vmatpush2.bf16.msra.mxu0 0
  %3309 = vmatprep.subr.bf16.mxu0 0
  %3310 = vmatpush2.bf16.msra.mxu0 0
  %3311 = vmatprep.subr.bf16.mxu0 0
  %3312 = vmatpush2.bf16.msra.mxu0 0
  %3313 = vmatprep.subr.bf16.mxu0 0
  %3314 = vmatpush2.bf16.msra.mxu0 0
  %3315 = vmatprep.subr.bf16.mxu0 0
  %3316 = vmatpush2.bf16.msra.mxu0 0
  %3317 = vmatprep.mubr.bf16.mxu0 0
  %3318 = vmatmul.mubr.bf16.gmra.mxu0 %v3283
  %v3319 = vpop.f32.mrf.mxu0
  %v3320 = vadd.f32 %v3256, %v3319
  %v3321 = vpop.f32.mrf.mxu0
  %v3322 = vpop.f32.mrf.mxu0
  %v3323 = vadd.f32 %v3256, %v3322
  %v3324 = vpop.f32.mrf.mxu0
  %3325 = vdwg.mxu0
  %vm3326 = vcmp.gt.f32.partialorder %v3246, 0.0
  %vm3327 = vcmp.gt.f32.partialorder %v3249, 0.0
  %v3328 = vsel %vm3326, 1, 0
  %v3329 = vsel %vm3327, 1, 0
  %v3330 = vcvt.s32.f32 %v3328
  %v3331 = vcvt.s32.f32 %v3329
  %v3332 = vmul.f32 %v3246, %v3330
  %v3333 = vmul.f32 %v3249, %v3331
  %v3334 = vmul.f32 %v3320, %v3330
  %v3335 = vmul.f32 %v3323, %v3331
  %v3336 = vadd.f32 %v3128, %v3332
  %v3337 = vadd.f32 %v3129, %v3333
  %v3338 = vadd.f32 %v3160, %v3334
  %v3339 = vadd.f32 %v3161, %v3335
  %3340 = vst.msk [vmem:[%s13] sm:$0xff] %vm76, %v3336
  %3341 = vst.msk [vmem:[%s13 + $0x8] sm:$0xff] %vm76, %v3337
  %3342 = vst.msk [vmem:[%s14] sm:$0xff] %vm76, %v3338
  %3343 = vst.msk [vmem:[%s14 + $0x8] sm:$0xff] %vm76, %v3339
  // Predicated region
  $region54: #{_lambda_.5} parent=0 // pred_check
    _
  $region55: #{_lambda_.5} parent=0 // pred_check_branch
    %3345 = sbr.rel (0) target = $region57
  $region56: #{_lambda_.5} parent=0 // pred_region
    _
  $region57: #{_lambda_.5} parent=0 // pred_fallthru
    _
  // Predicated region
  $region58: #{_lambda_.5} parent=0 // pred_check
    _
  $region59: #{_lambda_.5} parent=0 // pred_check_branch
    %3347 = sbr.rel (0) target = $region61
  $region60: #{_lambda_.5} parent=0 // pred_region
    _
  $region61: #{_lambda_.5} parent=0 // pred_fallthru
    _
  // Predicated region
  $region62: #{_lambda_.5} parent=0 // pred_check
    _
  $region63: #{_lambda_.5} parent=0 // pred_check_branch
    %3349 = sbr.rel (0) target = $region65
  $region64: #{_lambda_.5} parent=0 // pred_region
    _
  $region65: #{_lambda_.5} parent=0 // pred_fallthru
    _
  // Predicated region
  $region66: #{_lambda_.5} parent=0 // pred_check
    _
  $region67: #{_lambda_.5} parent=0 // pred_check_branch
    %3351 = sbr.rel (0) target = $region69
  $region68: #{_lambda_.5} parent=0 // pred_region
    _
  $region69: #{_lambda_.5} parent=0 // pred_fallthru
    _

</llo_original>
